<compile_context>
chip_gen: v7x
topology: tpu7x:2x2x1
jax: 0.10.0
libtpu: 0.0.40
codegen_flags: <defaults>
</compile_context>

<pallas_src>
import math

import jax
import jax.numpy as jnp
from jax import lax
from jax.experimental import pallas as pl
from jax.experimental.pallas import tpu as pltpu

BN_EPS = 1e-5
D_IN = 1536
D_H1 = 1024
D_H2 = 512
D_HEAD1 = 5 * 128   # five fused head first layers (pose/shape/scale/trans/rot)
D_OUT = 128         # 30+10+1+2+3 = 46 real columns, padded to a lane multiple
TB_MAX = 256        # max batch rows per grid step

# column layout of the final (padded) output
_THETA = (0, 30)
_BETA = (30, 40)
_SCALE = (40, 41)
_TRANS = (41, 43)
_ROT = (43, 46)


def posehand_kernel(x_ref, w0_ref, b0_ref, w1_ref, b1_ref,
                    wh1_ref, bh1_ref, wh2_ref, bh2_ref, o_ref):
    def mm_bf16(a, w_ref):
        # bf16 MXU operands, f32 accumulation.
        return jnp.dot(a.astype(jnp.bfloat16), w_ref[...],
                       preferred_element_type=jnp.float32)

    x = x_ref[...]                                        # (TB, 1536) f32
    h = jnp.maximum(mm_bf16(x, w0_ref) + b0_ref[...], 0.0)   # (TB, 1024) lin+BN+ReLU
    h = jnp.maximum(mm_bf16(h, w1_ref) + b1_ref[...], 0.0)   # (TB, 512)  lin+BN+ReLU
    g = jnp.maximum(mm_bf16(h, wh1_ref) + bh1_ref[...], 0.0)  # (TB, 640) 5 heads, layer 1
    # Folded head layer-2 (+ layer-3) affine map, small -> f32 MXU operands.
    o = jnp.dot(g, wh2_ref[...], preferred_element_type=jnp.float32) + bh2_ref[...]
    o_ref[...] = o.astype(o_ref.dtype)                    # (TB, 128) lane-dense store


def _fold_linear_bn(w, b, bn):
    """Fold eval-mode BatchNorm1d into the preceding Linear.  w: (out, in)."""
    gamma, beta, mean, var = bn
    s = gamma / jnp.sqrt(var + BN_EPS)
    w_f = (w * s[:, None]).T            # (in, out)
    b_f = (b - mean) * s + beta
    return w_f, b_f


def prepare_posehand_params(p):
    """Build the fused / padded weight set consumed by the kernel.

    Call once and reuse the result across posehand_pallas calls (weight folding
    and bf16 casting are hoisted out of the per-call path).
    """
    w0, b0 = _fold_linear_bn(p["base0_w"], p["base0_b"], p["bn0"])
    w1, b1 = _fold_linear_bn(p["base1_w"], p["base1_b"], p["bn1"])

    heads = [p["pose"], p["shape"], p["scale"], p["trans"], p["rot"]]
    col_ranges = (_THETA, _BETA, _SCALE, _TRANS, _ROT)

    # Fused head layer 1: (512, 640) = concat of five (512, 128) blocks.
    wh1 = jnp.concatenate([h[0].T for h in heads], axis=1)
    bh1 = jnp.concatenate([h[1] for h in heads], axis=0)

    # Head layer-2 (and, for scale/trans/rot, layer-3) folded into one f32
    # affine map: (640, 128) block-structured weight + (128,) bias.
    wh2 = jnp.zeros((D_HEAD1, D_OUT), jnp.float32)
    bh2 = jnp.zeros((D_OUT,), jnp.float32)
    for i, (h, (c0, c1)) in enumerate(zip(heads, col_ranges)):
        if len(h) == 4:          # pose / shape: Linear(128 -> out)
            w_blk = h[2].T
            b_blk = h[3]
        else:                    # scale / trans / rot: Linear(128->32) @ Linear(32->out)
            w_blk = h[2].T @ h[4].T
            b_blk = h[3] @ h[4].T + h[5]
        wh2 = wh2.at[i * 128:(i + 1) * 128, c0:c1].set(w_blk)
        bh2 = bh2.at[c0:c1].set(b_blk)

    def w_(a):   # big matmul operands shipped as bf16
        return a.astype(jnp.bfloat16)

    def b_(a):   # biases stay f32, shaped (1, C) for lane broadcast
        return a.reshape(1, -1).astype(jnp.float32)

    return (w_(w0), b_(b0), w_(w1), b_(b1), w_(wh1), b_(bh1),
            wh2.astype(jnp.float32), b_(bh2))


def _round_up(a, b):
    return ((a + b - 1) // b) * b


def _pick_tb(n):
    """Batch tile: as large as possible (<= TB_MAX) while keeping >= 2 grid
    steps when the batch allows, so the 'parallel' axis can shard across the
    two v7x TensorCores."""
    n8 = _round_up(max(n, 1), 8)
    if n8 < 16:
        return n8
    return min(TB_MAX, _round_up((n8 + 1) // 2, 8))


def posehand_pallas(features, params=None, *, fused=None, use_mean_shape=False):
    n, d_in = features.shape
    assert d_in == D_IN, d_in
    if fused is None:
        fused = prepare_posehand_params(params)

    tb = _pick_tb(n)
    n_pad = _round_up(n, tb)
    x = features.astype(jnp.float32)
    if n_pad != n:
        x = jnp.pad(x, ((0, n_pad - n), (0, 0)))

    def const_spec(shape):
        return pl.BlockSpec(shape, lambda i, _s=shape: (0,) * len(_s))

    in_specs = [pl.BlockSpec((tb, D_IN), lambda i: (i, 0))]
    in_specs += [const_spec(f.shape) for f in fused]

    out = pl.pallas_call(
        posehand_kernel,
        out_shape=jax.ShapeDtypeStruct((n_pad, D_OUT), jnp.float32),
        grid_spec=pltpu.PrefetchScalarGridSpec(
            num_scalar_prefetch=0,
            grid=(n_pad // tb,),
            in_specs=in_specs,
            out_specs=pl.BlockSpec((tb, D_OUT), lambda i: (i, 0)),
        ),
        compiler_params=pltpu.CompilerParams(
            dimension_semantics=("parallel",),
            vmem_limit_bytes=28 * 1024 * 1024),
    )(x, *fused)

    out = out[:n]
    theta = out[:, _THETA[0]:_THETA[1]]
    beta = out[:, _BETA[0]:_BETA[1]]
    scale = out[:, _SCALE[0]:_SCALE[1]]
    trans = out[:, _TRANS[0]:_TRANS[1]]
    rot = out[:, _ROT[0]:_ROT[1]]
    if use_mean_shape:
        beta = jnp.zeros_like(beta)
    return theta, beta, scale, trans, rot


def posehand_reference(features, p, use_mean_shape=False):
    """Pure-JAX f32 reference matching the PyTorch forward (eval-mode BN)."""
    hp = lax.Precision.HIGHEST

    def linear(y, w, b):
        return jnp.dot(y, w.T, precision=hp) + b

    def bn(y, bp):
        gamma, beta, mean, var = bp
        return (y - mean) / jnp.sqrt(var + BN_EPS) * gamma + beta

    h = jax.nn.relu(bn(linear(features, p["base0_w"], p["base0_b"]), p["bn0"]))
    h = jax.nn.relu(bn(linear(h, p["base1_w"], p["base1_b"]), p["bn1"]))

    def head2(pr):   # Linear, ReLU, Linear
        t = jax.nn.relu(linear(h, pr[0], pr[1]))
        return linear(t, pr[2], pr[3])

    def head3(pr):   # Linear, ReLU, Linear, Linear
        t = jax.nn.relu(linear(h, pr[0], pr[1]))
        t = linear(t, pr[2], pr[3])
        return linear(t, pr[4], pr[5])

    theta = head2(p["pose"])
    beta = head2(p["shape"])
    scale = head3(p["scale"])
    trans = head3(p["trans"])
    rot = head3(p["rot"])
    if use_mean_shape:
        beta = jnp.zeros_like(beta)
    return theta, beta, scale, trans, rot


def _linear_params(key, fan_out, fan_in, std=None, bias_val=None):
    kw, kb = jax.random.split(key)
    if std is None:   # PyTorch default Linear init
        bound = 1.0 / math.sqrt(fan_in)
        w = jax.random.uniform(kw, (fan_out, fan_in), jnp.float32, -bound, bound)
        b = jax.random.uniform(kb, (fan_out,), jnp.float32, -bound, bound)
    else:             # normal_init(module, std=..., bias=...)
        w = std * jax.random.normal(kw, (fan_out, fan_in), jnp.float32)
        b = jnp.full((fan_out,), 0.0 if bias_val is None else bias_val, jnp.float32)
    return w, b


def _bn_params(key, c):
    k1, k2, k3, k4 = jax.random.split(key, 4)
    gamma = jax.random.uniform(k1, (c,), jnp.float32, 0.5, 1.5)
    beta = 0.1 * jax.random.normal(k2, (c,), jnp.float32)
    mean = 0.1 * jax.random.normal(k3, (c,), jnp.float32)
    var = jax.random.uniform(k4, (c,), jnp.float32, 0.5, 1.5)
    return (gamma, beta, mean, var)


def _check(outs, refs, n, trans_dim, tag):
    names = ("theta", "beta", "scale", "trans", "rot")
    shapes = ((n, 30), (n, 10), (n, 1), (n, trans_dim), (n, 3))
    max_err, ref_mag = 0.0, 1.0
    for name, want, o, r in zip(names, shapes, outs, refs):
        assert o.shape == want, (tag, name, o.shape, want)
        max_err = max(max_err, float(jnp.max(jnp.abs(o - r))))
        ref_mag = max(ref_mag, float(jnp.max(jnp.abs(r))))
    # tolerance sized for bf16 MXU operand rounding vs the f32 (HIGHEST) reference
    assert max_err <= 5e-2 * ref_mag, f"{tag}: max abs error too large: {max_err}"


if __name__ == "__main__":
    INP, TRANS_DIM = 1536, 2
    N = 2

    key = jax.random.PRNGKey(0)
    ks = jax.random.split(key, 18)

    base0_w, base0_b = _linear_params(ks[0], 1024, INP)
    base1_w, base1_b = _linear_params(ks[1], 512, 1024)

    pose = (*_linear_params(ks[2], 128, 512), *_linear_params(ks[3], 30, 128))
    shape = (*_linear_params(ks[4], 128, 512), *_linear_params(ks[5], 10, 128))
    # init_weights(): trans/scale heads use normal(std=1e-3); scale_reg[3] bias=1,
    # trans_reg[3] bias=0.  pose/shape/rot keep the default Linear init.
    trans = (*_linear_params(ks[6], 128, 512, std=1e-3),
             *_linear_params(ks[7], 32, 128, std=1e-3),
             *_linear_params(ks[8], TRANS_DIM, 32, std=1e-3, bias_val=0.0))
    rot = (*_linear_params(ks[9], 128, 512),
           *_linear_params(ks[10], 32, 128),
           *_linear_params(ks[11], 3, 32))
    scale = (*_linear_params(ks[12], 128, 512, std=1e-3),
             *_linear_params(ks[13], 32, 128, std=1e-3),
             *_linear_params(ks[14], 1, 32, std=1e-3, bias_val=1.0))

    params = {
        "base0_w": base0_w, "base0_b": base0_b, "bn0": _bn_params(ks[15], 1024),
        "base1_w": base1_w, "base1_b": base1_b, "bn1": _bn_params(ks[16], 512),
        "pose": pose, "shape": shape, "scale": scale, "trans": trans, "rot": rot,
    }

    fused = prepare_posehand_params(params)   # hoisted out of the call path

    # Small demo batch (single 8-row grid step).
    x = jax.random.normal(ks[17], (N, INP), jnp.float32)
    outs = jax.block_until_ready(posehand_pallas(x, fused=fused))
    refs = posehand_reference(x, params)
    _check(outs, refs, N, TRANS_DIM, "n=2")

    # Slightly larger batch exercising multi-step grid + batch padding.
    N2 = 20
    x2 = jax.random.normal(jax.random.PRNGKey(1), (N2, INP), jnp.float32)
    outs2 = jax.block_until_ready(posehand_pallas(x2, fused=fused))
    refs2 = posehand_reference(x2, params)
    _check(outs2, refs2, N2, TRANS_DIM, "n=20")

    print("KERNEL_OK")
</pallas_src>

<mosaic_0001>
module attributes {stable_mosaic.version = 11 : i64} {
  func.func @posehand_kernel(%arg0: i32, %arg1: memref<8x1536xf32, #tpu.memory_space<vmem>>, %arg2: memref<1536x1024xbf16, #tpu.memory_space<vmem>>, %arg3: memref<1x1024xf32, #tpu.memory_space<vmem>>, %arg4: memref<1024x512xbf16, #tpu.memory_space<vmem>>, %arg5: memref<1x512xf32, #tpu.memory_space<vmem>>, %arg6: memref<512x640xbf16, #tpu.memory_space<vmem>>, %arg7: memref<1x640xf32, #tpu.memory_space<vmem>>, %arg8: memref<640x128xf32, #tpu.memory_space<vmem>>, %arg9: memref<1x128xf32, #tpu.memory_space<vmem>>, %arg10: memref<8x128xf32, #tpu.memory_space<vmem>>) attributes {dimension_semantics = [#tpu.dimension_semantics<parallel>], iteration_bounds = array<i64: 1>, scalar_prefetch = 0 : i64, scratch_operands = 0 : i64, tpu.core_type = #tpu.core_type<tc>, window_params = [{transform_indices = @transform_0, window_bounds = array<i64: 8, 1536>}, {pipeline_mode = #tpu.pipeline_mode<synchronous>, transform_indices = @transform_1, window_bounds = array<i64: 1536, 1024>}, {pipeline_mode = #tpu.pipeline_mode<synchronous>, transform_indices = @transform_2, window_bounds = array<i64: 1, 1024>}, {pipeline_mode = #tpu.pipeline_mode<synchronous>, transform_indices = @transform_3, window_bounds = array<i64: 1024, 512>}, {pipeline_mode = #tpu.pipeline_mode<synchronous>, transform_indices = @transform_4, window_bounds = array<i64: 1, 512>}, {pipeline_mode = #tpu.pipeline_mode<synchronous>, transform_indices = @transform_5, window_bounds = array<i64: 512, 640>}, {pipeline_mode = #tpu.pipeline_mode<synchronous>, transform_indices = @transform_6, window_bounds = array<i64: 1, 640>}, {pipeline_mode = #tpu.pipeline_mode<synchronous>, transform_indices = @transform_7, window_bounds = array<i64: 640, 128>}, {pipeline_mode = #tpu.pipeline_mode<synchronous>, transform_indices = @transform_8, window_bounds = array<i64: 1, 128>}, {transform_indices = @transform_9, window_bounds = array<i64: 8, 128>}]} {
    %c0 = arith.constant 0 : index
    %c0_0 = arith.constant 0 : index
    %0 = vector.load %arg1[%c0, %c0_0] : memref<8x1536xf32, #tpu.memory_space<vmem>>, vector<8x1536xf32>
    %1 = arith.truncf %0 : vector<8x1536xf32> to vector<8x1536xbf16>
    %c0_1 = arith.constant 0 : index
    %c0_2 = arith.constant 0 : index
    %2 = vector.load %arg2[%c0_1, %c0_2] : memref<1536x1024xbf16, #tpu.memory_space<vmem>>, vector<1536x1024xbf16>
    %cst = arith.constant dense<0.000000e+00> : vector<8x1024xf32>
    %3 = tpu.matmul %1, %2, %cst {dimension_numbers = #tpu.dot_dimension_numbers<[1], [0], [0], [1], [0, 0, 1, 1], [], []>} : vector<8x1536xbf16>, vector<1536x1024xbf16>, vector<8x1024xf32> -> vector<8x1024xf32>
    %c0_3 = arith.constant 0 : index
    %c0_4 = arith.constant 0 : index
    %4 = vector.load %arg3[%c0_3, %c0_4] : memref<1x1024xf32, #tpu.memory_space<vmem>>, vector<1x1024xf32>
    %5 = vector.broadcast %4 : vector<1x1024xf32> to vector<8x1024xf32>
    %6 = arith.addf %3, %5 : vector<8x1024xf32>
    %cst_5 = arith.constant 0.000000e+00 : f32
    %7 = vector.broadcast %cst_5 : f32 to vector<8x1024xf32>
    %8 = arith.maximumf %6, %7 : vector<8x1024xf32>
    %9 = arith.truncf %8 : vector<8x1024xf32> to vector<8x1024xbf16>
    %c0_6 = arith.constant 0 : index
    %c0_7 = arith.constant 0 : index
    %10 = vector.load %arg4[%c0_6, %c0_7] : memref<1024x512xbf16, #tpu.memory_space<vmem>>, vector<1024x512xbf16>
    %cst_8 = arith.constant dense<0.000000e+00> : vector<8x512xf32>
    %11 = tpu.matmul %9, %10, %cst_8 {dimension_numbers = #tpu.dot_dimension_numbers<[1], [0], [0], [1], [0, 0, 1, 1], [], []>} : vector<8x1024xbf16>, vector<1024x512xbf16>, vector<8x512xf32> -> vector<8x512xf32>
    %c0_9 = arith.constant 0 : index
    %c0_10 = arith.constant 0 : index
    %12 = vector.load %arg5[%c0_9, %c0_10] : memref<1x512xf32, #tpu.memory_space<vmem>>, vector<1x512xf32>
    %13 = vector.broadcast %12 : vector<1x512xf32> to vector<8x512xf32>
    %14 = arith.addf %11, %13 : vector<8x512xf32>
    %cst_11 = arith.constant 0.000000e+00 : f32
    %15 = vector.broadcast %cst_11 : f32 to vector<8x512xf32>
    %16 = arith.maximumf %14, %15 : vector<8x512xf32>
    %17 = arith.truncf %16 : vector<8x512xf32> to vector<8x512xbf16>
    %c0_12 = arith.constant 0 : index
    %c0_13 = arith.constant 0 : index
    %18 = vector.load %arg6[%c0_12, %c0_13] : memref<512x640xbf16, #tpu.memory_space<vmem>>, vector<512x640xbf16>
    %cst_14 = arith.constant dense<0.000000e+00> : vector<8x640xf32>
    %19 = tpu.matmul %17, %18, %cst_14 {dimension_numbers = #tpu.dot_dimension_numbers<[1], [0], [0], [1], [0, 0, 1, 1], [], []>} : vector<8x512xbf16>, vector<512x640xbf16>, vector<8x640xf32> -> vector<8x640xf32>
    %c0_15 = arith.constant 0 : index
    %c0_16 = arith.constant 0 : index
    %20 = vector.load %arg7[%c0_15, %c0_16] : memref<1x640xf32, #tpu.memory_space<vmem>>, vector<1x640xf32>
    %21 = vector.broadcast %20 : vector<1x640xf32> to vector<8x640xf32>
    %22 = arith.addf %19, %21 : vector<8x640xf32>
    %cst_17 = arith.constant 0.000000e+00 : f32
    %23 = vector.broadcast %cst_17 : f32 to vector<8x640xf32>
    %24 = arith.maximumf %22, %23 : vector<8x640xf32>
    %c0_18 = arith.constant 0 : index
    %c0_19 = arith.constant 0 : index
    %25 = vector.load %arg8[%c0_18, %c0_19] : memref<640x128xf32, #tpu.memory_space<vmem>>, vector<640x128xf32>
    %cst_20 = arith.constant dense<0.000000e+00> : vector<8x128xf32>
    %26 = tpu.matmul %24, %25, %cst_20 {dimension_numbers = #tpu.dot_dimension_numbers<[1], [0], [0], [1], [0, 0, 1, 1], [], []>} : vector<8x640xf32>, vector<640x128xf32>, vector<8x128xf32> -> vector<8x128xf32>
    %c0_21 = arith.constant 0 : index
    %c0_22 = arith.constant 0 : index
    %27 = vector.load %arg9[%c0_21, %c0_22] : memref<1x128xf32, #tpu.memory_space<vmem>>, vector<1x128xf32>
    %28 = vector.broadcast %27 : vector<1x128xf32> to vector<8x128xf32>
    %29 = arith.addf %26, %28 : vector<8x128xf32>
    %c0_23 = arith.constant 0 : index
    %c0_24 = arith.constant 0 : index
    %30 = vector.load %arg10[%c0_23, %c0_24] : memref<8x128xf32, #tpu.memory_space<vmem>>, vector<8x128xf32>
    tpu.vector_store %arg10[%c0_23, %c0_24], %29 {strides = array<i32>} : memref<8x128xf32, #tpu.memory_space<vmem>>, vector<8x128xf32>,
    return
  }
  func.func @transform_0(%arg0: i32) -> (i32, i32) {
    %c0_i32 = arith.constant 0 : i32
    %c0_i32_0 = arith.constant 0 : i32
    return %arg0, %c0_i32 : i32, i32
  }
  func.func @transform_1(%arg0: i32) -> (i32, i32) {
    %c0_i32 = arith.constant 0 : i32
    %c0_i32_0 = arith.constant 0 : i32
    %c0_i32_1 = arith.constant 0 : i32
    return %c0_i32, %c0_i32_0 : i32, i32
  }
  func.func @transform_2(%arg0: i32) -> (i32, i32) {
    %c0_i32 = arith.constant 0 : i32
    %c0_i32_0 = arith.constant 0 : i32
    %c0_i32_1 = arith.constant 0 : i32
    return %c0_i32, %c0_i32_0 : i32, i32
  }
  func.func @transform_3(%arg0: i32) -> (i32, i32) {
    %c0_i32 = arith.constant 0 : i32
    %c0_i32_0 = arith.constant 0 : i32
    %c0_i32_1 = arith.constant 0 : i32
    return %c0_i32, %c0_i32_0 : i32, i32
  }
  func.func @transform_4(%arg0: i32) -> (i32, i32) {
    %c0_i32 = arith.constant 0 : i32
    %c0_i32_0 = arith.constant 0 : i32
    %c0_i32_1 = arith.constant 0 : i32
    return %c0_i32, %c0_i32_0 : i32, i32
  }
  func.func @transform_5(%arg0: i32) -> (i32, i32) {
    %c0_i32 = arith.constant 0 : i32
    %c0_i32_0 = arith.constant 0 : i32
    %c0_i32_1 = arith.constant 0 : i32
    return %c0_i32, %c0_i32_0 : i32, i32
  }
  func.func @transform_6(%arg0: i32) -> (i32, i32) {
    %c0_i32 = arith.constant 0 : i32
    %c0_i32_0 = arith.constant 0 : i32
    %c0_i32_1 = arith.constant 0 : i32
    return %c0_i32, %c0_i32_0 : i32, i32
  }
  func.func @transform_7(%arg0: i32) -> (i32, i32) {
    %c0_i32 = arith.constant 0 : i32
    %c0_i32_0 = arith.constant 0 : i32
    %c0_i32_1 = arith.constant 0 : i32
    return %c0_i32, %c0_i32_0 : i32, i32
  }
  func.func @transform_8(%arg0: i32) -> (i32, i32) {
    %c0_i32 = arith.constant 0 : i32
    %c0_i32_0 = arith.constant 0 : i32
    %c0_i32_1 = arith.constant 0 : i32
    return %c0_i32, %c0_i32_0 : i32, i32
  }
  func.func @transform_9(%arg0: i32) -> (i32, i32) {
    %c0_i32 = arith.constant 0 : i32
    %c0_i32_0 = arith.constant 0 : i32
    return %arg0, %c0_i32 : i32, i32
  }
}

</mosaic_0001>

<llo_original>
// kernel: tpu_custom_call.1
$region0: #{tpu_custom_call.1}
  #allocation0 [shape = 'u32[]', space=smem, size = 0x4, offset = 0x4, fixed_abs, tag = 'smem constant byte address 0x4 - core index']
  #allocation1 [shape = 'u32[144,128]{1,0:T(1,128)}', space=vmem, size = 0x12000, scoped, tag = 'internal scratch']
  %s0 = inlined_call_operand.hbm [shape: f32[8,1536], index: 0, kind: input, shape index: {}]
  %s1 = inlined_call_operand.hbm [shape: bf16[1536,1024], index: 1, kind: input, shape index: {}]
  %s2 = inlined_call_operand.hbm [shape: f32[1,1024], index: 2, kind: input, shape index: {}]
  %s3 = inlined_call_operand.hbm [shape: bf16[1024,512], index: 3, kind: input, shape index: {}]
  %s4 = inlined_call_operand.hbm [shape: f32[1,512], index: 4, kind: input, shape index: {}]
  %s5 = inlined_call_operand.hbm [shape: bf16[512,640], index: 5, kind: input, shape index: {}]
  %s6 = inlined_call_operand.hbm [shape: f32[1,640], index: 6, kind: input, shape index: {}]
  %s7 = inlined_call_operand.hbm [shape: f32[640,128], index: 7, kind: input, shape index: {}]
  %s8 = inlined_call_operand.hbm [shape: f32[1,128], index: 8, kind: input, shape index: {}]
  %s9 = inlined_call_operand.hbm [shape: f32[8,128], index: 9, kind: output, shape index: {}]
  %s10 = sld [smem:[#allocation0]]
  $region82: #{tpu_custom_call.1} parent=0
    _
  %s12 = ssub.s32 1, %s10
  %s13 = scalar_select 0, %s12, %s10
  $region1: #{tpu_custom_call.1} parent=0
    #allocation2 [shape = 'u8[49152]{0}', space=vmem, size = 0xc000, scoped, tag = 'input window, operand 0, single buffered']
    #allocation3 [shape = 's32[1]{0}', space=sflag, size = 0x4, scoped, tag = 'scoped memory for tpu_custom_call.1']
    #allocation4 [shape = 's32[1]{0}', space=sflag, size = 0x4, scoped, tag = 'scoped memory for tpu_custom_call.1']
    #allocation5 [shape = 'u8[3145728]{0}', space=vmem, size = 0x300000, scoped, tag = 'input window, operand 1, single buffered']
    #allocation6 [shape = 's32[1]{0}', space=sflag, size = 0x4, scoped, tag = 'scoped memory for tpu_custom_call.1']
    #allocation7 [shape = 'u8[4096]{0}', space=vmem, size = 0x1000, scoped, tag = 'input window, operand 2, single buffered']
    #allocation8 [shape = 'u8[1048576]{0}', space=vmem, size = 0x100000, scoped, tag = 'input window, operand 3, single buffered']
    #allocation9 [shape = 's32[1]{0}', space=sflag, size = 0x4, scoped, tag = 'scoped memory for tpu_custom_call.1']
    #allocation10 [shape = 'u8[2048]{0}', space=vmem, size = 0x800, scoped, tag = 'input window, operand 4, single buffered']
    #allocation11 [shape = 'u8[655360]{0}', space=vmem, size = 0xa0000, scoped, tag = 'input window, operand 5, single buffered']
    #allocation12 [shape = 's32[1]{0}', space=sflag, size = 0x4, scoped, tag = 'scoped memory for tpu_custom_call.1']
    #allocation13 [shape = 'u8[2560]{0}', space=vmem, size = 0xc00, scoped, tag = 'input window, operand 6, single buffered']
    #allocation14 [shape = 'u8[327680]{0}', space=vmem, size = 0x50000, scoped, tag = 'input window, operand 7, single buffered']
    #allocation15 [shape = 's32[1]{0}', space=sflag, size = 0x4, scoped, tag = 'scoped memory for tpu_custom_call.1']
    #allocation16 [shape = 'u8[512]{0}', space=vmem, size = 0x400, scoped, tag = 'input window, operand 8, single buffered']
    #allocation17 [shape = 'u8[4096]{0}', space=vmem, size = 0x1000, scoped, tag = 'output window, operand 0, single buffered']
    %14 = vsyncpa [#allocation3], 0
    %15 = vsyncpa [#allocation6], 0
    %16 = vsyncpa [#allocation9], 0
    %17 = vsyncpa [#allocation12], 0
    %18 = vsyncpa [#allocation15], 0
    %19 = vsyncpa [#allocation4], 0
    // Predicated region
    $region2: #{tpu_custom_call.1} parent=1 // pred_check
      _
    $region3: #{tpu_custom_call.1} parent=1 // pred_check_branch
      %21 = sbr.rel (0) target = $region5
    $region4: #{tpu_custom_call.1} parent=1 // pred_region
      %s23 = ssub.s32 1536, 1536
      %24 = vsyncadd [#allocation3], %s23
      %s26 = sshll.u32 [#allocation2], 4
      %s27 = int_to_ptr.vmem [resolvable:$true] %s26
      %29 = dma.hbm_to_vmem [thread:$0]  %s0, 1536, %s27, [#allocation3]
    $region5: #{tpu_custom_call.1} parent=1 // pred_fallthru
      _
    // Predicated region
    $region6: #{tpu_custom_call.1} parent=1 // pred_check
      _
    $region7: #{tpu_custom_call.1} parent=1 // pred_check_branch
      %31 = sbr.rel (0) target = $region9
    $region8: #{tpu_custom_call.1} parent=1 // pred_region
      %s33 = ssub.s32 98304, 98304
      %34 = vsyncadd [#allocation6], %s33
      %s35 = sshll.u32 [#allocation5], 4
      %s36 = int_to_ptr.vmem [resolvable:$true] %s35
      %41 = dma.hbm_to_vmem [thread:$0]  %s1, 98304, %s36, [#allocation6], 512, 512, 32
    $region9: #{tpu_custom_call.1} parent=1 // pred_fallthru
      _
    // Predicated region
    $region10: #{tpu_custom_call.1} parent=1 // pred_check
      _
    $region11: #{tpu_custom_call.1} parent=1 // pred_check_branch
      %43 = sbr.rel (0) target = $region13
    $region12: #{tpu_custom_call.1} parent=1 // pred_region
      %s45 = ssub.s32 128, 128
      %46 = vsyncadd [#allocation6], %s45
      %s48 = sshll.u32 [#allocation7], 4
      %s49 = int_to_ptr.vmem [resolvable:$true] %s48
      %51 = dma.hbm_to_vmem [thread:$0]  %s2, 128, %s49, [#allocation6]
    $region13: #{tpu_custom_call.1} parent=1 // pred_fallthru
      _
    // Predicated region
    $region14: #{tpu_custom_call.1} parent=1 // pred_check
      _
    $region15: #{tpu_custom_call.1} parent=1 // pred_check_branch
      %53 = sbr.rel (0) target = $region17
    $region16: #{tpu_custom_call.1} parent=1 // pred_region
      %s55 = ssub.s32 32768, 32768
      %56 = vsyncadd [#allocation9], %s55
      %s57 = sshll.u32 [#allocation8], 4
      %s58 = int_to_ptr.vmem [resolvable:$true] %s57
      %63 = dma.hbm_to_vmem [thread:$0]  %s3, 32768, %s58, [#allocation9], 256, 256, 16
    $region17: #{tpu_custom_call.1} parent=1 // pred_fallthru
      _
    // Predicated region
    $region18: #{tpu_custom_call.1} parent=1 // pred_check
      _
    $region19: #{tpu_custom_call.1} parent=1 // pred_check_branch
      %65 = sbr.rel (0) target = $region21
    $region20: #{tpu_custom_call.1} parent=1 // pred_region
      %s67 = ssub.s32 64, 64
      %68 = vsyncadd [#allocation9], %s67
      %s70 = sshll.u32 [#allocation10], 4
      %s71 = int_to_ptr.vmem [resolvable:$true] %s70
      %73 = dma.hbm_to_vmem [thread:$0]  %s4, 64, %s71, [#allocation9]
    $region21: #{tpu_custom_call.1} parent=1 // pred_fallthru
      _
    // Predicated region
    $region22: #{tpu_custom_call.1} parent=1 // pred_check
      _
    $region23: #{tpu_custom_call.1} parent=1 // pred_check_branch
      %75 = sbr.rel (0) target = $region25
    $region24: #{tpu_custom_call.1} parent=1 // pred_region
      %s77 = ssub.s32 20480, 20480
      %78 = vsyncadd [#allocation12], %s77
      %s79 = sshll.u32 [#allocation11], 4
      %s80 = int_to_ptr.vmem [resolvable:$true] %s79
      %85 = dma.hbm_to_vmem [thread:$0]  %s5, 20480, %s80, [#allocation12], 320, 320, 20
    $region25: #{tpu_custom_call.1} parent=1 // pred_fallthru
      _
    // Predicated region
    $region26: #{tpu_custom_call.1} parent=1 // pred_check
      _
    $region27: #{tpu_custom_call.1} parent=1 // pred_check_branch
      %87 = sbr.rel (0) target = $region29
    $region28: #{tpu_custom_call.1} parent=1 // pred_region
      %s89 = ssub.s32 80, 80
      %90 = vsyncadd [#allocation12], %s89
      %s92 = sshll.u32 [#allocation13], 4
      %s93 = int_to_ptr.vmem [resolvable:$true] %s92
      %95 = dma.hbm_to_vmem [thread:$0]  %s6, 80, %s93, [#allocation12]
    $region29: #{tpu_custom_call.1} parent=1 // pred_fallthru
      _
    // Predicated region
    $region30: #{tpu_custom_call.1} parent=1 // pred_check
      _
    $region31: #{tpu_custom_call.1} parent=1 // pred_check_branch
      %97 = sbr.rel (0) target = $region33
    $region32: #{tpu_custom_call.1} parent=1 // pred_region
      %s99 = ssub.s32 10240, 10240
      %100 = vsyncadd [#allocation15], %s99
      %s101 = sshll.u32 [#allocation14], 4
      %s102 = int_to_ptr.vmem [resolvable:$true] %s101
      %107 = dma.hbm_to_vmem [thread:$0]  %s7, 10240, %s102, [#allocation15], 128, 128, 8
    $region33: #{tpu_custom_call.1} parent=1 // pred_fallthru
      _
    // Predicated region
    $region34: #{tpu_custom_call.1} parent=1 // pred_check
      _
    $region35: #{tpu_custom_call.1} parent=1 // pred_check_branch
      %109 = sbr.rel (0) target = $region37
    $region36: #{tpu_custom_call.1} parent=1 // pred_region
      %s111 = ssub.s32 16, 16
      %112 = vsyncadd [#allocation15], %s111
      %s114 = sshll.u32 [#allocation16], 4
      %s115 = int_to_ptr.vmem [resolvable:$true] %s114
      %117 = dma.hbm_to_vmem [thread:$0]  %s8, 16, %s115, [#allocation15]
    $region37: #{tpu_custom_call.1} parent=1 // pred_fallthru
      _
    // Predicated region
    $region38: #{tpu_custom_call.1} parent=1 // pred_check
      _
    $region39: #{tpu_custom_call.1} parent=1 // pred_check_branch
      %119 = sbr.rel (0) target = $region41
    $region40: #{tpu_custom_call.1} parent=1 // pred_region
      %120 = dma.done [#allocation3], 1536
    $region41: #{tpu_custom_call.1} parent=1 // pred_fallthru
      _
    // Predicated region
    $region42: #{tpu_custom_call.1} parent=1 // pred_check
      _
    $region43: #{tpu_custom_call.1} parent=1 // pred_check_branch
      %122 = sbr.rel (0) target = $region45
    $region44: #{tpu_custom_call.1} parent=1 // pred_region
      %123 = dma.done [#allocation6], 98304
    $region45: #{tpu_custom_call.1} parent=1 // pred_fallthru
      _
    // Predicated region
    $region46: #{tpu_custom_call.1} parent=1 // pred_check
      _
    $region47: #{tpu_custom_call.1} parent=1 // pred_check_branch
      %125 = sbr.rel (0) target = $region49
    $region48: #{tpu_custom_call.1} parent=1 // pred_region
      %126 = dma.done [#allocation6], 128
    $region49: #{tpu_custom_call.1} parent=1 // pred_fallthru
      _
    // Predicated region
    $region50: #{tpu_custom_call.1} parent=1 // pred_check
      _
    $region51: #{tpu_custom_call.1} parent=1 // pred_check_branch
      %128 = sbr.rel (0) target = $region53
    $region52: #{tpu_custom_call.1} parent=1 // pred_region
      %129 = dma.done [#allocation9], 32768
    $region53: #{tpu_custom_call.1} parent=1 // pred_fallthru
      _
    // Predicated region
    $region54: #{tpu_custom_call.1} parent=1 // pred_check
      _
    $region55: #{tpu_custom_call.1} parent=1 // pred_check_branch
      %131 = sbr.rel (0) target = $region57
    $region56: #{tpu_custom_call.1} parent=1 // pred_region
      %132 = dma.done [#allocation9], 64
    $region57: #{tpu_custom_call.1} parent=1 // pred_fallthru
      _
    // Predicated region
    $region58: #{tpu_custom_call.1} parent=1 // pred_check
      _
    $region59: #{tpu_custom_call.1} parent=1 // pred_check_branch
      %134 = sbr.rel (0) target = $region61
    $region60: #{tpu_custom_call.1} parent=1 // pred_region
      %135 = dma.done [#allocation12], 20480
    $region61: #{tpu_custom_call.1} parent=1 // pred_fallthru
      _
    // Predicated region
    $region62: #{tpu_custom_call.1} parent=1 // pred_check
      _
    $region63: #{tpu_custom_call.1} parent=1 // pred_check_branch
      %137 = sbr.rel (0) target = $region65
    $region64: #{tpu_custom_call.1} parent=1 // pred_region
      %138 = dma.done [#allocation12], 80
    $region65: #{tpu_custom_call.1} parent=1 // pred_fallthru
      _
    // Predicated region
    $region66: #{tpu_custom_call.1} parent=1 // pred_check
      _
    $region67: #{tpu_custom_call.1} parent=1 // pred_check_branch
      %140 = sbr.rel (0) target = $region69
    $region68: #{tpu_custom_call.1} parent=1 // pred_region
      %141 = dma.done [#allocation15], 10240
    $region69: #{tpu_custom_call.1} parent=1 // pred_fallthru
      _
    // Predicated region
    $region70: #{tpu_custom_call.1} parent=1 // pred_check
      _
    $region71: #{tpu_custom_call.1} parent=1 // pred_check_branch
      %143 = sbr.rel (0) target = $region73
    $region72: #{tpu_custom_call.1} parent=1 // pred_region
      %144 = dma.done [#allocation15], 16
    $region73: #{tpu_custom_call.1} parent=1 // pred_fallthru
      _
    %v146 = vld [vmem:[#allocation2] sm:$0xff]
    %v147 = vld [vmem:[#allocation2 + $0x8] sm:$0xff]
    %v148 = vld [vmem:[#allocation2 + $0x10] sm:$0xff]
    %v149 = vld [vmem:[#allocation2 + $0x18] sm:$0xff]
    %v150 = vld [vmem:[#allocation2 + $0x20] sm:$0xff]
    %v151 = vld [vmem:[#allocation2 + $0x28] sm:$0xff]
    %v152 = vld [vmem:[#allocation2 + $0x30] sm:$0xff]
    %v153 = vld [vmem:[#allocation2 + $0x38] sm:$0xff]
    %v154 = vld [vmem:[#allocation2 + $0x40] sm:$0xff]
    %v155 = vld [vmem:[#allocation2 + $0x48] sm:$0xff]
    %v156 = vld [vmem:[#allocation2 + $0x50] sm:$0xff]
    %v157 = vld [vmem:[#allocation2 + $0x58] sm:$0xff]
    %v158 = vpack.c.bf16 %v146, %v146
    %v159 = vpack.c.bf16 %v147, %v147
    %v160 = vpack.c.bf16 %v148, %v148
    %v161 = vpack.c.bf16 %v149, %v149
    %v162 = vpack.c.bf16 %v150, %v150
    %v163 = vpack.c.bf16 %v151, %v151
    %v164 = vpack.c.bf16 %v152, %v152
    %v165 = vpack.c.bf16 %v153, %v153
    %v166 = vpack.c.bf16 %v154, %v154
    %v167 = vpack.c.bf16 %v155, %v155
    %v168 = vpack.c.bf16 %v156, %v156
    %v169 = vpack.c.bf16 %v157, %v157
    %v170 = vld [vmem:[#allocation5] sm:$0xff]
    %v171 = vld [vmem:[#allocation5 + $0x8] sm:$0xff]
    %v172 = vld [vmem:[#allocation5 + $0x10] sm:$0xff]
    %v173 = vld [vmem:[#allocation5 + $0x18] sm:$0xff]
    %v174 = vld [vmem:[#allocation5 + $0x20] sm:$0xff]
    %v175 = vld [vmem:[#allocation5 + $0x28] sm:$0xff]
    %v176 = vld [vmem:[#allocation5 + $0x30] sm:$0xff]
    %v177 = vld [vmem:[#allocation5 + $0x38] sm:$0xff]
    %v178 = vld [vmem:[#allocation5 + $0x40] sm:$0xff]
    %v179 = vld [vmem:[#allocation5 + $0x48] sm:$0xff]
    %v180 = vld [vmem:[#allocation5 + $0x50] sm:$0xff]
    %v181 = vld [vmem:[#allocation5 + $0x58] sm:$0xff]
    %v182 = vld [vmem:[#allocation5 + $0x60] sm:$0xff]
    %v183 = vld [vmem:[#allocation5 + $0x68] sm:$0xff]
    %v184 = vld [vmem:[#allocation5 + $0x70] sm:$0xff]
    %v185 = vld [vmem:[#allocation5 + $0x78] sm:$0xff]
    %v186 = vld [vmem:[#allocation5 + $0x80] sm:$0xff]
    %v187 = vld [vmem:[#allocation5 + $0x88] sm:$0xff]
    %v188 = vld [vmem:[#allocation5 + $0x90] sm:$0xff]
    %v189 = vld [vmem:[#allocation5 + $0x98] sm:$0xff]
    %v190 = vld [vmem:[#allocation5 + $0xa0] sm:$0xff]
    %v191 = vld [vmem:[#allocation5 + $0xa8] sm:$0xff]
    %v192 = vld [vmem:[#allocation5 + $0xb0] sm:$0xff]
    %v193 = vld [vmem:[#allocation5 + $0xb8] sm:$0xff]
    %v194 = vld [vmem:[#allocation5 + $0xc0] sm:$0xff]
    %v195 = vld [vmem:[#allocation5 + $0xc8] sm:$0xff]
    %v196 = vld [vmem:[#allocation5 + $0xd0] sm:$0xff]
    %v197 = vld [vmem:[#allocation5 + $0xd8] sm:$0xff]
    %v198 = vld [vmem:[#allocation5 + $0xe0] sm:$0xff]
    %v199 = vld [vmem:[#allocation5 + $0xe8] sm:$0xff]
    %v200 = vld [vmem:[#allocation5 + $0xf0] sm:$0xff]
    %v201 = vld [vmem:[#allocation5 + $0xf8] sm:$0xff]
    %v202 = vld [vmem:[#allocation5 + $0x100] sm:$0xff]
    %v203 = vld [vmem:[#allocation5 + $0x108] sm:$0xff]
    %v204 = vld [vmem:[#allocation5 + $0x110] sm:$0xff]
    %v205 = vld [vmem:[#allocation5 + $0x118] sm:$0xff]
    %v206 = vld [vmem:[#allocation5 + $0x120] sm:$0xff]
    %v207 = vld [vmem:[#allocation5 + $0x128] sm:$0xff]
    %v208 = vld [vmem:[#allocation5 + $0x130] sm:$0xff]
    %v209 = vld [vmem:[#allocation5 + $0x138] sm:$0xff]
    %v210 = vld [vmem:[#allocation5 + $0x140] sm:$0xff]
    %v211 = vld [vmem:[#allocation5 + $0x148] sm:$0xff]
    %v212 = vld [vmem:[#allocation5 + $0x150] sm:$0xff]
    %v213 = vld [vmem:[#allocation5 + $0x158] sm:$0xff]
    %v214 = vld [vmem:[#allocation5 + $0x160] sm:$0xff]
    %v215 = vld [vmem:[#allocation5 + $0x168] sm:$0xff]
    %v216 = vld [vmem:[#allocation5 + $0x170] sm:$0xff]
    %v217 = vld [vmem:[#allocation5 + $0x178] sm:$0xff]
    %v218 = vld [vmem:[#allocation5 + $0x180] sm:$0xff]
    %v219 = vld [vmem:[#allocation5 + $0x188] sm:$0xff]
    %v220 = vld [vmem:[#allocation5 + $0x190] sm:$0xff]
    %v221 = vld [vmem:[#allocation5 + $0x198] sm:$0xff]
    %v222 = vld [vmem:[#allocation5 + $0x1a0] sm:$0xff]
    %v223 = vld [vmem:[#allocation5 + $0x1a8] sm:$0xff]
    %v224 = vld [vmem:[#allocation5 + $0x1b0] sm:$0xff]
    %v225 = vld [vmem:[#allocation5 + $0x1b8] sm:$0xff]
    %v226 = vld [vmem:[#allocation5 + $0x1c0] sm:$0xff]
    %v227 = vld [vmem:[#allocation5 + $0x1c8] sm:$0xff]
    %v228 = vld [vmem:[#allocation5 + $0x1d0] sm:$0xff]
    %v229 = vld [vmem:[#allocation5 + $0x1d8] sm:$0xff]
    %v230 = vld [vmem:[#allocation5 + $0x1e0] sm:$0xff]
    %v231 = vld [vmem:[#allocation5 + $0x1e8] sm:$0xff]
    %v232 = vld [vmem:[#allocation5 + $0x1f0] sm:$0xff]
    %v233 = vld [vmem:[#allocation5 + $0x1f8] sm:$0xff]
    %v234 = vld [vmem:[#allocation5 + $0x200] sm:$0xff]
    %v235 = vld [vmem:[#allocation5 + $0x208] sm:$0xff]
    %v236 = vld [vmem:[#allocation5 + $0x210] sm:$0xff]
    %v237 = vld [vmem:[#allocation5 + $0x218] sm:$0xff]
    %v238 = vld [vmem:[#allocation5 + $0x220] sm:$0xff]
    %v239 = vld [vmem:[#allocation5 + $0x228] sm:$0xff]
    %v240 = vld [vmem:[#allocation5 + $0x230] sm:$0xff]
    %v241 = vld [vmem:[#allocation5 + $0x238] sm:$0xff]
    %v242 = vld [vmem:[#allocation5 + $0x240] sm:$0xff]
    %v243 = vld [vmem:[#allocation5 + $0x248] sm:$0xff]
    %v244 = vld [vmem:[#allocation5 + $0x250] sm:$0xff]
    %v245 = vld [vmem:[#allocation5 + $0x258] sm:$0xff]
    %v246 = vld [vmem:[#allocation5 + $0x260] sm:$0xff]
    %v247 = vld [vmem:[#allocation5 + $0x268] sm:$0xff]
    %v248 = vld [vmem:[#allocation5 + $0x270] sm:$0xff]
    %v249 = vld [vmem:[#allocation5 + $0x278] sm:$0xff]
    %v250 = vld [vmem:[#allocation5 + $0x280] sm:$0xff]
    %v251 = vld [vmem:[#allocation5 + $0x288] sm:$0xff]
    %v252 = vld [vmem:[#allocation5 + $0x290] sm:$0xff]
    %v253 = vld [vmem:[#allocation5 + $0x298] sm:$0xff]
    %v254 = vld [vmem:[#allocation5 + $0x2a0] sm:$0xff]
    %v255 = vld [vmem:[#allocation5 + $0x2a8] sm:$0xff]
    %v256 = vld [vmem:[#allocation5 + $0x2b0] sm:$0xff]
    %v257 = vld [vmem:[#allocation5 + $0x2b8] sm:$0xff]
    %v258 = vld [vmem:[#allocation5 + $0x2c0] sm:$0xff]
    %v259 = vld [vmem:[#allocation5 + $0x2c8] sm:$0xff]
    %v260 = vld [vmem:[#allocation5 + $0x2d0] sm:$0xff]
    %v261 = vld [vmem:[#allocation5 + $0x2d8] sm:$0xff]
    %v262 = vld [vmem:[#allocation5 + $0x2e0] sm:$0xff]
    %v263 = vld [vmem:[#allocation5 + $0x2e8] sm:$0xff]
    %v264 = vld [vmem:[#allocation5 + $0x2f0] sm:$0xff]
    %v265 = vld [vmem:[#allocation5 + $0x2f8] sm:$0xff]
    %v266 = vld [vmem:[#allocation5 + $0x300] sm:$0xff]
    %v267 = vld [vmem:[#allocation5 + $0x308] sm:$0xff]
    %v268 = vld [vmem:[#allocation5 + $0x310] sm:$0xff]
    %v269 = vld [vmem:[#allocation5 + $0x318] sm:$0xff]
    %v270 = vld [vmem:[#allocation5 + $0x320] sm:$0xff]
    %v271 = vld [vmem:[#allocation5 + $0x328] sm:$0xff]
    %v272 = vld [vmem:[#allocation5 + $0x330] sm:$0xff]
    %v273 = vld [vmem:[#allocation5 + $0x338] sm:$0xff]
    %v274 = vld [vmem:[#allocation5 + $0x340] sm:$0xff]
    %v275 = vld [vmem:[#allocation5 + $0x348] sm:$0xff]
    %v276 = vld [vmem:[#allocation5 + $0x350] sm:$0xff]
    %v277 = vld [vmem:[#allocation5 + $0x358] sm:$0xff]
    %v278 = vld [vmem:[#allocation5 + $0x360] sm:$0xff]
    %v279 = vld [vmem:[#allocation5 + $0x368] sm:$0xff]
    %v280 = vld [vmem:[#allocation5 + $0x370] sm:$0xff]
    %v281 = vld [vmem:[#allocation5 + $0x378] sm:$0xff]
    %v282 = vld [vmem:[#allocation5 + $0x380] sm:$0xff]
    %v283 = vld [vmem:[#allocation5 + $0x388] sm:$0xff]
    %v284 = vld [vmem:[#allocation5 + $0x390] sm:$0xff]
    %v285 = vld [vmem:[#allocation5 + $0x398] sm:$0xff]
    %v286 = vld [vmem:[#allocation5 + $0x3a0] sm:$0xff]
    %v287 = vld [vmem:[#allocation5 + $0x3a8] sm:$0xff]
    %v288 = vld [vmem:[#allocation5 + $0x3b0] sm:$0xff]
    %v289 = vld [vmem:[#allocation5 + $0x3b8] sm:$0xff]
    %v290 = vld [vmem:[#allocation5 + $0x3c0] sm:$0xff]
    %v291 = vld [vmem:[#allocation5 + $0x3c8] sm:$0xff]
    %v292 = vld [vmem:[#allocation5 + $0x3d0] sm:$0xff]
    %v293 = vld [vmem:[#allocation5 + $0x3d8] sm:$0xff]
    %v294 = vld [vmem:[#allocation5 + $0x3e0] sm:$0xff]
    %v295 = vld [vmem:[#allocation5 + $0x3e8] sm:$0xff]
    %v296 = vld [vmem:[#allocation5 + $0x3f0] sm:$0xff]
    %v297 = vld [vmem:[#allocation5 + $0x3f8] sm:$0xff]
    %v298 = vld [vmem:[#allocation5 + $0x400] sm:$0xff]
    %v299 = vld [vmem:[#allocation5 + $0x408] sm:$0xff]
    %v300 = vld [vmem:[#allocation5 + $0x410] sm:$0xff]
    %v301 = vld [vmem:[#allocation5 + $0x418] sm:$0xff]
    %v302 = vld [vmem:[#allocation5 + $0x420] sm:$0xff]
    %v303 = vld [vmem:[#allocation5 + $0x428] sm:$0xff]
    %v304 = vld [vmem:[#allocation5 + $0x430] sm:$0xff]
    %v305 = vld [vmem:[#allocation5 + $0x438] sm:$0xff]
    %v306 = vld [vmem:[#allocation5 + $0x440] sm:$0xff]
    %v307 = vld [vmem:[#allocation5 + $0x448] sm:$0xff]
    %v308 = vld [vmem:[#allocation5 + $0x450] sm:$0xff]
    %v309 = vld [vmem:[#allocation5 + $0x458] sm:$0xff]
    %v310 = vld [vmem:[#allocation5 + $0x460] sm:$0xff]
    %v311 = vld [vmem:[#allocation5 + $0x468] sm:$0xff]
    %v312 = vld [vmem:[#allocation5 + $0x470] sm:$0xff]
    %v313 = vld [vmem:[#allocation5 + $0x478] sm:$0xff]
    %v314 = vld [vmem:[#allocation5 + $0x480] sm:$0xff]
    %v315 = vld [vmem:[#allocation5 + $0x488] sm:$0xff]
    %v316 = vld [vmem:[#allocation5 + $0x490] sm:$0xff]
    %v317 = vld [vmem:[#allocation5 + $0x498] sm:$0xff]
    %v318 = vld [vmem:[#allocation5 + $0x4a0] sm:$0xff]
    %v319 = vld [vmem:[#allocation5 + $0x4a8] sm:$0xff]
    %v320 = vld [vmem:[#allocation5 + $0x4b0] sm:$0xff]
    %v321 = vld [vmem:[#allocation5 + $0x4b8] sm:$0xff]
    %v322 = vld [vmem:[#allocation5 + $0x4c0] sm:$0xff]
    %v323 = vld [vmem:[#allocation5 + $0x4c8] sm:$0xff]
    %v324 = vld [vmem:[#allocation5 + $0x4d0] sm:$0xff]
    %v325 = vld [vmem:[#allocation5 + $0x4d8] sm:$0xff]
    %v326 = vld [vmem:[#allocation5 + $0x4e0] sm:$0xff]
    %v327 = vld [vmem:[#allocation5 + $0x4e8] sm:$0xff]
    %v328 = vld [vmem:[#allocation5 + $0x4f0] sm:$0xff]
    %v329 = vld [vmem:[#allocation5 + $0x4f8] sm:$0xff]
    %v330 = vld [vmem:[#allocation5 + $0x500] sm:$0xff]
    %v331 = vld [vmem:[#allocation5 + $0x508] sm:$0xff]
    %v332 = vld [vmem:[#allocation5 + $0x510] sm:$0xff]
    %v333 = vld [vmem:[#allocation5 + $0x518] sm:$0xff]
    %v334 = vld [vmem:[#allocation5 + $0x520] sm:$0xff]
    %v335 = vld [vmem:[#allocation5 + $0x528] sm:$0xff]
    %v336 = vld [vmem:[#allocation5 + $0x530] sm:$0xff]
    %v337 = vld [vmem:[#allocation5 + $0x538] sm:$0xff]
    %v338 = vld [vmem:[#allocation5 + $0x540] sm:$0xff]
    %v339 = vld [vmem:[#allocation5 + $0x548] sm:$0xff]
    %v340 = vld [vmem:[#allocation5 + $0x550] sm:$0xff]
    %v341 = vld [vmem:[#allocation5 + $0x558] sm:$0xff]
    %v342 = vld [vmem:[#allocation5 + $0x560] sm:$0xff]
    %v343 = vld [vmem:[#allocation5 + $0x568] sm:$0xff]
    %v344 = vld [vmem:[#allocation5 + $0x570] sm:$0xff]
    %v345 = vld [vmem:[#allocation5 + $0x578] sm:$0xff]
    %v346 = vld [vmem:[#allocation5 + $0x580] sm:$0xff]
    %v347 = vld [vmem:[#allocation5 + $0x588] sm:$0xff]
    %v348 = vld [vmem:[#allocation5 + $0x590] sm:$0xff]
    %v349 = vld [vmem:[#allocation5 + $0x598] sm:$0xff]
    %v350 = vld [vmem:[#allocation5 + $0x5a0] sm:$0xff]
    %v351 = vld [vmem:[#allocation5 + $0x5a8] sm:$0xff]
    %v352 = vld [vmem:[#allocation5 + $0x5b0] sm:$0xff]
    %v353 = vld [vmem:[#allocation5 + $0x5b8] sm:$0xff]
    %v354 = vld [vmem:[#allocation5 + $0x5c0] sm:$0xff]
    %v355 = vld [vmem:[#allocation5 + $0x5c8] sm:$0xff]
    %v356 = vld [vmem:[#allocation5 + $0x5d0] sm:$0xff]
    %v357 = vld [vmem:[#allocation5 + $0x5d8] sm:$0xff]
    %v358 = vld [vmem:[#allocation5 + $0x5e0] sm:$0xff]
    %v359 = vld [vmem:[#allocation5 + $0x5e8] sm:$0xff]
    %v360 = vld [vmem:[#allocation5 + $0x5f0] sm:$0xff]
    %v361 = vld [vmem:[#allocation5 + $0x5f8] sm:$0xff]
    %v362 = vld [vmem:[#allocation5 + $0x600] sm:$0xff]
    %v363 = vld [vmem:[#allocation5 + $0x608] sm:$0xff]
    %v364 = vld [vmem:[#allocation5 + $0x610] sm:$0xff]
    %v365 = vld [vmem:[#allocation5 + $0x618] sm:$0xff]
    %v366 = vld [vmem:[#allocation5 + $0x620] sm:$0xff]
    %v367 = vld [vmem:[#allocation5 + $0x628] sm:$0xff]
    %v368 = vld [vmem:[#allocation5 + $0x630] sm:$0xff]
    %v369 = vld [vmem:[#allocation5 + $0x638] sm:$0xff]
    %v370 = vld [vmem:[#allocation5 + $0x640] sm:$0xff]
    %v371 = vld [vmem:[#allocation5 + $0x648] sm:$0xff]
    %v372 = vld [vmem:[#allocation5 + $0x650] sm:$0xff]
    %v373 = vld [vmem:[#allocation5 + $0x658] sm:$0xff]
    %v374 = vld [vmem:[#allocation5 + $0x660] sm:$0xff]
    %v375 = vld [vmem:[#allocation5 + $0x668] sm:$0xff]
    %v376 = vld [vmem:[#allocation5 + $0x670] sm:$0xff]
    %v377 = vld [vmem:[#allocation5 + $0x678] sm:$0xff]
    %v378 = vld [vmem:[#allocation5 + $0x680] sm:$0xff]
    %v379 = vld [vmem:[#allocation5 + $0x688] sm:$0xff]
    %v380 = vld [vmem:[#allocation5 + $0x690] sm:$0xff]
    %v381 = vld [vmem:[#allocation5 + $0x698] sm:$0xff]
    %v382 = vld [vmem:[#allocation5 + $0x6a0] sm:$0xff]
    %v383 = vld [vmem:[#allocation5 + $0x6a8] sm:$0xff]
    %v384 = vld [vmem:[#allocation5 + $0x6b0] sm:$0xff]
    %v385 = vld [vmem:[#allocation5 + $0x6b8] sm:$0xff]
    %v386 = vld [vmem:[#allocation5 + $0x6c0] sm:$0xff]
    %v387 = vld [vmem:[#allocation5 + $0x6c8] sm:$0xff]
    %v388 = vld [vmem:[#allocation5 + $0x6d0] sm:$0xff]
    %v389 = vld [vmem:[#allocation5 + $0x6d8] sm:$0xff]
    %v390 = vld [vmem:[#allocation5 + $0x6e0] sm:$0xff]
    %v391 = vld [vmem:[#allocation5 + $0x6e8] sm:$0xff]
    %v392 = vld [vmem:[#allocation5 + $0x6f0] sm:$0xff]
    %v393 = vld [vmem:[#allocation5 + $0x6f8] sm:$0xff]
    %v394 = vld [vmem:[#allocation5 + $0x700] sm:$0xff]
    %v395 = vld [vmem:[#allocation5 + $0x708] sm:$0xff]
    %v396 = vld [vmem:[#allocation5 + $0x710] sm:$0xff]
    %v397 = vld [vmem:[#allocation5 + $0x718] sm:$0xff]
    %v398 = vld [vmem:[#allocation5 + $0x720] sm:$0xff]
    %v399 = vld [vmem:[#allocation5 + $0x728] sm:$0xff]
    %v400 = vld [vmem:[#allocation5 + $0x730] sm:$0xff]
    %v401 = vld [vmem:[#allocation5 + $0x738] sm:$0xff]
    %v402 = vld [vmem:[#allocation5 + $0x740] sm:$0xff]
    %v403 = vld [vmem:[#allocation5 + $0x748] sm:$0xff]
    %v404 = vld [vmem:[#allocation5 + $0x750] sm:$0xff]
    %v405 = vld [vmem:[#allocation5 + $0x758] sm:$0xff]
    %v406 = vld [vmem:[#allocation5 + $0x760] sm:$0xff]
    %v407 = vld [vmem:[#allocation5 + $0x768] sm:$0xff]
    %v408 = vld [vmem:[#allocation5 + $0x770] sm:$0xff]
    %v409 = vld [vmem:[#allocation5 + $0x778] sm:$0xff]
    %v410 = vld [vmem:[#allocation5 + $0x780] sm:$0xff]
    %v411 = vld [vmem:[#allocation5 + $0x788] sm:$0xff]
    %v412 = vld [vmem:[#allocation5 + $0x790] sm:$0xff]
    %v413 = vld [vmem:[#allocation5 + $0x798] sm:$0xff]
    %v414 = vld [vmem:[#allocation5 + $0x7a0] sm:$0xff]
    %v415 = vld [vmem:[#allocation5 + $0x7a8] sm:$0xff]
    %v416 = vld [vmem:[#allocation5 + $0x7b0] sm:$0xff]
    %v417 = vld [vmem:[#allocation5 + $0x7b8] sm:$0xff]
    %v418 = vld [vmem:[#allocation5 + $0x7c0] sm:$0xff]
    %v419 = vld [vmem:[#allocation5 + $0x7c8] sm:$0xff]
    %v420 = vld [vmem:[#allocation5 + $0x7d0] sm:$0xff]
    %v421 = vld [vmem:[#allocation5 + $0x7d8] sm:$0xff]
    %v422 = vld [vmem:[#allocation5 + $0x7e0] sm:$0xff]
    %v423 = vld [vmem:[#allocation5 + $0x7e8] sm:$0xff]
    %v424 = vld [vmem:[#allocation5 + $0x7f0] sm:$0xff]
    %v425 = vld [vmem:[#allocation5 + $0x7f8] sm:$0xff]
    %v426 = vld [vmem:[#allocation5 + $0x800] sm:$0xff]
    %v427 = vld [vmem:[#allocation5 + $0x808] sm:$0xff]
    %v428 = vld [vmem:[#allocation5 + $0x810] sm:$0xff]
    %v429 = vld [vmem:[#allocation5 + $0x818] sm:$0xff]
    %v430 = vld [vmem:[#allocation5 + $0x820] sm:$0xff]
    %v431 = vld [vmem:[#allocation5 + $0x828] sm:$0xff]
    %v432 = vld [vmem:[#allocation5 + $0x830] sm:$0xff]
    %v433 = vld [vmem:[#allocation5 + $0x838] sm:$0xff]
    %v434 = vld [vmem:[#allocation5 + $0x840] sm:$0xff]
    %v435 = vld [vmem:[#allocation5 + $0x848] sm:$0xff]
    %v436 = vld [vmem:[#allocation5 + $0x850] sm:$0xff]
    %v437 = vld [vmem:[#allocation5 + $0x858] sm:$0xff]
    %v438 = vld [vmem:[#allocation5 + $0x860] sm:$0xff]
    %v439 = vld [vmem:[#allocation5 + $0x868] sm:$0xff]
    %v440 = vld [vmem:[#allocation5 + $0x870] sm:$0xff]
    %v441 = vld [vmem:[#allocation5 + $0x878] sm:$0xff]
    %v442 = vld [vmem:[#allocation5 + $0x880] sm:$0xff]
    %v443 = vld [vmem:[#allocation5 + $0x888] sm:$0xff]
    %v444 = vld [vmem:[#allocation5 + $0x890] sm:$0xff]
    %v445 = vld [vmem:[#allocation5 + $0x898] sm:$0xff]
    %v446 = vld [vmem:[#allocation5 + $0x8a0] sm:$0xff]
    %v447 = vld [vmem:[#allocation5 + $0x8a8] sm:$0xff]
    %v448 = vld [vmem:[#allocation5 + $0x8b0] sm:$0xff]
    %v449 = vld [vmem:[#allocation5 + $0x8b8] sm:$0xff]
    %v450 = vld [vmem:[#allocation5 + $0x8c0] sm:$0xff]
    %v451 = vld [vmem:[#allocation5 + $0x8c8] sm:$0xff]
    %v452 = vld [vmem:[#allocation5 + $0x8d0] sm:$0xff]
    %v453 = vld [vmem:[#allocation5 + $0x8d8] sm:$0xff]
    %v454 = vld [vmem:[#allocation5 + $0x8e0] sm:$0xff]
    %v455 = vld [vmem:[#allocation5 + $0x8e8] sm:$0xff]
    %v456 = vld [vmem:[#allocation5 + $0x8f0] sm:$0xff]
    %v457 = vld [vmem:[#allocation5 + $0x8f8] sm:$0xff]
    %v458 = vld [vmem:[#allocation5 + $0x900] sm:$0xff]
    %v459 = vld [vmem:[#allocation5 + $0x908] sm:$0xff]
    %v460 = vld [vmem:[#allocation5 + $0x910] sm:$0xff]
    %v461 = vld [vmem:[#allocation5 + $0x918] sm:$0xff]
    %v462 = vld [vmem:[#allocation5 + $0x920] sm:$0xff]
    %v463 = vld [vmem:[#allocation5 + $0x928] sm:$0xff]
    %v464 = vld [vmem:[#allocation5 + $0x930] sm:$0xff]
    %v465 = vld [vmem:[#allocation5 + $0x938] sm:$0xff]
    %v466 = vld [vmem:[#allocation5 + $0x940] sm:$0xff]
    %v467 = vld [vmem:[#allocation5 + $0x948] sm:$0xff]
    %v468 = vld [vmem:[#allocation5 + $0x950] sm:$0xff]
    %v469 = vld [vmem:[#allocation5 + $0x958] sm:$0xff]
    %v470 = vld [vmem:[#allocation5 + $0x960] sm:$0xff]
    %v471 = vld [vmem:[#allocation5 + $0x968] sm:$0xff]
    %v472 = vld [vmem:[#allocation5 + $0x970] sm:$0xff]
    %v473 = vld [vmem:[#allocation5 + $0x978] sm:$0xff]
    %v474 = vld [vmem:[#allocation5 + $0x980] sm:$0xff]
    %v475 = vld [vmem:[#allocation5 + $0x988] sm:$0xff]
    %v476 = vld [vmem:[#allocation5 + $0x990] sm:$0xff]
    %v477 = vld [vmem:[#allocation5 + $0x998] sm:$0xff]
    %v478 = vld [vmem:[#allocation5 + $0x9a0] sm:$0xff]
    %v479 = vld [vmem:[#allocation5 + $0x9a8] sm:$0xff]
    %v480 = vld [vmem:[#allocation5 + $0x9b0] sm:$0xff]
    %v481 = vld [vmem:[#allocation5 + $0x9b8] sm:$0xff]
    %v482 = vld [vmem:[#allocation5 + $0x9c0] sm:$0xff]
    %v483 = vld [vmem:[#allocation5 + $0x9c8] sm:$0xff]
    %v484 = vld [vmem:[#allocation5 + $0x9d0] sm:$0xff]
    %v485 = vld [vmem:[#allocation5 + $0x9d8] sm:$0xff]
    %v486 = vld [vmem:[#allocation5 + $0x9e0] sm:$0xff]
    %v487 = vld [vmem:[#allocation5 + $0x9e8] sm:$0xff]
    %v488 = vld [vmem:[#allocation5 + $0x9f0] sm:$0xff]
    %v489 = vld [vmem:[#allocation5 + $0x9f8] sm:$0xff]
    %v490 = vld [vmem:[#allocation5 + $0xa00] sm:$0xff]
    %v491 = vld [vmem:[#allocation5 + $0xa08] sm:$0xff]
    %v492 = vld [vmem:[#allocation5 + $0xa10] sm:$0xff]
    %v493 = vld [vmem:[#allocation5 + $0xa18] sm:$0xff]
    %v494 = vld [vmem:[#allocation5 + $0xa20] sm:$0xff]
    %v495 = vld [vmem:[#allocation5 + $0xa28] sm:$0xff]
    %v496 = vld [vmem:[#allocation5 + $0xa30] sm:$0xff]
    %v497 = vld [vmem:[#allocation5 + $0xa38] sm:$0xff]
    %v498 = vld [vmem:[#allocation5 + $0xa40] sm:$0xff]
    %v499 = vld [vmem:[#allocation5 + $0xa48] sm:$0xff]
    %v500 = vld [vmem:[#allocation5 + $0xa50] sm:$0xff]
    %v501 = vld [vmem:[#allocation5 + $0xa58] sm:$0xff]
    %v502 = vld [vmem:[#allocation5 + $0xa60] sm:$0xff]
    %v503 = vld [vmem:[#allocation5 + $0xa68] sm:$0xff]
    %v504 = vld [vmem:[#allocation5 + $0xa70] sm:$0xff]
    %v505 = vld [vmem:[#allocation5 + $0xa78] sm:$0xff]
    %v506 = vld [vmem:[#allocation5 + $0xa80] sm:$0xff]
    %v507 = vld [vmem:[#allocation5 + $0xa88] sm:$0xff]
    %v508 = vld [vmem:[#allocation5 + $0xa90] sm:$0xff]
    %v509 = vld [vmem:[#allocation5 + $0xa98] sm:$0xff]
    %v510 = vld [vmem:[#allocation5 + $0xaa0] sm:$0xff]
    %v511 = vld [vmem:[#allocation5 + $0xaa8] sm:$0xff]
    %v512 = vld [vmem:[#allocation5 + $0xab0] sm:$0xff]
    %v513 = vld [vmem:[#allocation5 + $0xab8] sm:$0xff]
    %v514 = vld [vmem:[#allocation5 + $0xac0] sm:$0xff]
    %v515 = vld [vmem:[#allocation5 + $0xac8] sm:$0xff]
    %v516 = vld [vmem:[#allocation5 + $0xad0] sm:$0xff]
    %v517 = vld [vmem:[#allocation5 + $0xad8] sm:$0xff]
    %v518 = vld [vmem:[#allocation5 + $0xae0] sm:$0xff]
    %v519 = vld [vmem:[#allocation5 + $0xae8] sm:$0xff]
    %v520 = vld [vmem:[#allocation5 + $0xaf0] sm:$0xff]
    %v521 = vld [vmem:[#allocation5 + $0xaf8] sm:$0xff]
    %v522 = vld [vmem:[#allocation5 + $0xb00] sm:$0xff]
    %v523 = vld [vmem:[#allocation5 + $0xb08] sm:$0xff]
    %v524 = vld [vmem:[#allocation5 + $0xb10] sm:$0xff]
    %v525 = vld [vmem:[#allocation5 + $0xb18] sm:$0xff]
    %v526 = vld [vmem:[#allocation5 + $0xb20] sm:$0xff]
    %v527 = vld [vmem:[#allocation5 + $0xb28] sm:$0xff]
    %v528 = vld [vmem:[#allocation5 + $0xb30] sm:$0xff]
    %v529 = vld [vmem:[#allocation5 + $0xb38] sm:$0xff]
    %v530 = vld [vmem:[#allocation5 + $0xb40] sm:$0xff]
    %v531 = vld [vmem:[#allocation5 + $0xb48] sm:$0xff]
    %v532 = vld [vmem:[#allocation5 + $0xb50] sm:$0xff]
    %v533 = vld [vmem:[#allocation5 + $0xb58] sm:$0xff]
    %v534 = vld [vmem:[#allocation5 + $0xb60] sm:$0xff]
    %v535 = vld [vmem:[#allocation5 + $0xb68] sm:$0xff]
    %v536 = vld [vmem:[#allocation5 + $0xb70] sm:$0xff]
    %v537 = vld [vmem:[#allocation5 + $0xb78] sm:$0xff]
    %v538 = vld [vmem:[#allocation5 + $0xb80] sm:$0xff]
    %v539 = vld [vmem:[#allocation5 + $0xb88] sm:$0xff]
    %v540 = vld [vmem:[#allocation5 + $0xb90] sm:$0xff]
    %v541 = vld [vmem:[#allocation5 + $0xb98] sm:$0xff]
    %v542 = vld [vmem:[#allocation5 + $0xba0] sm:$0xff]
    %v543 = vld [vmem:[#allocation5 + $0xba8] sm:$0xff]
    %v544 = vld [vmem:[#allocation5 + $0xbb0] sm:$0xff]
    %v545 = vld [vmem:[#allocation5 + $0xbb8] sm:$0xff]
    %v546 = vld [vmem:[#allocation5 + $0xbc0] sm:$0xff]
    %v547 = vld [vmem:[#allocation5 + $0xbc8] sm:$0xff]
    %v548 = vld [vmem:[#allocation5 + $0xbd0] sm:$0xff]
    %v549 = vld [vmem:[#allocation5 + $0xbd8] sm:$0xff]
    %v550 = vld [vmem:[#allocation5 + $0xbe0] sm:$0xff]
    %v551 = vld [vmem:[#allocation5 + $0xbe8] sm:$0xff]
    %v552 = vld [vmem:[#allocation5 + $0xbf0] sm:$0xff]
    %v553 = vld [vmem:[#allocation5 + $0xbf8] sm:$0xff]
    %v554 = vld [vmem:[#allocation5 + $0xc00] sm:$0xff]
    %v555 = vld [vmem:[#allocation5 + $0xc08] sm:$0xff]
    %v556 = vld [vmem:[#allocation5 + $0xc10] sm:$0xff]
    %v557 = vld [vmem:[#allocation5 + $0xc18] sm:$0xff]
    %v558 = vld [vmem:[#allocation5 + $0xc20] sm:$0xff]
    %v559 = vld [vmem:[#allocation5 + $0xc28] sm:$0xff]
    %v560 = vld [vmem:[#allocation5 + $0xc30] sm:$0xff]
    %v561 = vld [vmem:[#allocation5 + $0xc38] sm:$0xff]
    %v562 = vld [vmem:[#allocation5 + $0xc40] sm:$0xff]
    %v563 = vld [vmem:[#allocation5 + $0xc48] sm:$0xff]
    %v564 = vld [vmem:[#allocation5 + $0xc50] sm:$0xff]
    %v565 = vld [vmem:[#allocation5 + $0xc58] sm:$0xff]
    %v566 = vld [vmem:[#allocation5 + $0xc60] sm:$0xff]
    %v567 = vld [vmem:[#allocation5 + $0xc68] sm:$0xff]
    %v568 = vld [vmem:[#allocation5 + $0xc70] sm:$0xff]
    %v569 = vld [vmem:[#allocation5 + $0xc78] sm:$0xff]
    %v570 = vld [vmem:[#allocation5 + $0xc80] sm:$0xff]
    %v571 = vld [vmem:[#allocation5 + $0xc88] sm:$0xff]
    %v572 = vld [vmem:[#allocation5 + $0xc90] sm:$0xff]
    %v573 = vld [vmem:[#allocation5 + $0xc98] sm:$0xff]
    %v574 = vld [vmem:[#allocation5 + $0xca0] sm:$0xff]
    %v575 = vld [vmem:[#allocation5 + $0xca8] sm:$0xff]
    %v576 = vld [vmem:[#allocation5 + $0xcb0] sm:$0xff]
    %v577 = vld [vmem:[#allocation5 + $0xcb8] sm:$0xff]
    %v578 = vld [vmem:[#allocation5 + $0xcc0] sm:$0xff]
    %v579 = vld [vmem:[#allocation5 + $0xcc8] sm:$0xff]
    %v580 = vld [vmem:[#allocation5 + $0xcd0] sm:$0xff]
    %v581 = vld [vmem:[#allocation5 + $0xcd8] sm:$0xff]
    %v582 = vld [vmem:[#allocation5 + $0xce0] sm:$0xff]
    %v583 = vld [vmem:[#allocation5 + $0xce8] sm:$0xff]
    %v584 = vld [vmem:[#allocation5 + $0xcf0] sm:$0xff]
    %v585 = vld [vmem:[#allocation5 + $0xcf8] sm:$0xff]
    %v586 = vld [vmem:[#allocation5 + $0xd00] sm:$0xff]
    %v587 = vld [vmem:[#allocation5 + $0xd08] sm:$0xff]
    %v588 = vld [vmem:[#allocation5 + $0xd10] sm:$0xff]
    %v589 = vld [vmem:[#allocation5 + $0xd18] sm:$0xff]
    %v590 = vld [vmem:[#allocation5 + $0xd20] sm:$0xff]
    %v591 = vld [vmem:[#allocation5 + $0xd28] sm:$0xff]
    %v592 = vld [vmem:[#allocation5 + $0xd30] sm:$0xff]
    %v593 = vld [vmem:[#allocation5 + $0xd38] sm:$0xff]
    %v594 = vld [vmem:[#allocation5 + $0xd40] sm:$0xff]
    %v595 = vld [vmem:[#allocation5 + $0xd48] sm:$0xff]
    %v596 = vld [vmem:[#allocation5 + $0xd50] sm:$0xff]
    %v597 = vld [vmem:[#allocation5 + $0xd58] sm:$0xff]
    %v598 = vld [vmem:[#allocation5 + $0xd60] sm:$0xff]
    %v599 = vld [vmem:[#allocation5 + $0xd68] sm:$0xff]
    %v600 = vld [vmem:[#allocation5 + $0xd70] sm:$0xff]
    %v601 = vld [vmem:[#allocation5 + $0xd78] sm:$0xff]
    %v602 = vld [vmem:[#allocation5 + $0xd80] sm:$0xff]
    %v603 = vld [vmem:[#allocation5 + $0xd88] sm:$0xff]
    %v604 = vld [vmem:[#allocation5 + $0xd90] sm:$0xff]
    %v605 = vld [vmem:[#allocation5 + $0xd98] sm:$0xff]
    %v606 = vld [vmem:[#allocation5 + $0xda0] sm:$0xff]
    %v607 = vld [vmem:[#allocation5 + $0xda8] sm:$0xff]
    %v608 = vld [vmem:[#allocation5 + $0xdb0] sm:$0xff]
    %v609 = vld [vmem:[#allocation5 + $0xdb8] sm:$0xff]
    %v610 = vld [vmem:[#allocation5 + $0xdc0] sm:$0xff]
    %v611 = vld [vmem:[#allocation5 + $0xdc8] sm:$0xff]
    %v612 = vld [vmem:[#allocation5 + $0xdd0] sm:$0xff]
    %v613 = vld [vmem:[#allocation5 + $0xdd8] sm:$0xff]
    %v614 = vld [vmem:[#allocation5 + $0xde0] sm:$0xff]
    %v615 = vld [vmem:[#allocation5 + $0xde8] sm:$0xff]
    %v616 = vld [vmem:[#allocation5 + $0xdf0] sm:$0xff]
    %v617 = vld [vmem:[#allocation5 + $0xdf8] sm:$0xff]
    %v618 = vld [vmem:[#allocation5 + $0xe00] sm:$0xff]
    %v619 = vld [vmem:[#allocation5 + $0xe08] sm:$0xff]
    %v620 = vld [vmem:[#allocation5 + $0xe10] sm:$0xff]
    %v621 = vld [vmem:[#allocation5 + $0xe18] sm:$0xff]
    %v622 = vld [vmem:[#allocation5 + $0xe20] sm:$0xff]
    %v623 = vld [vmem:[#allocation5 + $0xe28] sm:$0xff]
    %v624 = vld [vmem:[#allocation5 + $0xe30] sm:$0xff]
    %v625 = vld [vmem:[#allocation5 + $0xe38] sm:$0xff]
    %v626 = vld [vmem:[#allocation5 + $0xe40] sm:$0xff]
    %v627 = vld [vmem:[#allocation5 + $0xe48] sm:$0xff]
    %v628 = vld [vmem:[#allocation5 + $0xe50] sm:$0xff]
    %v629 = vld [vmem:[#allocation5 + $0xe58] sm:$0xff]
    %v630 = vld [vmem:[#allocation5 + $0xe60] sm:$0xff]
    %v631 = vld [vmem:[#allocation5 + $0xe68] sm:$0xff]
    %v632 = vld [vmem:[#allocation5 + $0xe70] sm:$0xff]
    %v633 = vld [vmem:[#allocation5 + $0xe78] sm:$0xff]
    %v634 = vld [vmem:[#allocation5 + $0xe80] sm:$0xff]
    %v635 = vld [vmem:[#allocation5 + $0xe88] sm:$0xff]
    %v636 = vld [vmem:[#allocation5 + $0xe90] sm:$0xff]
    %v637 = vld [vmem:[#allocation5 + $0xe98] sm:$0xff]
    %v638 = vld [vmem:[#allocation5 + $0xea0] sm:$0xff]
    %v639 = vld [vmem:[#allocation5 + $0xea8] sm:$0xff]
    %v640 = vld [vmem:[#allocation5 + $0xeb0] sm:$0xff]
    %v641 = vld [vmem:[#allocation5 + $0xeb8] sm:$0xff]
    %v642 = vld [vmem:[#allocation5 + $0xec0] sm:$0xff]
    %v643 = vld [vmem:[#allocation5 + $0xec8] sm:$0xff]
    %v644 = vld [vmem:[#allocation5 + $0xed0] sm:$0xff]
    %v645 = vld [vmem:[#allocation5 + $0xed8] sm:$0xff]
    %v646 = vld [vmem:[#allocation5 + $0xee0] sm:$0xff]
    %v647 = vld [vmem:[#allocation5 + $0xee8] sm:$0xff]
    %v648 = vld [vmem:[#allocation5 + $0xef0] sm:$0xff]
    %v649 = vld [vmem:[#allocation5 + $0xef8] sm:$0xff]
    %v650 = vld [vmem:[#allocation5 + $0xf00] sm:$0xff]
    %v651 = vld [vmem:[#allocation5 + $0xf08] sm:$0xff]
    %v652 = vld [vmem:[#allocation5 + $0xf10] sm:$0xff]
    %v653 = vld [vmem:[#allocation5 + $0xf18] sm:$0xff]
    %v654 = vld [vmem:[#allocation5 + $0xf20] sm:$0xff]
    %v655 = vld [vmem:[#allocation5 + $0xf28] sm:$0xff]
    %v656 = vld [vmem:[#allocation5 + $0xf30] sm:$0xff]
    %v657 = vld [vmem:[#allocation5 + $0xf38] sm:$0xff]
    %v658 = vld [vmem:[#allocation5 + $0xf40] sm:$0xff]
    %v659 = vld [vmem:[#allocation5 + $0xf48] sm:$0xff]
    %v660 = vld [vmem:[#allocation5 + $0xf50] sm:$0xff]
    %v661 = vld [vmem:[#allocation5 + $0xf58] sm:$0xff]
    %v662 = vld [vmem:[#allocation5 + $0xf60] sm:$0xff]
    %v663 = vld [vmem:[#allocation5 + $0xf68] sm:$0xff]
    %v664 = vld [vmem:[#allocation5 + $0xf70] sm:$0xff]
    %v665 = vld [vmem:[#allocation5 + $0xf78] sm:$0xff]
    %v666 = vld [vmem:[#allocation5 + $0xf80] sm:$0xff]
    %v667 = vld [vmem:[#allocation5 + $0xf88] sm:$0xff]
    %v668 = vld [vmem:[#allocation5 + $0xf90] sm:$0xff]
    %v669 = vld [vmem:[#allocation5 + $0xf98] sm:$0xff]
    %v670 = vld [vmem:[#allocation5 + $0xfa0] sm:$0xff]
    %v671 = vld [vmem:[#allocation5 + $0xfa8] sm:$0xff]
    %v672 = vld [vmem:[#allocation5 + $0xfb0] sm:$0xff]
    %v673 = vld [vmem:[#allocation5 + $0xfb8] sm:$0xff]
    %v674 = vld [vmem:[#allocation5 + $0xfc0] sm:$0xff]
    %v675 = vld [vmem:[#allocation5 + $0xfc8] sm:$0xff]
    %v676 = vld [vmem:[#allocation5 + $0xfd0] sm:$0xff]
    %v677 = vld [vmem:[#allocation5 + $0xfd8] sm:$0xff]
    %v678 = vld [vmem:[#allocation5 + $0xfe0] sm:$0xff]
    %v679 = vld [vmem:[#allocation5 + $0xfe8] sm:$0xff]
    %v680 = vld [vmem:[#allocation5 + $0xff0] sm:$0xff]
    %v681 = vld [vmem:[#allocation5 + $0xff8] sm:$0xff]
    %v682 = vld [vmem:[#allocation5 + $0x1000] sm:$0xff]
    %v683 = vld [vmem:[#allocation5 + $0x1008] sm:$0xff]
    %v684 = vld [vmem:[#allocation5 + $0x1010] sm:$0xff]
    %v685 = vld [vmem:[#allocation5 + $0x1018] sm:$0xff]
    %v686 = vld [vmem:[#allocation5 + $0x1020] sm:$0xff]
    %v687 = vld [vmem:[#allocation5 + $0x1028] sm:$0xff]
    %v688 = vld [vmem:[#allocation5 + $0x1030] sm:$0xff]
    %v689 = vld [vmem:[#allocation5 + $0x1038] sm:$0xff]
    %v690 = vld [vmem:[#allocation5 + $0x1040] sm:$0xff]
    %v691 = vld [vmem:[#allocation5 + $0x1048] sm:$0xff]
    %v692 = vld [vmem:[#allocation5 + $0x1050] sm:$0xff]
    %v693 = vld [vmem:[#allocation5 + $0x1058] sm:$0xff]
    %v694 = vld [vmem:[#allocation5 + $0x1060] sm:$0xff]
    %v695 = vld [vmem:[#allocation5 + $0x1068] sm:$0xff]
    %v696 = vld [vmem:[#allocation5 + $0x1070] sm:$0xff]
    %v697 = vld [vmem:[#allocation5 + $0x1078] sm:$0xff]
    %v698 = vld [vmem:[#allocation5 + $0x1080] sm:$0xff]
    %v699 = vld [vmem:[#allocation5 + $0x1088] sm:$0xff]
    %v700 = vld [vmem:[#allocation5 + $0x1090] sm:$0xff]
    %v701 = vld [vmem:[#allocation5 + $0x1098] sm:$0xff]
    %v702 = vld [vmem:[#allocation5 + $0x10a0] sm:$0xff]
    %v703 = vld [vmem:[#allocation5 + $0x10a8] sm:$0xff]
    %v704 = vld [vmem:[#allocation5 + $0x10b0] sm:$0xff]
    %v705 = vld [vmem:[#allocation5 + $0x10b8] sm:$0xff]
    %v706 = vld [vmem:[#allocation5 + $0x10c0] sm:$0xff]
    %v707 = vld [vmem:[#allocation5 + $0x10c8] sm:$0xff]
    %v708 = vld [vmem:[#allocation5 + $0x10d0] sm:$0xff]
    %v709 = vld [vmem:[#allocation5 + $0x10d8] sm:$0xff]
    %v710 = vld [vmem:[#allocation5 + $0x10e0] sm:$0xff]
    %v711 = vld [vmem:[#allocation5 + $0x10e8] sm:$0xff]
    %v712 = vld [vmem:[#allocation5 + $0x10f0] sm:$0xff]
    %v713 = vld [vmem:[#allocation5 + $0x10f8] sm:$0xff]
    %v714 = vld [vmem:[#allocation5 + $0x1100] sm:$0xff]
    %v715 = vld [vmem:[#allocation5 + $0x1108] sm:$0xff]
    %v716 = vld [vmem:[#allocation5 + $0x1110] sm:$0xff]
    %v717 = vld [vmem:[#allocation5 + $0x1118] sm:$0xff]
    %v718 = vld [vmem:[#allocation5 + $0x1120] sm:$0xff]
    %v719 = vld [vmem:[#allocation5 + $0x1128] sm:$0xff]
    %v720 = vld [vmem:[#allocation5 + $0x1130] sm:$0xff]
    %v721 = vld [vmem:[#allocation5 + $0x1138] sm:$0xff]
    %v722 = vld [vmem:[#allocation5 + $0x1140] sm:$0xff]
    %v723 = vld [vmem:[#allocation5 + $0x1148] sm:$0xff]
    %v724 = vld [vmem:[#allocation5 + $0x1150] sm:$0xff]
    %v725 = vld [vmem:[#allocation5 + $0x1158] sm:$0xff]
    %v726 = vld [vmem:[#allocation5 + $0x1160] sm:$0xff]
    %v727 = vld [vmem:[#allocation5 + $0x1168] sm:$0xff]
    %v728 = vld [vmem:[#allocation5 + $0x1170] sm:$0xff]
    %v729 = vld [vmem:[#allocation5 + $0x1178] sm:$0xff]
    %v730 = vld [vmem:[#allocation5 + $0x1180] sm:$0xff]
    %v731 = vld [vmem:[#allocation5 + $0x1188] sm:$0xff]
    %v732 = vld [vmem:[#allocation5 + $0x1190] sm:$0xff]
    %v733 = vld [vmem:[#allocation5 + $0x1198] sm:$0xff]
    %v734 = vld [vmem:[#allocation5 + $0x11a0] sm:$0xff]
    %v735 = vld [vmem:[#allocation5 + $0x11a8] sm:$0xff]
    %v736 = vld [vmem:[#allocation5 + $0x11b0] sm:$0xff]
    %v737 = vld [vmem:[#allocation5 + $0x11b8] sm:$0xff]
    %v738 = vld [vmem:[#allocation5 + $0x11c0] sm:$0xff]
    %v739 = vld [vmem:[#allocation5 + $0x11c8] sm:$0xff]
    %v740 = vld [vmem:[#allocation5 + $0x11d0] sm:$0xff]
    %v741 = vld [vmem:[#allocation5 + $0x11d8] sm:$0xff]
    %v742 = vld [vmem:[#allocation5 + $0x11e0] sm:$0xff]
    %v743 = vld [vmem:[#allocation5 + $0x11e8] sm:$0xff]
    %v744 = vld [vmem:[#allocation5 + $0x11f0] sm:$0xff]
    %v745 = vld [vmem:[#allocation5 + $0x11f8] sm:$0xff]
    %v746 = vld [vmem:[#allocation5 + $0x1200] sm:$0xff]
    %v747 = vld [vmem:[#allocation5 + $0x1208] sm:$0xff]
    %v748 = vld [vmem:[#allocation5 + $0x1210] sm:$0xff]
    %v749 = vld [vmem:[#allocation5 + $0x1218] sm:$0xff]
    %v750 = vld [vmem:[#allocation5 + $0x1220] sm:$0xff]
    %v751 = vld [vmem:[#allocation5 + $0x1228] sm:$0xff]
    %v752 = vld [vmem:[#allocation5 + $0x1230] sm:$0xff]
    %v753 = vld [vmem:[#allocation5 + $0x1238] sm:$0xff]
    %v754 = vld [vmem:[#allocation5 + $0x1240] sm:$0xff]
    %v755 = vld [vmem:[#allocation5 + $0x1248] sm:$0xff]
    %v756 = vld [vmem:[#allocation5 + $0x1250] sm:$0xff]
    %v757 = vld [vmem:[#allocation5 + $0x1258] sm:$0xff]
    %v758 = vld [vmem:[#allocation5 + $0x1260] sm:$0xff]
    %v759 = vld [vmem:[#allocation5 + $0x1268] sm:$0xff]
    %v760 = vld [vmem:[#allocation5 + $0x1270] sm:$0xff]
    %v761 = vld [vmem:[#allocation5 + $0x1278] sm:$0xff]
    %v762 = vld [vmem:[#allocation5 + $0x1280] sm:$0xff]
    %v763 = vld [vmem:[#allocation5 + $0x1288] sm:$0xff]
    %v764 = vld [vmem:[#allocation5 + $0x1290] sm:$0xff]
    %v765 = vld [vmem:[#allocation5 + $0x1298] sm:$0xff]
    %v766 = vld [vmem:[#allocation5 + $0x12a0] sm:$0xff]
    %v767 = vld [vmem:[#allocation5 + $0x12a8] sm:$0xff]
    %v768 = vld [vmem:[#allocation5 + $0x12b0] sm:$0xff]
    %v769 = vld [vmem:[#allocation5 + $0x12b8] sm:$0xff]
    %v770 = vld [vmem:[#allocation5 + $0x12c0] sm:$0xff]
    %v771 = vld [vmem:[#allocation5 + $0x12c8] sm:$0xff]
    %v772 = vld [vmem:[#allocation5 + $0x12d0] sm:$0xff]
    %v773 = vld [vmem:[#allocation5 + $0x12d8] sm:$0xff]
    %v774 = vld [vmem:[#allocation5 + $0x12e0] sm:$0xff]
    %v775 = vld [vmem:[#allocation5 + $0x12e8] sm:$0xff]
    %v776 = vld [vmem:[#allocation5 + $0x12f0] sm:$0xff]
    %v777 = vld [vmem:[#allocation5 + $0x12f8] sm:$0xff]
    %v778 = vld [vmem:[#allocation5 + $0x1300] sm:$0xff]
    %v779 = vld [vmem:[#allocation5 + $0x1308] sm:$0xff]
    %v780 = vld [vmem:[#allocation5 + $0x1310] sm:$0xff]
    %v781 = vld [vmem:[#allocation5 + $0x1318] sm:$0xff]
    %v782 = vld [vmem:[#allocation5 + $0x1320] sm:$0xff]
    %v783 = vld [vmem:[#allocation5 + $0x1328] sm:$0xff]
    %v784 = vld [vmem:[#allocation5 + $0x1330] sm:$0xff]
    %v785 = vld [vmem:[#allocation5 + $0x1338] sm:$0xff]
    %v786 = vld [vmem:[#allocation5 + $0x1340] sm:$0xff]
    %v787 = vld [vmem:[#allocation5 + $0x1348] sm:$0xff]
    %v788 = vld [vmem:[#allocation5 + $0x1350] sm:$0xff]
    %v789 = vld [vmem:[#allocation5 + $0x1358] sm:$0xff]
    %v790 = vld [vmem:[#allocation5 + $0x1360] sm:$0xff]
    %v791 = vld [vmem:[#allocation5 + $0x1368] sm:$0xff]
    %v792 = vld [vmem:[#allocation5 + $0x1370] sm:$0xff]
    %v793 = vld [vmem:[#allocation5 + $0x1378] sm:$0xff]
    %v794 = vld [vmem:[#allocation5 + $0x1380] sm:$0xff]
    %v795 = vld [vmem:[#allocation5 + $0x1388] sm:$0xff]
    %v796 = vld [vmem:[#allocation5 + $0x1390] sm:$0xff]
    %v797 = vld [vmem:[#allocation5 + $0x1398] sm:$0xff]
    %v798 = vld [vmem:[#allocation5 + $0x13a0] sm:$0xff]
    %v799 = vld [vmem:[#allocation5 + $0x13a8] sm:$0xff]
    %v800 = vld [vmem:[#allocation5 + $0x13b0] sm:$0xff]
    %v801 = vld [vmem:[#allocation5 + $0x13b8] sm:$0xff]
    %v802 = vld [vmem:[#allocation5 + $0x13c0] sm:$0xff]
    %v803 = vld [vmem:[#allocation5 + $0x13c8] sm:$0xff]
    %v804 = vld [vmem:[#allocation5 + $0x13d0] sm:$0xff]
    %v805 = vld [vmem:[#allocation5 + $0x13d8] sm:$0xff]
    %v806 = vld [vmem:[#allocation5 + $0x13e0] sm:$0xff]
    %v807 = vld [vmem:[#allocation5 + $0x13e8] sm:$0xff]
    %v808 = vld [vmem:[#allocation5 + $0x13f0] sm:$0xff]
    %v809 = vld [vmem:[#allocation5 + $0x13f8] sm:$0xff]
    %v810 = vld [vmem:[#allocation5 + $0x1400] sm:$0xff]
    %v811 = vld [vmem:[#allocation5 + $0x1408] sm:$0xff]
    %v812 = vld [vmem:[#allocation5 + $0x1410] sm:$0xff]
    %v813 = vld [vmem:[#allocation5 + $0x1418] sm:$0xff]
    %v814 = vld [vmem:[#allocation5 + $0x1420] sm:$0xff]
    %v815 = vld [vmem:[#allocation5 + $0x1428] sm:$0xff]
    %v816 = vld [vmem:[#allocation5 + $0x1430] sm:$0xff]
    %v817 = vld [vmem:[#allocation5 + $0x1438] sm:$0xff]
    %v818 = vld [vmem:[#allocation5 + $0x1440] sm:$0xff]
    %v819 = vld [vmem:[#allocation5 + $0x1448] sm:$0xff]
    %v820 = vld [vmem:[#allocation5 + $0x1450] sm:$0xff]
    %v821 = vld [vmem:[#allocation5 + $0x1458] sm:$0xff]
    %v822 = vld [vmem:[#allocation5 + $0x1460] sm:$0xff]
    %v823 = vld [vmem:[#allocation5 + $0x1468] sm:$0xff]
    %v824 = vld [vmem:[#allocation5 + $0x1470] sm:$0xff]
    %v825 = vld [vmem:[#allocation5 + $0x1478] sm:$0xff]
    %v826 = vld [vmem:[#allocation5 + $0x1480] sm:$0xff]
    %v827 = vld [vmem:[#allocation5 + $0x1488] sm:$0xff]
    %v828 = vld [vmem:[#allocation5 + $0x1490] sm:$0xff]
    %v829 = vld [vmem:[#allocation5 + $0x1498] sm:$0xff]
    %v830 = vld [vmem:[#allocation5 + $0x14a0] sm:$0xff]
    %v831 = vld [vmem:[#allocation5 + $0x14a8] sm:$0xff]
    %v832 = vld [vmem:[#allocation5 + $0x14b0] sm:$0xff]
    %v833 = vld [vmem:[#allocation5 + $0x14b8] sm:$0xff]
    %v834 = vld [vmem:[#allocation5 + $0x14c0] sm:$0xff]
    %v835 = vld [vmem:[#allocation5 + $0x14c8] sm:$0xff]
    %v836 = vld [vmem:[#allocation5 + $0x14d0] sm:$0xff]
    %v837 = vld [vmem:[#allocation5 + $0x14d8] sm:$0xff]
    %v838 = vld [vmem:[#allocation5 + $0x14e0] sm:$0xff]
    %v839 = vld [vmem:[#allocation5 + $0x14e8] sm:$0xff]
    %v840 = vld [vmem:[#allocation5 + $0x14f0] sm:$0xff]
    %v841 = vld [vmem:[#allocation5 + $0x14f8] sm:$0xff]
    %v842 = vld [vmem:[#allocation5 + $0x1500] sm:$0xff]
    %v843 = vld [vmem:[#allocation5 + $0x1508] sm:$0xff]
    %v844 = vld [vmem:[#allocation5 + $0x1510] sm:$0xff]
    %v845 = vld [vmem:[#allocation5 + $0x1518] sm:$0xff]
    %v846 = vld [vmem:[#allocation5 + $0x1520] sm:$0xff]
    %v847 = vld [vmem:[#allocation5 + $0x1528] sm:$0xff]
    %v848 = vld [vmem:[#allocation5 + $0x1530] sm:$0xff]
    %v849 = vld [vmem:[#allocation5 + $0x1538] sm:$0xff]
    %v850 = vld [vmem:[#allocation5 + $0x1540] sm:$0xff]
    %v851 = vld [vmem:[#allocation5 + $0x1548] sm:$0xff]
    %v852 = vld [vmem:[#allocation5 + $0x1550] sm:$0xff]
    %v853 = vld [vmem:[#allocation5 + $0x1558] sm:$0xff]
    %v854 = vld [vmem:[#allocation5 + $0x1560] sm:$0xff]
    %v855 = vld [vmem:[#allocation5 + $0x1568] sm:$0xff]
    %v856 = vld [vmem:[#allocation5 + $0x1570] sm:$0xff]
    %v857 = vld [vmem:[#allocation5 + $0x1578] sm:$0xff]
    %v858 = vld [vmem:[#allocation5 + $0x1580] sm:$0xff]
    %v859 = vld [vmem:[#allocation5 + $0x1588] sm:$0xff]
    %v860 = vld [vmem:[#allocation5 + $0x1590] sm:$0xff]
    %v861 = vld [vmem:[#allocation5 + $0x1598] sm:$0xff]
    %v862 = vld [vmem:[#allocation5 + $0x15a0] sm:$0xff]
    %v863 = vld [vmem:[#allocation5 + $0x15a8] sm:$0xff]
    %v864 = vld [vmem:[#allocation5 + $0x15b0] sm:$0xff]
    %v865 = vld [vmem:[#allocation5 + $0x15b8] sm:$0xff]
    %v866 = vld [vmem:[#allocation5 + $0x15c0] sm:$0xff]
    %v867 = vld [vmem:[#allocation5 + $0x15c8] sm:$0xff]
    %v868 = vld [vmem:[#allocation5 + $0x15d0] sm:$0xff]
    %v869 = vld [vmem:[#allocation5 + $0x15d8] sm:$0xff]
    %v870 = vld [vmem:[#allocation5 + $0x15e0] sm:$0xff]
    %v871 = vld [vmem:[#allocation5 + $0x15e8] sm:$0xff]
    %v872 = vld [vmem:[#allocation5 + $0x15f0] sm:$0xff]
    %v873 = vld [vmem:[#allocation5 + $0x15f8] sm:$0xff]
    %v874 = vld [vmem:[#allocation5 + $0x1600] sm:$0xff]
    %v875 = vld [vmem:[#allocation5 + $0x1608] sm:$0xff]
    %v876 = vld [vmem:[#allocation5 + $0x1610] sm:$0xff]
    %v877 = vld [vmem:[#allocation5 + $0x1618] sm:$0xff]
    %v878 = vld [vmem:[#allocation5 + $0x1620] sm:$0xff]
    %v879 = vld [vmem:[#allocation5 + $0x1628] sm:$0xff]
    %v880 = vld [vmem:[#allocation5 + $0x1630] sm:$0xff]
    %v881 = vld [vmem:[#allocation5 + $0x1638] sm:$0xff]
    %v882 = vld [vmem:[#allocation5 + $0x1640] sm:$0xff]
    %v883 = vld [vmem:[#allocation5 + $0x1648] sm:$0xff]
    %v884 = vld [vmem:[#allocation5 + $0x1650] sm:$0xff]
    %v885 = vld [vmem:[#allocation5 + $0x1658] sm:$0xff]
    %v886 = vld [vmem:[#allocation5 + $0x1660] sm:$0xff]
    %v887 = vld [vmem:[#allocation5 + $0x1668] sm:$0xff]
    %v888 = vld [vmem:[#allocation5 + $0x1670] sm:$0xff]
    %v889 = vld [vmem:[#allocation5 + $0x1678] sm:$0xff]
    %v890 = vld [vmem:[#allocation5 + $0x1680] sm:$0xff]
    %v891 = vld [vmem:[#allocation5 + $0x1688] sm:$0xff]
    %v892 = vld [vmem:[#allocation5 + $0x1690] sm:$0xff]
    %v893 = vld [vmem:[#allocation5 + $0x1698] sm:$0xff]
    %v894 = vld [vmem:[#allocation5 + $0x16a0] sm:$0xff]
    %v895 = vld [vmem:[#allocation5 + $0x16a8] sm:$0xff]
    %v896 = vld [vmem:[#allocation5 + $0x16b0] sm:$0xff]
    %v897 = vld [vmem:[#allocation5 + $0x16b8] sm:$0xff]
    %v898 = vld [vmem:[#allocation5 + $0x16c0] sm:$0xff]
    %v899 = vld [vmem:[#allocation5 + $0x16c8] sm:$0xff]
    %v900 = vld [vmem:[#allocation5 + $0x16d0] sm:$0xff]
    %v901 = vld [vmem:[#allocation5 + $0x16d8] sm:$0xff]
    %v902 = vld [vmem:[#allocation5 + $0x16e0] sm:$0xff]
    %v903 = vld [vmem:[#allocation5 + $0x16e8] sm:$0xff]
    %v904 = vld [vmem:[#allocation5 + $0x16f0] sm:$0xff]
    %v905 = vld [vmem:[#allocation5 + $0x16f8] sm:$0xff]
    %v906 = vld [vmem:[#allocation5 + $0x1700] sm:$0xff]
    %v907 = vld [vmem:[#allocation5 + $0x1708] sm:$0xff]
    %v908 = vld [vmem:[#allocation5 + $0x1710] sm:$0xff]
    %v909 = vld [vmem:[#allocation5 + $0x1718] sm:$0xff]
    %v910 = vld [vmem:[#allocation5 + $0x1720] sm:$0xff]
    %v911 = vld [vmem:[#allocation5 + $0x1728] sm:$0xff]
    %v912 = vld [vmem:[#allocation5 + $0x1730] sm:$0xff]
    %v913 = vld [vmem:[#allocation5 + $0x1738] sm:$0xff]
    %v914 = vld [vmem:[#allocation5 + $0x1740] sm:$0xff]
    %v915 = vld [vmem:[#allocation5 + $0x1748] sm:$0xff]
    %v916 = vld [vmem:[#allocation5 + $0x1750] sm:$0xff]
    %v917 = vld [vmem:[#allocation5 + $0x1758] sm:$0xff]
    %v918 = vld [vmem:[#allocation5 + $0x1760] sm:$0xff]
    %v919 = vld [vmem:[#allocation5 + $0x1768] sm:$0xff]
    %v920 = vld [vmem:[#allocation5 + $0x1770] sm:$0xff]
    %v921 = vld [vmem:[#allocation5 + $0x1778] sm:$0xff]
    %v922 = vld [vmem:[#allocation5 + $0x1780] sm:$0xff]
    %v923 = vld [vmem:[#allocation5 + $0x1788] sm:$0xff]
    %v924 = vld [vmem:[#allocation5 + $0x1790] sm:$0xff]
    %v925 = vld [vmem:[#allocation5 + $0x1798] sm:$0xff]
    %v926 = vld [vmem:[#allocation5 + $0x17a0] sm:$0xff]
    %v927 = vld [vmem:[#allocation5 + $0x17a8] sm:$0xff]
    %v928 = vld [vmem:[#allocation5 + $0x17b0] sm:$0xff]
    %v929 = vld [vmem:[#allocation5 + $0x17b8] sm:$0xff]
    %v930 = vld [vmem:[#allocation5 + $0x17c0] sm:$0xff]
    %v931 = vld [vmem:[#allocation5 + $0x17c8] sm:$0xff]
    %v932 = vld [vmem:[#allocation5 + $0x17d0] sm:$0xff]
    %v933 = vld [vmem:[#allocation5 + $0x17d8] sm:$0xff]
    %v934 = vld [vmem:[#allocation5 + $0x17e0] sm:$0xff]
    %v935 = vld [vmem:[#allocation5 + $0x17e8] sm:$0xff]
    %v936 = vld [vmem:[#allocation5 + $0x17f0] sm:$0xff]
    %v937 = vld [vmem:[#allocation5 + $0x17f8] sm:$0xff]
    %v938 = vld [vmem:[#allocation7] sm:$0xff]
    %v940 = vlaneseq
    %v941 = vshrl.u32 %v940, 7
    %v942 = vsub.s32 0, %v941
    %v943 = vrot.slane %v938, %v942
    %v944 = vlaneseq
    %v945 = vshrl.u32 %v944, 7
    %v946 = vsub.s32 1, %v945
    %v947 = vrot.slane %v938, %v946
    %v948 = vlaneseq
    %v949 = vshrl.u32 %v948, 7
    %v950 = vsub.s32 2, %v949
    %v951 = vrot.slane %v938, %v950
    %v952 = vlaneseq
    %v953 = vshrl.u32 %v952, 7
    %v954 = vsub.s32 3, %v953
    %v955 = vrot.slane %v938, %v954
    %v956 = vlaneseq
    %v957 = vshrl.u32 %v956, 7
    %v958 = vsub.s32 4, %v957
    %v959 = vrot.slane %v938, %v958
    %v960 = vlaneseq
    %v961 = vshrl.u32 %v960, 7
    %v962 = vsub.s32 5, %v961
    %v963 = vrot.slane %v938, %v962
    %v964 = vlaneseq
    %v965 = vshrl.u32 %v964, 7
    %v966 = vsub.s32 6, %v965
    %v967 = vrot.slane %v938, %v966
    %v968 = vlaneseq
    %v969 = vshrl.u32 %v968, 7
    %v970 = vsub.s32 7, %v969
    %v971 = vrot.slane %v938, %v970
    %v1748 = vunpack.c.l.b16 %v170
    %v1749 = vunpack.c.h.b16 %v170
    %v1750 = vunpack.c.l.b16 %v171
    %v1751 = vunpack.c.h.b16 %v171
    %v1752 = vunpack.c.l.b16 %v172
    %v1753 = vunpack.c.h.b16 %v172
    %v1754 = vunpack.c.l.b16 %v173
    %v1755 = vunpack.c.h.b16 %v173
    %v1756 = vunpack.c.l.b16 %v174
    %v1757 = vunpack.c.h.b16 %v174
    %v1758 = vunpack.c.l.b16 %v175
    %v1759 = vunpack.c.h.b16 %v175
    %v1760 = vunpack.c.l.b16 %v176
    %v1761 = vunpack.c.h.b16 %v176
    %v1762 = vunpack.c.l.b16 %v177
    %v1763 = vunpack.c.h.b16 %v177
    %v1764 = vunpack.c.l.b16 %v178
    %v1765 = vunpack.c.h.b16 %v178
    %v1766 = vunpack.c.l.b16 %v179
    %v1767 = vunpack.c.h.b16 %v179
    %v1768 = vunpack.c.l.b16 %v180
    %v1769 = vunpack.c.h.b16 %v180
    %v1770 = vunpack.c.l.b16 %v181
    %v1771 = vunpack.c.h.b16 %v181
    %v1772 = vunpack.c.l.b16 %v182
    %v1773 = vunpack.c.h.b16 %v182
    %v1774 = vunpack.c.l.b16 %v183
    %v1775 = vunpack.c.h.b16 %v183
    %v1776 = vunpack.c.l.b16 %v184
    %v1777 = vunpack.c.h.b16 %v184
    %v1778 = vunpack.c.l.b16 %v185
    %v1779 = vunpack.c.h.b16 %v185
    %v1780 = vunpack.c.l.b16 %v186
    %v1781 = vunpack.c.h.b16 %v186
    %v1782 = vunpack.c.l.b16 %v187
    %v1783 = vunpack.c.h.b16 %v187
    %v1784 = vunpack.c.l.b16 %v188
    %v1785 = vunpack.c.h.b16 %v188
    %v1786 = vunpack.c.l.b16 %v189
    %v1787 = vunpack.c.h.b16 %v189
    %v1788 = vunpack.c.l.b16 %v190
    %v1789 = vunpack.c.h.b16 %v190
    %v1790 = vunpack.c.l.b16 %v191
    %v1791 = vunpack.c.h.b16 %v191
    %v1792 = vunpack.c.l.b16 %v192
    %v1793 = vunpack.c.h.b16 %v192
    %v1794 = vunpack.c.l.b16 %v193
    %v1795 = vunpack.c.h.b16 %v193
    %v1796 = vunpack.c.l.b16 %v194
    %v1797 = vunpack.c.h.b16 %v194
    %v1798 = vunpack.c.l.b16 %v195
    %v1799 = vunpack.c.h.b16 %v195
    %v1800 = vunpack.c.l.b16 %v196
    %v1801 = vunpack.c.h.b16 %v196
    %v1802 = vunpack.c.l.b16 %v197
    %v1803 = vunpack.c.h.b16 %v197
    %v1804 = vunpack.c.l.b16 %v198
    %v1805 = vunpack.c.h.b16 %v198
    %v1806 = vunpack.c.l.b16 %v199
    %v1807 = vunpack.c.h.b16 %v199
    %v1808 = vunpack.c.l.b16 %v200
    %v1809 = vunpack.c.h.b16 %v200
    %v1810 = vunpack.c.l.b16 %v201
    %v1811 = vunpack.c.h.b16 %v201
    %v1812 = vunpack.c.l.b16 %v202
    %v1813 = vunpack.c.h.b16 %v202
    %v1814 = vunpack.c.l.b16 %v203
    %v1815 = vunpack.c.h.b16 %v203
    %v1816 = vunpack.c.l.b16 %v204
    %v1817 = vunpack.c.h.b16 %v204
    %v1818 = vunpack.c.l.b16 %v205
    %v1819 = vunpack.c.h.b16 %v205
    %v1820 = vunpack.c.l.b16 %v206
    %v1821 = vunpack.c.h.b16 %v206
    %v1822 = vunpack.c.l.b16 %v207
    %v1823 = vunpack.c.h.b16 %v207
    %v1824 = vunpack.c.l.b16 %v208
    %v1825 = vunpack.c.h.b16 %v208
    %v1826 = vunpack.c.l.b16 %v209
    %v1827 = vunpack.c.h.b16 %v209
    %v1828 = vunpack.c.l.b16 %v210
    %v1829 = vunpack.c.h.b16 %v210
    %v1830 = vunpack.c.l.b16 %v211
    %v1831 = vunpack.c.h.b16 %v211
    %v1832 = vunpack.c.l.b16 %v212
    %v1833 = vunpack.c.h.b16 %v212
    %v1834 = vunpack.c.l.b16 %v213
    %v1835 = vunpack.c.h.b16 %v213
    %v1836 = vunpack.c.l.b16 %v214
    %v1837 = vunpack.c.h.b16 %v214
    %v1838 = vunpack.c.l.b16 %v215
    %v1839 = vunpack.c.h.b16 %v215
    %v1840 = vunpack.c.l.b16 %v216
    %v1841 = vunpack.c.h.b16 %v216
    %v1842 = vunpack.c.l.b16 %v217
    %v1843 = vunpack.c.h.b16 %v217
    %v1844 = vunpack.c.l.b16 %v218
    %v1845 = vunpack.c.h.b16 %v218
    %v1846 = vunpack.c.l.b16 %v219
    %v1847 = vunpack.c.h.b16 %v219
    %v1848 = vunpack.c.l.b16 %v220
    %v1849 = vunpack.c.h.b16 %v220
    %v1850 = vunpack.c.l.b16 %v221
    %v1851 = vunpack.c.h.b16 %v221
    %v1852 = vunpack.c.l.b16 %v222
    %v1853 = vunpack.c.h.b16 %v222
    %v1854 = vunpack.c.l.b16 %v223
    %v1855 = vunpack.c.h.b16 %v223
    %v1856 = vunpack.c.l.b16 %v224
    %v1857 = vunpack.c.h.b16 %v224
    %v1858 = vunpack.c.l.b16 %v225
    %v1859 = vunpack.c.h.b16 %v225
    %v1860 = vunpack.c.l.b16 %v226
    %v1861 = vunpack.c.h.b16 %v226
    %v1862 = vunpack.c.l.b16 %v227
    %v1863 = vunpack.c.h.b16 %v227
    %v1864 = vunpack.c.l.b16 %v228
    %v1865 = vunpack.c.h.b16 %v228
    %v1866 = vunpack.c.l.b16 %v229
    %v1867 = vunpack.c.h.b16 %v229
    %v1868 = vunpack.c.l.b16 %v230
    %v1869 = vunpack.c.h.b16 %v230
    %v1870 = vunpack.c.l.b16 %v231
    %v1871 = vunpack.c.h.b16 %v231
    %v1872 = vunpack.c.l.b16 %v232
    %v1873 = vunpack.c.h.b16 %v232
    %v1874 = vunpack.c.l.b16 %v233
    %v1875 = vunpack.c.h.b16 %v233
    %v1876 = vunpack.c.l.b16 %v234
    %v1877 = vunpack.c.h.b16 %v234
    %v1878 = vunpack.c.l.b16 %v235
    %v1879 = vunpack.c.h.b16 %v235
    %v1880 = vunpack.c.l.b16 %v236
    %v1881 = vunpack.c.h.b16 %v236
    %v1882 = vunpack.c.l.b16 %v237
    %v1883 = vunpack.c.h.b16 %v237
    %v1884 = vunpack.c.l.b16 %v238
    %v1885 = vunpack.c.h.b16 %v238
    %v1886 = vunpack.c.l.b16 %v239
    %v1887 = vunpack.c.h.b16 %v239
    %v1888 = vunpack.c.l.b16 %v240
    %v1889 = vunpack.c.h.b16 %v240
    %v1890 = vunpack.c.l.b16 %v241
    %v1891 = vunpack.c.h.b16 %v241
    %v1892 = vunpack.c.l.b16 %v242
    %v1893 = vunpack.c.h.b16 %v242
    %v1894 = vunpack.c.l.b16 %v243
    %v1895 = vunpack.c.h.b16 %v243
    %v1896 = vunpack.c.l.b16 %v244
    %v1897 = vunpack.c.h.b16 %v244
    %v1898 = vunpack.c.l.b16 %v245
    %v1899 = vunpack.c.h.b16 %v245
    %v1900 = vunpack.c.l.b16 %v246
    %v1901 = vunpack.c.h.b16 %v246
    %v1902 = vunpack.c.l.b16 %v247
    %v1903 = vunpack.c.h.b16 %v247
    %v1904 = vunpack.c.l.b16 %v248
    %v1905 = vunpack.c.h.b16 %v248
    %v1906 = vunpack.c.l.b16 %v249
    %v1907 = vunpack.c.h.b16 %v249
    %v1908 = vunpack.c.l.b16 %v250
    %v1909 = vunpack.c.h.b16 %v250
    %v1910 = vunpack.c.l.b16 %v251
    %v1911 = vunpack.c.h.b16 %v251
    %v1912 = vunpack.c.l.b16 %v252
    %v1913 = vunpack.c.h.b16 %v252
    %v1914 = vunpack.c.l.b16 %v253
    %v1915 = vunpack.c.h.b16 %v253
    %v1916 = vunpack.c.l.b16 %v254
    %v1917 = vunpack.c.h.b16 %v254
    %v1918 = vunpack.c.l.b16 %v255
    %v1919 = vunpack.c.h.b16 %v255
    %v1920 = vunpack.c.l.b16 %v256
    %v1921 = vunpack.c.h.b16 %v256
    %v1922 = vunpack.c.l.b16 %v257
    %v1923 = vunpack.c.h.b16 %v257
    %v1924 = vunpack.c.l.b16 %v258
    %v1925 = vunpack.c.h.b16 %v258
    %v1926 = vunpack.c.l.b16 %v259
    %v1927 = vunpack.c.h.b16 %v259
    %v1928 = vunpack.c.l.b16 %v260
    %v1929 = vunpack.c.h.b16 %v260
    %v1930 = vunpack.c.l.b16 %v261
    %v1931 = vunpack.c.h.b16 %v261
    %v1932 = vunpack.c.l.b16 %v262
    %v1933 = vunpack.c.h.b16 %v262
    %v1934 = vunpack.c.l.b16 %v263
    %v1935 = vunpack.c.h.b16 %v263
    %v1936 = vunpack.c.l.b16 %v264
    %v1937 = vunpack.c.h.b16 %v264
    %v1938 = vunpack.c.l.b16 %v265
    %v1939 = vunpack.c.h.b16 %v265
    %v1940 = vunpack.c.l.b16 %v266
    %v1941 = vunpack.c.h.b16 %v266
    %v1942 = vunpack.c.l.b16 %v267
    %v1943 = vunpack.c.h.b16 %v267
    %v1944 = vunpack.c.l.b16 %v268
    %v1945 = vunpack.c.h.b16 %v268
    %v1946 = vunpack.c.l.b16 %v269
    %v1947 = vunpack.c.h.b16 %v269
    %v1948 = vunpack.c.l.b16 %v270
    %v1949 = vunpack.c.h.b16 %v270
    %v1950 = vunpack.c.l.b16 %v271
    %v1951 = vunpack.c.h.b16 %v271
    %v1952 = vunpack.c.l.b16 %v272
    %v1953 = vunpack.c.h.b16 %v272
    %v1954 = vunpack.c.l.b16 %v273
    %v1955 = vunpack.c.h.b16 %v273
    %v1956 = vunpack.c.l.b16 %v274
    %v1957 = vunpack.c.h.b16 %v274
    %v1958 = vunpack.c.l.b16 %v275
    %v1959 = vunpack.c.h.b16 %v275
    %v1960 = vunpack.c.l.b16 %v276
    %v1961 = vunpack.c.h.b16 %v276
    %v1962 = vunpack.c.l.b16 %v277
    %v1963 = vunpack.c.h.b16 %v277
    %v1964 = vunpack.c.l.b16 %v278
    %v1965 = vunpack.c.h.b16 %v278
    %v1966 = vunpack.c.l.b16 %v279
    %v1967 = vunpack.c.h.b16 %v279
    %v1968 = vunpack.c.l.b16 %v280
    %v1969 = vunpack.c.h.b16 %v280
    %v1970 = vunpack.c.l.b16 %v281
    %v1971 = vunpack.c.h.b16 %v281
    %v1972 = vunpack.c.l.b16 %v282
    %v1973 = vunpack.c.h.b16 %v282
    %v1974 = vunpack.c.l.b16 %v283
    %v1975 = vunpack.c.h.b16 %v283
    %v1976 = vunpack.c.l.b16 %v284
    %v1977 = vunpack.c.h.b16 %v284
    %v1978 = vunpack.c.l.b16 %v285
    %v1979 = vunpack.c.h.b16 %v285
    %v1980 = vunpack.c.l.b16 %v286
    %v1981 = vunpack.c.h.b16 %v286
    %v1982 = vunpack.c.l.b16 %v287
    %v1983 = vunpack.c.h.b16 %v287
    %v1984 = vunpack.c.l.b16 %v288
    %v1985 = vunpack.c.h.b16 %v288
    %v1986 = vunpack.c.l.b16 %v289
    %v1987 = vunpack.c.h.b16 %v289
    %v1988 = vunpack.c.l.b16 %v290
    %v1989 = vunpack.c.h.b16 %v290
    %v1990 = vunpack.c.l.b16 %v291
    %v1991 = vunpack.c.h.b16 %v291
    %v1992 = vunpack.c.l.b16 %v292
    %v1993 = vunpack.c.h.b16 %v292
    %v1994 = vunpack.c.l.b16 %v293
    %v1995 = vunpack.c.h.b16 %v293
    %v1996 = vunpack.c.l.b16 %v294
    %v1997 = vunpack.c.h.b16 %v294
    %v1998 = vunpack.c.l.b16 %v295
    %v1999 = vunpack.c.h.b16 %v295
    %v2000 = vunpack.c.l.b16 %v296
    %v2001 = vunpack.c.h.b16 %v296
    %v2002 = vunpack.c.l.b16 %v297
    %v2003 = vunpack.c.h.b16 %v297
    %v2004 = vunpack.c.l.b16 %v298
    %v2005 = vunpack.c.h.b16 %v298
    %v2006 = vunpack.c.l.b16 %v299
    %v2007 = vunpack.c.h.b16 %v299
    %v2008 = vunpack.c.l.b16 %v300
    %v2009 = vunpack.c.h.b16 %v300
    %v2010 = vunpack.c.l.b16 %v301
    %v2011 = vunpack.c.h.b16 %v301
    %v2012 = vunpack.c.l.b16 %v302
    %v2013 = vunpack.c.h.b16 %v302
    %v2014 = vunpack.c.l.b16 %v303
    %v2015 = vunpack.c.h.b16 %v303
    %v2016 = vunpack.c.l.b16 %v304
    %v2017 = vunpack.c.h.b16 %v304
    %v2018 = vunpack.c.l.b16 %v305
    %v2019 = vunpack.c.h.b16 %v305
    %v2020 = vunpack.c.l.b16 %v306
    %v2021 = vunpack.c.h.b16 %v306
    %v2022 = vunpack.c.l.b16 %v307
    %v2023 = vunpack.c.h.b16 %v307
    %v2024 = vunpack.c.l.b16 %v308
    %v2025 = vunpack.c.h.b16 %v308
    %v2026 = vunpack.c.l.b16 %v309
    %v2027 = vunpack.c.h.b16 %v309
    %v2028 = vunpack.c.l.b16 %v310
    %v2029 = vunpack.c.h.b16 %v310
    %v2030 = vunpack.c.l.b16 %v311
    %v2031 = vunpack.c.h.b16 %v311
    %v2032 = vunpack.c.l.b16 %v312
    %v2033 = vunpack.c.h.b16 %v312
    %v2034 = vunpack.c.l.b16 %v313
    %v2035 = vunpack.c.h.b16 %v313
    %v2036 = vunpack.c.l.b16 %v314
    %v2037 = vunpack.c.h.b16 %v314
    %v2038 = vunpack.c.l.b16 %v315
    %v2039 = vunpack.c.h.b16 %v315
    %v2040 = vunpack.c.l.b16 %v316
    %v2041 = vunpack.c.h.b16 %v316
    %v2042 = vunpack.c.l.b16 %v317
    %v2043 = vunpack.c.h.b16 %v317
    %v2044 = vunpack.c.l.b16 %v318
    %v2045 = vunpack.c.h.b16 %v318
    %v2046 = vunpack.c.l.b16 %v319
    %v2047 = vunpack.c.h.b16 %v319
    %v2048 = vunpack.c.l.b16 %v320
    %v2049 = vunpack.c.h.b16 %v320
    %v2050 = vunpack.c.l.b16 %v321
    %v2051 = vunpack.c.h.b16 %v321
    %v2052 = vunpack.c.l.b16 %v322
    %v2053 = vunpack.c.h.b16 %v322
    %v2054 = vunpack.c.l.b16 %v323
    %v2055 = vunpack.c.h.b16 %v323
    %v2056 = vunpack.c.l.b16 %v324
    %v2057 = vunpack.c.h.b16 %v324
    %v2058 = vunpack.c.l.b16 %v325
    %v2059 = vunpack.c.h.b16 %v325
    %v2060 = vunpack.c.l.b16 %v326
    %v2061 = vunpack.c.h.b16 %v326
    %v2062 = vunpack.c.l.b16 %v327
    %v2063 = vunpack.c.h.b16 %v327
    %v2064 = vunpack.c.l.b16 %v328
    %v2065 = vunpack.c.h.b16 %v328
    %v2066 = vunpack.c.l.b16 %v329
    %v2067 = vunpack.c.h.b16 %v329
    %v2068 = vunpack.c.l.b16 %v330
    %v2069 = vunpack.c.h.b16 %v330
    %v2070 = vunpack.c.l.b16 %v331
    %v2071 = vunpack.c.h.b16 %v331
    %v2072 = vunpack.c.l.b16 %v332
    %v2073 = vunpack.c.h.b16 %v332
    %v2074 = vunpack.c.l.b16 %v333
    %v2075 = vunpack.c.h.b16 %v333
    %v2076 = vunpack.c.l.b16 %v334
    %v2077 = vunpack.c.h.b16 %v334
    %v2078 = vunpack.c.l.b16 %v335
    %v2079 = vunpack.c.h.b16 %v335
    %v2080 = vunpack.c.l.b16 %v336
    %v2081 = vunpack.c.h.b16 %v336
    %v2082 = vunpack.c.l.b16 %v337
    %v2083 = vunpack.c.h.b16 %v337
    %v2084 = vunpack.c.l.b16 %v338
    %v2085 = vunpack.c.h.b16 %v338
    %v2086 = vunpack.c.l.b16 %v339
    %v2087 = vunpack.c.h.b16 %v339
    %v2088 = vunpack.c.l.b16 %v340
    %v2089 = vunpack.c.h.b16 %v340
    %v2090 = vunpack.c.l.b16 %v341
    %v2091 = vunpack.c.h.b16 %v341
    %v2092 = vunpack.c.l.b16 %v342
    %v2093 = vunpack.c.h.b16 %v342
    %v2094 = vunpack.c.l.b16 %v343
    %v2095 = vunpack.c.h.b16 %v343
    %v2096 = vunpack.c.l.b16 %v344
    %v2097 = vunpack.c.h.b16 %v344
    %v2098 = vunpack.c.l.b16 %v345
    %v2099 = vunpack.c.h.b16 %v345
    %v2100 = vunpack.c.l.b16 %v346
    %v2101 = vunpack.c.h.b16 %v346
    %v2102 = vunpack.c.l.b16 %v347
    %v2103 = vunpack.c.h.b16 %v347
    %v2104 = vunpack.c.l.b16 %v348
    %v2105 = vunpack.c.h.b16 %v348
    %v2106 = vunpack.c.l.b16 %v349
    %v2107 = vunpack.c.h.b16 %v349
    %v2108 = vunpack.c.l.b16 %v350
    %v2109 = vunpack.c.h.b16 %v350
    %v2110 = vunpack.c.l.b16 %v351
    %v2111 = vunpack.c.h.b16 %v351
    %v2112 = vunpack.c.l.b16 %v352
    %v2113 = vunpack.c.h.b16 %v352
    %v2114 = vunpack.c.l.b16 %v353
    %v2115 = vunpack.c.h.b16 %v353
    %v2116 = vunpack.c.l.b16 %v354
    %v2117 = vunpack.c.h.b16 %v354
    %v2118 = vunpack.c.l.b16 %v355
    %v2119 = vunpack.c.h.b16 %v355
    %v2120 = vunpack.c.l.b16 %v356
    %v2121 = vunpack.c.h.b16 %v356
    %v2122 = vunpack.c.l.b16 %v357
    %v2123 = vunpack.c.h.b16 %v357
    %v2124 = vunpack.c.l.b16 %v358
    %v2125 = vunpack.c.h.b16 %v358
    %v2126 = vunpack.c.l.b16 %v359
    %v2127 = vunpack.c.h.b16 %v359
    %v2128 = vunpack.c.l.b16 %v360
    %v2129 = vunpack.c.h.b16 %v360
    %v2130 = vunpack.c.l.b16 %v361
    %v2131 = vunpack.c.h.b16 %v361
    %v2132 = vunpack.c.l.b16 %v362
    %v2133 = vunpack.c.h.b16 %v362
    %v2134 = vunpack.c.l.b16 %v363
    %v2135 = vunpack.c.h.b16 %v363
    %v2136 = vunpack.c.l.b16 %v364
    %v2137 = vunpack.c.h.b16 %v364
    %v2138 = vunpack.c.l.b16 %v365
    %v2139 = vunpack.c.h.b16 %v365
    %v2140 = vunpack.c.l.b16 %v366
    %v2141 = vunpack.c.h.b16 %v366
    %v2142 = vunpack.c.l.b16 %v367
    %v2143 = vunpack.c.h.b16 %v367
    %v2144 = vunpack.c.l.b16 %v368
    %v2145 = vunpack.c.h.b16 %v368
    %v2146 = vunpack.c.l.b16 %v369
    %v2147 = vunpack.c.h.b16 %v369
    %v2148 = vunpack.c.l.b16 %v370
    %v2149 = vunpack.c.h.b16 %v370
    %v2150 = vunpack.c.l.b16 %v371
    %v2151 = vunpack.c.h.b16 %v371
    %v2152 = vunpack.c.l.b16 %v372
    %v2153 = vunpack.c.h.b16 %v372
    %v2154 = vunpack.c.l.b16 %v373
    %v2155 = vunpack.c.h.b16 %v373
    %v2156 = vunpack.c.l.b16 %v374
    %v2157 = vunpack.c.h.b16 %v374
    %v2158 = vunpack.c.l.b16 %v375
    %v2159 = vunpack.c.h.b16 %v375
    %v2160 = vunpack.c.l.b16 %v376
    %v2161 = vunpack.c.h.b16 %v376
    %v2162 = vunpack.c.l.b16 %v377
    %v2163 = vunpack.c.h.b16 %v377
    %v2164 = vunpack.c.l.b16 %v378
    %v2165 = vunpack.c.h.b16 %v378
    %v2166 = vunpack.c.l.b16 %v379
    %v2167 = vunpack.c.h.b16 %v379
    %v2168 = vunpack.c.l.b16 %v380
    %v2169 = vunpack.c.h.b16 %v380
    %v2170 = vunpack.c.l.b16 %v381
    %v2171 = vunpack.c.h.b16 %v381
    %v2172 = vunpack.c.l.b16 %v382
    %v2173 = vunpack.c.h.b16 %v382
    %v2174 = vunpack.c.l.b16 %v383
    %v2175 = vunpack.c.h.b16 %v383
    %v2176 = vunpack.c.l.b16 %v384
    %v2177 = vunpack.c.h.b16 %v384
    %v2178 = vunpack.c.l.b16 %v385
    %v2179 = vunpack.c.h.b16 %v385
    %v2180 = vunpack.c.l.b16 %v386
    %v2181 = vunpack.c.h.b16 %v386
    %v2182 = vunpack.c.l.b16 %v387
    %v2183 = vunpack.c.h.b16 %v387
    %v2184 = vunpack.c.l.b16 %v388
    %v2185 = vunpack.c.h.b16 %v388
    %v2186 = vunpack.c.l.b16 %v389
    %v2187 = vunpack.c.h.b16 %v389
    %v2188 = vunpack.c.l.b16 %v390
    %v2189 = vunpack.c.h.b16 %v390
    %v2190 = vunpack.c.l.b16 %v391
    %v2191 = vunpack.c.h.b16 %v391
    %v2192 = vunpack.c.l.b16 %v392
    %v2193 = vunpack.c.h.b16 %v392
    %v2194 = vunpack.c.l.b16 %v393
    %v2195 = vunpack.c.h.b16 %v393
    %v2196 = vunpack.c.l.b16 %v394
    %v2197 = vunpack.c.h.b16 %v394
    %v2198 = vunpack.c.l.b16 %v395
    %v2199 = vunpack.c.h.b16 %v395
    %v2200 = vunpack.c.l.b16 %v396
    %v2201 = vunpack.c.h.b16 %v396
    %v2202 = vunpack.c.l.b16 %v397
    %v2203 = vunpack.c.h.b16 %v397
    %v2204 = vunpack.c.l.b16 %v398
    %v2205 = vunpack.c.h.b16 %v398
    %v2206 = vunpack.c.l.b16 %v399
    %v2207 = vunpack.c.h.b16 %v399
    %v2208 = vunpack.c.l.b16 %v400
    %v2209 = vunpack.c.h.b16 %v400
    %v2210 = vunpack.c.l.b16 %v401
    %v2211 = vunpack.c.h.b16 %v401
    %v2212 = vunpack.c.l.b16 %v402
    %v2213 = vunpack.c.h.b16 %v402
    %v2214 = vunpack.c.l.b16 %v403
    %v2215 = vunpack.c.h.b16 %v403
    %v2216 = vunpack.c.l.b16 %v404
    %v2217 = vunpack.c.h.b16 %v404
    %v2218 = vunpack.c.l.b16 %v405
    %v2219 = vunpack.c.h.b16 %v405
    %v2220 = vunpack.c.l.b16 %v406
    %v2221 = vunpack.c.h.b16 %v406
    %v2222 = vunpack.c.l.b16 %v407
    %v2223 = vunpack.c.h.b16 %v407
    %v2224 = vunpack.c.l.b16 %v408
    %v2225 = vunpack.c.h.b16 %v408
    %v2226 = vunpack.c.l.b16 %v409
    %v2227 = vunpack.c.h.b16 %v409
    %v2228 = vunpack.c.l.b16 %v410
    %v2229 = vunpack.c.h.b16 %v410
    %v2230 = vunpack.c.l.b16 %v411
    %v2231 = vunpack.c.h.b16 %v411
    %v2232 = vunpack.c.l.b16 %v412
    %v2233 = vunpack.c.h.b16 %v412
    %v2234 = vunpack.c.l.b16 %v413
    %v2235 = vunpack.c.h.b16 %v413
    %v2236 = vunpack.c.l.b16 %v414
    %v2237 = vunpack.c.h.b16 %v414
    %v2238 = vunpack.c.l.b16 %v415
    %v2239 = vunpack.c.h.b16 %v415
    %v2240 = vunpack.c.l.b16 %v416
    %v2241 = vunpack.c.h.b16 %v416
    %v2242 = vunpack.c.l.b16 %v417
    %v2243 = vunpack.c.h.b16 %v417
    %v2244 = vunpack.c.l.b16 %v418
    %v2245 = vunpack.c.h.b16 %v418
    %v2246 = vunpack.c.l.b16 %v419
    %v2247 = vunpack.c.h.b16 %v419
    %v2248 = vunpack.c.l.b16 %v420
    %v2249 = vunpack.c.h.b16 %v420
    %v2250 = vunpack.c.l.b16 %v421
    %v2251 = vunpack.c.h.b16 %v421
    %v2252 = vunpack.c.l.b16 %v422
    %v2253 = vunpack.c.h.b16 %v422
    %v2254 = vunpack.c.l.b16 %v423
    %v2255 = vunpack.c.h.b16 %v423
    %v2256 = vunpack.c.l.b16 %v424
    %v2257 = vunpack.c.h.b16 %v424
    %v2258 = vunpack.c.l.b16 %v425
    %v2259 = vunpack.c.h.b16 %v425
    %v2260 = vunpack.c.l.b16 %v426
    %v2261 = vunpack.c.h.b16 %v426
    %v2262 = vunpack.c.l.b16 %v427
    %v2263 = vunpack.c.h.b16 %v427
    %v2264 = vunpack.c.l.b16 %v428
    %v2265 = vunpack.c.h.b16 %v428
    %v2266 = vunpack.c.l.b16 %v429
    %v2267 = vunpack.c.h.b16 %v429
    %v2268 = vunpack.c.l.b16 %v430
    %v2269 = vunpack.c.h.b16 %v430
    %v2270 = vunpack.c.l.b16 %v431
    %v2271 = vunpack.c.h.b16 %v431
    %v2272 = vunpack.c.l.b16 %v432
    %v2273 = vunpack.c.h.b16 %v432
    %v2274 = vunpack.c.l.b16 %v433
    %v2275 = vunpack.c.h.b16 %v433
    %v2276 = vunpack.c.l.b16 %v434
    %v2277 = vunpack.c.h.b16 %v434
    %v2278 = vunpack.c.l.b16 %v435
    %v2279 = vunpack.c.h.b16 %v435
    %v2280 = vunpack.c.l.b16 %v436
    %v2281 = vunpack.c.h.b16 %v436
    %v2282 = vunpack.c.l.b16 %v437
    %v2283 = vunpack.c.h.b16 %v437
    %v2284 = vunpack.c.l.b16 %v438
    %v2285 = vunpack.c.h.b16 %v438
    %v2286 = vunpack.c.l.b16 %v439
    %v2287 = vunpack.c.h.b16 %v439
    %v2288 = vunpack.c.l.b16 %v440
    %v2289 = vunpack.c.h.b16 %v440
    %v2290 = vunpack.c.l.b16 %v441
    %v2291 = vunpack.c.h.b16 %v441
    %v2292 = vunpack.c.l.b16 %v442
    %v2293 = vunpack.c.h.b16 %v442
    %v2294 = vunpack.c.l.b16 %v443
    %v2295 = vunpack.c.h.b16 %v443
    %v2296 = vunpack.c.l.b16 %v444
    %v2297 = vunpack.c.h.b16 %v444
    %v2298 = vunpack.c.l.b16 %v445
    %v2299 = vunpack.c.h.b16 %v445
    %v2300 = vunpack.c.l.b16 %v446
    %v2301 = vunpack.c.h.b16 %v446
    %v2302 = vunpack.c.l.b16 %v447
    %v2303 = vunpack.c.h.b16 %v447
    %v2304 = vunpack.c.l.b16 %v448
    %v2305 = vunpack.c.h.b16 %v448
    %v2306 = vunpack.c.l.b16 %v449
    %v2307 = vunpack.c.h.b16 %v449
    %v2308 = vunpack.c.l.b16 %v450
    %v2309 = vunpack.c.h.b16 %v450
    %v2310 = vunpack.c.l.b16 %v451
    %v2311 = vunpack.c.h.b16 %v451
    %v2312 = vunpack.c.l.b16 %v452
    %v2313 = vunpack.c.h.b16 %v452
    %v2314 = vunpack.c.l.b16 %v453
    %v2315 = vunpack.c.h.b16 %v453
    %v2316 = vunpack.c.l.b16 %v454
    %v2317 = vunpack.c.h.b16 %v454
    %v2318 = vunpack.c.l.b16 %v455
    %v2319 = vunpack.c.h.b16 %v455
    %v2320 = vunpack.c.l.b16 %v456
    %v2321 = vunpack.c.h.b16 %v456
    %v2322 = vunpack.c.l.b16 %v457
    %v2323 = vunpack.c.h.b16 %v457
    %v2324 = vunpack.c.l.b16 %v458
    %v2325 = vunpack.c.h.b16 %v458
    %v2326 = vunpack.c.l.b16 %v459
    %v2327 = vunpack.c.h.b16 %v459
    %v2328 = vunpack.c.l.b16 %v460
    %v2329 = vunpack.c.h.b16 %v460
    %v2330 = vunpack.c.l.b16 %v461
    %v2331 = vunpack.c.h.b16 %v461
    %v2332 = vunpack.c.l.b16 %v462
    %v2333 = vunpack.c.h.b16 %v462
    %v2334 = vunpack.c.l.b16 %v463
    %v2335 = vunpack.c.h.b16 %v463
    %v2336 = vunpack.c.l.b16 %v464
    %v2337 = vunpack.c.h.b16 %v464
    %v2338 = vunpack.c.l.b16 %v465
    %v2339 = vunpack.c.h.b16 %v465
    %v2340 = vunpack.c.l.b16 %v466
    %v2341 = vunpack.c.h.b16 %v466
    %v2342 = vunpack.c.l.b16 %v467
    %v2343 = vunpack.c.h.b16 %v467
    %v2344 = vunpack.c.l.b16 %v468
    %v2345 = vunpack.c.h.b16 %v468
    %v2346 = vunpack.c.l.b16 %v469
    %v2347 = vunpack.c.h.b16 %v469
    %v2348 = vunpack.c.l.b16 %v470
    %v2349 = vunpack.c.h.b16 %v470
    %v2350 = vunpack.c.l.b16 %v471
    %v2351 = vunpack.c.h.b16 %v471
    %v2352 = vunpack.c.l.b16 %v472
    %v2353 = vunpack.c.h.b16 %v472
    %v2354 = vunpack.c.l.b16 %v473
    %v2355 = vunpack.c.h.b16 %v473
    %v2356 = vunpack.c.l.b16 %v474
    %v2357 = vunpack.c.h.b16 %v474
    %v2358 = vunpack.c.l.b16 %v475
    %v2359 = vunpack.c.h.b16 %v475
    %v2360 = vunpack.c.l.b16 %v476
    %v2361 = vunpack.c.h.b16 %v476
    %v2362 = vunpack.c.l.b16 %v477
    %v2363 = vunpack.c.h.b16 %v477
    %v2364 = vunpack.c.l.b16 %v478
    %v2365 = vunpack.c.h.b16 %v478
    %v2366 = vunpack.c.l.b16 %v479
    %v2367 = vunpack.c.h.b16 %v479
    %v2368 = vunpack.c.l.b16 %v480
    %v2369 = vunpack.c.h.b16 %v480
    %v2370 = vunpack.c.l.b16 %v481
    %v2371 = vunpack.c.h.b16 %v481
    %v2372 = vunpack.c.l.b16 %v482
    %v2373 = vunpack.c.h.b16 %v482
    %v2374 = vunpack.c.l.b16 %v483
    %v2375 = vunpack.c.h.b16 %v483
    %v2376 = vunpack.c.l.b16 %v484
    %v2377 = vunpack.c.h.b16 %v484
    %v2378 = vunpack.c.l.b16 %v485
    %v2379 = vunpack.c.h.b16 %v485
    %v2380 = vunpack.c.l.b16 %v486
    %v2381 = vunpack.c.h.b16 %v486
    %v2382 = vunpack.c.l.b16 %v487
    %v2383 = vunpack.c.h.b16 %v487
    %v2384 = vunpack.c.l.b16 %v488
    %v2385 = vunpack.c.h.b16 %v488
    %v2386 = vunpack.c.l.b16 %v489
    %v2387 = vunpack.c.h.b16 %v489
    %v2388 = vunpack.c.l.b16 %v490
    %v2389 = vunpack.c.h.b16 %v490
    %v2390 = vunpack.c.l.b16 %v491
    %v2391 = vunpack.c.h.b16 %v491
    %v2392 = vunpack.c.l.b16 %v492
    %v2393 = vunpack.c.h.b16 %v492
    %v2394 = vunpack.c.l.b16 %v493
    %v2395 = vunpack.c.h.b16 %v493
    %v2396 = vunpack.c.l.b16 %v494
    %v2397 = vunpack.c.h.b16 %v494
    %v2398 = vunpack.c.l.b16 %v495
    %v2399 = vunpack.c.h.b16 %v495
    %v2400 = vunpack.c.l.b16 %v496
    %v2401 = vunpack.c.h.b16 %v496
    %v2402 = vunpack.c.l.b16 %v497
    %v2403 = vunpack.c.h.b16 %v497
    %v2404 = vunpack.c.l.b16 %v498
    %v2405 = vunpack.c.h.b16 %v498
    %v2406 = vunpack.c.l.b16 %v499
    %v2407 = vunpack.c.h.b16 %v499
    %v2408 = vunpack.c.l.b16 %v500
    %v2409 = vunpack.c.h.b16 %v500
    %v2410 = vunpack.c.l.b16 %v501
    %v2411 = vunpack.c.h.b16 %v501
    %v2412 = vunpack.c.l.b16 %v502
    %v2413 = vunpack.c.h.b16 %v502
    %v2414 = vunpack.c.l.b16 %v503
    %v2415 = vunpack.c.h.b16 %v503
    %v2416 = vunpack.c.l.b16 %v504
    %v2417 = vunpack.c.h.b16 %v504
    %v2418 = vunpack.c.l.b16 %v505
    %v2419 = vunpack.c.h.b16 %v505
    %v2420 = vunpack.c.l.b16 %v506
    %v2421 = vunpack.c.h.b16 %v506
    %v2422 = vunpack.c.l.b16 %v507
    %v2423 = vunpack.c.h.b16 %v507
    %v2424 = vunpack.c.l.b16 %v508
    %v2425 = vunpack.c.h.b16 %v508
    %v2426 = vunpack.c.l.b16 %v509
    %v2427 = vunpack.c.h.b16 %v509
    %v2428 = vunpack.c.l.b16 %v510
    %v2429 = vunpack.c.h.b16 %v510
    %v2430 = vunpack.c.l.b16 %v511
    %v2431 = vunpack.c.h.b16 %v511
    %v2432 = vunpack.c.l.b16 %v512
    %v2433 = vunpack.c.h.b16 %v512
    %v2434 = vunpack.c.l.b16 %v513
    %v2435 = vunpack.c.h.b16 %v513
    %v2436 = vunpack.c.l.b16 %v514
    %v2437 = vunpack.c.h.b16 %v514
    %v2438 = vunpack.c.l.b16 %v515
    %v2439 = vunpack.c.h.b16 %v515
    %v2440 = vunpack.c.l.b16 %v516
    %v2441 = vunpack.c.h.b16 %v516
    %v2442 = vunpack.c.l.b16 %v517
    %v2443 = vunpack.c.h.b16 %v517
    %v2444 = vunpack.c.l.b16 %v518
    %v2445 = vunpack.c.h.b16 %v518
    %v2446 = vunpack.c.l.b16 %v519
    %v2447 = vunpack.c.h.b16 %v519
    %v2448 = vunpack.c.l.b16 %v520
    %v2449 = vunpack.c.h.b16 %v520
    %v2450 = vunpack.c.l.b16 %v521
    %v2451 = vunpack.c.h.b16 %v521
    %v2452 = vunpack.c.l.b16 %v522
    %v2453 = vunpack.c.h.b16 %v522
    %v2454 = vunpack.c.l.b16 %v523
    %v2455 = vunpack.c.h.b16 %v523
    %v2456 = vunpack.c.l.b16 %v524
    %v2457 = vunpack.c.h.b16 %v524
    %v2458 = vunpack.c.l.b16 %v525
    %v2459 = vunpack.c.h.b16 %v525
    %v2460 = vunpack.c.l.b16 %v526
    %v2461 = vunpack.c.h.b16 %v526
    %v2462 = vunpack.c.l.b16 %v527
    %v2463 = vunpack.c.h.b16 %v527
    %v2464 = vunpack.c.l.b16 %v528
    %v2465 = vunpack.c.h.b16 %v528
    %v2466 = vunpack.c.l.b16 %v529
    %v2467 = vunpack.c.h.b16 %v529
    %v2468 = vunpack.c.l.b16 %v530
    %v2469 = vunpack.c.h.b16 %v530
    %v2470 = vunpack.c.l.b16 %v531
    %v2471 = vunpack.c.h.b16 %v531
    %v2472 = vunpack.c.l.b16 %v532
    %v2473 = vunpack.c.h.b16 %v532
    %v2474 = vunpack.c.l.b16 %v533
    %v2475 = vunpack.c.h.b16 %v533
    %v2476 = vunpack.c.l.b16 %v534
    %v2477 = vunpack.c.h.b16 %v534
    %v2478 = vunpack.c.l.b16 %v535
    %v2479 = vunpack.c.h.b16 %v535
    %v2480 = vunpack.c.l.b16 %v536
    %v2481 = vunpack.c.h.b16 %v536
    %v2482 = vunpack.c.l.b16 %v537
    %v2483 = vunpack.c.h.b16 %v537
    %v2484 = vunpack.c.l.b16 %v538
    %v2485 = vunpack.c.h.b16 %v538
    %v2486 = vunpack.c.l.b16 %v539
    %v2487 = vunpack.c.h.b16 %v539
    %v2488 = vunpack.c.l.b16 %v540
    %v2489 = vunpack.c.h.b16 %v540
    %v2490 = vunpack.c.l.b16 %v541
    %v2491 = vunpack.c.h.b16 %v541
    %v2492 = vunpack.c.l.b16 %v542
    %v2493 = vunpack.c.h.b16 %v542
    %v2494 = vunpack.c.l.b16 %v543
    %v2495 = vunpack.c.h.b16 %v543
    %v2496 = vunpack.c.l.b16 %v544
    %v2497 = vunpack.c.h.b16 %v544
    %v2498 = vunpack.c.l.b16 %v545
    %v2499 = vunpack.c.h.b16 %v545
    %v2500 = vunpack.c.l.b16 %v546
    %v2501 = vunpack.c.h.b16 %v546
    %v2502 = vunpack.c.l.b16 %v547
    %v2503 = vunpack.c.h.b16 %v547
    %v2504 = vunpack.c.l.b16 %v548
    %v2505 = vunpack.c.h.b16 %v548
    %v2506 = vunpack.c.l.b16 %v549
    %v2507 = vunpack.c.h.b16 %v549
    %v2508 = vunpack.c.l.b16 %v550
    %v2509 = vunpack.c.h.b16 %v550
    %v2510 = vunpack.c.l.b16 %v551
    %v2511 = vunpack.c.h.b16 %v551
    %v2512 = vunpack.c.l.b16 %v552
    %v2513 = vunpack.c.h.b16 %v552
    %v2514 = vunpack.c.l.b16 %v553
    %v2515 = vunpack.c.h.b16 %v553
    %v2516 = vunpack.c.l.b16 %v554
    %v2517 = vunpack.c.h.b16 %v554
    %v2518 = vunpack.c.l.b16 %v555
    %v2519 = vunpack.c.h.b16 %v555
    %v2520 = vunpack.c.l.b16 %v556
    %v2521 = vunpack.c.h.b16 %v556
    %v2522 = vunpack.c.l.b16 %v557
    %v2523 = vunpack.c.h.b16 %v557
    %v2524 = vunpack.c.l.b16 %v558
    %v2525 = vunpack.c.h.b16 %v558
    %v2526 = vunpack.c.l.b16 %v559
    %v2527 = vunpack.c.h.b16 %v559
    %v2528 = vunpack.c.l.b16 %v560
    %v2529 = vunpack.c.h.b16 %v560
    %v2530 = vunpack.c.l.b16 %v561
    %v2531 = vunpack.c.h.b16 %v561
    %v2532 = vunpack.c.l.b16 %v562
    %v2533 = vunpack.c.h.b16 %v562
    %v2534 = vunpack.c.l.b16 %v563
    %v2535 = vunpack.c.h.b16 %v563
    %v2536 = vunpack.c.l.b16 %v564
    %v2537 = vunpack.c.h.b16 %v564
    %v2538 = vunpack.c.l.b16 %v565
    %v2539 = vunpack.c.h.b16 %v565
    %v2540 = vunpack.c.l.b16 %v566
    %v2541 = vunpack.c.h.b16 %v566
    %v2542 = vunpack.c.l.b16 %v567
    %v2543 = vunpack.c.h.b16 %v567
    %v2544 = vunpack.c.l.b16 %v568
    %v2545 = vunpack.c.h.b16 %v568
    %v2546 = vunpack.c.l.b16 %v569
    %v2547 = vunpack.c.h.b16 %v569
    %v2548 = vunpack.c.l.b16 %v570
    %v2549 = vunpack.c.h.b16 %v570
    %v2550 = vunpack.c.l.b16 %v571
    %v2551 = vunpack.c.h.b16 %v571
    %v2552 = vunpack.c.l.b16 %v572
    %v2553 = vunpack.c.h.b16 %v572
    %v2554 = vunpack.c.l.b16 %v573
    %v2555 = vunpack.c.h.b16 %v573
    %v2556 = vunpack.c.l.b16 %v574
    %v2557 = vunpack.c.h.b16 %v574
    %v2558 = vunpack.c.l.b16 %v575
    %v2559 = vunpack.c.h.b16 %v575
    %v2560 = vunpack.c.l.b16 %v576
    %v2561 = vunpack.c.h.b16 %v576
    %v2562 = vunpack.c.l.b16 %v577
    %v2563 = vunpack.c.h.b16 %v577
    %v2564 = vunpack.c.l.b16 %v578
    %v2565 = vunpack.c.h.b16 %v578
    %v2566 = vunpack.c.l.b16 %v579
    %v2567 = vunpack.c.h.b16 %v579
    %v2568 = vunpack.c.l.b16 %v580
    %v2569 = vunpack.c.h.b16 %v580
    %v2570 = vunpack.c.l.b16 %v581
    %v2571 = vunpack.c.h.b16 %v581
    %v2572 = vunpack.c.l.b16 %v582
    %v2573 = vunpack.c.h.b16 %v582
    %v2574 = vunpack.c.l.b16 %v583
    %v2575 = vunpack.c.h.b16 %v583
    %v2576 = vunpack.c.l.b16 %v584
    %v2577 = vunpack.c.h.b16 %v584
    %v2578 = vunpack.c.l.b16 %v585
    %v2579 = vunpack.c.h.b16 %v585
    %v2580 = vunpack.c.l.b16 %v586
    %v2581 = vunpack.c.h.b16 %v586
    %v2582 = vunpack.c.l.b16 %v587
    %v2583 = vunpack.c.h.b16 %v587
    %v2584 = vunpack.c.l.b16 %v588
    %v2585 = vunpack.c.h.b16 %v588
    %v2586 = vunpack.c.l.b16 %v589
    %v2587 = vunpack.c.h.b16 %v589
    %v2588 = vunpack.c.l.b16 %v590
    %v2589 = vunpack.c.h.b16 %v590
    %v2590 = vunpack.c.l.b16 %v591
    %v2591 = vunpack.c.h.b16 %v591
    %v2592 = vunpack.c.l.b16 %v592
    %v2593 = vunpack.c.h.b16 %v592
    %v2594 = vunpack.c.l.b16 %v593
    %v2595 = vunpack.c.h.b16 %v593
    %v2596 = vunpack.c.l.b16 %v594
    %v2597 = vunpack.c.h.b16 %v594
    %v2598 = vunpack.c.l.b16 %v595
    %v2599 = vunpack.c.h.b16 %v595
    %v2600 = vunpack.c.l.b16 %v596
    %v2601 = vunpack.c.h.b16 %v596
    %v2602 = vunpack.c.l.b16 %v597
    %v2603 = vunpack.c.h.b16 %v597
    %v2604 = vunpack.c.l.b16 %v598
    %v2605 = vunpack.c.h.b16 %v598
    %v2606 = vunpack.c.l.b16 %v599
    %v2607 = vunpack.c.h.b16 %v599
    %v2608 = vunpack.c.l.b16 %v600
    %v2609 = vunpack.c.h.b16 %v600
    %v2610 = vunpack.c.l.b16 %v601
    %v2611 = vunpack.c.h.b16 %v601
    %v2612 = vunpack.c.l.b16 %v602
    %v2613 = vunpack.c.h.b16 %v602
    %v2614 = vunpack.c.l.b16 %v603
    %v2615 = vunpack.c.h.b16 %v603
    %v2616 = vunpack.c.l.b16 %v604
    %v2617 = vunpack.c.h.b16 %v604
    %v2618 = vunpack.c.l.b16 %v605
    %v2619 = vunpack.c.h.b16 %v605
    %v2620 = vunpack.c.l.b16 %v606
    %v2621 = vunpack.c.h.b16 %v606
    %v2622 = vunpack.c.l.b16 %v607
    %v2623 = vunpack.c.h.b16 %v607
    %v2624 = vunpack.c.l.b16 %v608
    %v2625 = vunpack.c.h.b16 %v608
    %v2626 = vunpack.c.l.b16 %v609
    %v2627 = vunpack.c.h.b16 %v609
    %v2628 = vunpack.c.l.b16 %v610
    %v2629 = vunpack.c.h.b16 %v610
    %v2630 = vunpack.c.l.b16 %v611
    %v2631 = vunpack.c.h.b16 %v611
    %v2632 = vunpack.c.l.b16 %v612
    %v2633 = vunpack.c.h.b16 %v612
    %v2634 = vunpack.c.l.b16 %v613
    %v2635 = vunpack.c.h.b16 %v613
    %v2636 = vunpack.c.l.b16 %v614
    %v2637 = vunpack.c.h.b16 %v614
    %v2638 = vunpack.c.l.b16 %v615
    %v2639 = vunpack.c.h.b16 %v615
    %v2640 = vunpack.c.l.b16 %v616
    %v2641 = vunpack.c.h.b16 %v616
    %v2642 = vunpack.c.l.b16 %v617
    %v2643 = vunpack.c.h.b16 %v617
    %v2644 = vunpack.c.l.b16 %v618
    %v2645 = vunpack.c.h.b16 %v618
    %v2646 = vunpack.c.l.b16 %v619
    %v2647 = vunpack.c.h.b16 %v619
    %v2648 = vunpack.c.l.b16 %v620
    %v2649 = vunpack.c.h.b16 %v620
    %v2650 = vunpack.c.l.b16 %v621
    %v2651 = vunpack.c.h.b16 %v621
    %v2652 = vunpack.c.l.b16 %v622
    %v2653 = vunpack.c.h.b16 %v622
    %v2654 = vunpack.c.l.b16 %v623
    %v2655 = vunpack.c.h.b16 %v623
    %v2656 = vunpack.c.l.b16 %v624
    %v2657 = vunpack.c.h.b16 %v624
    %v2658 = vunpack.c.l.b16 %v625
    %v2659 = vunpack.c.h.b16 %v625
    %v2660 = vunpack.c.l.b16 %v626
    %v2661 = vunpack.c.h.b16 %v626
    %v2662 = vunpack.c.l.b16 %v627
    %v2663 = vunpack.c.h.b16 %v627
    %v2664 = vunpack.c.l.b16 %v628
    %v2665 = vunpack.c.h.b16 %v628
    %v2666 = vunpack.c.l.b16 %v629
    %v2667 = vunpack.c.h.b16 %v629
    %v2668 = vunpack.c.l.b16 %v630
    %v2669 = vunpack.c.h.b16 %v630
    %v2670 = vunpack.c.l.b16 %v631
    %v2671 = vunpack.c.h.b16 %v631
    %v2672 = vunpack.c.l.b16 %v632
    %v2673 = vunpack.c.h.b16 %v632
    %v2674 = vunpack.c.l.b16 %v633
    %v2675 = vunpack.c.h.b16 %v633
    %v2676 = vunpack.c.l.b16 %v634
    %v2677 = vunpack.c.h.b16 %v634
    %v2678 = vunpack.c.l.b16 %v635
    %v2679 = vunpack.c.h.b16 %v635
    %v2680 = vunpack.c.l.b16 %v636
    %v2681 = vunpack.c.h.b16 %v636
    %v2682 = vunpack.c.l.b16 %v637
    %v2683 = vunpack.c.h.b16 %v637
    %v2684 = vunpack.c.l.b16 %v638
    %v2685 = vunpack.c.h.b16 %v638
    %v2686 = vunpack.c.l.b16 %v639
    %v2687 = vunpack.c.h.b16 %v639
    %v2688 = vunpack.c.l.b16 %v640
    %v2689 = vunpack.c.h.b16 %v640
    %v2690 = vunpack.c.l.b16 %v641
    %v2691 = vunpack.c.h.b16 %v641
    %v2692 = vunpack.c.l.b16 %v642
    %v2693 = vunpack.c.h.b16 %v642
    %v2694 = vunpack.c.l.b16 %v643
    %v2695 = vunpack.c.h.b16 %v643
    %v2696 = vunpack.c.l.b16 %v644
    %v2697 = vunpack.c.h.b16 %v644
    %v2698 = vunpack.c.l.b16 %v645
    %v2699 = vunpack.c.h.b16 %v645
    %v2700 = vunpack.c.l.b16 %v646
    %v2701 = vunpack.c.h.b16 %v646
    %v2702 = vunpack.c.l.b16 %v647
    %v2703 = vunpack.c.h.b16 %v647
    %v2704 = vunpack.c.l.b16 %v648
    %v2705 = vunpack.c.h.b16 %v648
    %v2706 = vunpack.c.l.b16 %v649
    %v2707 = vunpack.c.h.b16 %v649
    %v2708 = vunpack.c.l.b16 %v650
    %v2709 = vunpack.c.h.b16 %v650
    %v2710 = vunpack.c.l.b16 %v651
    %v2711 = vunpack.c.h.b16 %v651
    %v2712 = vunpack.c.l.b16 %v652
    %v2713 = vunpack.c.h.b16 %v652
    %v2714 = vunpack.c.l.b16 %v653
    %v2715 = vunpack.c.h.b16 %v653
    %v2716 = vunpack.c.l.b16 %v654
    %v2717 = vunpack.c.h.b16 %v654
    %v2718 = vunpack.c.l.b16 %v655
    %v2719 = vunpack.c.h.b16 %v655
    %v2720 = vunpack.c.l.b16 %v656
    %v2721 = vunpack.c.h.b16 %v656
    %v2722 = vunpack.c.l.b16 %v657
    %v2723 = vunpack.c.h.b16 %v657
    %v2724 = vunpack.c.l.b16 %v658
    %v2725 = vunpack.c.h.b16 %v658
    %v2726 = vunpack.c.l.b16 %v659
    %v2727 = vunpack.c.h.b16 %v659
    %v2728 = vunpack.c.l.b16 %v660
    %v2729 = vunpack.c.h.b16 %v660
    %v2730 = vunpack.c.l.b16 %v661
    %v2731 = vunpack.c.h.b16 %v661
    %v2732 = vunpack.c.l.b16 %v662
    %v2733 = vunpack.c.h.b16 %v662
    %v2734 = vunpack.c.l.b16 %v663
    %v2735 = vunpack.c.h.b16 %v663
    %v2736 = vunpack.c.l.b16 %v664
    %v2737 = vunpack.c.h.b16 %v664
    %v2738 = vunpack.c.l.b16 %v665
    %v2739 = vunpack.c.h.b16 %v665
    %v2740 = vunpack.c.l.b16 %v666
    %v2741 = vunpack.c.h.b16 %v666
    %v2742 = vunpack.c.l.b16 %v667
    %v2743 = vunpack.c.h.b16 %v667
    %v2744 = vunpack.c.l.b16 %v668
    %v2745 = vunpack.c.h.b16 %v668
    %v2746 = vunpack.c.l.b16 %v669
    %v2747 = vunpack.c.h.b16 %v669
    %v2748 = vunpack.c.l.b16 %v670
    %v2749 = vunpack.c.h.b16 %v670
    %v2750 = vunpack.c.l.b16 %v671
    %v2751 = vunpack.c.h.b16 %v671
    %v2752 = vunpack.c.l.b16 %v672
    %v2753 = vunpack.c.h.b16 %v672
    %v2754 = vunpack.c.l.b16 %v673
    %v2755 = vunpack.c.h.b16 %v673
    %v2756 = vunpack.c.l.b16 %v674
    %v2757 = vunpack.c.h.b16 %v674
    %v2758 = vunpack.c.l.b16 %v675
    %v2759 = vunpack.c.h.b16 %v675
    %v2760 = vunpack.c.l.b16 %v676
    %v2761 = vunpack.c.h.b16 %v676
    %v2762 = vunpack.c.l.b16 %v677
    %v2763 = vunpack.c.h.b16 %v677
    %v2764 = vunpack.c.l.b16 %v678
    %v2765 = vunpack.c.h.b16 %v678
    %v2766 = vunpack.c.l.b16 %v679
    %v2767 = vunpack.c.h.b16 %v679
    %v2768 = vunpack.c.l.b16 %v680
    %v2769 = vunpack.c.h.b16 %v680
    %v2770 = vunpack.c.l.b16 %v681
    %v2771 = vunpack.c.h.b16 %v681
    %v2772 = vunpack.c.l.b16 %v682
    %v2773 = vunpack.c.h.b16 %v682
    %v2774 = vunpack.c.l.b16 %v683
    %v2775 = vunpack.c.h.b16 %v683
    %v2776 = vunpack.c.l.b16 %v684
    %v2777 = vunpack.c.h.b16 %v684
    %v2778 = vunpack.c.l.b16 %v685
    %v2779 = vunpack.c.h.b16 %v685
    %v2780 = vunpack.c.l.b16 %v686
    %v2781 = vunpack.c.h.b16 %v686
    %v2782 = vunpack.c.l.b16 %v687
    %v2783 = vunpack.c.h.b16 %v687
    %v2784 = vunpack.c.l.b16 %v688
    %v2785 = vunpack.c.h.b16 %v688
    %v2786 = vunpack.c.l.b16 %v689
    %v2787 = vunpack.c.h.b16 %v689
    %v2788 = vunpack.c.l.b16 %v690
    %v2789 = vunpack.c.h.b16 %v690
    %v2790 = vunpack.c.l.b16 %v691
    %v2791 = vunpack.c.h.b16 %v691
    %v2792 = vunpack.c.l.b16 %v692
    %v2793 = vunpack.c.h.b16 %v692
    %v2794 = vunpack.c.l.b16 %v693
    %v2795 = vunpack.c.h.b16 %v693
    %v2796 = vunpack.c.l.b16 %v694
    %v2797 = vunpack.c.h.b16 %v694
    %v2798 = vunpack.c.l.b16 %v695
    %v2799 = vunpack.c.h.b16 %v695
    %v2800 = vunpack.c.l.b16 %v696
    %v2801 = vunpack.c.h.b16 %v696
    %v2802 = vunpack.c.l.b16 %v697
    %v2803 = vunpack.c.h.b16 %v697
    %v2804 = vunpack.c.l.b16 %v698
    %v2805 = vunpack.c.h.b16 %v698
    %v2806 = vunpack.c.l.b16 %v699
    %v2807 = vunpack.c.h.b16 %v699
    %v2808 = vunpack.c.l.b16 %v700
    %v2809 = vunpack.c.h.b16 %v700
    %v2810 = vunpack.c.l.b16 %v701
    %v2811 = vunpack.c.h.b16 %v701
    %v2812 = vunpack.c.l.b16 %v702
    %v2813 = vunpack.c.h.b16 %v702
    %v2814 = vunpack.c.l.b16 %v703
    %v2815 = vunpack.c.h.b16 %v703
    %v2816 = vunpack.c.l.b16 %v704
    %v2817 = vunpack.c.h.b16 %v704
    %v2818 = vunpack.c.l.b16 %v705
    %v2819 = vunpack.c.h.b16 %v705
    %v2820 = vunpack.c.l.b16 %v706
    %v2821 = vunpack.c.h.b16 %v706
    %v2822 = vunpack.c.l.b16 %v707
    %v2823 = vunpack.c.h.b16 %v707
    %v2824 = vunpack.c.l.b16 %v708
    %v2825 = vunpack.c.h.b16 %v708
    %v2826 = vunpack.c.l.b16 %v709
    %v2827 = vunpack.c.h.b16 %v709
    %v2828 = vunpack.c.l.b16 %v710
    %v2829 = vunpack.c.h.b16 %v710
    %v2830 = vunpack.c.l.b16 %v711
    %v2831 = vunpack.c.h.b16 %v711
    %v2832 = vunpack.c.l.b16 %v712
    %v2833 = vunpack.c.h.b16 %v712
    %v2834 = vunpack.c.l.b16 %v713
    %v2835 = vunpack.c.h.b16 %v713
    %v2836 = vunpack.c.l.b16 %v714
    %v2837 = vunpack.c.h.b16 %v714
    %v2838 = vunpack.c.l.b16 %v715
    %v2839 = vunpack.c.h.b16 %v715
    %v2840 = vunpack.c.l.b16 %v716
    %v2841 = vunpack.c.h.b16 %v716
    %v2842 = vunpack.c.l.b16 %v717
    %v2843 = vunpack.c.h.b16 %v717
    %v2844 = vunpack.c.l.b16 %v718
    %v2845 = vunpack.c.h.b16 %v718
    %v2846 = vunpack.c.l.b16 %v719
    %v2847 = vunpack.c.h.b16 %v719
    %v2848 = vunpack.c.l.b16 %v720
    %v2849 = vunpack.c.h.b16 %v720
    %v2850 = vunpack.c.l.b16 %v721
    %v2851 = vunpack.c.h.b16 %v721
    %v2852 = vunpack.c.l.b16 %v722
    %v2853 = vunpack.c.h.b16 %v722
    %v2854 = vunpack.c.l.b16 %v723
    %v2855 = vunpack.c.h.b16 %v723
    %v2856 = vunpack.c.l.b16 %v724
    %v2857 = vunpack.c.h.b16 %v724
    %v2858 = vunpack.c.l.b16 %v725
    %v2859 = vunpack.c.h.b16 %v725
    %v2860 = vunpack.c.l.b16 %v726
    %v2861 = vunpack.c.h.b16 %v726
    %v2862 = vunpack.c.l.b16 %v727
    %v2863 = vunpack.c.h.b16 %v727
    %v2864 = vunpack.c.l.b16 %v728
    %v2865 = vunpack.c.h.b16 %v728
    %v2866 = vunpack.c.l.b16 %v729
    %v2867 = vunpack.c.h.b16 %v729
    %v2868 = vunpack.c.l.b16 %v730
    %v2869 = vunpack.c.h.b16 %v730
    %v2870 = vunpack.c.l.b16 %v731
    %v2871 = vunpack.c.h.b16 %v731
    %v2872 = vunpack.c.l.b16 %v732
    %v2873 = vunpack.c.h.b16 %v732
    %v2874 = vunpack.c.l.b16 %v733
    %v2875 = vunpack.c.h.b16 %v733
    %v2876 = vunpack.c.l.b16 %v734
    %v2877 = vunpack.c.h.b16 %v734
    %v2878 = vunpack.c.l.b16 %v735
    %v2879 = vunpack.c.h.b16 %v735
    %v2880 = vunpack.c.l.b16 %v736
    %v2881 = vunpack.c.h.b16 %v736
    %v2882 = vunpack.c.l.b16 %v737
    %v2883 = vunpack.c.h.b16 %v737
    %v2884 = vunpack.c.l.b16 %v738
    %v2885 = vunpack.c.h.b16 %v738
    %v2886 = vunpack.c.l.b16 %v739
    %v2887 = vunpack.c.h.b16 %v739
    %v2888 = vunpack.c.l.b16 %v740
    %v2889 = vunpack.c.h.b16 %v740
    %v2890 = vunpack.c.l.b16 %v741
    %v2891 = vunpack.c.h.b16 %v741
    %v2892 = vunpack.c.l.b16 %v742
    %v2893 = vunpack.c.h.b16 %v742
    %v2894 = vunpack.c.l.b16 %v743
    %v2895 = vunpack.c.h.b16 %v743
    %v2896 = vunpack.c.l.b16 %v744
    %v2897 = vunpack.c.h.b16 %v744
    %v2898 = vunpack.c.l.b16 %v745
    %v2899 = vunpack.c.h.b16 %v745
    %v2900 = vunpack.c.l.b16 %v746
    %v2901 = vunpack.c.h.b16 %v746
    %v2902 = vunpack.c.l.b16 %v747
    %v2903 = vunpack.c.h.b16 %v747
    %v2904 = vunpack.c.l.b16 %v748
    %v2905 = vunpack.c.h.b16 %v748
    %v2906 = vunpack.c.l.b16 %v749
    %v2907 = vunpack.c.h.b16 %v749
    %v2908 = vunpack.c.l.b16 %v750
    %v2909 = vunpack.c.h.b16 %v750
    %v2910 = vunpack.c.l.b16 %v751
    %v2911 = vunpack.c.h.b16 %v751
    %v2912 = vunpack.c.l.b16 %v752
    %v2913 = vunpack.c.h.b16 %v752
    %v2914 = vunpack.c.l.b16 %v753
    %v2915 = vunpack.c.h.b16 %v753
    %v2916 = vunpack.c.l.b16 %v754
    %v2917 = vunpack.c.h.b16 %v754
    %v2918 = vunpack.c.l.b16 %v755
    %v2919 = vunpack.c.h.b16 %v755
    %v2920 = vunpack.c.l.b16 %v756
    %v2921 = vunpack.c.h.b16 %v756
    %v2922 = vunpack.c.l.b16 %v757
    %v2923 = vunpack.c.h.b16 %v757
    %v2924 = vunpack.c.l.b16 %v758
    %v2925 = vunpack.c.h.b16 %v758
    %v2926 = vunpack.c.l.b16 %v759
    %v2927 = vunpack.c.h.b16 %v759
    %v2928 = vunpack.c.l.b16 %v760
    %v2929 = vunpack.c.h.b16 %v760
    %v2930 = vunpack.c.l.b16 %v761
    %v2931 = vunpack.c.h.b16 %v761
    %v2932 = vunpack.c.l.b16 %v762
    %v2933 = vunpack.c.h.b16 %v762
    %v2934 = vunpack.c.l.b16 %v763
    %v2935 = vunpack.c.h.b16 %v763
    %v2936 = vunpack.c.l.b16 %v764
    %v2937 = vunpack.c.h.b16 %v764
    %v2938 = vunpack.c.l.b16 %v765
    %v2939 = vunpack.c.h.b16 %v765
    %v2940 = vunpack.c.l.b16 %v766
    %v2941 = vunpack.c.h.b16 %v766
    %v2942 = vunpack.c.l.b16 %v767
    %v2943 = vunpack.c.h.b16 %v767
    %v2944 = vunpack.c.l.b16 %v768
    %v2945 = vunpack.c.h.b16 %v768
    %v2946 = vunpack.c.l.b16 %v769
    %v2947 = vunpack.c.h.b16 %v769
    %v2948 = vunpack.c.l.b16 %v770
    %v2949 = vunpack.c.h.b16 %v770
    %v2950 = vunpack.c.l.b16 %v771
    %v2951 = vunpack.c.h.b16 %v771
    %v2952 = vunpack.c.l.b16 %v772
    %v2953 = vunpack.c.h.b16 %v772
    %v2954 = vunpack.c.l.b16 %v773
    %v2955 = vunpack.c.h.b16 %v773
    %v2956 = vunpack.c.l.b16 %v774
    %v2957 = vunpack.c.h.b16 %v774
    %v2958 = vunpack.c.l.b16 %v775
    %v2959 = vunpack.c.h.b16 %v775
    %v2960 = vunpack.c.l.b16 %v776
    %v2961 = vunpack.c.h.b16 %v776
    %v2962 = vunpack.c.l.b16 %v777
    %v2963 = vunpack.c.h.b16 %v777
    %v2964 = vunpack.c.l.b16 %v778
    %v2965 = vunpack.c.h.b16 %v778
    %v2966 = vunpack.c.l.b16 %v779
    %v2967 = vunpack.c.h.b16 %v779
    %v2968 = vunpack.c.l.b16 %v780
    %v2969 = vunpack.c.h.b16 %v780
    %v2970 = vunpack.c.l.b16 %v781
    %v2971 = vunpack.c.h.b16 %v781
    %v2972 = vunpack.c.l.b16 %v782
    %v2973 = vunpack.c.h.b16 %v782
    %v2974 = vunpack.c.l.b16 %v783
    %v2975 = vunpack.c.h.b16 %v783
    %v2976 = vunpack.c.l.b16 %v784
    %v2977 = vunpack.c.h.b16 %v784
    %v2978 = vunpack.c.l.b16 %v785
    %v2979 = vunpack.c.h.b16 %v785
    %v2980 = vunpack.c.l.b16 %v786
    %v2981 = vunpack.c.h.b16 %v786
    %v2982 = vunpack.c.l.b16 %v787
    %v2983 = vunpack.c.h.b16 %v787
    %v2984 = vunpack.c.l.b16 %v788
    %v2985 = vunpack.c.h.b16 %v788
    %v2986 = vunpack.c.l.b16 %v789
    %v2987 = vunpack.c.h.b16 %v789
    %v2988 = vunpack.c.l.b16 %v790
    %v2989 = vunpack.c.h.b16 %v790
    %v2990 = vunpack.c.l.b16 %v791
    %v2991 = vunpack.c.h.b16 %v791
    %v2992 = vunpack.c.l.b16 %v792
    %v2993 = vunpack.c.h.b16 %v792
    %v2994 = vunpack.c.l.b16 %v793
    %v2995 = vunpack.c.h.b16 %v793
    %v2996 = vunpack.c.l.b16 %v794
    %v2997 = vunpack.c.h.b16 %v794
    %v2998 = vunpack.c.l.b16 %v795
    %v2999 = vunpack.c.h.b16 %v795
    %v3000 = vunpack.c.l.b16 %v796
    %v3001 = vunpack.c.h.b16 %v796
    %v3002 = vunpack.c.l.b16 %v797
    %v3003 = vunpack.c.h.b16 %v797
    %v3004 = vunpack.c.l.b16 %v798
    %v3005 = vunpack.c.h.b16 %v798
    %v3006 = vunpack.c.l.b16 %v799
    %v3007 = vunpack.c.h.b16 %v799
    %v3008 = vunpack.c.l.b16 %v800
    %v3009 = vunpack.c.h.b16 %v800
    %v3010 = vunpack.c.l.b16 %v801
    %v3011 = vunpack.c.h.b16 %v801
    %v3012 = vunpack.c.l.b16 %v802
    %v3013 = vunpack.c.h.b16 %v802
    %v3014 = vunpack.c.l.b16 %v803
    %v3015 = vunpack.c.h.b16 %v803
    %v3016 = vunpack.c.l.b16 %v804
    %v3017 = vunpack.c.h.b16 %v804
    %v3018 = vunpack.c.l.b16 %v805
    %v3019 = vunpack.c.h.b16 %v805
    %v3020 = vunpack.c.l.b16 %v806
    %v3021 = vunpack.c.h.b16 %v806
    %v3022 = vunpack.c.l.b16 %v807
    %v3023 = vunpack.c.h.b16 %v807
    %v3024 = vunpack.c.l.b16 %v808
    %v3025 = vunpack.c.h.b16 %v808
    %v3026 = vunpack.c.l.b16 %v809
    %v3027 = vunpack.c.h.b16 %v809
    %v3028 = vunpack.c.l.b16 %v810
    %v3029 = vunpack.c.h.b16 %v810
    %v3030 = vunpack.c.l.b16 %v811
    %v3031 = vunpack.c.h.b16 %v811
    %v3032 = vunpack.c.l.b16 %v812
    %v3033 = vunpack.c.h.b16 %v812
    %v3034 = vunpack.c.l.b16 %v813
    %v3035 = vunpack.c.h.b16 %v813
    %v3036 = vunpack.c.l.b16 %v814
    %v3037 = vunpack.c.h.b16 %v814
    %v3038 = vunpack.c.l.b16 %v815
    %v3039 = vunpack.c.h.b16 %v815
    %v3040 = vunpack.c.l.b16 %v816
    %v3041 = vunpack.c.h.b16 %v816
    %v3042 = vunpack.c.l.b16 %v817
    %v3043 = vunpack.c.h.b16 %v817
    %v3044 = vunpack.c.l.b16 %v818
    %v3045 = vunpack.c.h.b16 %v818
    %v3046 = vunpack.c.l.b16 %v819
    %v3047 = vunpack.c.h.b16 %v819
    %v3048 = vunpack.c.l.b16 %v820
    %v3049 = vunpack.c.h.b16 %v820
    %v3050 = vunpack.c.l.b16 %v821
    %v3051 = vunpack.c.h.b16 %v821
    %v3052 = vunpack.c.l.b16 %v822
    %v3053 = vunpack.c.h.b16 %v822
    %v3054 = vunpack.c.l.b16 %v823
    %v3055 = vunpack.c.h.b16 %v823
    %v3056 = vunpack.c.l.b16 %v824
    %v3057 = vunpack.c.h.b16 %v824
    %v3058 = vunpack.c.l.b16 %v825
    %v3059 = vunpack.c.h.b16 %v825
    %v3060 = vunpack.c.l.b16 %v826
    %v3061 = vunpack.c.h.b16 %v826
    %v3062 = vunpack.c.l.b16 %v827
    %v3063 = vunpack.c.h.b16 %v827
    %v3064 = vunpack.c.l.b16 %v828
    %v3065 = vunpack.c.h.b16 %v828
    %v3066 = vunpack.c.l.b16 %v829
    %v3067 = vunpack.c.h.b16 %v829
    %v3068 = vunpack.c.l.b16 %v830
    %v3069 = vunpack.c.h.b16 %v830
    %v3070 = vunpack.c.l.b16 %v831
    %v3071 = vunpack.c.h.b16 %v831
    %v3072 = vunpack.c.l.b16 %v832
    %v3073 = vunpack.c.h.b16 %v832
    %v3074 = vunpack.c.l.b16 %v833
    %v3075 = vunpack.c.h.b16 %v833
    %v3076 = vunpack.c.l.b16 %v834
    %v3077 = vunpack.c.h.b16 %v834
    %v3078 = vunpack.c.l.b16 %v835
    %v3079 = vunpack.c.h.b16 %v835
    %v3080 = vunpack.c.l.b16 %v836
    %v3081 = vunpack.c.h.b16 %v836
    %v3082 = vunpack.c.l.b16 %v837
    %v3083 = vunpack.c.h.b16 %v837
    %v3084 = vunpack.c.l.b16 %v838
    %v3085 = vunpack.c.h.b16 %v838
    %v3086 = vunpack.c.l.b16 %v839
    %v3087 = vunpack.c.h.b16 %v839
    %v3088 = vunpack.c.l.b16 %v840
    %v3089 = vunpack.c.h.b16 %v840
    %v3090 = vunpack.c.l.b16 %v841
    %v3091 = vunpack.c.h.b16 %v841
    %v3092 = vunpack.c.l.b16 %v842
    %v3093 = vunpack.c.h.b16 %v842
    %v3094 = vunpack.c.l.b16 %v843
    %v3095 = vunpack.c.h.b16 %v843
    %v3096 = vunpack.c.l.b16 %v844
    %v3097 = vunpack.c.h.b16 %v844
    %v3098 = vunpack.c.l.b16 %v845
    %v3099 = vunpack.c.h.b16 %v845
    %v3100 = vunpack.c.l.b16 %v846
    %v3101 = vunpack.c.h.b16 %v846
    %v3102 = vunpack.c.l.b16 %v847
    %v3103 = vunpack.c.h.b16 %v847
    %v3104 = vunpack.c.l.b16 %v848
    %v3105 = vunpack.c.h.b16 %v848
    %v3106 = vunpack.c.l.b16 %v849
    %v3107 = vunpack.c.h.b16 %v849
    %v3108 = vunpack.c.l.b16 %v850
    %v3109 = vunpack.c.h.b16 %v850
    %v3110 = vunpack.c.l.b16 %v851
    %v3111 = vunpack.c.h.b16 %v851
    %v3112 = vunpack.c.l.b16 %v852
    %v3113 = vunpack.c.h.b16 %v852
    %v3114 = vunpack.c.l.b16 %v853
    %v3115 = vunpack.c.h.b16 %v853
    %v3116 = vunpack.c.l.b16 %v854
    %v3117 = vunpack.c.h.b16 %v854
    %v3118 = vunpack.c.l.b16 %v855
    %v3119 = vunpack.c.h.b16 %v855
    %v3120 = vunpack.c.l.b16 %v856
    %v3121 = vunpack.c.h.b16 %v856
    %v3122 = vunpack.c.l.b16 %v857
    %v3123 = vunpack.c.h.b16 %v857
    %v3124 = vunpack.c.l.b16 %v858
    %v3125 = vunpack.c.h.b16 %v858
    %v3126 = vunpack.c.l.b16 %v859
    %v3127 = vunpack.c.h.b16 %v859
    %v3128 = vunpack.c.l.b16 %v860
    %v3129 = vunpack.c.h.b16 %v860
    %v3130 = vunpack.c.l.b16 %v861
    %v3131 = vunpack.c.h.b16 %v861
    %v3132 = vunpack.c.l.b16 %v862
    %v3133 = vunpack.c.h.b16 %v862
    %v3134 = vunpack.c.l.b16 %v863
    %v3135 = vunpack.c.h.b16 %v863
    %v3136 = vunpack.c.l.b16 %v864
    %v3137 = vunpack.c.h.b16 %v864
    %v3138 = vunpack.c.l.b16 %v865
    %v3139 = vunpack.c.h.b16 %v865
    %v3140 = vunpack.c.l.b16 %v866
    %v3141 = vunpack.c.h.b16 %v866
    %v3142 = vunpack.c.l.b16 %v867
    %v3143 = vunpack.c.h.b16 %v867
    %v3144 = vunpack.c.l.b16 %v868
    %v3145 = vunpack.c.h.b16 %v868
    %v3146 = vunpack.c.l.b16 %v869
    %v3147 = vunpack.c.h.b16 %v869
    %v3148 = vunpack.c.l.b16 %v870
    %v3149 = vunpack.c.h.b16 %v870
    %v3150 = vunpack.c.l.b16 %v871
    %v3151 = vunpack.c.h.b16 %v871
    %v3152 = vunpack.c.l.b16 %v872
    %v3153 = vunpack.c.h.b16 %v872
    %v3154 = vunpack.c.l.b16 %v873
    %v3155 = vunpack.c.h.b16 %v873
    %v3156 = vunpack.c.l.b16 %v874
    %v3157 = vunpack.c.h.b16 %v874
    %v3158 = vunpack.c.l.b16 %v875
    %v3159 = vunpack.c.h.b16 %v875
    %v3160 = vunpack.c.l.b16 %v876
    %v3161 = vunpack.c.h.b16 %v876
    %v3162 = vunpack.c.l.b16 %v877
    %v3163 = vunpack.c.h.b16 %v877
    %v3164 = vunpack.c.l.b16 %v878
    %v3165 = vunpack.c.h.b16 %v878
    %v3166 = vunpack.c.l.b16 %v879
    %v3167 = vunpack.c.h.b16 %v879
    %v3168 = vunpack.c.l.b16 %v880
    %v3169 = vunpack.c.h.b16 %v880
    %v3170 = vunpack.c.l.b16 %v881
    %v3171 = vunpack.c.h.b16 %v881
    %v3172 = vunpack.c.l.b16 %v882
    %v3173 = vunpack.c.h.b16 %v882
    %v3174 = vunpack.c.l.b16 %v883
    %v3175 = vunpack.c.h.b16 %v883
    %v3176 = vunpack.c.l.b16 %v884
    %v3177 = vunpack.c.h.b16 %v884
    %v3178 = vunpack.c.l.b16 %v885
    %v3179 = vunpack.c.h.b16 %v885
    %v3180 = vunpack.c.l.b16 %v886
    %v3181 = vunpack.c.h.b16 %v886
    %v3182 = vunpack.c.l.b16 %v887
    %v3183 = vunpack.c.h.b16 %v887
    %v3184 = vunpack.c.l.b16 %v888
    %v3185 = vunpack.c.h.b16 %v888
    %v3186 = vunpack.c.l.b16 %v889
    %v3187 = vunpack.c.h.b16 %v889
    %v3188 = vunpack.c.l.b16 %v890
    %v3189 = vunpack.c.h.b16 %v890
    %v3190 = vunpack.c.l.b16 %v891
    %v3191 = vunpack.c.h.b16 %v891
    %v3192 = vunpack.c.l.b16 %v892
    %v3193 = vunpack.c.h.b16 %v892
    %v3194 = vunpack.c.l.b16 %v893
    %v3195 = vunpack.c.h.b16 %v893
    %v3196 = vunpack.c.l.b16 %v894
    %v3197 = vunpack.c.h.b16 %v894
    %v3198 = vunpack.c.l.b16 %v895
    %v3199 = vunpack.c.h.b16 %v895
    %v3200 = vunpack.c.l.b16 %v896
    %v3201 = vunpack.c.h.b16 %v896
    %v3202 = vunpack.c.l.b16 %v897
    %v3203 = vunpack.c.h.b16 %v897
    %v3204 = vunpack.c.l.b16 %v898
    %v3205 = vunpack.c.h.b16 %v898
    %v3206 = vunpack.c.l.b16 %v899
    %v3207 = vunpack.c.h.b16 %v899
    %v3208 = vunpack.c.l.b16 %v900
    %v3209 = vunpack.c.h.b16 %v900
    %v3210 = vunpack.c.l.b16 %v901
    %v3211 = vunpack.c.h.b16 %v901
    %v3212 = vunpack.c.l.b16 %v902
    %v3213 = vunpack.c.h.b16 %v902
    %v3214 = vunpack.c.l.b16 %v903
    %v3215 = vunpack.c.h.b16 %v903
    %v3216 = vunpack.c.l.b16 %v904
    %v3217 = vunpack.c.h.b16 %v904
    %v3218 = vunpack.c.l.b16 %v905
    %v3219 = vunpack.c.h.b16 %v905
    %v3220 = vunpack.c.l.b16 %v906
    %v3221 = vunpack.c.h.b16 %v906
    %v3222 = vunpack.c.l.b16 %v907
    %v3223 = vunpack.c.h.b16 %v907
    %v3224 = vunpack.c.l.b16 %v908
    %v3225 = vunpack.c.h.b16 %v908
    %v3226 = vunpack.c.l.b16 %v909
    %v3227 = vunpack.c.h.b16 %v909
    %v3228 = vunpack.c.l.b16 %v910
    %v3229 = vunpack.c.h.b16 %v910
    %v3230 = vunpack.c.l.b16 %v911
    %v3231 = vunpack.c.h.b16 %v911
    %v3232 = vunpack.c.l.b16 %v912
    %v3233 = vunpack.c.h.b16 %v912
    %v3234 = vunpack.c.l.b16 %v913
    %v3235 = vunpack.c.h.b16 %v913
    %v3236 = vunpack.c.l.b16 %v914
    %v3237 = vunpack.c.h.b16 %v914
    %v3238 = vunpack.c.l.b16 %v915
    %v3239 = vunpack.c.h.b16 %v915
    %v3240 = vunpack.c.l.b16 %v916
    %v3241 = vunpack.c.h.b16 %v916
    %v3242 = vunpack.c.l.b16 %v917
    %v3243 = vunpack.c.h.b16 %v917
    %v3244 = vunpack.c.l.b16 %v918
    %v3245 = vunpack.c.h.b16 %v918
    %v3246 = vunpack.c.l.b16 %v919
    %v3247 = vunpack.c.h.b16 %v919
    %v3248 = vunpack.c.l.b16 %v920
    %v3249 = vunpack.c.h.b16 %v920
    %v3250 = vunpack.c.l.b16 %v921
    %v3251 = vunpack.c.h.b16 %v921
    %v3252 = vunpack.c.l.b16 %v922
    %v3253 = vunpack.c.h.b16 %v922
    %v3254 = vunpack.c.l.b16 %v923
    %v3255 = vunpack.c.h.b16 %v923
    %v3256 = vunpack.c.l.b16 %v924
    %v3257 = vunpack.c.h.b16 %v924
    %v3258 = vunpack.c.l.b16 %v925
    %v3259 = vunpack.c.h.b16 %v925
    %v3260 = vunpack.c.l.b16 %v926
    %v3261 = vunpack.c.h.b16 %v926
    %v3262 = vunpack.c.l.b16 %v927
    %v3263 = vunpack.c.h.b16 %v927
    %v3264 = vunpack.c.l.b16 %v928
    %v3265 = vunpack.c.h.b16 %v928
    %v3266 = vunpack.c.l.b16 %v929
    %v3267 = vunpack.c.h.b16 %v929
    %v3268 = vunpack.c.l.b16 %v930
    %v3269 = vunpack.c.h.b16 %v930
    %v3270 = vunpack.c.l.b16 %v931
    %v3271 = vunpack.c.h.b16 %v931
    %v3272 = vunpack.c.l.b16 %v932
    %v3273 = vunpack.c.h.b16 %v932
    %v3274 = vunpack.c.l.b16 %v933
    %v3275 = vunpack.c.h.b16 %v933
    %v3276 = vunpack.c.l.b16 %v934
    %v3277 = vunpack.c.h.b16 %v934
    %v3278 = vunpack.c.l.b16 %v935
    %v3279 = vunpack.c.h.b16 %v935
    %v3280 = vunpack.c.l.b16 %v936
    %v3281 = vunpack.c.h.b16 %v936
    %v3282 = vunpack.c.l.b16 %v937
    %v3283 = vunpack.c.h.b16 %v937
    %v3284 = vpack.c.b16 %v1756, %v1748
    %v3285 = vpack.c.b16 %v1757, %v1749
    %v3286 = vpack.c.b16 %v1758, %v1750
    %v3287 = vpack.c.b16 %v1759, %v1751
    %v3288 = vpack.c.b16 %v1760, %v1752
    %v3289 = vpack.c.b16 %v1761, %v1753
    %v3290 = vpack.c.b16 %v1762, %v1754
    %v3291 = vpack.c.b16 %v1763, %v1755
    %v3292 = vpack.c.b16 %v1772, %v1764
    %v3293 = vpack.c.b16 %v1773, %v1765
    %v3294 = vpack.c.b16 %v1774, %v1766
    %v3295 = vpack.c.b16 %v1775, %v1767
    %v3296 = vpack.c.b16 %v1776, %v1768
    %v3297 = vpack.c.b16 %v1777, %v1769
    %v3298 = vpack.c.b16 %v1778, %v1770
    %v3299 = vpack.c.b16 %v1779, %v1771
    %v3300 = vpack.c.b16 %v1788, %v1780
    %v3301 = vpack.c.b16 %v1789, %v1781
    %v3302 = vpack.c.b16 %v1790, %v1782
    %v3303 = vpack.c.b16 %v1791, %v1783
    %v3304 = vpack.c.b16 %v1792, %v1784
    %v3305 = vpack.c.b16 %v1793, %v1785
    %v3306 = vpack.c.b16 %v1794, %v1786
    %v3307 = vpack.c.b16 %v1795, %v1787
    %v3308 = vpack.c.b16 %v1804, %v1796
    %v3309 = vpack.c.b16 %v1805, %v1797
    %v3310 = vpack.c.b16 %v1806, %v1798
    %v3311 = vpack.c.b16 %v1807, %v1799
    %v3312 = vpack.c.b16 %v1808, %v1800
    %v3313 = vpack.c.b16 %v1809, %v1801
    %v3314 = vpack.c.b16 %v1810, %v1802
    %v3315 = vpack.c.b16 %v1811, %v1803
    %v3316 = vpack.c.b16 %v1820, %v1812
    %v3317 = vpack.c.b16 %v1821, %v1813
    %v3318 = vpack.c.b16 %v1822, %v1814
    %v3319 = vpack.c.b16 %v1823, %v1815
    %v3320 = vpack.c.b16 %v1824, %v1816
    %v3321 = vpack.c.b16 %v1825, %v1817
    %v3322 = vpack.c.b16 %v1826, %v1818
    %v3323 = vpack.c.b16 %v1827, %v1819
    %v3324 = vpack.c.b16 %v1836, %v1828
    %v3325 = vpack.c.b16 %v1837, %v1829
    %v3326 = vpack.c.b16 %v1838, %v1830
    %v3327 = vpack.c.b16 %v1839, %v1831
    %v3328 = vpack.c.b16 %v1840, %v1832
    %v3329 = vpack.c.b16 %v1841, %v1833
    %v3330 = vpack.c.b16 %v1842, %v1834
    %v3331 = vpack.c.b16 %v1843, %v1835
    %v3332 = vpack.c.b16 %v1852, %v1844
    %v3333 = vpack.c.b16 %v1853, %v1845
    %v3334 = vpack.c.b16 %v1854, %v1846
    %v3335 = vpack.c.b16 %v1855, %v1847
    %v3336 = vpack.c.b16 %v1856, %v1848
    %v3337 = vpack.c.b16 %v1857, %v1849
    %v3338 = vpack.c.b16 %v1858, %v1850
    %v3339 = vpack.c.b16 %v1859, %v1851
    %v3340 = vpack.c.b16 %v1868, %v1860
    %v3341 = vpack.c.b16 %v1869, %v1861
    %v3342 = vpack.c.b16 %v1870, %v1862
    %v3343 = vpack.c.b16 %v1871, %v1863
    %v3344 = vpack.c.b16 %v1872, %v1864
    %v3345 = vpack.c.b16 %v1873, %v1865
    %v3346 = vpack.c.b16 %v1874, %v1866
    %v3347 = vpack.c.b16 %v1875, %v1867
    %v3348 = vpack.c.b16 %v1884, %v1876
    %v3349 = vpack.c.b16 %v1885, %v1877
    %v3350 = vpack.c.b16 %v1886, %v1878
    %v3351 = vpack.c.b16 %v1887, %v1879
    %v3352 = vpack.c.b16 %v1888, %v1880
    %v3353 = vpack.c.b16 %v1889, %v1881
    %v3354 = vpack.c.b16 %v1890, %v1882
    %v3355 = vpack.c.b16 %v1891, %v1883
    %v3356 = vpack.c.b16 %v1900, %v1892
    %v3357 = vpack.c.b16 %v1901, %v1893
    %v3358 = vpack.c.b16 %v1902, %v1894
    %v3359 = vpack.c.b16 %v1903, %v1895
    %v3360 = vpack.c.b16 %v1904, %v1896
    %v3361 = vpack.c.b16 %v1905, %v1897
    %v3362 = vpack.c.b16 %v1906, %v1898
    %v3363 = vpack.c.b16 %v1907, %v1899
    %v3364 = vpack.c.b16 %v1916, %v1908
    %v3365 = vpack.c.b16 %v1917, %v1909
    %v3366 = vpack.c.b16 %v1918, %v1910
    %v3367 = vpack.c.b16 %v1919, %v1911
    %v3368 = vpack.c.b16 %v1920, %v1912
    %v3369 = vpack.c.b16 %v1921, %v1913
    %v3370 = vpack.c.b16 %v1922, %v1914
    %v3371 = vpack.c.b16 %v1923, %v1915
    %v3372 = vpack.c.b16 %v1932, %v1924
    %v3373 = vpack.c.b16 %v1933, %v1925
    %v3374 = vpack.c.b16 %v1934, %v1926
    %v3375 = vpack.c.b16 %v1935, %v1927
    %v3376 = vpack.c.b16 %v1936, %v1928
    %v3377 = vpack.c.b16 %v1937, %v1929
    %v3378 = vpack.c.b16 %v1938, %v1930
    %v3379 = vpack.c.b16 %v1939, %v1931
    %v3380 = vpack.c.b16 %v1948, %v1940
    %v3381 = vpack.c.b16 %v1949, %v1941
    %v3382 = vpack.c.b16 %v1950, %v1942
    %v3383 = vpack.c.b16 %v1951, %v1943
    %v3384 = vpack.c.b16 %v1952, %v1944
    %v3385 = vpack.c.b16 %v1953, %v1945
    %v3386 = vpack.c.b16 %v1954, %v1946
    %v3387 = vpack.c.b16 %v1955, %v1947
    %v3388 = vpack.c.b16 %v1964, %v1956
    %v3389 = vpack.c.b16 %v1965, %v1957
    %v3390 = vpack.c.b16 %v1966, %v1958
    %v3391 = vpack.c.b16 %v1967, %v1959
    %v3392 = vpack.c.b16 %v1968, %v1960
    %v3393 = vpack.c.b16 %v1969, %v1961
    %v3394 = vpack.c.b16 %v1970, %v1962
    %v3395 = vpack.c.b16 %v1971, %v1963
    %v3396 = vpack.c.b16 %v1980, %v1972
    %v3397 = vpack.c.b16 %v1981, %v1973
    %v3398 = vpack.c.b16 %v1982, %v1974
    %v3399 = vpack.c.b16 %v1983, %v1975
    %v3400 = vpack.c.b16 %v1984, %v1976
    %v3401 = vpack.c.b16 %v1985, %v1977
    %v3402 = vpack.c.b16 %v1986, %v1978
    %v3403 = vpack.c.b16 %v1987, %v1979
    %v3404 = vpack.c.b16 %v1996, %v1988
    %v3405 = vpack.c.b16 %v1997, %v1989
    %v3406 = vpack.c.b16 %v1998, %v1990
    %v3407 = vpack.c.b16 %v1999, %v1991
    %v3408 = vpack.c.b16 %v2000, %v1992
    %v3409 = vpack.c.b16 %v2001, %v1993
    %v3410 = vpack.c.b16 %v2002, %v1994
    %v3411 = vpack.c.b16 %v2003, %v1995
    %v3412 = vpack.c.b16 %v2012, %v2004
    %v3413 = vpack.c.b16 %v2013, %v2005
    %v3414 = vpack.c.b16 %v2014, %v2006
    %v3415 = vpack.c.b16 %v2015, %v2007
    %v3416 = vpack.c.b16 %v2016, %v2008
    %v3417 = vpack.c.b16 %v2017, %v2009
    %v3418 = vpack.c.b16 %v2018, %v2010
    %v3419 = vpack.c.b16 %v2019, %v2011
    %v3420 = vpack.c.b16 %v2028, %v2020
    %v3421 = vpack.c.b16 %v2029, %v2021
    %v3422 = vpack.c.b16 %v2030, %v2022
    %v3423 = vpack.c.b16 %v2031, %v2023
    %v3424 = vpack.c.b16 %v2032, %v2024
    %v3425 = vpack.c.b16 %v2033, %v2025
    %v3426 = vpack.c.b16 %v2034, %v2026
    %v3427 = vpack.c.b16 %v2035, %v2027
    %v3428 = vpack.c.b16 %v2044, %v2036
    %v3429 = vpack.c.b16 %v2045, %v2037
    %v3430 = vpack.c.b16 %v2046, %v2038
    %v3431 = vpack.c.b16 %v2047, %v2039
    %v3432 = vpack.c.b16 %v2048, %v2040
    %v3433 = vpack.c.b16 %v2049, %v2041
    %v3434 = vpack.c.b16 %v2050, %v2042
    %v3435 = vpack.c.b16 %v2051, %v2043
    %v3436 = vpack.c.b16 %v2060, %v2052
    %v3437 = vpack.c.b16 %v2061, %v2053
    %v3438 = vpack.c.b16 %v2062, %v2054
    %v3439 = vpack.c.b16 %v2063, %v2055
    %v3440 = vpack.c.b16 %v2064, %v2056
    %v3441 = vpack.c.b16 %v2065, %v2057
    %v3442 = vpack.c.b16 %v2066, %v2058
    %v3443 = vpack.c.b16 %v2067, %v2059
    %v3444 = vpack.c.b16 %v2076, %v2068
    %v3445 = vpack.c.b16 %v2077, %v2069
    %v3446 = vpack.c.b16 %v2078, %v2070
    %v3447 = vpack.c.b16 %v2079, %v2071
    %v3448 = vpack.c.b16 %v2080, %v2072
    %v3449 = vpack.c.b16 %v2081, %v2073
    %v3450 = vpack.c.b16 %v2082, %v2074
    %v3451 = vpack.c.b16 %v2083, %v2075
    %v3452 = vpack.c.b16 %v2092, %v2084
    %v3453 = vpack.c.b16 %v2093, %v2085
    %v3454 = vpack.c.b16 %v2094, %v2086
    %v3455 = vpack.c.b16 %v2095, %v2087
    %v3456 = vpack.c.b16 %v2096, %v2088
    %v3457 = vpack.c.b16 %v2097, %v2089
    %v3458 = vpack.c.b16 %v2098, %v2090
    %v3459 = vpack.c.b16 %v2099, %v2091
    %v3460 = vpack.c.b16 %v2108, %v2100
    %v3461 = vpack.c.b16 %v2109, %v2101
    %v3462 = vpack.c.b16 %v2110, %v2102
    %v3463 = vpack.c.b16 %v2111, %v2103
    %v3464 = vpack.c.b16 %v2112, %v2104
    %v3465 = vpack.c.b16 %v2113, %v2105
    %v3466 = vpack.c.b16 %v2114, %v2106
    %v3467 = vpack.c.b16 %v2115, %v2107
    %v3468 = vpack.c.b16 %v2124, %v2116
    %v3469 = vpack.c.b16 %v2125, %v2117
    %v3470 = vpack.c.b16 %v2126, %v2118
    %v3471 = vpack.c.b16 %v2127, %v2119
    %v3472 = vpack.c.b16 %v2128, %v2120
    %v3473 = vpack.c.b16 %v2129, %v2121
    %v3474 = vpack.c.b16 %v2130, %v2122
    %v3475 = vpack.c.b16 %v2131, %v2123
    %v3476 = vpack.c.b16 %v2140, %v2132
    %v3477 = vpack.c.b16 %v2141, %v2133
    %v3478 = vpack.c.b16 %v2142, %v2134
    %v3479 = vpack.c.b16 %v2143, %v2135
    %v3480 = vpack.c.b16 %v2144, %v2136
    %v3481 = vpack.c.b16 %v2145, %v2137
    %v3482 = vpack.c.b16 %v2146, %v2138
    %v3483 = vpack.c.b16 %v2147, %v2139
    %v3484 = vpack.c.b16 %v2156, %v2148
    %v3485 = vpack.c.b16 %v2157, %v2149
    %v3486 = vpack.c.b16 %v2158, %v2150
    %v3487 = vpack.c.b16 %v2159, %v2151
    %v3488 = vpack.c.b16 %v2160, %v2152
    %v3489 = vpack.c.b16 %v2161, %v2153
    %v3490 = vpack.c.b16 %v2162, %v2154
    %v3491 = vpack.c.b16 %v2163, %v2155
    %v3492 = vpack.c.b16 %v2172, %v2164
    %v3493 = vpack.c.b16 %v2173, %v2165
    %v3494 = vpack.c.b16 %v2174, %v2166
    %v3495 = vpack.c.b16 %v2175, %v2167
    %v3496 = vpack.c.b16 %v2176, %v2168
    %v3497 = vpack.c.b16 %v2177, %v2169
    %v3498 = vpack.c.b16 %v2178, %v2170
    %v3499 = vpack.c.b16 %v2179, %v2171
    %v3500 = vpack.c.b16 %v2188, %v2180
    %v3501 = vpack.c.b16 %v2189, %v2181
    %v3502 = vpack.c.b16 %v2190, %v2182
    %v3503 = vpack.c.b16 %v2191, %v2183
    %v3504 = vpack.c.b16 %v2192, %v2184
    %v3505 = vpack.c.b16 %v2193, %v2185
    %v3506 = vpack.c.b16 %v2194, %v2186
    %v3507 = vpack.c.b16 %v2195, %v2187
    %v3508 = vpack.c.b16 %v2204, %v2196
    %v3509 = vpack.c.b16 %v2205, %v2197
    %v3510 = vpack.c.b16 %v2206, %v2198
    %v3511 = vpack.c.b16 %v2207, %v2199
    %v3512 = vpack.c.b16 %v2208, %v2200
    %v3513 = vpack.c.b16 %v2209, %v2201
    %v3514 = vpack.c.b16 %v2210, %v2202
    %v3515 = vpack.c.b16 %v2211, %v2203
    %v3516 = vpack.c.b16 %v2220, %v2212
    %v3517 = vpack.c.b16 %v2221, %v2213
    %v3518 = vpack.c.b16 %v2222, %v2214
    %v3519 = vpack.c.b16 %v2223, %v2215
    %v3520 = vpack.c.b16 %v2224, %v2216
    %v3521 = vpack.c.b16 %v2225, %v2217
    %v3522 = vpack.c.b16 %v2226, %v2218
    %v3523 = vpack.c.b16 %v2227, %v2219
    %v3524 = vpack.c.b16 %v2236, %v2228
    %v3525 = vpack.c.b16 %v2237, %v2229
    %v3526 = vpack.c.b16 %v2238, %v2230
    %v3527 = vpack.c.b16 %v2239, %v2231
    %v3528 = vpack.c.b16 %v2240, %v2232
    %v3529 = vpack.c.b16 %v2241, %v2233
    %v3530 = vpack.c.b16 %v2242, %v2234
    %v3531 = vpack.c.b16 %v2243, %v2235
    %v3532 = vpack.c.b16 %v2252, %v2244
    %v3533 = vpack.c.b16 %v2253, %v2245
    %v3534 = vpack.c.b16 %v2254, %v2246
    %v3535 = vpack.c.b16 %v2255, %v2247
    %v3536 = vpack.c.b16 %v2256, %v2248
    %v3537 = vpack.c.b16 %v2257, %v2249
    %v3538 = vpack.c.b16 %v2258, %v2250
    %v3539 = vpack.c.b16 %v2259, %v2251
    %v3540 = vpack.c.b16 %v2268, %v2260
    %v3541 = vpack.c.b16 %v2269, %v2261
    %v3542 = vpack.c.b16 %v2270, %v2262
    %v3543 = vpack.c.b16 %v2271, %v2263
    %v3544 = vpack.c.b16 %v2272, %v2264
    %v3545 = vpack.c.b16 %v2273, %v2265
    %v3546 = vpack.c.b16 %v2274, %v2266
    %v3547 = vpack.c.b16 %v2275, %v2267
    %v3548 = vpack.c.b16 %v2284, %v2276
    %v3549 = vpack.c.b16 %v2285, %v2277
    %v3550 = vpack.c.b16 %v2286, %v2278
    %v3551 = vpack.c.b16 %v2287, %v2279
    %v3552 = vpack.c.b16 %v2288, %v2280
    %v3553 = vpack.c.b16 %v2289, %v2281
    %v3554 = vpack.c.b16 %v2290, %v2282
    %v3555 = vpack.c.b16 %v2291, %v2283
    %v3556 = vpack.c.b16 %v2300, %v2292
    %v3557 = vpack.c.b16 %v2301, %v2293
    %v3558 = vpack.c.b16 %v2302, %v2294
    %v3559 = vpack.c.b16 %v2303, %v2295
    %v3560 = vpack.c.b16 %v2304, %v2296
    %v3561 = vpack.c.b16 %v2305, %v2297
    %v3562 = vpack.c.b16 %v2306, %v2298
    %v3563 = vpack.c.b16 %v2307, %v2299
    %v3564 = vpack.c.b16 %v2316, %v2308
    %v3565 = vpack.c.b16 %v2317, %v2309
    %v3566 = vpack.c.b16 %v2318, %v2310
    %v3567 = vpack.c.b16 %v2319, %v2311
    %v3568 = vpack.c.b16 %v2320, %v2312
    %v3569 = vpack.c.b16 %v2321, %v2313
    %v3570 = vpack.c.b16 %v2322, %v2314
    %v3571 = vpack.c.b16 %v2323, %v2315
    %v3572 = vpack.c.b16 %v2332, %v2324
    %v3573 = vpack.c.b16 %v2333, %v2325
    %v3574 = vpack.c.b16 %v2334, %v2326
    %v3575 = vpack.c.b16 %v2335, %v2327
    %v3576 = vpack.c.b16 %v2336, %v2328
    %v3577 = vpack.c.b16 %v2337, %v2329
    %v3578 = vpack.c.b16 %v2338, %v2330
    %v3579 = vpack.c.b16 %v2339, %v2331
    %v3580 = vpack.c.b16 %v2348, %v2340
    %v3581 = vpack.c.b16 %v2349, %v2341
    %v3582 = vpack.c.b16 %v2350, %v2342
    %v3583 = vpack.c.b16 %v2351, %v2343
    %v3584 = vpack.c.b16 %v2352, %v2344
    %v3585 = vpack.c.b16 %v2353, %v2345
    %v3586 = vpack.c.b16 %v2354, %v2346
    %v3587 = vpack.c.b16 %v2355, %v2347
    %v3588 = vpack.c.b16 %v2364, %v2356
    %v3589 = vpack.c.b16 %v2365, %v2357
    %v3590 = vpack.c.b16 %v2366, %v2358
    %v3591 = vpack.c.b16 %v2367, %v2359
    %v3592 = vpack.c.b16 %v2368, %v2360
    %v3593 = vpack.c.b16 %v2369, %v2361
    %v3594 = vpack.c.b16 %v2370, %v2362
    %v3595 = vpack.c.b16 %v2371, %v2363
    %v3596 = vpack.c.b16 %v2380, %v2372
    %v3597 = vpack.c.b16 %v2381, %v2373
    %v3598 = vpack.c.b16 %v2382, %v2374
    %v3599 = vpack.c.b16 %v2383, %v2375
    %v3600 = vpack.c.b16 %v2384, %v2376
    %v3601 = vpack.c.b16 %v2385, %v2377
    %v3602 = vpack.c.b16 %v2386, %v2378
    %v3603 = vpack.c.b16 %v2387, %v2379
    %v3604 = vpack.c.b16 %v2396, %v2388
    %v3605 = vpack.c.b16 %v2397, %v2389
    %v3606 = vpack.c.b16 %v2398, %v2390
    %v3607 = vpack.c.b16 %v2399, %v2391
    %v3608 = vpack.c.b16 %v2400, %v2392
    %v3609 = vpack.c.b16 %v2401, %v2393
    %v3610 = vpack.c.b16 %v2402, %v2394
    %v3611 = vpack.c.b16 %v2403, %v2395
    %v3612 = vpack.c.b16 %v2412, %v2404
    %v3613 = vpack.c.b16 %v2413, %v2405
    %v3614 = vpack.c.b16 %v2414, %v2406
    %v3615 = vpack.c.b16 %v2415, %v2407
    %v3616 = vpack.c.b16 %v2416, %v2408
    %v3617 = vpack.c.b16 %v2417, %v2409
    %v3618 = vpack.c.b16 %v2418, %v2410
    %v3619 = vpack.c.b16 %v2419, %v2411
    %v3620 = vpack.c.b16 %v2428, %v2420
    %v3621 = vpack.c.b16 %v2429, %v2421
    %v3622 = vpack.c.b16 %v2430, %v2422
    %v3623 = vpack.c.b16 %v2431, %v2423
    %v3624 = vpack.c.b16 %v2432, %v2424
    %v3625 = vpack.c.b16 %v2433, %v2425
    %v3626 = vpack.c.b16 %v2434, %v2426
    %v3627 = vpack.c.b16 %v2435, %v2427
    %v3628 = vpack.c.b16 %v2444, %v2436
    %v3629 = vpack.c.b16 %v2445, %v2437
    %v3630 = vpack.c.b16 %v2446, %v2438
    %v3631 = vpack.c.b16 %v2447, %v2439
    %v3632 = vpack.c.b16 %v2448, %v2440
    %v3633 = vpack.c.b16 %v2449, %v2441
    %v3634 = vpack.c.b16 %v2450, %v2442
    %v3635 = vpack.c.b16 %v2451, %v2443
    %v3636 = vpack.c.b16 %v2460, %v2452
    %v3637 = vpack.c.b16 %v2461, %v2453
    %v3638 = vpack.c.b16 %v2462, %v2454
    %v3639 = vpack.c.b16 %v2463, %v2455
    %v3640 = vpack.c.b16 %v2464, %v2456
    %v3641 = vpack.c.b16 %v2465, %v2457
    %v3642 = vpack.c.b16 %v2466, %v2458
    %v3643 = vpack.c.b16 %v2467, %v2459
    %v3644 = vpack.c.b16 %v2476, %v2468
    %v3645 = vpack.c.b16 %v2477, %v2469
    %v3646 = vpack.c.b16 %v2478, %v2470
    %v3647 = vpack.c.b16 %v2479, %v2471
    %v3648 = vpack.c.b16 %v2480, %v2472
    %v3649 = vpack.c.b16 %v2481, %v2473
    %v3650 = vpack.c.b16 %v2482, %v2474
    %v3651 = vpack.c.b16 %v2483, %v2475
    %v3652 = vpack.c.b16 %v2492, %v2484
    %v3653 = vpack.c.b16 %v2493, %v2485
    %v3654 = vpack.c.b16 %v2494, %v2486
    %v3655 = vpack.c.b16 %v2495, %v2487
    %v3656 = vpack.c.b16 %v2496, %v2488
    %v3657 = vpack.c.b16 %v2497, %v2489
    %v3658 = vpack.c.b16 %v2498, %v2490
    %v3659 = vpack.c.b16 %v2499, %v2491
    %v3660 = vpack.c.b16 %v2508, %v2500
    %v3661 = vpack.c.b16 %v2509, %v2501
    %v3662 = vpack.c.b16 %v2510, %v2502
    %v3663 = vpack.c.b16 %v2511, %v2503
    %v3664 = vpack.c.b16 %v2512, %v2504
    %v3665 = vpack.c.b16 %v2513, %v2505
    %v3666 = vpack.c.b16 %v2514, %v2506
    %v3667 = vpack.c.b16 %v2515, %v2507
    %v3668 = vpack.c.b16 %v2524, %v2516
    %v3669 = vpack.c.b16 %v2525, %v2517
    %v3670 = vpack.c.b16 %v2526, %v2518
    %v3671 = vpack.c.b16 %v2527, %v2519
    %v3672 = vpack.c.b16 %v2528, %v2520
    %v3673 = vpack.c.b16 %v2529, %v2521
    %v3674 = vpack.c.b16 %v2530, %v2522
    %v3675 = vpack.c.b16 %v2531, %v2523
    %v3676 = vpack.c.b16 %v2540, %v2532
    %v3677 = vpack.c.b16 %v2541, %v2533
    %v3678 = vpack.c.b16 %v2542, %v2534
    %v3679 = vpack.c.b16 %v2543, %v2535
    %v3680 = vpack.c.b16 %v2544, %v2536
    %v3681 = vpack.c.b16 %v2545, %v2537
    %v3682 = vpack.c.b16 %v2546, %v2538
    %v3683 = vpack.c.b16 %v2547, %v2539
    %v3684 = vpack.c.b16 %v2556, %v2548
    %v3685 = vpack.c.b16 %v2557, %v2549
    %v3686 = vpack.c.b16 %v2558, %v2550
    %v3687 = vpack.c.b16 %v2559, %v2551
    %v3688 = vpack.c.b16 %v2560, %v2552
    %v3689 = vpack.c.b16 %v2561, %v2553
    %v3690 = vpack.c.b16 %v2562, %v2554
    %v3691 = vpack.c.b16 %v2563, %v2555
    %v3692 = vpack.c.b16 %v2572, %v2564
    %v3693 = vpack.c.b16 %v2573, %v2565
    %v3694 = vpack.c.b16 %v2574, %v2566
    %v3695 = vpack.c.b16 %v2575, %v2567
    %v3696 = vpack.c.b16 %v2576, %v2568
    %v3697 = vpack.c.b16 %v2577, %v2569
    %v3698 = vpack.c.b16 %v2578, %v2570
    %v3699 = vpack.c.b16 %v2579, %v2571
    %v3700 = vpack.c.b16 %v2588, %v2580
    %v3701 = vpack.c.b16 %v2589, %v2581
    %v3702 = vpack.c.b16 %v2590, %v2582
    %v3703 = vpack.c.b16 %v2591, %v2583
    %v3704 = vpack.c.b16 %v2592, %v2584
    %v3705 = vpack.c.b16 %v2593, %v2585
    %v3706 = vpack.c.b16 %v2594, %v2586
    %v3707 = vpack.c.b16 %v2595, %v2587
    %v3708 = vpack.c.b16 %v2604, %v2596
    %v3709 = vpack.c.b16 %v2605, %v2597
    %v3710 = vpack.c.b16 %v2606, %v2598
    %v3711 = vpack.c.b16 %v2607, %v2599
    %v3712 = vpack.c.b16 %v2608, %v2600
    %v3713 = vpack.c.b16 %v2609, %v2601
    %v3714 = vpack.c.b16 %v2610, %v2602
    %v3715 = vpack.c.b16 %v2611, %v2603
    %v3716 = vpack.c.b16 %v2620, %v2612
    %v3717 = vpack.c.b16 %v2621, %v2613
    %v3718 = vpack.c.b16 %v2622, %v2614
    %v3719 = vpack.c.b16 %v2623, %v2615
    %v3720 = vpack.c.b16 %v2624, %v2616
    %v3721 = vpack.c.b16 %v2625, %v2617
    %v3722 = vpack.c.b16 %v2626, %v2618
    %v3723 = vpack.c.b16 %v2627, %v2619
    %v3724 = vpack.c.b16 %v2636, %v2628
    %v3725 = vpack.c.b16 %v2637, %v2629
    %v3726 = vpack.c.b16 %v2638, %v2630
    %v3727 = vpack.c.b16 %v2639, %v2631
    %v3728 = vpack.c.b16 %v2640, %v2632
    %v3729 = vpack.c.b16 %v2641, %v2633
    %v3730 = vpack.c.b16 %v2642, %v2634
    %v3731 = vpack.c.b16 %v2643, %v2635
    %v3732 = vpack.c.b16 %v2652, %v2644
    %v3733 = vpack.c.b16 %v2653, %v2645
    %v3734 = vpack.c.b16 %v2654, %v2646
    %v3735 = vpack.c.b16 %v2655, %v2647
    %v3736 = vpack.c.b16 %v2656, %v2648
    %v3737 = vpack.c.b16 %v2657, %v2649
    %v3738 = vpack.c.b16 %v2658, %v2650
    %v3739 = vpack.c.b16 %v2659, %v2651
    %v3740 = vpack.c.b16 %v2668, %v2660
    %v3741 = vpack.c.b16 %v2669, %v2661
    %v3742 = vpack.c.b16 %v2670, %v2662
    %v3743 = vpack.c.b16 %v2671, %v2663
    %v3744 = vpack.c.b16 %v2672, %v2664
    %v3745 = vpack.c.b16 %v2673, %v2665
    %v3746 = vpack.c.b16 %v2674, %v2666
    %v3747 = vpack.c.b16 %v2675, %v2667
    %v3748 = vpack.c.b16 %v2684, %v2676
    %v3749 = vpack.c.b16 %v2685, %v2677
    %v3750 = vpack.c.b16 %v2686, %v2678
    %v3751 = vpack.c.b16 %v2687, %v2679
    %v3752 = vpack.c.b16 %v2688, %v2680
    %v3753 = vpack.c.b16 %v2689, %v2681
    %v3754 = vpack.c.b16 %v2690, %v2682
    %v3755 = vpack.c.b16 %v2691, %v2683
    %v3756 = vpack.c.b16 %v2700, %v2692
    %v3757 = vpack.c.b16 %v2701, %v2693
    %v3758 = vpack.c.b16 %v2702, %v2694
    %v3759 = vpack.c.b16 %v2703, %v2695
    %v3760 = vpack.c.b16 %v2704, %v2696
    %v3761 = vpack.c.b16 %v2705, %v2697
    %v3762 = vpack.c.b16 %v2706, %v2698
    %v3763 = vpack.c.b16 %v2707, %v2699
    %v3764 = vpack.c.b16 %v2716, %v2708
    %v3765 = vpack.c.b16 %v2717, %v2709
    %v3766 = vpack.c.b16 %v2718, %v2710
    %v3767 = vpack.c.b16 %v2719, %v2711
    %v3768 = vpack.c.b16 %v2720, %v2712
    %v3769 = vpack.c.b16 %v2721, %v2713
    %v3770 = vpack.c.b16 %v2722, %v2714
    %v3771 = vpack.c.b16 %v2723, %v2715
    %v3772 = vpack.c.b16 %v2732, %v2724
    %v3773 = vpack.c.b16 %v2733, %v2725
    %v3774 = vpack.c.b16 %v2734, %v2726
    %v3775 = vpack.c.b16 %v2735, %v2727
    %v3776 = vpack.c.b16 %v2736, %v2728
    %v3777 = vpack.c.b16 %v2737, %v2729
    %v3778 = vpack.c.b16 %v2738, %v2730
    %v3779 = vpack.c.b16 %v2739, %v2731
    %v3780 = vpack.c.b16 %v2748, %v2740
    %v3781 = vpack.c.b16 %v2749, %v2741
    %v3782 = vpack.c.b16 %v2750, %v2742
    %v3783 = vpack.c.b16 %v2751, %v2743
    %v3784 = vpack.c.b16 %v2752, %v2744
    %v3785 = vpack.c.b16 %v2753, %v2745
    %v3786 = vpack.c.b16 %v2754, %v2746
    %v3787 = vpack.c.b16 %v2755, %v2747
    %v3788 = vpack.c.b16 %v2764, %v2756
    %v3789 = vpack.c.b16 %v2765, %v2757
    %v3790 = vpack.c.b16 %v2766, %v2758
    %v3791 = vpack.c.b16 %v2767, %v2759
    %v3792 = vpack.c.b16 %v2768, %v2760
    %v3793 = vpack.c.b16 %v2769, %v2761
    %v3794 = vpack.c.b16 %v2770, %v2762
    %v3795 = vpack.c.b16 %v2771, %v2763
    %v3796 = vpack.c.b16 %v2780, %v2772
    %v3797 = vpack.c.b16 %v2781, %v2773
    %v3798 = vpack.c.b16 %v2782, %v2774
    %v3799 = vpack.c.b16 %v2783, %v2775
    %v3800 = vpack.c.b16 %v2784, %v2776
    %v3801 = vpack.c.b16 %v2785, %v2777
    %v3802 = vpack.c.b16 %v2786, %v2778
    %v3803 = vpack.c.b16 %v2787, %v2779
    %v3804 = vpack.c.b16 %v2796, %v2788
    %v3805 = vpack.c.b16 %v2797, %v2789
    %v3806 = vpack.c.b16 %v2798, %v2790
    %v3807 = vpack.c.b16 %v2799, %v2791
    %v3808 = vpack.c.b16 %v2800, %v2792
    %v3809 = vpack.c.b16 %v2801, %v2793
    %v3810 = vpack.c.b16 %v2802, %v2794
    %v3811 = vpack.c.b16 %v2803, %v2795
    %v3812 = vpack.c.b16 %v2812, %v2804
    %v3813 = vpack.c.b16 %v2813, %v2805
    %v3814 = vpack.c.b16 %v2814, %v2806
    %v3815 = vpack.c.b16 %v2815, %v2807
    %v3816 = vpack.c.b16 %v2816, %v2808
    %v3817 = vpack.c.b16 %v2817, %v2809
    %v3818 = vpack.c.b16 %v2818, %v2810
    %v3819 = vpack.c.b16 %v2819, %v2811
    %v3820 = vpack.c.b16 %v2828, %v2820
    %v3821 = vpack.c.b16 %v2829, %v2821
    %v3822 = vpack.c.b16 %v2830, %v2822
    %v3823 = vpack.c.b16 %v2831, %v2823
    %v3824 = vpack.c.b16 %v2832, %v2824
    %v3825 = vpack.c.b16 %v2833, %v2825
    %v3826 = vpack.c.b16 %v2834, %v2826
    %v3827 = vpack.c.b16 %v2835, %v2827
    %v3828 = vpack.c.b16 %v2844, %v2836
    %v3829 = vpack.c.b16 %v2845, %v2837
    %v3830 = vpack.c.b16 %v2846, %v2838
    %v3831 = vpack.c.b16 %v2847, %v2839
    %v3832 = vpack.c.b16 %v2848, %v2840
    %v3833 = vpack.c.b16 %v2849, %v2841
    %v3834 = vpack.c.b16 %v2850, %v2842
    %v3835 = vpack.c.b16 %v2851, %v2843
    %v3836 = vpack.c.b16 %v2860, %v2852
    %v3837 = vpack.c.b16 %v2861, %v2853
    %v3838 = vpack.c.b16 %v2862, %v2854
    %v3839 = vpack.c.b16 %v2863, %v2855
    %v3840 = vpack.c.b16 %v2864, %v2856
    %v3841 = vpack.c.b16 %v2865, %v2857
    %v3842 = vpack.c.b16 %v2866, %v2858
    %v3843 = vpack.c.b16 %v2867, %v2859
    %v3844 = vpack.c.b16 %v2876, %v2868
    %v3845 = vpack.c.b16 %v2877, %v2869
    %v3846 = vpack.c.b16 %v2878, %v2870
    %v3847 = vpack.c.b16 %v2879, %v2871
    %v3848 = vpack.c.b16 %v2880, %v2872
    %v3849 = vpack.c.b16 %v2881, %v2873
    %v3850 = vpack.c.b16 %v2882, %v2874
    %v3851 = vpack.c.b16 %v2883, %v2875
    %v3852 = vpack.c.b16 %v2892, %v2884
    %v3853 = vpack.c.b16 %v2893, %v2885
    %v3854 = vpack.c.b16 %v2894, %v2886
    %v3855 = vpack.c.b16 %v2895, %v2887
    %v3856 = vpack.c.b16 %v2896, %v2888
    %v3857 = vpack.c.b16 %v2897, %v2889
    %v3858 = vpack.c.b16 %v2898, %v2890
    %v3859 = vpack.c.b16 %v2899, %v2891
    %v3860 = vpack.c.b16 %v2908, %v2900
    %v3861 = vpack.c.b16 %v2909, %v2901
    %v3862 = vpack.c.b16 %v2910, %v2902
    %v3863 = vpack.c.b16 %v2911, %v2903
    %v3864 = vpack.c.b16 %v2912, %v2904
    %v3865 = vpack.c.b16 %v2913, %v2905
    %v3866 = vpack.c.b16 %v2914, %v2906
    %v3867 = vpack.c.b16 %v2915, %v2907
    %v3868 = vpack.c.b16 %v2924, %v2916
    %v3869 = vpack.c.b16 %v2925, %v2917
    %v3870 = vpack.c.b16 %v2926, %v2918
    %v3871 = vpack.c.b16 %v2927, %v2919
    %v3872 = vpack.c.b16 %v2928, %v2920
    %v3873 = vpack.c.b16 %v2929, %v2921
    %v3874 = vpack.c.b16 %v2930, %v2922
    %v3875 = vpack.c.b16 %v2931, %v2923
    %v3876 = vpack.c.b16 %v2940, %v2932
    %v3877 = vpack.c.b16 %v2941, %v2933
    %v3878 = vpack.c.b16 %v2942, %v2934
    %v3879 = vpack.c.b16 %v2943, %v2935
    %v3880 = vpack.c.b16 %v2944, %v2936
    %v3881 = vpack.c.b16 %v2945, %v2937
    %v3882 = vpack.c.b16 %v2946, %v2938
    %v3883 = vpack.c.b16 %v2947, %v2939
    %v3884 = vpack.c.b16 %v2956, %v2948
    %v3885 = vpack.c.b16 %v2957, %v2949
    %v3886 = vpack.c.b16 %v2958, %v2950
    %v3887 = vpack.c.b16 %v2959, %v2951
    %v3888 = vpack.c.b16 %v2960, %v2952
    %v3889 = vpack.c.b16 %v2961, %v2953
    %v3890 = vpack.c.b16 %v2962, %v2954
    %v3891 = vpack.c.b16 %v2963, %v2955
    %v3892 = vpack.c.b16 %v2972, %v2964
    %v3893 = vpack.c.b16 %v2973, %v2965
    %v3894 = vpack.c.b16 %v2974, %v2966
    %v3895 = vpack.c.b16 %v2975, %v2967
    %v3896 = vpack.c.b16 %v2976, %v2968
    %v3897 = vpack.c.b16 %v2977, %v2969
    %v3898 = vpack.c.b16 %v2978, %v2970
    %v3899 = vpack.c.b16 %v2979, %v2971
    %v3900 = vpack.c.b16 %v2988, %v2980
    %v3901 = vpack.c.b16 %v2989, %v2981
    %v3902 = vpack.c.b16 %v2990, %v2982
    %v3903 = vpack.c.b16 %v2991, %v2983
    %v3904 = vpack.c.b16 %v2992, %v2984
    %v3905 = vpack.c.b16 %v2993, %v2985
    %v3906 = vpack.c.b16 %v2994, %v2986
    %v3907 = vpack.c.b16 %v2995, %v2987
    %v3908 = vpack.c.b16 %v3004, %v2996
    %v3909 = vpack.c.b16 %v3005, %v2997
    %v3910 = vpack.c.b16 %v3006, %v2998
    %v3911 = vpack.c.b16 %v3007, %v2999
    %v3912 = vpack.c.b16 %v3008, %v3000
    %v3913 = vpack.c.b16 %v3009, %v3001
    %v3914 = vpack.c.b16 %v3010, %v3002
    %v3915 = vpack.c.b16 %v3011, %v3003
    %v3916 = vpack.c.b16 %v3020, %v3012
    %v3917 = vpack.c.b16 %v3021, %v3013
    %v3918 = vpack.c.b16 %v3022, %v3014
    %v3919 = vpack.c.b16 %v3023, %v3015
    %v3920 = vpack.c.b16 %v3024, %v3016
    %v3921 = vpack.c.b16 %v3025, %v3017
    %v3922 = vpack.c.b16 %v3026, %v3018
    %v3923 = vpack.c.b16 %v3027, %v3019
    %v3924 = vpack.c.b16 %v3036, %v3028
    %v3925 = vpack.c.b16 %v3037, %v3029
    %v3926 = vpack.c.b16 %v3038, %v3030
    %v3927 = vpack.c.b16 %v3039, %v3031
    %v3928 = vpack.c.b16 %v3040, %v3032
    %v3929 = vpack.c.b16 %v3041, %v3033
    %v3930 = vpack.c.b16 %v3042, %v3034
    %v3931 = vpack.c.b16 %v3043, %v3035
    %v3932 = vpack.c.b16 %v3052, %v3044
    %v3933 = vpack.c.b16 %v3053, %v3045
    %v3934 = vpack.c.b16 %v3054, %v3046
    %v3935 = vpack.c.b16 %v3055, %v3047
    %v3936 = vpack.c.b16 %v3056, %v3048
    %v3937 = vpack.c.b16 %v3057, %v3049
    %v3938 = vpack.c.b16 %v3058, %v3050
    %v3939 = vpack.c.b16 %v3059, %v3051
    %v3940 = vpack.c.b16 %v3068, %v3060
    %v3941 = vpack.c.b16 %v3069, %v3061
    %v3942 = vpack.c.b16 %v3070, %v3062
    %v3943 = vpack.c.b16 %v3071, %v3063
    %v3944 = vpack.c.b16 %v3072, %v3064
    %v3945 = vpack.c.b16 %v3073, %v3065
    %v3946 = vpack.c.b16 %v3074, %v3066
    %v3947 = vpack.c.b16 %v3075, %v3067
    %v3948 = vpack.c.b16 %v3084, %v3076
    %v3949 = vpack.c.b16 %v3085, %v3077
    %v3950 = vpack.c.b16 %v3086, %v3078
    %v3951 = vpack.c.b16 %v3087, %v3079
    %v3952 = vpack.c.b16 %v3088, %v3080
    %v3953 = vpack.c.b16 %v3089, %v3081
    %v3954 = vpack.c.b16 %v3090, %v3082
    %v3955 = vpack.c.b16 %v3091, %v3083
    %v3956 = vpack.c.b16 %v3100, %v3092
    %v3957 = vpack.c.b16 %v3101, %v3093
    %v3958 = vpack.c.b16 %v3102, %v3094
    %v3959 = vpack.c.b16 %v3103, %v3095
    %v3960 = vpack.c.b16 %v3104, %v3096
    %v3961 = vpack.c.b16 %v3105, %v3097
    %v3962 = vpack.c.b16 %v3106, %v3098
    %v3963 = vpack.c.b16 %v3107, %v3099
    %v3964 = vpack.c.b16 %v3116, %v3108
    %v3965 = vpack.c.b16 %v3117, %v3109
    %v3966 = vpack.c.b16 %v3118, %v3110
    %v3967 = vpack.c.b16 %v3119, %v3111
    %v3968 = vpack.c.b16 %v3120, %v3112
    %v3969 = vpack.c.b16 %v3121, %v3113
    %v3970 = vpack.c.b16 %v3122, %v3114
    %v3971 = vpack.c.b16 %v3123, %v3115
    %v3972 = vpack.c.b16 %v3132, %v3124
    %v3973 = vpack.c.b16 %v3133, %v3125
    %v3974 = vpack.c.b16 %v3134, %v3126
    %v3975 = vpack.c.b16 %v3135, %v3127
    %v3976 = vpack.c.b16 %v3136, %v3128
    %v3977 = vpack.c.b16 %v3137, %v3129
    %v3978 = vpack.c.b16 %v3138, %v3130
    %v3979 = vpack.c.b16 %v3139, %v3131
    %v3980 = vpack.c.b16 %v3148, %v3140
    %v3981 = vpack.c.b16 %v3149, %v3141
    %v3982 = vpack.c.b16 %v3150, %v3142
    %v3983 = vpack.c.b16 %v3151, %v3143
    %v3984 = vpack.c.b16 %v3152, %v3144
    %v3985 = vpack.c.b16 %v3153, %v3145
    %v3986 = vpack.c.b16 %v3154, %v3146
    %v3987 = vpack.c.b16 %v3155, %v3147
    %v3988 = vpack.c.b16 %v3164, %v3156
    %v3989 = vpack.c.b16 %v3165, %v3157
    %v3990 = vpack.c.b16 %v3166, %v3158
    %v3991 = vpack.c.b16 %v3167, %v3159
    %v3992 = vpack.c.b16 %v3168, %v3160
    %v3993 = vpack.c.b16 %v3169, %v3161
    %v3994 = vpack.c.b16 %v3170, %v3162
    %v3995 = vpack.c.b16 %v3171, %v3163
    %v3996 = vpack.c.b16 %v3180, %v3172
    %v3997 = vpack.c.b16 %v3181, %v3173
    %v3998 = vpack.c.b16 %v3182, %v3174
    %v3999 = vpack.c.b16 %v3183, %v3175
    %v4000 = vpack.c.b16 %v3184, %v3176
    %v4001 = vpack.c.b16 %v3185, %v3177
    %v4002 = vpack.c.b16 %v3186, %v3178
    %v4003 = vpack.c.b16 %v3187, %v3179
    %v4004 = vpack.c.b16 %v3196, %v3188
    %v4005 = vpack.c.b16 %v3197, %v3189
    %v4006 = vpack.c.b16 %v3198, %v3190
    %v4007 = vpack.c.b16 %v3199, %v3191
    %v4008 = vpack.c.b16 %v3200, %v3192
    %v4009 = vpack.c.b16 %v3201, %v3193
    %v4010 = vpack.c.b16 %v3202, %v3194
    %v4011 = vpack.c.b16 %v3203, %v3195
    %v4012 = vpack.c.b16 %v3212, %v3204
    %v4013 = vpack.c.b16 %v3213, %v3205
    %v4014 = vpack.c.b16 %v3214, %v3206
    %v4015 = vpack.c.b16 %v3215, %v3207
    %v4016 = vpack.c.b16 %v3216, %v3208
    %v4017 = vpack.c.b16 %v3217, %v3209
    %v4018 = vpack.c.b16 %v3218, %v3210
    %v4019 = vpack.c.b16 %v3219, %v3211
    %v4020 = vpack.c.b16 %v3228, %v3220
    %v4021 = vpack.c.b16 %v3229, %v3221
    %v4022 = vpack.c.b16 %v3230, %v3222
    %v4023 = vpack.c.b16 %v3231, %v3223
    %v4024 = vpack.c.b16 %v3232, %v3224
    %v4025 = vpack.c.b16 %v3233, %v3225
    %v4026 = vpack.c.b16 %v3234, %v3226
    %v4027 = vpack.c.b16 %v3235, %v3227
    %v4028 = vpack.c.b16 %v3244, %v3236
    %v4029 = vpack.c.b16 %v3245, %v3237
    %v4030 = vpack.c.b16 %v3246, %v3238
    %v4031 = vpack.c.b16 %v3247, %v3239
    %v4032 = vpack.c.b16 %v3248, %v3240
    %v4033 = vpack.c.b16 %v3249, %v3241
    %v4034 = vpack.c.b16 %v3250, %v3242
    %v4035 = vpack.c.b16 %v3251, %v3243
    %v4036 = vpack.c.b16 %v3260, %v3252
    %v4037 = vpack.c.b16 %v3261, %v3253
    %v4038 = vpack.c.b16 %v3262, %v3254
    %v4039 = vpack.c.b16 %v3263, %v3255
    %v4040 = vpack.c.b16 %v3264, %v3256
    %v4041 = vpack.c.b16 %v3265, %v3257
    %v4042 = vpack.c.b16 %v3266, %v3258
    %v4043 = vpack.c.b16 %v3267, %v3259
    %v4044 = vpack.c.b16 %v3276, %v3268
    %v4045 = vpack.c.b16 %v3277, %v3269
    %v4046 = vpack.c.b16 %v3278, %v3270
    %v4047 = vpack.c.b16 %v3279, %v3271
    %v4048 = vpack.c.b16 %v3280, %v3272
    %v4049 = vpack.c.b16 %v3281, %v3273
    %v4050 = vpack.c.b16 %v3282, %v3274
    %v4051 = vpack.c.b16 %v3283, %v3275
    %4820 = vmatprep.subr.bf16.mxu0 %v3285
    %4821 = vmatpush1.bf16.msra.mxu0 %v3284
    %4822 = vmatprep.subr.bf16.mxu0 %v3293
    %4823 = vmatpush1.bf16.msra.mxu0 %v3292
    %4824 = vmatprep.subr.bf16.mxu0 %v3301
    %4825 = vmatpush1.bf16.msra.mxu0 %v3300
    %4826 = vmatprep.subr.bf16.mxu0 %v3309
    %4827 = vmatpush1.bf16.msra.mxu0 %v3308
    %4828 = vmatprep.subr.bf16.mxu0 %v3317
    %4829 = vmatpush1.bf16.msra.mxu0 %v3316
    %4830 = vmatprep.subr.bf16.mxu0 %v3325
    %4831 = vmatpush1.bf16.msra.mxu0 %v3324
    %4832 = vmatprep.subr.bf16.mxu0 %v3333
    %4833 = vmatpush1.bf16.msra.mxu0 %v3332
    %4834 = vmatprep.subr.bf16.mxu0 %v3341
    %4835 = vmatpush1.bf16.msra.mxu0 %v3340
    %4836 = vmatprep.subr.bf16.mxu0 %v3349
    %4837 = vmatpush1.bf16.msra.mxu0 %v3348
    %4838 = vmatprep.subr.bf16.mxu0 %v3357
    %4839 = vmatpush1.bf16.msra.mxu0 %v3356
    %4840 = vmatprep.subr.bf16.mxu0 %v3365
    %4841 = vmatpush1.bf16.msra.mxu0 %v3364
    %4842 = vmatprep.subr.bf16.mxu0 %v3373
    %4843 = vmatpush1.bf16.msra.mxu0 %v3372
    %4844 = vmatprep.subr.bf16.mxu0 %v3381
    %4845 = vmatpush1.bf16.msra.mxu0 %v3380
    %4846 = vmatprep.subr.bf16.mxu0 %v3389
    %4847 = vmatpush1.bf16.msra.mxu0 %v3388
    %4848 = vmatprep.subr.bf16.mxu0 %v3397
    %4849 = vmatpush1.bf16.msra.mxu0 %v3396
    %4850 = vmatprep.subr.bf16.mxu0 %v3405
    %4851 = vmatpush1.bf16.msra.mxu0 %v3404
    %4852 = vmatprep.mubr.bf16.mxu0 %v159
    %4853 = vmatmul.mubr.bf16.gmra.mrb[0].mxu0 %v158
    %v4854 = vpop.f32.mrb[0].mxu0
    %v4855 = vadd.f32 %v943, %v4854
    %v4856 = vpop.f32.mrb[0].mxu0
    %v4857 = vadd.f32 %v947, %v4856
    %v4858 = vpop.f32.mrb[0].mxu0
    %v4859 = vpop.f32.mrb[0].mxu0
    %4860 = vdwg.mxu0
    %4861 = vmatprep.subr.bf16.mxu0 %v3413
    %4862 = vmatpush1.bf16.msra.mxu0 %v3412
    %4863 = vmatprep.subr.bf16.mxu0 %v3421
    %4864 = vmatpush1.bf16.msra.mxu0 %v3420
    %4865 = vmatprep.subr.bf16.mxu0 %v3429
    %4866 = vmatpush1.bf16.msra.mxu0 %v3428
    %4867 = vmatprep.subr.bf16.mxu0 %v3437
    %4868 = vmatpush1.bf16.msra.mxu0 %v3436
    %4869 = vmatprep.subr.bf16.mxu0 %v3445
    %4870 = vmatpush1.bf16.msra.mxu0 %v3444
    %4871 = vmatprep.subr.bf16.mxu0 %v3453
    %4872 = vmatpush1.bf16.msra.mxu0 %v3452
    %4873 = vmatprep.subr.bf16.mxu0 %v3461
    %4874 = vmatpush1.bf16.msra.mxu0 %v3460
    %4875 = vmatprep.subr.bf16.mxu0 %v3469
    %4876 = vmatpush1.bf16.msra.mxu0 %v3468
    %4877 = vmatprep.subr.bf16.mxu0 %v3477
    %4878 = vmatpush1.bf16.msra.mxu0 %v3476
    %4879 = vmatprep.subr.bf16.mxu0 %v3485
    %4880 = vmatpush1.bf16.msra.mxu0 %v3484
    %4881 = vmatprep.subr.bf16.mxu0 %v3493
    %4882 = vmatpush1.bf16.msra.mxu0 %v3492
    %4883 = vmatprep.subr.bf16.mxu0 %v3501
    %4884 = vmatpush1.bf16.msra.mxu0 %v3500
    %4885 = vmatprep.subr.bf16.mxu0 %v3509
    %4886 = vmatpush1.bf16.msra.mxu0 %v3508
    %4887 = vmatprep.subr.bf16.mxu0 %v3517
    %4888 = vmatpush1.bf16.msra.mxu0 %v3516
    %4889 = vmatprep.subr.bf16.mxu0 %v3525
    %4890 = vmatpush1.bf16.msra.mxu0 %v3524
    %4891 = vmatprep.subr.bf16.mxu0 %v3533
    %4892 = vmatpush1.bf16.msra.mxu0 %v3532
    %4893 = vmatprep.mubr.bf16.mxu0 %v161
    %4894 = vmatmul.mubr.bf16.gmra.mrb[0].mxu0 %v160
    %v4895 = vpop.f32.mrb[0].mxu0
    %v4896 = vadd.f32 %v4855, %v4895
    %v4897 = vpop.f32.mrb[0].mxu0
    %v4898 = vadd.f32 %v4857, %v4897
    %v4899 = vpop.f32.mrb[0].mxu0
    %v4900 = vpop.f32.mrb[0].mxu0
    %4901 = vdwg.mxu0
    %4902 = vmatprep.subr.bf16.mxu0 %v3541
    %4903 = vmatpush1.bf16.msra.mxu0 %v3540
    %4904 = vmatprep.subr.bf16.mxu0 %v3549
    %4905 = vmatpush1.bf16.msra.mxu0 %v3548
    %4906 = vmatprep.subr.bf16.mxu0 %v3557
    %4907 = vmatpush1.bf16.msra.mxu0 %v3556
    %4908 = vmatprep.subr.bf16.mxu0 %v3565
    %4909 = vmatpush1.bf16.msra.mxu0 %v3564
    %4910 = vmatprep.subr.bf16.mxu0 %v3573
    %4911 = vmatpush1.bf16.msra.mxu0 %v3572
    %4912 = vmatprep.subr.bf16.mxu0 %v3581
    %4913 = vmatpush1.bf16.msra.mxu0 %v3580
    %4914 = vmatprep.subr.bf16.mxu0 %v3589
    %4915 = vmatpush1.bf16.msra.mxu0 %v3588
    %4916 = vmatprep.subr.bf16.mxu0 %v3597
    %4917 = vmatpush1.bf16.msra.mxu0 %v3596
    %4918 = vmatprep.subr.bf16.mxu0 %v3605
    %4919 = vmatpush1.bf16.msra.mxu0 %v3604
    %4920 = vmatprep.subr.bf16.mxu0 %v3613
    %4921 = vmatpush1.bf16.msra.mxu0 %v3612
    %4922 = vmatprep.subr.bf16.mxu0 %v3621
    %4923 = vmatpush1.bf16.msra.mxu0 %v3620
    %4924 = vmatprep.subr.bf16.mxu0 %v3629
    %4925 = vmatpush1.bf16.msra.mxu0 %v3628
    %4926 = vmatprep.subr.bf16.mxu0 %v3637
    %4927 = vmatpush1.bf16.msra.mxu0 %v3636
    %4928 = vmatprep.subr.bf16.mxu0 %v3645
    %4929 = vmatpush1.bf16.msra.mxu0 %v3644
    %4930 = vmatprep.subr.bf16.mxu0 %v3653
    %4931 = vmatpush1.bf16.msra.mxu0 %v3652
    %4932 = vmatprep.subr.bf16.mxu0 %v3661
    %4933 = vmatpush1.bf16.msra.mxu0 %v3660
    %4934 = vmatprep.mubr.bf16.mxu0 %v163
    %4935 = vmatmul.mubr.bf16.gmra.mrb[0].mxu0 %v162
    %v4936 = vpop.f32.mrb[0].mxu0
    %v4937 = vadd.f32 %v4896, %v4936
    %v4938 = vpop.f32.mrb[0].mxu0
    %v4939 = vadd.f32 %v4898, %v4938
    %v4940 = vpop.f32.mrb[0].mxu0
    %v4941 = vpop.f32.mrb[0].mxu0
    %4942 = vdwg.mxu0
    %4943 = vmatprep.subr.bf16.mxu0 %v3669
    %4944 = vmatpush1.bf16.msra.mxu0 %v3668
    %4945 = vmatprep.subr.bf16.mxu0 %v3677
    %4946 = vmatpush1.bf16.msra.mxu0 %v3676
    %4947 = vmatprep.subr.bf16.mxu0 %v3685
    %4948 = vmatpush1.bf16.msra.mxu0 %v3684
    %4949 = vmatprep.subr.bf16.mxu0 %v3693
    %4950 = vmatpush1.bf16.msra.mxu0 %v3692
    %4951 = vmatprep.subr.bf16.mxu0 %v3701
    %4952 = vmatpush1.bf16.msra.mxu0 %v3700
    %4953 = vmatprep.subr.bf16.mxu0 %v3709
    %4954 = vmatpush1.bf16.msra.mxu0 %v3708
    %4955 = vmatprep.subr.bf16.mxu0 %v3717
    %4956 = vmatpush1.bf16.msra.mxu0 %v3716
    %4957 = vmatprep.subr.bf16.mxu0 %v3725
    %4958 = vmatpush1.bf16.msra.mxu0 %v3724
    %4959 = vmatprep.subr.bf16.mxu0 %v3733
    %4960 = vmatpush1.bf16.msra.mxu0 %v3732
    %4961 = vmatprep.subr.bf16.mxu0 %v3741
    %4962 = vmatpush1.bf16.msra.mxu0 %v3740
    %4963 = vmatprep.subr.bf16.mxu0 %v3749
    %4964 = vmatpush1.bf16.msra.mxu0 %v3748
    %4965 = vmatprep.subr.bf16.mxu0 %v3757
    %4966 = vmatpush1.bf16.msra.mxu0 %v3756
    %4967 = vmatprep.subr.bf16.mxu0 %v3765
    %4968 = vmatpush1.bf16.msra.mxu0 %v3764
    %4969 = vmatprep.subr.bf16.mxu0 %v3773
    %4970 = vmatpush1.bf16.msra.mxu0 %v3772
    %4971 = vmatprep.subr.bf16.mxu0 %v3781
    %4972 = vmatpush1.bf16.msra.mxu0 %v3780
    %4973 = vmatprep.subr.bf16.mxu0 %v3789
    %4974 = vmatpush1.bf16.msra.mxu0 %v3788
    %4975 = vmatprep.mubr.bf16.mxu0 %v165
    %4976 = vmatmul.mubr.bf16.gmra.mrb[0].mxu0 %v164
    %v4977 = vpop.f32.mrb[0].mxu0
    %v4978 = vadd.f32 %v4937, %v4977
    %v4979 = vpop.f32.mrb[0].mxu0
    %v4980 = vadd.f32 %v4939, %v4979
    %v4981 = vpop.f32.mrb[0].mxu0
    %v4982 = vpop.f32.mrb[0].mxu0
    %4983 = vdwg.mxu0
    %4984 = vmatprep.subr.bf16.mxu0 %v3797
    %4985 = vmatpush1.bf16.msra.mxu0 %v3796
    %4986 = vmatprep.subr.bf16.mxu0 %v3805
    %4987 = vmatpush1.bf16.msra.mxu0 %v3804
    %4988 = vmatprep.subr.bf16.mxu0 %v3813
    %4989 = vmatpush1.bf16.msra.mxu0 %v3812
    %4990 = vmatprep.subr.bf16.mxu0 %v3821
    %4991 = vmatpush1.bf16.msra.mxu0 %v3820
    %4992 = vmatprep.subr.bf16.mxu0 %v3829
    %4993 = vmatpush1.bf16.msra.mxu0 %v3828
    %4994 = vmatprep.subr.bf16.mxu0 %v3837
    %4995 = vmatpush1.bf16.msra.mxu0 %v3836
    %4996 = vmatprep.subr.bf16.mxu0 %v3845
    %4997 = vmatpush1.bf16.msra.mxu0 %v3844
    %4998 = vmatprep.subr.bf16.mxu0 %v3853
    %4999 = vmatpush1.bf16.msra.mxu0 %v3852
    %5000 = vmatprep.subr.bf16.mxu0 %v3861
    %5001 = vmatpush1.bf16.msra.mxu0 %v3860
    %5002 = vmatprep.subr.bf16.mxu0 %v3869
    %5003 = vmatpush1.bf16.msra.mxu0 %v3868
    %5004 = vmatprep.subr.bf16.mxu0 %v3877
    %5005 = vmatpush1.bf16.msra.mxu0 %v3876
    %5006 = vmatprep.subr.bf16.mxu0 %v3885
    %5007 = vmatpush1.bf16.msra.mxu0 %v3884
    %5008 = vmatprep.subr.bf16.mxu0 %v3893
    %5009 = vmatpush1.bf16.msra.mxu0 %v3892
    %5010 = vmatprep.subr.bf16.mxu0 %v3901
    %5011 = vmatpush1.bf16.msra.mxu0 %v3900
    %5012 = vmatprep.subr.bf16.mxu0 %v3909
    %5013 = vmatpush1.bf16.msra.mxu0 %v3908
    %5014 = vmatprep.subr.bf16.mxu0 %v3917
    %5015 = vmatpush1.bf16.msra.mxu0 %v3916
    %5016 = vmatprep.mubr.bf16.mxu0 %v167
    %5017 = vmatmul.mubr.bf16.gmra.mrb[0].mxu0 %v166
    %v5018 = vpop.f32.mrb[0].mxu0
    %v5019 = vadd.f32 %v4978, %v5018
    %v5020 = vpop.f32.mrb[0].mxu0
    %v5021 = vadd.f32 %v4980, %v5020
    %v5022 = vpop.f32.mrb[0].mxu0
    %v5023 = vpop.f32.mrb[0].mxu0
    %5024 = vdwg.mxu0
    %5025 = vmatprep.subr.bf16.mxu0 %v3925
    %5026 = vmatpush1.bf16.msra.mxu0 %v3924
    %5027 = vmatprep.subr.bf16.mxu0 %v3933
    %5028 = vmatpush1.bf16.msra.mxu0 %v3932
    %5029 = vmatprep.subr.bf16.mxu0 %v3941
    %5030 = vmatpush1.bf16.msra.mxu0 %v3940
    %5031 = vmatprep.subr.bf16.mxu0 %v3949
    %5032 = vmatpush1.bf16.msra.mxu0 %v3948
    %5033 = vmatprep.subr.bf16.mxu0 %v3957
    %5034 = vmatpush1.bf16.msra.mxu0 %v3956
    %5035 = vmatprep.subr.bf16.mxu0 %v3965
    %5036 = vmatpush1.bf16.msra.mxu0 %v3964
    %5037 = vmatprep.subr.bf16.mxu0 %v3973
    %5038 = vmatpush1.bf16.msra.mxu0 %v3972
    %5039 = vmatprep.subr.bf16.mxu0 %v3981
    %5040 = vmatpush1.bf16.msra.mxu0 %v3980
    %5041 = vmatprep.subr.bf16.mxu0 %v3989
    %5042 = vmatpush1.bf16.msra.mxu0 %v3988
    %5043 = vmatprep.subr.bf16.mxu0 %v3997
    %5044 = vmatpush1.bf16.msra.mxu0 %v3996
    %5045 = vmatprep.subr.bf16.mxu0 %v4005
    %5046 = vmatpush1.bf16.msra.mxu0 %v4004
    %5047 = vmatprep.subr.bf16.mxu0 %v4013
    %5048 = vmatpush1.bf16.msra.mxu0 %v4012
    %5049 = vmatprep.subr.bf16.mxu0 %v4021
    %5050 = vmatpush1.bf16.msra.mxu0 %v4020
    %5051 = vmatprep.subr.bf16.mxu0 %v4029
    %5052 = vmatpush1.bf16.msra.mxu0 %v4028
    %5053 = vmatprep.subr.bf16.mxu0 %v4037
    %5054 = vmatpush1.bf16.msra.mxu0 %v4036
    %5055 = vmatprep.subr.bf16.mxu0 %v4045
    %5056 = vmatpush1.bf16.msra.mxu0 %v4044
    %5057 = vmatprep.mubr.bf16.mxu0 %v169
    %5058 = vmatmul.mubr.bf16.gmra.mrb[0].mxu0 %v168
    %v5059 = vpop.f32.mrb[0].mxu0
    %v5060 = vadd.f32 %v5019, %v5059
    %v5061 = vpop.f32.mrb[0].mxu0
    %v5062 = vadd.f32 %v5021, %v5061
    %v5063 = vpop.f32.mrb[0].mxu0
    %v5064 = vpop.f32.mrb[0].mxu0
    %5065 = vdwg.mxu0
    %5066 = vmatprep.subr.bf16.mxu0 %v3287
    %5067 = vmatpush1.bf16.msra.mxu0 %v3286
    %5068 = vmatprep.subr.bf16.mxu0 %v3295
    %5069 = vmatpush1.bf16.msra.mxu0 %v3294
    %5070 = vmatprep.subr.bf16.mxu0 %v3303
    %5071 = vmatpush1.bf16.msra.mxu0 %v3302
    %5072 = vmatprep.subr.bf16.mxu0 %v3311
    %5073 = vmatpush1.bf16.msra.mxu0 %v3310
    %5074 = vmatprep.subr.bf16.mxu0 %v3319
    %5075 = vmatpush1.bf16.msra.mxu0 %v3318
    %5076 = vmatprep.subr.bf16.mxu0 %v3327
    %5077 = vmatpush1.bf16.msra.mxu0 %v3326
    %5078 = vmatprep.subr.bf16.mxu0 %v3335
    %5079 = vmatpush1.bf16.msra.mxu0 %v3334
    %5080 = vmatprep.subr.bf16.mxu0 %v3343
    %5081 = vmatpush1.bf16.msra.mxu0 %v3342
    %5082 = vmatprep.subr.bf16.mxu0 %v3351
    %5083 = vmatpush1.bf16.msra.mxu0 %v3350
    %5084 = vmatprep.subr.bf16.mxu0 %v3359
    %5085 = vmatpush1.bf16.msra.mxu0 %v3358
    %5086 = vmatprep.subr.bf16.mxu0 %v3367
    %5087 = vmatpush1.bf16.msra.mxu0 %v3366
    %5088 = vmatprep.subr.bf16.mxu0 %v3375
    %5089 = vmatpush1.bf16.msra.mxu0 %v3374
    %5090 = vmatprep.subr.bf16.mxu0 %v3383
    %5091 = vmatpush1.bf16.msra.mxu0 %v3382
    %5092 = vmatprep.subr.bf16.mxu0 %v3391
    %5093 = vmatpush1.bf16.msra.mxu0 %v3390
    %5094 = vmatprep.subr.bf16.mxu0 %v3399
    %5095 = vmatpush1.bf16.msra.mxu0 %v3398
    %5096 = vmatprep.subr.bf16.mxu0 %v3407
    %5097 = vmatpush1.bf16.msra.mxu0 %v3406
    %5098 = vmatprep.mubr.bf16.mxu0 %v159
    %5099 = vmatmul.mubr.bf16.gmra.mrb[0].mxu0 %v158
    %v5100 = vpop.f32.mrb[0].mxu0
    %v5101 = vadd.f32 %v951, %v5100
    %v5102 = vpop.f32.mrb[0].mxu0
    %v5103 = vadd.f32 %v955, %v5102
    %v5104 = vpop.f32.mrb[0].mxu0
    %v5105 = vpop.f32.mrb[0].mxu0
    %5106 = vdwg.mxu0
    %5107 = vmatprep.subr.bf16.mxu0 %v3415
    %5108 = vmatpush1.bf16.msra.mxu0 %v3414
    %5109 = vmatprep.subr.bf16.mxu0 %v3423
    %5110 = vmatpush1.bf16.msra.mxu0 %v3422
    %5111 = vmatprep.subr.bf16.mxu0 %v3431
    %5112 = vmatpush1.bf16.msra.mxu0 %v3430
    %5113 = vmatprep.subr.bf16.mxu0 %v3439
    %5114 = vmatpush1.bf16.msra.mxu0 %v3438
    %5115 = vmatprep.subr.bf16.mxu0 %v3447
    %5116 = vmatpush1.bf16.msra.mxu0 %v3446
    %5117 = vmatprep.subr.bf16.mxu0 %v3455
    %5118 = vmatpush1.bf16.msra.mxu0 %v3454
    %5119 = vmatprep.subr.bf16.mxu0 %v3463
    %5120 = vmatpush1.bf16.msra.mxu0 %v3462
    %5121 = vmatprep.subr.bf16.mxu0 %v3471
    %5122 = vmatpush1.bf16.msra.mxu0 %v3470
    %5123 = vmatprep.subr.bf16.mxu0 %v3479
    %5124 = vmatpush1.bf16.msra.mxu0 %v3478
    %5125 = vmatprep.subr.bf16.mxu0 %v3487
    %5126 = vmatpush1.bf16.msra.mxu0 %v3486
    %5127 = vmatprep.subr.bf16.mxu0 %v3495
    %5128 = vmatpush1.bf16.msra.mxu0 %v3494
    %5129 = vmatprep.subr.bf16.mxu0 %v3503
    %5130 = vmatpush1.bf16.msra.mxu0 %v3502
    %5131 = vmatprep.subr.bf16.mxu0 %v3511
    %5132 = vmatpush1.bf16.msra.mxu0 %v3510
    %5133 = vmatprep.subr.bf16.mxu0 %v3519
    %5134 = vmatpush1.bf16.msra.mxu0 %v3518
    %5135 = vmatprep.subr.bf16.mxu0 %v3527
    %5136 = vmatpush1.bf16.msra.mxu0 %v3526
    %5137 = vmatprep.subr.bf16.mxu0 %v3535
    %5138 = vmatpush1.bf16.msra.mxu0 %v3534
    %5139 = vmatprep.mubr.bf16.mxu0 %v161
    %5140 = vmatmul.mubr.bf16.gmra.mrb[0].mxu0 %v160
    %v5141 = vpop.f32.mrb[0].mxu0
    %v5142 = vadd.f32 %v5101, %v5141
    %v5143 = vpop.f32.mrb[0].mxu0
    %v5144 = vadd.f32 %v5103, %v5143
    %v5145 = vpop.f32.mrb[0].mxu0
    %v5146 = vpop.f32.mrb[0].mxu0
    %5147 = vdwg.mxu0
    %5148 = vmatprep.subr.bf16.mxu0 %v3543
    %5149 = vmatpush1.bf16.msra.mxu0 %v3542
    %5150 = vmatprep.subr.bf16.mxu0 %v3551
    %5151 = vmatpush1.bf16.msra.mxu0 %v3550
    %5152 = vmatprep.subr.bf16.mxu0 %v3559
    %5153 = vmatpush1.bf16.msra.mxu0 %v3558
    %5154 = vmatprep.subr.bf16.mxu0 %v3567
    %5155 = vmatpush1.bf16.msra.mxu0 %v3566
    %5156 = vmatprep.subr.bf16.mxu0 %v3575
    %5157 = vmatpush1.bf16.msra.mxu0 %v3574
    %5158 = vmatprep.subr.bf16.mxu0 %v3583
    %5159 = vmatpush1.bf16.msra.mxu0 %v3582
    %5160 = vmatprep.subr.bf16.mxu0 %v3591
    %5161 = vmatpush1.bf16.msra.mxu0 %v3590
    %5162 = vmatprep.subr.bf16.mxu0 %v3599
    %5163 = vmatpush1.bf16.msra.mxu0 %v3598
    %5164 = vmatprep.subr.bf16.mxu0 %v3607
    %5165 = vmatpush1.bf16.msra.mxu0 %v3606
    %5166 = vmatprep.subr.bf16.mxu0 %v3615
    %5167 = vmatpush1.bf16.msra.mxu0 %v3614
    %5168 = vmatprep.subr.bf16.mxu0 %v3623
    %5169 = vmatpush1.bf16.msra.mxu0 %v3622
    %5170 = vmatprep.subr.bf16.mxu0 %v3631
    %5171 = vmatpush1.bf16.msra.mxu0 %v3630
    %5172 = vmatprep.subr.bf16.mxu0 %v3639
    %5173 = vmatpush1.bf16.msra.mxu0 %v3638
    %5174 = vmatprep.subr.bf16.mxu0 %v3647
    %5175 = vmatpush1.bf16.msra.mxu0 %v3646
    %5176 = vmatprep.subr.bf16.mxu0 %v3655
    %5177 = vmatpush1.bf16.msra.mxu0 %v3654
    %5178 = vmatprep.subr.bf16.mxu0 %v3663
    %5179 = vmatpush1.bf16.msra.mxu0 %v3662
    %5180 = vmatprep.mubr.bf16.mxu0 %v163
    %5181 = vmatmul.mubr.bf16.gmra.mrb[0].mxu0 %v162
    %v5182 = vpop.f32.mrb[0].mxu0
    %v5183 = vadd.f32 %v5142, %v5182
    %v5184 = vpop.f32.mrb[0].mxu0
    %v5185 = vadd.f32 %v5144, %v5184
    %v5186 = vpop.f32.mrb[0].mxu0
    %v5187 = vpop.f32.mrb[0].mxu0
    %5188 = vdwg.mxu0
    %5189 = vmatprep.subr.bf16.mxu0 %v3671
    %5190 = vmatpush1.bf16.msra.mxu0 %v3670
    %5191 = vmatprep.subr.bf16.mxu0 %v3679
    %5192 = vmatpush1.bf16.msra.mxu0 %v3678
    %5193 = vmatprep.subr.bf16.mxu0 %v3687
    %5194 = vmatpush1.bf16.msra.mxu0 %v3686
    %5195 = vmatprep.subr.bf16.mxu0 %v3695
    %5196 = vmatpush1.bf16.msra.mxu0 %v3694
    %5197 = vmatprep.subr.bf16.mxu0 %v3703
    %5198 = vmatpush1.bf16.msra.mxu0 %v3702
    %5199 = vmatprep.subr.bf16.mxu0 %v3711
    %5200 = vmatpush1.bf16.msra.mxu0 %v3710
    %5201 = vmatprep.subr.bf16.mxu0 %v3719
    %5202 = vmatpush1.bf16.msra.mxu0 %v3718
    %5203 = vmatprep.subr.bf16.mxu0 %v3727
    %5204 = vmatpush1.bf16.msra.mxu0 %v3726
    %5205 = vmatprep.subr.bf16.mxu0 %v3735
    %5206 = vmatpush1.bf16.msra.mxu0 %v3734
    %5207 = vmatprep.subr.bf16.mxu0 %v3743
    %5208 = vmatpush1.bf16.msra.mxu0 %v3742
    %5209 = vmatprep.subr.bf16.mxu0 %v3751
    %5210 = vmatpush1.bf16.msra.mxu0 %v3750
    %5211 = vmatprep.subr.bf16.mxu0 %v3759
    %5212 = vmatpush1.bf16.msra.mxu0 %v3758
    %5213 = vmatprep.subr.bf16.mxu0 %v3767
    %5214 = vmatpush1.bf16.msra.mxu0 %v3766
    %5215 = vmatprep.subr.bf16.mxu0 %v3775
    %5216 = vmatpush1.bf16.msra.mxu0 %v3774
    %5217 = vmatprep.subr.bf16.mxu0 %v3783
    %5218 = vmatpush1.bf16.msra.mxu0 %v3782
    %5219 = vmatprep.subr.bf16.mxu0 %v3791
    %5220 = vmatpush1.bf16.msra.mxu0 %v3790
    %5221 = vmatprep.mubr.bf16.mxu0 %v165
    %5222 = vmatmul.mubr.bf16.gmra.mrb[0].mxu0 %v164
    %v5223 = vpop.f32.mrb[0].mxu0
    %v5224 = vadd.f32 %v5183, %v5223
    %v5225 = vpop.f32.mrb[0].mxu0
    %v5226 = vadd.f32 %v5185, %v5225
    %v5227 = vpop.f32.mrb[0].mxu0
    %v5228 = vpop.f32.mrb[0].mxu0
    %5229 = vdwg.mxu0
    %5230 = vmatprep.subr.bf16.mxu0 %v3799
    %5231 = vmatpush1.bf16.msra.mxu0 %v3798
    %5232 = vmatprep.subr.bf16.mxu0 %v3807
    %5233 = vmatpush1.bf16.msra.mxu0 %v3806
    %5234 = vmatprep.subr.bf16.mxu0 %v3815
    %5235 = vmatpush1.bf16.msra.mxu0 %v3814
    %5236 = vmatprep.subr.bf16.mxu0 %v3823
    %5237 = vmatpush1.bf16.msra.mxu0 %v3822
    %5238 = vmatprep.subr.bf16.mxu0 %v3831
    %5239 = vmatpush1.bf16.msra.mxu0 %v3830
    %5240 = vmatprep.subr.bf16.mxu0 %v3839
    %5241 = vmatpush1.bf16.msra.mxu0 %v3838
    %5242 = vmatprep.subr.bf16.mxu0 %v3847
    %5243 = vmatpush1.bf16.msra.mxu0 %v3846
    %5244 = vmatprep.subr.bf16.mxu0 %v3855
    %5245 = vmatpush1.bf16.msra.mxu0 %v3854
    %5246 = vmatprep.subr.bf16.mxu0 %v3863
    %5247 = vmatpush1.bf16.msra.mxu0 %v3862
    %5248 = vmatprep.subr.bf16.mxu0 %v3871
    %5249 = vmatpush1.bf16.msra.mxu0 %v3870
    %5250 = vmatprep.subr.bf16.mxu0 %v3879
    %5251 = vmatpush1.bf16.msra.mxu0 %v3878
    %5252 = vmatprep.subr.bf16.mxu0 %v3887
    %5253 = vmatpush1.bf16.msra.mxu0 %v3886
    %5254 = vmatprep.subr.bf16.mxu0 %v3895
    %5255 = vmatpush1.bf16.msra.mxu0 %v3894
    %5256 = vmatprep.subr.bf16.mxu0 %v3903
    %5257 = vmatpush1.bf16.msra.mxu0 %v3902
    %5258 = vmatprep.subr.bf16.mxu0 %v3911
    %5259 = vmatpush1.bf16.msra.mxu0 %v3910
    %5260 = vmatprep.subr.bf16.mxu0 %v3919
    %5261 = vmatpush1.bf16.msra.mxu0 %v3918
    %5262 = vmatprep.mubr.bf16.mxu0 %v167
    %5263 = vmatmul.mubr.bf16.gmra.mrb[0].mxu0 %v166
    %v5264 = vpop.f32.mrb[0].mxu0
    %v5265 = vadd.f32 %v5224, %v5264
    %v5266 = vpop.f32.mrb[0].mxu0
    %v5267 = vadd.f32 %v5226, %v5266
    %v5268 = vpop.f32.mrb[0].mxu0
    %v5269 = vpop.f32.mrb[0].mxu0
    %5270 = vdwg.mxu0
    %5271 = vmatprep.subr.bf16.mxu0 %v3927
    %5272 = vmatpush1.bf16.msra.mxu0 %v3926
    %5273 = vmatprep.subr.bf16.mxu0 %v3935
    %5274 = vmatpush1.bf16.msra.mxu0 %v3934
    %5275 = vmatprep.subr.bf16.mxu0 %v3943
    %5276 = vmatpush1.bf16.msra.mxu0 %v3942
    %5277 = vmatprep.subr.bf16.mxu0 %v3951
    %5278 = vmatpush1.bf16.msra.mxu0 %v3950
    %5279 = vmatprep.subr.bf16.mxu0 %v3959
    %5280 = vmatpush1.bf16.msra.mxu0 %v3958
    %5281 = vmatprep.subr.bf16.mxu0 %v3967
    %5282 = vmatpush1.bf16.msra.mxu0 %v3966
    %5283 = vmatprep.subr.bf16.mxu0 %v3975
    %5284 = vmatpush1.bf16.msra.mxu0 %v3974
    %5285 = vmatprep.subr.bf16.mxu0 %v3983
    %5286 = vmatpush1.bf16.msra.mxu0 %v3982
    %5287 = vmatprep.subr.bf16.mxu0 %v3991
    %5288 = vmatpush1.bf16.msra.mxu0 %v3990
    %5289 = vmatprep.subr.bf16.mxu0 %v3999
    %5290 = vmatpush1.bf16.msra.mxu0 %v3998
    %5291 = vmatprep.subr.bf16.mxu0 %v4007
    %5292 = vmatpush1.bf16.msra.mxu0 %v4006
    %5293 = vmatprep.subr.bf16.mxu0 %v4015
    %5294 = vmatpush1.bf16.msra.mxu0 %v4014
    %5295 = vmatprep.subr.bf16.mxu0 %v4023
    %5296 = vmatpush1.bf16.msra.mxu0 %v4022
    %5297 = vmatprep.subr.bf16.mxu0 %v4031
    %5298 = vmatpush1.bf16.msra.mxu0 %v4030
    %5299 = vmatprep.subr.bf16.mxu0 %v4039
    %5300 = vmatpush1.bf16.msra.mxu0 %v4038
    %5301 = vmatprep.subr.bf16.mxu0 %v4047
    %5302 = vmatpush1.bf16.msra.mxu0 %v4046
    %5303 = vmatprep.mubr.bf16.mxu0 %v169
    %5304 = vmatmul.mubr.bf16.gmra.mrb[0].mxu0 %v168
    %v5305 = vpop.f32.mrb[0].mxu0
    %v5306 = vadd.f32 %v5265, %v5305
    %v5307 = vpop.f32.mrb[0].mxu0
    %v5308 = vadd.f32 %v5267, %v5307
    %v5309 = vpop.f32.mrb[0].mxu0
    %v5310 = vpop.f32.mrb[0].mxu0
    %5311 = vdwg.mxu0
    %5312 = vmatprep.subr.bf16.mxu0 %v3289
    %5313 = vmatpush1.bf16.msra.mxu0 %v3288
    %5314 = vmatprep.subr.bf16.mxu0 %v3297
    %5315 = vmatpush1.bf16.msra.mxu0 %v3296
    %5316 = vmatprep.subr.bf16.mxu0 %v3305
    %5317 = vmatpush1.bf16.msra.mxu0 %v3304
    %5318 = vmatprep.subr.bf16.mxu0 %v3313
    %5319 = vmatpush1.bf16.msra.mxu0 %v3312
    %5320 = vmatprep.subr.bf16.mxu0 %v3321
    %5321 = vmatpush1.bf16.msra.mxu0 %v3320
    %5322 = vmatprep.subr.bf16.mxu0 %v3329
    %5323 = vmatpush1.bf16.msra.mxu0 %v3328
    %5324 = vmatprep.subr.bf16.mxu0 %v3337
    %5325 = vmatpush1.bf16.msra.mxu0 %v3336
    %5326 = vmatprep.subr.bf16.mxu0 %v3345
    %5327 = vmatpush1.bf16.msra.mxu0 %v3344
    %5328 = vmatprep.subr.bf16.mxu0 %v3353
    %5329 = vmatpush1.bf16.msra.mxu0 %v3352
    %5330 = vmatprep.subr.bf16.mxu0 %v3361
    %5331 = vmatpush1.bf16.msra.mxu0 %v3360
    %5332 = vmatprep.subr.bf16.mxu0 %v3369
    %5333 = vmatpush1.bf16.msra.mxu0 %v3368
    %5334 = vmatprep.subr.bf16.mxu0 %v3377
    %5335 = vmatpush1.bf16.msra.mxu0 %v3376
    %5336 = vmatprep.subr.bf16.mxu0 %v3385
    %5337 = vmatpush1.bf16.msra.mxu0 %v3384
    %5338 = vmatprep.subr.bf16.mxu0 %v3393
    %5339 = vmatpush1.bf16.msra.mxu0 %v3392
    %5340 = vmatprep.subr.bf16.mxu0 %v3401
    %5341 = vmatpush1.bf16.msra.mxu0 %v3400
    %5342 = vmatprep.subr.bf16.mxu0 %v3409
    %5343 = vmatpush1.bf16.msra.mxu0 %v3408
    %5344 = vmatprep.mubr.bf16.mxu0 %v159
    %5345 = vmatmul.mubr.bf16.gmra.mrb[0].mxu0 %v158
    %v5346 = vpop.f32.mrb[0].mxu0
    %v5347 = vadd.f32 %v959, %v5346
    %v5348 = vpop.f32.mrb[0].mxu0
    %v5349 = vadd.f32 %v963, %v5348
    %v5350 = vpop.f32.mrb[0].mxu0
    %v5351 = vpop.f32.mrb[0].mxu0
    %5352 = vdwg.mxu0
    %5353 = vmatprep.subr.bf16.mxu0 %v3417
    %5354 = vmatpush1.bf16.msra.mxu0 %v3416
    %5355 = vmatprep.subr.bf16.mxu0 %v3425
    %5356 = vmatpush1.bf16.msra.mxu0 %v3424
    %5357 = vmatprep.subr.bf16.mxu0 %v3433
    %5358 = vmatpush1.bf16.msra.mxu0 %v3432
    %5359 = vmatprep.subr.bf16.mxu0 %v3441
    %5360 = vmatpush1.bf16.msra.mxu0 %v3440
    %5361 = vmatprep.subr.bf16.mxu0 %v3449
    %5362 = vmatpush1.bf16.msra.mxu0 %v3448
    %5363 = vmatprep.subr.bf16.mxu0 %v3457
    %5364 = vmatpush1.bf16.msra.mxu0 %v3456
    %5365 = vmatprep.subr.bf16.mxu0 %v3465
    %5366 = vmatpush1.bf16.msra.mxu0 %v3464
    %5367 = vmatprep.subr.bf16.mxu0 %v3473
    %5368 = vmatpush1.bf16.msra.mxu0 %v3472
    %5369 = vmatprep.subr.bf16.mxu0 %v3481
    %5370 = vmatpush1.bf16.msra.mxu0 %v3480
    %5371 = vmatprep.subr.bf16.mxu0 %v3489
    %5372 = vmatpush1.bf16.msra.mxu0 %v3488
    %5373 = vmatprep.subr.bf16.mxu0 %v3497
    %5374 = vmatpush1.bf16.msra.mxu0 %v3496
    %5375 = vmatprep.subr.bf16.mxu0 %v3505
    %5376 = vmatpush1.bf16.msra.mxu0 %v3504
    %5377 = vmatprep.subr.bf16.mxu0 %v3513
    %5378 = vmatpush1.bf16.msra.mxu0 %v3512
    %5379 = vmatprep.subr.bf16.mxu0 %v3521
    %5380 = vmatpush1.bf16.msra.mxu0 %v3520
    %5381 = vmatprep.subr.bf16.mxu0 %v3529
    %5382 = vmatpush1.bf16.msra.mxu0 %v3528
    %5383 = vmatprep.subr.bf16.mxu0 %v3537
    %5384 = vmatpush1.bf16.msra.mxu0 %v3536
    %5385 = vmatprep.mubr.bf16.mxu0 %v161
    %5386 = vmatmul.mubr.bf16.gmra.mrb[0].mxu0 %v160
    %v5387 = vpop.f32.mrb[0].mxu0
    %v5388 = vadd.f32 %v5347, %v5387
    %v5389 = vpop.f32.mrb[0].mxu0
    %v5390 = vadd.f32 %v5349, %v5389
    %v5391 = vpop.f32.mrb[0].mxu0
    %v5392 = vpop.f32.mrb[0].mxu0
    %5393 = vdwg.mxu0
    %5394 = vmatprep.subr.bf16.mxu0 %v3545
    %5395 = vmatpush1.bf16.msra.mxu0 %v3544
    %5396 = vmatprep.subr.bf16.mxu0 %v3553
    %5397 = vmatpush1.bf16.msra.mxu0 %v3552
    %5398 = vmatprep.subr.bf16.mxu0 %v3561
    %5399 = vmatpush1.bf16.msra.mxu0 %v3560
    %5400 = vmatprep.subr.bf16.mxu0 %v3569
    %5401 = vmatpush1.bf16.msra.mxu0 %v3568
    %5402 = vmatprep.subr.bf16.mxu0 %v3577
    %5403 = vmatpush1.bf16.msra.mxu0 %v3576
    %5404 = vmatprep.subr.bf16.mxu0 %v3585
    %5405 = vmatpush1.bf16.msra.mxu0 %v3584
    %5406 = vmatprep.subr.bf16.mxu0 %v3593
    %5407 = vmatpush1.bf16.msra.mxu0 %v3592
    %5408 = vmatprep.subr.bf16.mxu0 %v3601
    %5409 = vmatpush1.bf16.msra.mxu0 %v3600
    %5410 = vmatprep.subr.bf16.mxu0 %v3609
    %5411 = vmatpush1.bf16.msra.mxu0 %v3608
    %5412 = vmatprep.subr.bf16.mxu0 %v3617
    %5413 = vmatpush1.bf16.msra.mxu0 %v3616
    %5414 = vmatprep.subr.bf16.mxu0 %v3625
    %5415 = vmatpush1.bf16.msra.mxu0 %v3624
    %5416 = vmatprep.subr.bf16.mxu0 %v3633
    %5417 = vmatpush1.bf16.msra.mxu0 %v3632
    %5418 = vmatprep.subr.bf16.mxu0 %v3641
    %5419 = vmatpush1.bf16.msra.mxu0 %v3640
    %5420 = vmatprep.subr.bf16.mxu0 %v3649
    %5421 = vmatpush1.bf16.msra.mxu0 %v3648
    %5422 = vmatprep.subr.bf16.mxu0 %v3657
    %5423 = vmatpush1.bf16.msra.mxu0 %v3656
    %5424 = vmatprep.subr.bf16.mxu0 %v3665
    %5425 = vmatpush1.bf16.msra.mxu0 %v3664
    %5426 = vmatprep.mubr.bf16.mxu0 %v163
    %5427 = vmatmul.mubr.bf16.gmra.mrb[0].mxu0 %v162
    %v5428 = vpop.f32.mrb[0].mxu0
    %v5429 = vadd.f32 %v5388, %v5428
    %v5430 = vpop.f32.mrb[0].mxu0
    %v5431 = vadd.f32 %v5390, %v5430
    %v5432 = vpop.f32.mrb[0].mxu0
    %v5433 = vpop.f32.mrb[0].mxu0
    %5434 = vdwg.mxu0
    %5435 = vmatprep.subr.bf16.mxu0 %v3673
    %5436 = vmatpush1.bf16.msra.mxu0 %v3672
    %5437 = vmatprep.subr.bf16.mxu0 %v3681
    %5438 = vmatpush1.bf16.msra.mxu0 %v3680
    %5439 = vmatprep.subr.bf16.mxu0 %v3689
    %5440 = vmatpush1.bf16.msra.mxu0 %v3688
    %5441 = vmatprep.subr.bf16.mxu0 %v3697
    %5442 = vmatpush1.bf16.msra.mxu0 %v3696
    %5443 = vmatprep.subr.bf16.mxu0 %v3705
    %5444 = vmatpush1.bf16.msra.mxu0 %v3704
    %5445 = vmatprep.subr.bf16.mxu0 %v3713
    %5446 = vmatpush1.bf16.msra.mxu0 %v3712
    %5447 = vmatprep.subr.bf16.mxu0 %v3721
    %5448 = vmatpush1.bf16.msra.mxu0 %v3720
    %5449 = vmatprep.subr.bf16.mxu0 %v3729
    %5450 = vmatpush1.bf16.msra.mxu0 %v3728
    %5451 = vmatprep.subr.bf16.mxu0 %v3737
    %5452 = vmatpush1.bf16.msra.mxu0 %v3736
    %5453 = vmatprep.subr.bf16.mxu0 %v3745
    %5454 = vmatpush1.bf16.msra.mxu0 %v3744
    %5455 = vmatprep.subr.bf16.mxu0 %v3753
    %5456 = vmatpush1.bf16.msra.mxu0 %v3752
    %5457 = vmatprep.subr.bf16.mxu0 %v3761
    %5458 = vmatpush1.bf16.msra.mxu0 %v3760
    %5459 = vmatprep.subr.bf16.mxu0 %v3769
    %5460 = vmatpush1.bf16.msra.mxu0 %v3768
    %5461 = vmatprep.subr.bf16.mxu0 %v3777
    %5462 = vmatpush1.bf16.msra.mxu0 %v3776
    %5463 = vmatprep.subr.bf16.mxu0 %v3785
    %5464 = vmatpush1.bf16.msra.mxu0 %v3784
    %5465 = vmatprep.subr.bf16.mxu0 %v3793
    %5466 = vmatpush1.bf16.msra.mxu0 %v3792
    %5467 = vmatprep.mubr.bf16.mxu0 %v165
    %5468 = vmatmul.mubr.bf16.gmra.mrb[0].mxu0 %v164
    %v5469 = vpop.f32.mrb[0].mxu0
    %v5470 = vadd.f32 %v5429, %v5469
    %v5471 = vpop.f32.mrb[0].mxu0
    %v5472 = vadd.f32 %v5431, %v5471
    %v5473 = vpop.f32.mrb[0].mxu0
    %v5474 = vpop.f32.mrb[0].mxu0
    %5475 = vdwg.mxu0
    %5476 = vmatprep.subr.bf16.mxu0 %v3801
    %5477 = vmatpush1.bf16.msra.mxu0 %v3800
    %5478 = vmatprep.subr.bf16.mxu0 %v3809
    %5479 = vmatpush1.bf16.msra.mxu0 %v3808
    %5480 = vmatprep.subr.bf16.mxu0 %v3817
    %5481 = vmatpush1.bf16.msra.mxu0 %v3816
    %5482 = vmatprep.subr.bf16.mxu0 %v3825
    %5483 = vmatpush1.bf16.msra.mxu0 %v3824
    %5484 = vmatprep.subr.bf16.mxu0 %v3833
    %5485 = vmatpush1.bf16.msra.mxu0 %v3832
    %5486 = vmatprep.subr.bf16.mxu0 %v3841
    %5487 = vmatpush1.bf16.msra.mxu0 %v3840
    %5488 = vmatprep.subr.bf16.mxu0 %v3849
    %5489 = vmatpush1.bf16.msra.mxu0 %v3848
    %5490 = vmatprep.subr.bf16.mxu0 %v3857
    %5491 = vmatpush1.bf16.msra.mxu0 %v3856
    %5492 = vmatprep.subr.bf16.mxu0 %v3865
    %5493 = vmatpush1.bf16.msra.mxu0 %v3864
    %5494 = vmatprep.subr.bf16.mxu0 %v3873
    %5495 = vmatpush1.bf16.msra.mxu0 %v3872
    %5496 = vmatprep.subr.bf16.mxu0 %v3881
    %5497 = vmatpush1.bf16.msra.mxu0 %v3880
    %5498 = vmatprep.subr.bf16.mxu0 %v3889
    %5499 = vmatpush1.bf16.msra.mxu0 %v3888
    %5500 = vmatprep.subr.bf16.mxu0 %v3897
    %5501 = vmatpush1.bf16.msra.mxu0 %v3896
    %5502 = vmatprep.subr.bf16.mxu0 %v3905
    %5503 = vmatpush1.bf16.msra.mxu0 %v3904
    %5504 = vmatprep.subr.bf16.mxu0 %v3913
    %5505 = vmatpush1.bf16.msra.mxu0 %v3912
    %5506 = vmatprep.subr.bf16.mxu0 %v3921
    %5507 = vmatpush1.bf16.msra.mxu0 %v3920
    %5508 = vmatprep.mubr.bf16.mxu0 %v167
    %5509 = vmatmul.mubr.bf16.gmra.mrb[0].mxu0 %v166
    %v5510 = vpop.f32.mrb[0].mxu0
    %v5511 = vadd.f32 %v5470, %v5510
    %v5512 = vpop.f32.mrb[0].mxu0
    %v5513 = vadd.f32 %v5472, %v5512
    %v5514 = vpop.f32.mrb[0].mxu0
    %v5515 = vpop.f32.mrb[0].mxu0
    %5516 = vdwg.mxu0
    %5517 = vmatprep.subr.bf16.mxu0 %v3929
    %5518 = vmatpush1.bf16.msra.mxu0 %v3928
    %5519 = vmatprep.subr.bf16.mxu0 %v3937
    %5520 = vmatpush1.bf16.msra.mxu0 %v3936
    %5521 = vmatprep.subr.bf16.mxu0 %v3945
    %5522 = vmatpush1.bf16.msra.mxu0 %v3944
    %5523 = vmatprep.subr.bf16.mxu0 %v3953
    %5524 = vmatpush1.bf16.msra.mxu0 %v3952
    %5525 = vmatprep.subr.bf16.mxu0 %v3961
    %5526 = vmatpush1.bf16.msra.mxu0 %v3960
    %5527 = vmatprep.subr.bf16.mxu0 %v3969
    %5528 = vmatpush1.bf16.msra.mxu0 %v3968
    %5529 = vmatprep.subr.bf16.mxu0 %v3977
    %5530 = vmatpush1.bf16.msra.mxu0 %v3976
    %5531 = vmatprep.subr.bf16.mxu0 %v3985
    %5532 = vmatpush1.bf16.msra.mxu0 %v3984
    %5533 = vmatprep.subr.bf16.mxu0 %v3993
    %5534 = vmatpush1.bf16.msra.mxu0 %v3992
    %5535 = vmatprep.subr.bf16.mxu0 %v4001
    %5536 = vmatpush1.bf16.msra.mxu0 %v4000
    %5537 = vmatprep.subr.bf16.mxu0 %v4009
    %5538 = vmatpush1.bf16.msra.mxu0 %v4008
    %5539 = vmatprep.subr.bf16.mxu0 %v4017
    %5540 = vmatpush1.bf16.msra.mxu0 %v4016
    %5541 = vmatprep.subr.bf16.mxu0 %v4025
    %5542 = vmatpush1.bf16.msra.mxu0 %v4024
    %5543 = vmatprep.subr.bf16.mxu0 %v4033
    %5544 = vmatpush1.bf16.msra.mxu0 %v4032
    %5545 = vmatprep.subr.bf16.mxu0 %v4041
    %5546 = vmatpush1.bf16.msra.mxu0 %v4040
    %5547 = vmatprep.subr.bf16.mxu0 %v4049
    %5548 = vmatpush1.bf16.msra.mxu0 %v4048
    %5549 = vmatprep.mubr.bf16.mxu0 %v169
    %5550 = vmatmul.mubr.bf16.gmra.mrb[0].mxu0 %v168
    %v5551 = vpop.f32.mrb[0].mxu0
    %v5552 = vadd.f32 %v5511, %v5551
    %v5553 = vpop.f32.mrb[0].mxu0
    %v5554 = vadd.f32 %v5513, %v5553
    %v5555 = vpop.f32.mrb[0].mxu0
    %v5556 = vpop.f32.mrb[0].mxu0
    %5557 = vdwg.mxu0
    %5558 = vmatprep.subr.bf16.mxu0 %v3291
    %5559 = vmatpush1.bf16.msra.mxu0 %v3290
    %5560 = vmatprep.subr.bf16.mxu0 %v3299
    %5561 = vmatpush1.bf16.msra.mxu0 %v3298
    %5562 = vmatprep.subr.bf16.mxu0 %v3307
    %5563 = vmatpush1.bf16.msra.mxu0 %v3306
    %5564 = vmatprep.subr.bf16.mxu0 %v3315
    %5565 = vmatpush1.bf16.msra.mxu0 %v3314
    %5566 = vmatprep.subr.bf16.mxu0 %v3323
    %5567 = vmatpush1.bf16.msra.mxu0 %v3322
    %5568 = vmatprep.subr.bf16.mxu0 %v3331
    %5569 = vmatpush1.bf16.msra.mxu0 %v3330
    %5570 = vmatprep.subr.bf16.mxu0 %v3339
    %5571 = vmatpush1.bf16.msra.mxu0 %v3338
    %5572 = vmatprep.subr.bf16.mxu0 %v3347
    %5573 = vmatpush1.bf16.msra.mxu0 %v3346
    %5574 = vmatprep.subr.bf16.mxu0 %v3355
    %5575 = vmatpush1.bf16.msra.mxu0 %v3354
    %5576 = vmatprep.subr.bf16.mxu0 %v3363
    %5577 = vmatpush1.bf16.msra.mxu0 %v3362
    %5578 = vmatprep.subr.bf16.mxu0 %v3371
    %5579 = vmatpush1.bf16.msra.mxu0 %v3370
    %5580 = vmatprep.subr.bf16.mxu0 %v3379
    %5581 = vmatpush1.bf16.msra.mxu0 %v3378
    %5582 = vmatprep.subr.bf16.mxu0 %v3387
    %5583 = vmatpush1.bf16.msra.mxu0 %v3386
    %5584 = vmatprep.subr.bf16.mxu0 %v3395
    %5585 = vmatpush1.bf16.msra.mxu0 %v3394
    %5586 = vmatprep.subr.bf16.mxu0 %v3403
    %5587 = vmatpush1.bf16.msra.mxu0 %v3402
    %5588 = vmatprep.subr.bf16.mxu0 %v3411
    %5589 = vmatpush1.bf16.msra.mxu0 %v3410
    %5590 = vmatprep.mubr.bf16.mxu0 %v159
    %5591 = vmatmul.mubr.bf16.gmra.mrb[0].mxu0 %v158
    %v5592 = vpop.f32.mrb[0].mxu0
    %v5593 = vadd.f32 %v967, %v5592
    %v5594 = vpop.f32.mrb[0].mxu0
    %v5595 = vadd.f32 %v971, %v5594
    %v5596 = vpop.f32.mrb[0].mxu0
    %v5597 = vpop.f32.mrb[0].mxu0
    %5598 = vdwg.mxu0
    %5599 = vmatprep.subr.bf16.mxu0 %v3419
    %5600 = vmatpush1.bf16.msra.mxu0 %v3418
    %5601 = vmatprep.subr.bf16.mxu0 %v3427
    %5602 = vmatpush1.bf16.msra.mxu0 %v3426
    %5603 = vmatprep.subr.bf16.mxu0 %v3435
    %5604 = vmatpush1.bf16.msra.mxu0 %v3434
    %5605 = vmatprep.subr.bf16.mxu0 %v3443
    %5606 = vmatpush1.bf16.msra.mxu0 %v3442
    %5607 = vmatprep.subr.bf16.mxu0 %v3451
    %5608 = vmatpush1.bf16.msra.mxu0 %v3450
    %5609 = vmatprep.subr.bf16.mxu0 %v3459
    %5610 = vmatpush1.bf16.msra.mxu0 %v3458
    %5611 = vmatprep.subr.bf16.mxu0 %v3467
    %5612 = vmatpush1.bf16.msra.mxu0 %v3466
    %5613 = vmatprep.subr.bf16.mxu0 %v3475
    %5614 = vmatpush1.bf16.msra.mxu0 %v3474
    %5615 = vmatprep.subr.bf16.mxu0 %v3483
    %5616 = vmatpush1.bf16.msra.mxu0 %v3482
    %5617 = vmatprep.subr.bf16.mxu0 %v3491
    %5618 = vmatpush1.bf16.msra.mxu0 %v3490
    %5619 = vmatprep.subr.bf16.mxu0 %v3499
    %5620 = vmatpush1.bf16.msra.mxu0 %v3498
    %5621 = vmatprep.subr.bf16.mxu0 %v3507
    %5622 = vmatpush1.bf16.msra.mxu0 %v3506
    %5623 = vmatprep.subr.bf16.mxu0 %v3515
    %5624 = vmatpush1.bf16.msra.mxu0 %v3514
    %5625 = vmatprep.subr.bf16.mxu0 %v3523
    %5626 = vmatpush1.bf16.msra.mxu0 %v3522
    %5627 = vmatprep.subr.bf16.mxu0 %v3531
    %5628 = vmatpush1.bf16.msra.mxu0 %v3530
    %5629 = vmatprep.subr.bf16.mxu0 %v3539
    %5630 = vmatpush1.bf16.msra.mxu0 %v3538
    %5631 = vmatprep.mubr.bf16.mxu0 %v161
    %5632 = vmatmul.mubr.bf16.gmra.mrb[0].mxu0 %v160
    %v5633 = vpop.f32.mrb[0].mxu0
    %v5634 = vadd.f32 %v5593, %v5633
    %v5635 = vpop.f32.mrb[0].mxu0
    %v5636 = vadd.f32 %v5595, %v5635
    %v5637 = vpop.f32.mrb[0].mxu0
    %v5638 = vpop.f32.mrb[0].mxu0
    %5639 = vdwg.mxu0
    %5640 = vmatprep.subr.bf16.mxu0 %v3547
    %5641 = vmatpush1.bf16.msra.mxu0 %v3546
    %5642 = vmatprep.subr.bf16.mxu0 %v3555
    %5643 = vmatpush1.bf16.msra.mxu0 %v3554
    %5644 = vmatprep.subr.bf16.mxu0 %v3563
    %5645 = vmatpush1.bf16.msra.mxu0 %v3562
    %5646 = vmatprep.subr.bf16.mxu0 %v3571
    %5647 = vmatpush1.bf16.msra.mxu0 %v3570
    %5648 = vmatprep.subr.bf16.mxu0 %v3579
    %5649 = vmatpush1.bf16.msra.mxu0 %v3578
    %5650 = vmatprep.subr.bf16.mxu0 %v3587
    %5651 = vmatpush1.bf16.msra.mxu0 %v3586
    %5652 = vmatprep.subr.bf16.mxu0 %v3595
    %5653 = vmatpush1.bf16.msra.mxu0 %v3594
    %5654 = vmatprep.subr.bf16.mxu0 %v3603
    %5655 = vmatpush1.bf16.msra.mxu0 %v3602
    %5656 = vmatprep.subr.bf16.mxu0 %v3611
    %5657 = vmatpush1.bf16.msra.mxu0 %v3610
    %5658 = vmatprep.subr.bf16.mxu0 %v3619
    %5659 = vmatpush1.bf16.msra.mxu0 %v3618
    %5660 = vmatprep.subr.bf16.mxu0 %v3627
    %5661 = vmatpush1.bf16.msra.mxu0 %v3626
    %5662 = vmatprep.subr.bf16.mxu0 %v3635
    %5663 = vmatpush1.bf16.msra.mxu0 %v3634
    %5664 = vmatprep.subr.bf16.mxu0 %v3643
    %5665 = vmatpush1.bf16.msra.mxu0 %v3642
    %5666 = vmatprep.subr.bf16.mxu0 %v3651
    %5667 = vmatpush1.bf16.msra.mxu0 %v3650
    %5668 = vmatprep.subr.bf16.mxu0 %v3659
    %5669 = vmatpush1.bf16.msra.mxu0 %v3658
    %5670 = vmatprep.subr.bf16.mxu0 %v3667
    %5671 = vmatpush1.bf16.msra.mxu0 %v3666
    %5672 = vmatprep.mubr.bf16.mxu0 %v163
    %5673 = vmatmul.mubr.bf16.gmra.mrb[0].mxu0 %v162
    %v5674 = vpop.f32.mrb[0].mxu0
    %v5675 = vadd.f32 %v5634, %v5674
    %v5676 = vpop.f32.mrb[0].mxu0
    %v5677 = vadd.f32 %v5636, %v5676
    %v5678 = vpop.f32.mrb[0].mxu0
    %v5679 = vpop.f32.mrb[0].mxu0
    %5680 = vdwg.mxu0
    %5681 = vmatprep.subr.bf16.mxu0 %v3675
    %5682 = vmatpush1.bf16.msra.mxu0 %v3674
    %5683 = vmatprep.subr.bf16.mxu0 %v3683
    %5684 = vmatpush1.bf16.msra.mxu0 %v3682
    %5685 = vmatprep.subr.bf16.mxu0 %v3691
    %5686 = vmatpush1.bf16.msra.mxu0 %v3690
    %5687 = vmatprep.subr.bf16.mxu0 %v3699
    %5688 = vmatpush1.bf16.msra.mxu0 %v3698
    %5689 = vmatprep.subr.bf16.mxu0 %v3707
    %5690 = vmatpush1.bf16.msra.mxu0 %v3706
    %5691 = vmatprep.subr.bf16.mxu0 %v3715
    %5692 = vmatpush1.bf16.msra.mxu0 %v3714
    %5693 = vmatprep.subr.bf16.mxu0 %v3723
    %5694 = vmatpush1.bf16.msra.mxu0 %v3722
    %5695 = vmatprep.subr.bf16.mxu0 %v3731
    %5696 = vmatpush1.bf16.msra.mxu0 %v3730
    %5697 = vmatprep.subr.bf16.mxu0 %v3739
    %5698 = vmatpush1.bf16.msra.mxu0 %v3738
    %5699 = vmatprep.subr.bf16.mxu0 %v3747
    %5700 = vmatpush1.bf16.msra.mxu0 %v3746
    %5701 = vmatprep.subr.bf16.mxu0 %v3755
    %5702 = vmatpush1.bf16.msra.mxu0 %v3754
    %5703 = vmatprep.subr.bf16.mxu0 %v3763
    %5704 = vmatpush1.bf16.msra.mxu0 %v3762
    %5705 = vmatprep.subr.bf16.mxu0 %v3771
    %5706 = vmatpush1.bf16.msra.mxu0 %v3770
    %5707 = vmatprep.subr.bf16.mxu0 %v3779
    %5708 = vmatpush1.bf16.msra.mxu0 %v3778
    %5709 = vmatprep.subr.bf16.mxu0 %v3787
    %5710 = vmatpush1.bf16.msra.mxu0 %v3786
    %5711 = vmatprep.subr.bf16.mxu0 %v3795
    %5712 = vmatpush1.bf16.msra.mxu0 %v3794
    %5713 = vmatprep.mubr.bf16.mxu0 %v165
    %5714 = vmatmul.mubr.bf16.gmra.mrb[0].mxu0 %v164
    %v5715 = vpop.f32.mrb[0].mxu0
    %v5716 = vadd.f32 %v5675, %v5715
    %v5717 = vpop.f32.mrb[0].mxu0
    %v5718 = vadd.f32 %v5677, %v5717
    %v5719 = vpop.f32.mrb[0].mxu0
    %v5720 = vpop.f32.mrb[0].mxu0
    %5721 = vdwg.mxu0
    %5722 = vmatprep.subr.bf16.mxu0 %v3803
    %5723 = vmatpush1.bf16.msra.mxu0 %v3802
    %5724 = vmatprep.subr.bf16.mxu0 %v3811
    %5725 = vmatpush1.bf16.msra.mxu0 %v3810
    %5726 = vmatprep.subr.bf16.mxu0 %v3819
    %5727 = vmatpush1.bf16.msra.mxu0 %v3818
    %5728 = vmatprep.subr.bf16.mxu0 %v3827
    %5729 = vmatpush1.bf16.msra.mxu0 %v3826
    %5730 = vmatprep.subr.bf16.mxu0 %v3835
    %5731 = vmatpush1.bf16.msra.mxu0 %v3834
    %5732 = vmatprep.subr.bf16.mxu0 %v3843
    %5733 = vmatpush1.bf16.msra.mxu0 %v3842
    %5734 = vmatprep.subr.bf16.mxu0 %v3851
    %5735 = vmatpush1.bf16.msra.mxu0 %v3850
    %5736 = vmatprep.subr.bf16.mxu0 %v3859
    %5737 = vmatpush1.bf16.msra.mxu0 %v3858
    %5738 = vmatprep.subr.bf16.mxu0 %v3867
    %5739 = vmatpush1.bf16.msra.mxu0 %v3866
    %5740 = vmatprep.subr.bf16.mxu0 %v3875
    %5741 = vmatpush1.bf16.msra.mxu0 %v3874
    %5742 = vmatprep.subr.bf16.mxu0 %v3883
    %5743 = vmatpush1.bf16.msra.mxu0 %v3882
    %5744 = vmatprep.subr.bf16.mxu0 %v3891
    %5745 = vmatpush1.bf16.msra.mxu0 %v3890
    %5746 = vmatprep.subr.bf16.mxu0 %v3899
    %5747 = vmatpush1.bf16.msra.mxu0 %v3898
    %5748 = vmatprep.subr.bf16.mxu0 %v3907
    %5749 = vmatpush1.bf16.msra.mxu0 %v3906
    %5750 = vmatprep.subr.bf16.mxu0 %v3915
    %5751 = vmatpush1.bf16.msra.mxu0 %v3914
    %5752 = vmatprep.subr.bf16.mxu0 %v3923
    %5753 = vmatpush1.bf16.msra.mxu0 %v3922
    %5754 = vmatprep.mubr.bf16.mxu0 %v167
    %5755 = vmatmul.mubr.bf16.gmra.mrb[0].mxu0 %v166
    %v5756 = vpop.f32.mrb[0].mxu0
    %v5757 = vadd.f32 %v5716, %v5756
    %v5758 = vpop.f32.mrb[0].mxu0
    %v5759 = vadd.f32 %v5718, %v5758
    %v5760 = vpop.f32.mrb[0].mxu0
    %v5761 = vpop.f32.mrb[0].mxu0
    %5762 = vdwg.mxu0
    %5763 = vmatprep.subr.bf16.mxu0 %v3931
    %5764 = vmatpush1.bf16.msra.mxu0 %v3930
    %5765 = vmatprep.subr.bf16.mxu0 %v3939
    %5766 = vmatpush1.bf16.msra.mxu0 %v3938
    %5767 = vmatprep.subr.bf16.mxu0 %v3947
    %5768 = vmatpush1.bf16.msra.mxu0 %v3946
    %5769 = vmatprep.subr.bf16.mxu0 %v3955
    %5770 = vmatpush1.bf16.msra.mxu0 %v3954
    %5771 = vmatprep.subr.bf16.mxu0 %v3963
    %5772 = vmatpush1.bf16.msra.mxu0 %v3962
    %5773 = vmatprep.subr.bf16.mxu0 %v3971
    %5774 = vmatpush1.bf16.msra.mxu0 %v3970
    %5775 = vmatprep.subr.bf16.mxu0 %v3979
    %5776 = vmatpush1.bf16.msra.mxu0 %v3978
    %5777 = vmatprep.subr.bf16.mxu0 %v3987
    %5778 = vmatpush1.bf16.msra.mxu0 %v3986
    %5779 = vmatprep.subr.bf16.mxu0 %v3995
    %5780 = vmatpush1.bf16.msra.mxu0 %v3994
    %5781 = vmatprep.subr.bf16.mxu0 %v4003
    %5782 = vmatpush1.bf16.msra.mxu0 %v4002
    %5783 = vmatprep.subr.bf16.mxu0 %v4011
    %5784 = vmatpush1.bf16.msra.mxu0 %v4010
    %5785 = vmatprep.subr.bf16.mxu0 %v4019
    %5786 = vmatpush1.bf16.msra.mxu0 %v4018
    %5787 = vmatprep.subr.bf16.mxu0 %v4027
    %5788 = vmatpush1.bf16.msra.mxu0 %v4026
    %5789 = vmatprep.subr.bf16.mxu0 %v4035
    %5790 = vmatpush1.bf16.msra.mxu0 %v4034
    %5791 = vmatprep.subr.bf16.mxu0 %v4043
    %5792 = vmatpush1.bf16.msra.mxu0 %v4042
    %5793 = vmatprep.subr.bf16.mxu0 %v4051
    %5794 = vmatpush1.bf16.msra.mxu0 %v4050
    %5795 = vmatprep.mubr.bf16.mxu0 %v169
    %5796 = vmatmul.mubr.bf16.gmra.mrb[0].mxu0 %v168
    %v5797 = vpop.f32.mrb[0].mxu0
    %v5798 = vadd.f32 %v5757, %v5797
    %v5799 = vpop.f32.mrb[0].mxu0
    %v5800 = vadd.f32 %v5759, %v5799
    %v5801 = vpop.f32.mrb[0].mxu0
    %v5802 = vpop.f32.mrb[0].mxu0
    %5803 = vdwg.mxu0
    %v5804 = vmax.f32 %v5060, 0.0
    %v5805 = vmax.f32 %v5062, 0.0
    %v5806 = vmax.f32 %v5306, 0.0
    %v5807 = vmax.f32 %v5308, 0.0
    %v5808 = vmax.f32 %v5552, 0.0
    %v5809 = vmax.f32 %v5554, 0.0
    %v5810 = vmax.f32 %v5798, 0.0
    %v5811 = vmax.f32 %v5800, 0.0
    %v5812 = vpack.c.bf16 %v5804, %v5804
    %v5813 = vpack.c.bf16 %v5805, %v5805
    %v5814 = vpack.c.bf16 %v5806, %v5806
    %v5815 = vpack.c.bf16 %v5807, %v5807
    %v5816 = vpack.c.bf16 %v5808, %v5808
    %v5817 = vpack.c.bf16 %v5809, %v5809
    %v5818 = vpack.c.bf16 %v5810, %v5810
    %v5819 = vpack.c.bf16 %v5811, %v5811
    %v5820 = vld [vmem:[#allocation8] sm:$0xff]
    %v5821 = vld [vmem:[#allocation8 + $0x8] sm:$0xff]
    %v5822 = vld [vmem:[#allocation8 + $0x10] sm:$0xff]
    %v5823 = vld [vmem:[#allocation8 + $0x18] sm:$0xff]
    %v5824 = vld [vmem:[#allocation8 + $0x20] sm:$0xff]
    %v5825 = vld [vmem:[#allocation8 + $0x28] sm:$0xff]
    %v5826 = vld [vmem:[#allocation8 + $0x30] sm:$0xff]
    %v5827 = vld [vmem:[#allocation8 + $0x38] sm:$0xff]
    %v5828 = vld [vmem:[#allocation8 + $0x40] sm:$0xff]
    %v5829 = vld [vmem:[#allocation8 + $0x48] sm:$0xff]
    %v5830 = vld [vmem:[#allocation8 + $0x50] sm:$0xff]
    %v5831 = vld [vmem:[#allocation8 + $0x58] sm:$0xff]
    %v5832 = vld [vmem:[#allocation8 + $0x60] sm:$0xff]
    %v5833 = vld [vmem:[#allocation8 + $0x68] sm:$0xff]
    %v5834 = vld [vmem:[#allocation8 + $0x70] sm:$0xff]
    %v5835 = vld [vmem:[#allocation8 + $0x78] sm:$0xff]
    %v5836 = vld [vmem:[#allocation8 + $0x80] sm:$0xff]
    %v5837 = vld [vmem:[#allocation8 + $0x88] sm:$0xff]
    %v5838 = vld [vmem:[#allocation8 + $0x90] sm:$0xff]
    %v5839 = vld [vmem:[#allocation8 + $0x98] sm:$0xff]
    %v5840 = vld [vmem:[#allocation8 + $0xa0] sm:$0xff]
    %v5841 = vld [vmem:[#allocation8 + $0xa8] sm:$0xff]
    %v5842 = vld [vmem:[#allocation8 + $0xb0] sm:$0xff]
    %v5843 = vld [vmem:[#allocation8 + $0xb8] sm:$0xff]
    %v5844 = vld [vmem:[#allocation8 + $0xc0] sm:$0xff]
    %v5845 = vld [vmem:[#allocation8 + $0xc8] sm:$0xff]
    %v5846 = vld [vmem:[#allocation8 + $0xd0] sm:$0xff]
    %v5847 = vld [vmem:[#allocation8 + $0xd8] sm:$0xff]
    %v5848 = vld [vmem:[#allocation8 + $0xe0] sm:$0xff]
    %v5849 = vld [vmem:[#allocation8 + $0xe8] sm:$0xff]
    %v5850 = vld [vmem:[#allocation8 + $0xf0] sm:$0xff]
    %v5851 = vld [vmem:[#allocation8 + $0xf8] sm:$0xff]
    %v5852 = vld [vmem:[#allocation8 + $0x100] sm:$0xff]
    %v5853 = vld [vmem:[#allocation8 + $0x108] sm:$0xff]
    %v5854 = vld [vmem:[#allocation8 + $0x110] sm:$0xff]
    %v5855 = vld [vmem:[#allocation8 + $0x118] sm:$0xff]
    %v5856 = vld [vmem:[#allocation8 + $0x120] sm:$0xff]
    %v5857 = vld [vmem:[#allocation8 + $0x128] sm:$0xff]
    %v5858 = vld [vmem:[#allocation8 + $0x130] sm:$0xff]
    %v5859 = vld [vmem:[#allocation8 + $0x138] sm:$0xff]
    %v5860 = vld [vmem:[#allocation8 + $0x140] sm:$0xff]
    %v5861 = vld [vmem:[#allocation8 + $0x148] sm:$0xff]
    %v5862 = vld [vmem:[#allocation8 + $0x150] sm:$0xff]
    %v5863 = vld [vmem:[#allocation8 + $0x158] sm:$0xff]
    %v5864 = vld [vmem:[#allocation8 + $0x160] sm:$0xff]
    %v5865 = vld [vmem:[#allocation8 + $0x168] sm:$0xff]
    %v5866 = vld [vmem:[#allocation8 + $0x170] sm:$0xff]
    %v5867 = vld [vmem:[#allocation8 + $0x178] sm:$0xff]
    %v5868 = vld [vmem:[#allocation8 + $0x180] sm:$0xff]
    %v5869 = vld [vmem:[#allocation8 + $0x188] sm:$0xff]
    %v5870 = vld [vmem:[#allocation8 + $0x190] sm:$0xff]
    %v5871 = vld [vmem:[#allocation8 + $0x198] sm:$0xff]
    %v5872 = vld [vmem:[#allocation8 + $0x1a0] sm:$0xff]
    %v5873 = vld [vmem:[#allocation8 + $0x1a8] sm:$0xff]
    %v5874 = vld [vmem:[#allocation8 + $0x1b0] sm:$0xff]
    %v5875 = vld [vmem:[#allocation8 + $0x1b8] sm:$0xff]
    %v5876 = vld [vmem:[#allocation8 + $0x1c0] sm:$0xff]
    %v5877 = vld [vmem:[#allocation8 + $0x1c8] sm:$0xff]
    %v5878 = vld [vmem:[#allocation8 + $0x1d0] sm:$0xff]
    %v5879 = vld [vmem:[#allocation8 + $0x1d8] sm:$0xff]
    %v5880 = vld [vmem:[#allocation8 + $0x1e0] sm:$0xff]
    %v5881 = vld [vmem:[#allocation8 + $0x1e8] sm:$0xff]
    %v5882 = vld [vmem:[#allocation8 + $0x1f0] sm:$0xff]
    %v5883 = vld [vmem:[#allocation8 + $0x1f8] sm:$0xff]
    %v5884 = vld [vmem:[#allocation8 + $0x200] sm:$0xff]
    %v5885 = vld [vmem:[#allocation8 + $0x208] sm:$0xff]
    %v5886 = vld [vmem:[#allocation8 + $0x210] sm:$0xff]
    %v5887 = vld [vmem:[#allocation8 + $0x218] sm:$0xff]
    %v5888 = vld [vmem:[#allocation8 + $0x220] sm:$0xff]
    %v5889 = vld [vmem:[#allocation8 + $0x228] sm:$0xff]
    %v5890 = vld [vmem:[#allocation8 + $0x230] sm:$0xff]
    %v5891 = vld [vmem:[#allocation8 + $0x238] sm:$0xff]
    %v5892 = vld [vmem:[#allocation8 + $0x240] sm:$0xff]
    %v5893 = vld [vmem:[#allocation8 + $0x248] sm:$0xff]
    %v5894 = vld [vmem:[#allocation8 + $0x250] sm:$0xff]
    %v5895 = vld [vmem:[#allocation8 + $0x258] sm:$0xff]
    %v5896 = vld [vmem:[#allocation8 + $0x260] sm:$0xff]
    %v5897 = vld [vmem:[#allocation8 + $0x268] sm:$0xff]
    %v5898 = vld [vmem:[#allocation8 + $0x270] sm:$0xff]
    %v5899 = vld [vmem:[#allocation8 + $0x278] sm:$0xff]
    %v5900 = vld [vmem:[#allocation8 + $0x280] sm:$0xff]
    %v5901 = vld [vmem:[#allocation8 + $0x288] sm:$0xff]
    %v5902 = vld [vmem:[#allocation8 + $0x290] sm:$0xff]
    %v5903 = vld [vmem:[#allocation8 + $0x298] sm:$0xff]
    %v5904 = vld [vmem:[#allocation8 + $0x2a0] sm:$0xff]
    %v5905 = vld [vmem:[#allocation8 + $0x2a8] sm:$0xff]
    %v5906 = vld [vmem:[#allocation8 + $0x2b0] sm:$0xff]
    %v5907 = vld [vmem:[#allocation8 + $0x2b8] sm:$0xff]
    %v5908 = vld [vmem:[#allocation8 + $0x2c0] sm:$0xff]
    %v5909 = vld [vmem:[#allocation8 + $0x2c8] sm:$0xff]
    %v5910 = vld [vmem:[#allocation8 + $0x2d0] sm:$0xff]
    %v5911 = vld [vmem:[#allocation8 + $0x2d8] sm:$0xff]
    %v5912 = vld [vmem:[#allocation8 + $0x2e0] sm:$0xff]
    %v5913 = vld [vmem:[#allocation8 + $0x2e8] sm:$0xff]
    %v5914 = vld [vmem:[#allocation8 + $0x2f0] sm:$0xff]
    %v5915 = vld [vmem:[#allocation8 + $0x2f8] sm:$0xff]
    %v5916 = vld [vmem:[#allocation8 + $0x300] sm:$0xff]
    %v5917 = vld [vmem:[#allocation8 + $0x308] sm:$0xff]
    %v5918 = vld [vmem:[#allocation8 + $0x310] sm:$0xff]
    %v5919 = vld [vmem:[#allocation8 + $0x318] sm:$0xff]
    %v5920 = vld [vmem:[#allocation8 + $0x320] sm:$0xff]
    %v5921 = vld [vmem:[#allocation8 + $0x328] sm:$0xff]
    %v5922 = vld [vmem:[#allocation8 + $0x330] sm:$0xff]
    %v5923 = vld [vmem:[#allocation8 + $0x338] sm:$0xff]
    %v5924 = vld [vmem:[#allocation8 + $0x340] sm:$0xff]
    %v5925 = vld [vmem:[#allocation8 + $0x348] sm:$0xff]
    %v5926 = vld [vmem:[#allocation8 + $0x350] sm:$0xff]
    %v5927 = vld [vmem:[#allocation8 + $0x358] sm:$0xff]
    %v5928 = vld [vmem:[#allocation8 + $0x360] sm:$0xff]
    %v5929 = vld [vmem:[#allocation8 + $0x368] sm:$0xff]
    %v5930 = vld [vmem:[#allocation8 + $0x370] sm:$0xff]
    %v5931 = vld [vmem:[#allocation8 + $0x378] sm:$0xff]
    %v5932 = vld [vmem:[#allocation8 + $0x380] sm:$0xff]
    %v5933 = vld [vmem:[#allocation8 + $0x388] sm:$0xff]
    %v5934 = vld [vmem:[#allocation8 + $0x390] sm:$0xff]
    %v5935 = vld [vmem:[#allocation8 + $0x398] sm:$0xff]
    %v5936 = vld [vmem:[#allocation8 + $0x3a0] sm:$0xff]
    %v5937 = vld [vmem:[#allocation8 + $0x3a8] sm:$0xff]
    %v5938 = vld [vmem:[#allocation8 + $0x3b0] sm:$0xff]
    %v5939 = vld [vmem:[#allocation8 + $0x3b8] sm:$0xff]
    %v5940 = vld [vmem:[#allocation8 + $0x3c0] sm:$0xff]
    %v5941 = vld [vmem:[#allocation8 + $0x3c8] sm:$0xff]
    %v5942 = vld [vmem:[#allocation8 + $0x3d0] sm:$0xff]
    %v5943 = vld [vmem:[#allocation8 + $0x3d8] sm:$0xff]
    %v5944 = vld [vmem:[#allocation8 + $0x3e0] sm:$0xff]
    %v5945 = vld [vmem:[#allocation8 + $0x3e8] sm:$0xff]
    %v5946 = vld [vmem:[#allocation8 + $0x3f0] sm:$0xff]
    %v5947 = vld [vmem:[#allocation8 + $0x3f8] sm:$0xff]
    %v5948 = vld [vmem:[#allocation8 + $0x400] sm:$0xff]
    %v5949 = vld [vmem:[#allocation8 + $0x408] sm:$0xff]
    %v5950 = vld [vmem:[#allocation8 + $0x410] sm:$0xff]
    %v5951 = vld [vmem:[#allocation8 + $0x418] sm:$0xff]
    %v5952 = vld [vmem:[#allocation8 + $0x420] sm:$0xff]
    %v5953 = vld [vmem:[#allocation8 + $0x428] sm:$0xff]
    %v5954 = vld [vmem:[#allocation8 + $0x430] sm:$0xff]
    %v5955 = vld [vmem:[#allocation8 + $0x438] sm:$0xff]
    %v5956 = vld [vmem:[#allocation8 + $0x440] sm:$0xff]
    %v5957 = vld [vmem:[#allocation8 + $0x448] sm:$0xff]
    %v5958 = vld [vmem:[#allocation8 + $0x450] sm:$0xff]
    %v5959 = vld [vmem:[#allocation8 + $0x458] sm:$0xff]
    %v5960 = vld [vmem:[#allocation8 + $0x460] sm:$0xff]
    %v5961 = vld [vmem:[#allocation8 + $0x468] sm:$0xff]
    %v5962 = vld [vmem:[#allocation8 + $0x470] sm:$0xff]
    %v5963 = vld [vmem:[#allocation8 + $0x478] sm:$0xff]
    %v5964 = vld [vmem:[#allocation8 + $0x480] sm:$0xff]
    %v5965 = vld [vmem:[#allocation8 + $0x488] sm:$0xff]
    %v5966 = vld [vmem:[#allocation8 + $0x490] sm:$0xff]
    %v5967 = vld [vmem:[#allocation8 + $0x498] sm:$0xff]
    %v5968 = vld [vmem:[#allocation8 + $0x4a0] sm:$0xff]
    %v5969 = vld [vmem:[#allocation8 + $0x4a8] sm:$0xff]
    %v5970 = vld [vmem:[#allocation8 + $0x4b0] sm:$0xff]
    %v5971 = vld [vmem:[#allocation8 + $0x4b8] sm:$0xff]
    %v5972 = vld [vmem:[#allocation8 + $0x4c0] sm:$0xff]
    %v5973 = vld [vmem:[#allocation8 + $0x4c8] sm:$0xff]
    %v5974 = vld [vmem:[#allocation8 + $0x4d0] sm:$0xff]
    %v5975 = vld [vmem:[#allocation8 + $0x4d8] sm:$0xff]
    %v5976 = vld [vmem:[#allocation8 + $0x4e0] sm:$0xff]
    %v5977 = vld [vmem:[#allocation8 + $0x4e8] sm:$0xff]
    %v5978 = vld [vmem:[#allocation8 + $0x4f0] sm:$0xff]
    %v5979 = vld [vmem:[#allocation8 + $0x4f8] sm:$0xff]
    %v5980 = vld [vmem:[#allocation8 + $0x500] sm:$0xff]
    %v5981 = vld [vmem:[#allocation8 + $0x508] sm:$0xff]
    %v5982 = vld [vmem:[#allocation8 + $0x510] sm:$0xff]
    %v5983 = vld [vmem:[#allocation8 + $0x518] sm:$0xff]
    %v5984 = vld [vmem:[#allocation8 + $0x520] sm:$0xff]
    %v5985 = vld [vmem:[#allocation8 + $0x528] sm:$0xff]
    %v5986 = vld [vmem:[#allocation8 + $0x530] sm:$0xff]
    %v5987 = vld [vmem:[#allocation8 + $0x538] sm:$0xff]
    %v5988 = vld [vmem:[#allocation8 + $0x540] sm:$0xff]
    %v5989 = vld [vmem:[#allocation8 + $0x548] sm:$0xff]
    %v5990 = vld [vmem:[#allocation8 + $0x550] sm:$0xff]
    %v5991 = vld [vmem:[#allocation8 + $0x558] sm:$0xff]
    %v5992 = vld [vmem:[#allocation8 + $0x560] sm:$0xff]
    %v5993 = vld [vmem:[#allocation8 + $0x568] sm:$0xff]
    %v5994 = vld [vmem:[#allocation8 + $0x570] sm:$0xff]
    %v5995 = vld [vmem:[#allocation8 + $0x578] sm:$0xff]
    %v5996 = vld [vmem:[#allocation8 + $0x580] sm:$0xff]
    %v5997 = vld [vmem:[#allocation8 + $0x588] sm:$0xff]
    %v5998 = vld [vmem:[#allocation8 + $0x590] sm:$0xff]
    %v5999 = vld [vmem:[#allocation8 + $0x598] sm:$0xff]
    %v6000 = vld [vmem:[#allocation8 + $0x5a0] sm:$0xff]
    %v6001 = vld [vmem:[#allocation8 + $0x5a8] sm:$0xff]
    %v6002 = vld [vmem:[#allocation8 + $0x5b0] sm:$0xff]
    %v6003 = vld [vmem:[#allocation8 + $0x5b8] sm:$0xff]
    %v6004 = vld [vmem:[#allocation8 + $0x5c0] sm:$0xff]
    %v6005 = vld [vmem:[#allocation8 + $0x5c8] sm:$0xff]
    %v6006 = vld [vmem:[#allocation8 + $0x5d0] sm:$0xff]
    %v6007 = vld [vmem:[#allocation8 + $0x5d8] sm:$0xff]
    %v6008 = vld [vmem:[#allocation8 + $0x5e0] sm:$0xff]
    %v6009 = vld [vmem:[#allocation8 + $0x5e8] sm:$0xff]
    %v6010 = vld [vmem:[#allocation8 + $0x5f0] sm:$0xff]
    %v6011 = vld [vmem:[#allocation8 + $0x5f8] sm:$0xff]
    %v6012 = vld [vmem:[#allocation8 + $0x600] sm:$0xff]
    %v6013 = vld [vmem:[#allocation8 + $0x608] sm:$0xff]
    %v6014 = vld [vmem:[#allocation8 + $0x610] sm:$0xff]
    %v6015 = vld [vmem:[#allocation8 + $0x618] sm:$0xff]
    %v6016 = vld [vmem:[#allocation8 + $0x620] sm:$0xff]
    %v6017 = vld [vmem:[#allocation8 + $0x628] sm:$0xff]
    %v6018 = vld [vmem:[#allocation8 + $0x630] sm:$0xff]
    %v6019 = vld [vmem:[#allocation8 + $0x638] sm:$0xff]
    %v6020 = vld [vmem:[#allocation8 + $0x640] sm:$0xff]
    %v6021 = vld [vmem:[#allocation8 + $0x648] sm:$0xff]
    %v6022 = vld [vmem:[#allocation8 + $0x650] sm:$0xff]
    %v6023 = vld [vmem:[#allocation8 + $0x658] sm:$0xff]
    %v6024 = vld [vmem:[#allocation8 + $0x660] sm:$0xff]
    %v6025 = vld [vmem:[#allocation8 + $0x668] sm:$0xff]
    %v6026 = vld [vmem:[#allocation8 + $0x670] sm:$0xff]
    %v6027 = vld [vmem:[#allocation8 + $0x678] sm:$0xff]
    %v6028 = vld [vmem:[#allocation8 + $0x680] sm:$0xff]
    %v6029 = vld [vmem:[#allocation8 + $0x688] sm:$0xff]
    %v6030 = vld [vmem:[#allocation8 + $0x690] sm:$0xff]
    %v6031 = vld [vmem:[#allocation8 + $0x698] sm:$0xff]
    %v6032 = vld [vmem:[#allocation8 + $0x6a0] sm:$0xff]
    %v6033 = vld [vmem:[#allocation8 + $0x6a8] sm:$0xff]
    %v6034 = vld [vmem:[#allocation8 + $0x6b0] sm:$0xff]
    %v6035 = vld [vmem:[#allocation8 + $0x6b8] sm:$0xff]
    %v6036 = vld [vmem:[#allocation8 + $0x6c0] sm:$0xff]
    %v6037 = vld [vmem:[#allocation8 + $0x6c8] sm:$0xff]
    %v6038 = vld [vmem:[#allocation8 + $0x6d0] sm:$0xff]
    %v6039 = vld [vmem:[#allocation8 + $0x6d8] sm:$0xff]
    %v6040 = vld [vmem:[#allocation8 + $0x6e0] sm:$0xff]
    %v6041 = vld [vmem:[#allocation8 + $0x6e8] sm:$0xff]
    %v6042 = vld [vmem:[#allocation8 + $0x6f0] sm:$0xff]
    %v6043 = vld [vmem:[#allocation8 + $0x6f8] sm:$0xff]
    %v6044 = vld [vmem:[#allocation8 + $0x700] sm:$0xff]
    %v6045 = vld [vmem:[#allocation8 + $0x708] sm:$0xff]
    %v6046 = vld [vmem:[#allocation8 + $0x710] sm:$0xff]
    %v6047 = vld [vmem:[#allocation8 + $0x718] sm:$0xff]
    %v6048 = vld [vmem:[#allocation8 + $0x720] sm:$0xff]
    %v6049 = vld [vmem:[#allocation8 + $0x728] sm:$0xff]
    %v6050 = vld [vmem:[#allocation8 + $0x730] sm:$0xff]
    %v6051 = vld [vmem:[#allocation8 + $0x738] sm:$0xff]
    %v6052 = vld [vmem:[#allocation8 + $0x740] sm:$0xff]
    %v6053 = vld [vmem:[#allocation8 + $0x748] sm:$0xff]
    %v6054 = vld [vmem:[#allocation8 + $0x750] sm:$0xff]
    %v6055 = vld [vmem:[#allocation8 + $0x758] sm:$0xff]
    %v6056 = vld [vmem:[#allocation8 + $0x760] sm:$0xff]
    %v6057 = vld [vmem:[#allocation8 + $0x768] sm:$0xff]
    %v6058 = vld [vmem:[#allocation8 + $0x770] sm:$0xff]
    %v6059 = vld [vmem:[#allocation8 + $0x778] sm:$0xff]
    %v6060 = vld [vmem:[#allocation8 + $0x780] sm:$0xff]
    %v6061 = vld [vmem:[#allocation8 + $0x788] sm:$0xff]
    %v6062 = vld [vmem:[#allocation8 + $0x790] sm:$0xff]
    %v6063 = vld [vmem:[#allocation8 + $0x798] sm:$0xff]
    %v6064 = vld [vmem:[#allocation8 + $0x7a0] sm:$0xff]
    %v6065 = vld [vmem:[#allocation8 + $0x7a8] sm:$0xff]
    %v6066 = vld [vmem:[#allocation8 + $0x7b0] sm:$0xff]
    %v6067 = vld [vmem:[#allocation8 + $0x7b8] sm:$0xff]
    %v6068 = vld [vmem:[#allocation8 + $0x7c0] sm:$0xff]
    %v6069 = vld [vmem:[#allocation8 + $0x7c8] sm:$0xff]
    %v6070 = vld [vmem:[#allocation8 + $0x7d0] sm:$0xff]
    %v6071 = vld [vmem:[#allocation8 + $0x7d8] sm:$0xff]
    %v6072 = vld [vmem:[#allocation8 + $0x7e0] sm:$0xff]
    %v6073 = vld [vmem:[#allocation8 + $0x7e8] sm:$0xff]
    %v6074 = vld [vmem:[#allocation8 + $0x7f0] sm:$0xff]
    %v6075 = vld [vmem:[#allocation8 + $0x7f8] sm:$0xff]
    %v6076 = vld [vmem:[#allocation10] sm:$0xf]
    %v6078 = vlaneseq
    %v6079 = vshrl.u32 %v6078, 7
    %v6080 = vsub.s32 0, %v6079
    %v6081 = vrot.slane %v6076, %v6080
    %v6082 = vlaneseq
    %v6083 = vshrl.u32 %v6082, 7
    %v6084 = vsub.s32 1, %v6083
    %v6085 = vrot.slane %v6076, %v6084
    %v6086 = vlaneseq
    %v6087 = vshrl.u32 %v6086, 7
    %v6088 = vsub.s32 2, %v6087
    %v6089 = vrot.slane %v6076, %v6088
    %v6090 = vlaneseq
    %v6091 = vshrl.u32 %v6090, 7
    %v6092 = vsub.s32 3, %v6091
    %v6093 = vrot.slane %v6076, %v6092
    %v6354 = vunpack.c.l.b16 %v5820
    %v6355 = vunpack.c.h.b16 %v5820
    %v6356 = vunpack.c.l.b16 %v5821
    %v6357 = vunpack.c.h.b16 %v5821
    %v6358 = vunpack.c.l.b16 %v5822
    %v6359 = vunpack.c.h.b16 %v5822
    %v6360 = vunpack.c.l.b16 %v5823
    %v6361 = vunpack.c.h.b16 %v5823
    %v6362 = vunpack.c.l.b16 %v5824
    %v6363 = vunpack.c.h.b16 %v5824
    %v6364 = vunpack.c.l.b16 %v5825
    %v6365 = vunpack.c.h.b16 %v5825
    %v6366 = vunpack.c.l.b16 %v5826
    %v6367 = vunpack.c.h.b16 %v5826
    %v6368 = vunpack.c.l.b16 %v5827
    %v6369 = vunpack.c.h.b16 %v5827
    %v6370 = vunpack.c.l.b16 %v5828
    %v6371 = vunpack.c.h.b16 %v5828
    %v6372 = vunpack.c.l.b16 %v5829
    %v6373 = vunpack.c.h.b16 %v5829
    %v6374 = vunpack.c.l.b16 %v5830
    %v6375 = vunpack.c.h.b16 %v5830
    %v6376 = vunpack.c.l.b16 %v5831
    %v6377 = vunpack.c.h.b16 %v5831
    %v6378 = vunpack.c.l.b16 %v5832
    %v6379 = vunpack.c.h.b16 %v5832
    %v6380 = vunpack.c.l.b16 %v5833
    %v6381 = vunpack.c.h.b16 %v5833
    %v6382 = vunpack.c.l.b16 %v5834
    %v6383 = vunpack.c.h.b16 %v5834
    %v6384 = vunpack.c.l.b16 %v5835
    %v6385 = vunpack.c.h.b16 %v5835
    %v6386 = vunpack.c.l.b16 %v5836
    %v6387 = vunpack.c.h.b16 %v5836
    %v6388 = vunpack.c.l.b16 %v5837
    %v6389 = vunpack.c.h.b16 %v5837
    %v6390 = vunpack.c.l.b16 %v5838
    %v6391 = vunpack.c.h.b16 %v5838
    %v6392 = vunpack.c.l.b16 %v5839
    %v6393 = vunpack.c.h.b16 %v5839
    %v6394 = vunpack.c.l.b16 %v5840
    %v6395 = vunpack.c.h.b16 %v5840
    %v6396 = vunpack.c.l.b16 %v5841
    %v6397 = vunpack.c.h.b16 %v5841
    %v6398 = vunpack.c.l.b16 %v5842
    %v6399 = vunpack.c.h.b16 %v5842
    %v6400 = vunpack.c.l.b16 %v5843
    %v6401 = vunpack.c.h.b16 %v5843
    %v6402 = vunpack.c.l.b16 %v5844
    %v6403 = vunpack.c.h.b16 %v5844
    %v6404 = vunpack.c.l.b16 %v5845
    %v6405 = vunpack.c.h.b16 %v5845
    %v6406 = vunpack.c.l.b16 %v5846
    %v6407 = vunpack.c.h.b16 %v5846
    %v6408 = vunpack.c.l.b16 %v5847
    %v6409 = vunpack.c.h.b16 %v5847
    %v6410 = vunpack.c.l.b16 %v5848
    %v6411 = vunpack.c.h.b16 %v5848
    %v6412 = vunpack.c.l.b16 %v5849
    %v6413 = vunpack.c.h.b16 %v5849
    %v6414 = vunpack.c.l.b16 %v5850
    %v6415 = vunpack.c.h.b16 %v5850
    %v6416 = vunpack.c.l.b16 %v5851
    %v6417 = vunpack.c.h.b16 %v5851
    %v6418 = vunpack.c.l.b16 %v5852
    %v6419 = vunpack.c.h.b16 %v5852
    %v6420 = vunpack.c.l.b16 %v5853
    %v6421 = vunpack.c.h.b16 %v5853
    %v6422 = vunpack.c.l.b16 %v5854
    %v6423 = vunpack.c.h.b16 %v5854
    %v6424 = vunpack.c.l.b16 %v5855
    %v6425 = vunpack.c.h.b16 %v5855
    %v6426 = vunpack.c.l.b16 %v5856
    %v6427 = vunpack.c.h.b16 %v5856
    %v6428 = vunpack.c.l.b16 %v5857
    %v6429 = vunpack.c.h.b16 %v5857
    %v6430 = vunpack.c.l.b16 %v5858
    %v6431 = vunpack.c.h.b16 %v5858
    %v6432 = vunpack.c.l.b16 %v5859
    %v6433 = vunpack.c.h.b16 %v5859
    %v6434 = vunpack.c.l.b16 %v5860
    %v6435 = vunpack.c.h.b16 %v5860
    %v6436 = vunpack.c.l.b16 %v5861
    %v6437 = vunpack.c.h.b16 %v5861
    %v6438 = vunpack.c.l.b16 %v5862
    %v6439 = vunpack.c.h.b16 %v5862
    %v6440 = vunpack.c.l.b16 %v5863
    %v6441 = vunpack.c.h.b16 %v5863
    %v6442 = vunpack.c.l.b16 %v5864
    %v6443 = vunpack.c.h.b16 %v5864
    %v6444 = vunpack.c.l.b16 %v5865
    %v6445 = vunpack.c.h.b16 %v5865
    %v6446 = vunpack.c.l.b16 %v5866
    %v6447 = vunpack.c.h.b16 %v5866
    %v6448 = vunpack.c.l.b16 %v5867
    %v6449 = vunpack.c.h.b16 %v5867
    %v6450 = vunpack.c.l.b16 %v5868
    %v6451 = vunpack.c.h.b16 %v5868
    %v6452 = vunpack.c.l.b16 %v5869
    %v6453 = vunpack.c.h.b16 %v5869
    %v6454 = vunpack.c.l.b16 %v5870
    %v6455 = vunpack.c.h.b16 %v5870
    %v6456 = vunpack.c.l.b16 %v5871
    %v6457 = vunpack.c.h.b16 %v5871
    %v6458 = vunpack.c.l.b16 %v5872
    %v6459 = vunpack.c.h.b16 %v5872
    %v6460 = vunpack.c.l.b16 %v5873
    %v6461 = vunpack.c.h.b16 %v5873
    %v6462 = vunpack.c.l.b16 %v5874
    %v6463 = vunpack.c.h.b16 %v5874
    %v6464 = vunpack.c.l.b16 %v5875
    %v6465 = vunpack.c.h.b16 %v5875
    %v6466 = vunpack.c.l.b16 %v5876
    %v6467 = vunpack.c.h.b16 %v5876
    %v6468 = vunpack.c.l.b16 %v5877
    %v6469 = vunpack.c.h.b16 %v5877
    %v6470 = vunpack.c.l.b16 %v5878
    %v6471 = vunpack.c.h.b16 %v5878
    %v6472 = vunpack.c.l.b16 %v5879
    %v6473 = vunpack.c.h.b16 %v5879
    %v6474 = vunpack.c.l.b16 %v5880
    %v6475 = vunpack.c.h.b16 %v5880
    %v6476 = vunpack.c.l.b16 %v5881
    %v6477 = vunpack.c.h.b16 %v5881
    %v6478 = vunpack.c.l.b16 %v5882
    %v6479 = vunpack.c.h.b16 %v5882
    %v6480 = vunpack.c.l.b16 %v5883
    %v6481 = vunpack.c.h.b16 %v5883
    %v6482 = vunpack.c.l.b16 %v5884
    %v6483 = vunpack.c.h.b16 %v5884
    %v6484 = vunpack.c.l.b16 %v5885
    %v6485 = vunpack.c.h.b16 %v5885
    %v6486 = vunpack.c.l.b16 %v5886
    %v6487 = vunpack.c.h.b16 %v5886
    %v6488 = vunpack.c.l.b16 %v5887
    %v6489 = vunpack.c.h.b16 %v5887
    %v6490 = vunpack.c.l.b16 %v5888
    %v6491 = vunpack.c.h.b16 %v5888
    %v6492 = vunpack.c.l.b16 %v5889
    %v6493 = vunpack.c.h.b16 %v5889
    %v6494 = vunpack.c.l.b16 %v5890
    %v6495 = vunpack.c.h.b16 %v5890
    %v6496 = vunpack.c.l.b16 %v5891
    %v6497 = vunpack.c.h.b16 %v5891
    %v6498 = vunpack.c.l.b16 %v5892
    %v6499 = vunpack.c.h.b16 %v5892
    %v6500 = vunpack.c.l.b16 %v5893
    %v6501 = vunpack.c.h.b16 %v5893
    %v6502 = vunpack.c.l.b16 %v5894
    %v6503 = vunpack.c.h.b16 %v5894
    %v6504 = vunpack.c.l.b16 %v5895
    %v6505 = vunpack.c.h.b16 %v5895
    %v6506 = vunpack.c.l.b16 %v5896
    %v6507 = vunpack.c.h.b16 %v5896
    %v6508 = vunpack.c.l.b16 %v5897
    %v6509 = vunpack.c.h.b16 %v5897
    %v6510 = vunpack.c.l.b16 %v5898
    %v6511 = vunpack.c.h.b16 %v5898
    %v6512 = vunpack.c.l.b16 %v5899
    %v6513 = vunpack.c.h.b16 %v5899
    %v6514 = vunpack.c.l.b16 %v5900
    %v6515 = vunpack.c.h.b16 %v5900
    %v6516 = vunpack.c.l.b16 %v5901
    %v6517 = vunpack.c.h.b16 %v5901
    %v6518 = vunpack.c.l.b16 %v5902
    %v6519 = vunpack.c.h.b16 %v5902
    %v6520 = vunpack.c.l.b16 %v5903
    %v6521 = vunpack.c.h.b16 %v5903
    %v6522 = vunpack.c.l.b16 %v5904
    %v6523 = vunpack.c.h.b16 %v5904
    %v6524 = vunpack.c.l.b16 %v5905
    %v6525 = vunpack.c.h.b16 %v5905
    %v6526 = vunpack.c.l.b16 %v5906
    %v6527 = vunpack.c.h.b16 %v5906
    %v6528 = vunpack.c.l.b16 %v5907
    %v6529 = vunpack.c.h.b16 %v5907
    %v6530 = vunpack.c.l.b16 %v5908
    %v6531 = vunpack.c.h.b16 %v5908
    %v6532 = vunpack.c.l.b16 %v5909
    %v6533 = vunpack.c.h.b16 %v5909
    %v6534 = vunpack.c.l.b16 %v5910
    %v6535 = vunpack.c.h.b16 %v5910
    %v6536 = vunpack.c.l.b16 %v5911
    %v6537 = vunpack.c.h.b16 %v5911
    %v6538 = vunpack.c.l.b16 %v5912
    %v6539 = vunpack.c.h.b16 %v5912
    %v6540 = vunpack.c.l.b16 %v5913
    %v6541 = vunpack.c.h.b16 %v5913
    %v6542 = vunpack.c.l.b16 %v5914
    %v6543 = vunpack.c.h.b16 %v5914
    %v6544 = vunpack.c.l.b16 %v5915
    %v6545 = vunpack.c.h.b16 %v5915
    %v6546 = vunpack.c.l.b16 %v5916
    %v6547 = vunpack.c.h.b16 %v5916
    %v6548 = vunpack.c.l.b16 %v5917
    %v6549 = vunpack.c.h.b16 %v5917
    %v6550 = vunpack.c.l.b16 %v5918
    %v6551 = vunpack.c.h.b16 %v5918
    %v6552 = vunpack.c.l.b16 %v5919
    %v6553 = vunpack.c.h.b16 %v5919
    %v6554 = vunpack.c.l.b16 %v5920
    %v6555 = vunpack.c.h.b16 %v5920
    %v6556 = vunpack.c.l.b16 %v5921
    %v6557 = vunpack.c.h.b16 %v5921
    %v6558 = vunpack.c.l.b16 %v5922
    %v6559 = vunpack.c.h.b16 %v5922
    %v6560 = vunpack.c.l.b16 %v5923
    %v6561 = vunpack.c.h.b16 %v5923
    %v6562 = vunpack.c.l.b16 %v5924
    %v6563 = vunpack.c.h.b16 %v5924
    %v6564 = vunpack.c.l.b16 %v5925
    %v6565 = vunpack.c.h.b16 %v5925
    %v6566 = vunpack.c.l.b16 %v5926
    %v6567 = vunpack.c.h.b16 %v5926
    %v6568 = vunpack.c.l.b16 %v5927
    %v6569 = vunpack.c.h.b16 %v5927
    %v6570 = vunpack.c.l.b16 %v5928
    %v6571 = vunpack.c.h.b16 %v5928
    %v6572 = vunpack.c.l.b16 %v5929
    %v6573 = vunpack.c.h.b16 %v5929
    %v6574 = vunpack.c.l.b16 %v5930
    %v6575 = vunpack.c.h.b16 %v5930
    %v6576 = vunpack.c.l.b16 %v5931
    %v6577 = vunpack.c.h.b16 %v5931
    %v6578 = vunpack.c.l.b16 %v5932
    %v6579 = vunpack.c.h.b16 %v5932
    %v6580 = vunpack.c.l.b16 %v5933
    %v6581 = vunpack.c.h.b16 %v5933
    %v6582 = vunpack.c.l.b16 %v5934
    %v6583 = vunpack.c.h.b16 %v5934
    %v6584 = vunpack.c.l.b16 %v5935
    %v6585 = vunpack.c.h.b16 %v5935
    %v6586 = vunpack.c.l.b16 %v5936
    %v6587 = vunpack.c.h.b16 %v5936
    %v6588 = vunpack.c.l.b16 %v5937
    %v6589 = vunpack.c.h.b16 %v5937
    %v6590 = vunpack.c.l.b16 %v5938
    %v6591 = vunpack.c.h.b16 %v5938
    %v6592 = vunpack.c.l.b16 %v5939
    %v6593 = vunpack.c.h.b16 %v5939
    %v6594 = vunpack.c.l.b16 %v5940
    %v6595 = vunpack.c.h.b16 %v5940
    %v6596 = vunpack.c.l.b16 %v5941
    %v6597 = vunpack.c.h.b16 %v5941
    %v6598 = vunpack.c.l.b16 %v5942
    %v6599 = vunpack.c.h.b16 %v5942
    %v6600 = vunpack.c.l.b16 %v5943
    %v6601 = vunpack.c.h.b16 %v5943
    %v6602 = vunpack.c.l.b16 %v5944
    %v6603 = vunpack.c.h.b16 %v5944
    %v6604 = vunpack.c.l.b16 %v5945
    %v6605 = vunpack.c.h.b16 %v5945
    %v6606 = vunpack.c.l.b16 %v5946
    %v6607 = vunpack.c.h.b16 %v5946
    %v6608 = vunpack.c.l.b16 %v5947
    %v6609 = vunpack.c.h.b16 %v5947
    %v6610 = vunpack.c.l.b16 %v5948
    %v6611 = vunpack.c.h.b16 %v5948
    %v6612 = vunpack.c.l.b16 %v5949
    %v6613 = vunpack.c.h.b16 %v5949
    %v6614 = vunpack.c.l.b16 %v5950
    %v6615 = vunpack.c.h.b16 %v5950
    %v6616 = vunpack.c.l.b16 %v5951
    %v6617 = vunpack.c.h.b16 %v5951
    %v6618 = vunpack.c.l.b16 %v5952
    %v6619 = vunpack.c.h.b16 %v5952
    %v6620 = vunpack.c.l.b16 %v5953
    %v6621 = vunpack.c.h.b16 %v5953
    %v6622 = vunpack.c.l.b16 %v5954
    %v6623 = vunpack.c.h.b16 %v5954
    %v6624 = vunpack.c.l.b16 %v5955
    %v6625 = vunpack.c.h.b16 %v5955
    %v6626 = vunpack.c.l.b16 %v5956
    %v6627 = vunpack.c.h.b16 %v5956
    %v6628 = vunpack.c.l.b16 %v5957
    %v6629 = vunpack.c.h.b16 %v5957
    %v6630 = vunpack.c.l.b16 %v5958
    %v6631 = vunpack.c.h.b16 %v5958
    %v6632 = vunpack.c.l.b16 %v5959
    %v6633 = vunpack.c.h.b16 %v5959
    %v6634 = vunpack.c.l.b16 %v5960
    %v6635 = vunpack.c.h.b16 %v5960
    %v6636 = vunpack.c.l.b16 %v5961
    %v6637 = vunpack.c.h.b16 %v5961
    %v6638 = vunpack.c.l.b16 %v5962
    %v6639 = vunpack.c.h.b16 %v5962
    %v6640 = vunpack.c.l.b16 %v5963
    %v6641 = vunpack.c.h.b16 %v5963
    %v6642 = vunpack.c.l.b16 %v5964
    %v6643 = vunpack.c.h.b16 %v5964
    %v6644 = vunpack.c.l.b16 %v5965
    %v6645 = vunpack.c.h.b16 %v5965
    %v6646 = vunpack.c.l.b16 %v5966
    %v6647 = vunpack.c.h.b16 %v5966
    %v6648 = vunpack.c.l.b16 %v5967
    %v6649 = vunpack.c.h.b16 %v5967
    %v6650 = vunpack.c.l.b16 %v5968
    %v6651 = vunpack.c.h.b16 %v5968
    %v6652 = vunpack.c.l.b16 %v5969
    %v6653 = vunpack.c.h.b16 %v5969
    %v6654 = vunpack.c.l.b16 %v5970
    %v6655 = vunpack.c.h.b16 %v5970
    %v6656 = vunpack.c.l.b16 %v5971
    %v6657 = vunpack.c.h.b16 %v5971
    %v6658 = vunpack.c.l.b16 %v5972
    %v6659 = vunpack.c.h.b16 %v5972
    %v6660 = vunpack.c.l.b16 %v5973
    %v6661 = vunpack.c.h.b16 %v5973
    %v6662 = vunpack.c.l.b16 %v5974
    %v6663 = vunpack.c.h.b16 %v5974
    %v6664 = vunpack.c.l.b16 %v5975
    %v6665 = vunpack.c.h.b16 %v5975
    %v6666 = vunpack.c.l.b16 %v5976
    %v6667 = vunpack.c.h.b16 %v5976
    %v6668 = vunpack.c.l.b16 %v5977
    %v6669 = vunpack.c.h.b16 %v5977
    %v6670 = vunpack.c.l.b16 %v5978
    %v6671 = vunpack.c.h.b16 %v5978
    %v6672 = vunpack.c.l.b16 %v5979
    %v6673 = vunpack.c.h.b16 %v5979
    %v6674 = vunpack.c.l.b16 %v5980
    %v6675 = vunpack.c.h.b16 %v5980
    %v6676 = vunpack.c.l.b16 %v5981
    %v6677 = vunpack.c.h.b16 %v5981
    %v6678 = vunpack.c.l.b16 %v5982
    %v6679 = vunpack.c.h.b16 %v5982
    %v6680 = vunpack.c.l.b16 %v5983
    %v6681 = vunpack.c.h.b16 %v5983
    %v6682 = vunpack.c.l.b16 %v5984
    %v6683 = vunpack.c.h.b16 %v5984
    %v6684 = vunpack.c.l.b16 %v5985
    %v6685 = vunpack.c.h.b16 %v5985
    %v6686 = vunpack.c.l.b16 %v5986
    %v6687 = vunpack.c.h.b16 %v5986
    %v6688 = vunpack.c.l.b16 %v5987
    %v6689 = vunpack.c.h.b16 %v5987
    %v6690 = vunpack.c.l.b16 %v5988
    %v6691 = vunpack.c.h.b16 %v5988
    %v6692 = vunpack.c.l.b16 %v5989
    %v6693 = vunpack.c.h.b16 %v5989
    %v6694 = vunpack.c.l.b16 %v5990
    %v6695 = vunpack.c.h.b16 %v5990
    %v6696 = vunpack.c.l.b16 %v5991
    %v6697 = vunpack.c.h.b16 %v5991
    %v6698 = vunpack.c.l.b16 %v5992
    %v6699 = vunpack.c.h.b16 %v5992
    %v6700 = vunpack.c.l.b16 %v5993
    %v6701 = vunpack.c.h.b16 %v5993
    %v6702 = vunpack.c.l.b16 %v5994
    %v6703 = vunpack.c.h.b16 %v5994
    %v6704 = vunpack.c.l.b16 %v5995
    %v6705 = vunpack.c.h.b16 %v5995
    %v6706 = vunpack.c.l.b16 %v5996
    %v6707 = vunpack.c.h.b16 %v5996
    %v6708 = vunpack.c.l.b16 %v5997
    %v6709 = vunpack.c.h.b16 %v5997
    %v6710 = vunpack.c.l.b16 %v5998
    %v6711 = vunpack.c.h.b16 %v5998
    %v6712 = vunpack.c.l.b16 %v5999
    %v6713 = vunpack.c.h.b16 %v5999
    %v6714 = vunpack.c.l.b16 %v6000
    %v6715 = vunpack.c.h.b16 %v6000
    %v6716 = vunpack.c.l.b16 %v6001
    %v6717 = vunpack.c.h.b16 %v6001
    %v6718 = vunpack.c.l.b16 %v6002
    %v6719 = vunpack.c.h.b16 %v6002
    %v6720 = vunpack.c.l.b16 %v6003
    %v6721 = vunpack.c.h.b16 %v6003
    %v6722 = vunpack.c.l.b16 %v6004
    %v6723 = vunpack.c.h.b16 %v6004
    %v6724 = vunpack.c.l.b16 %v6005
    %v6725 = vunpack.c.h.b16 %v6005
    %v6726 = vunpack.c.l.b16 %v6006
    %v6727 = vunpack.c.h.b16 %v6006
    %v6728 = vunpack.c.l.b16 %v6007
    %v6729 = vunpack.c.h.b16 %v6007
    %v6730 = vunpack.c.l.b16 %v6008
    %v6731 = vunpack.c.h.b16 %v6008
    %v6732 = vunpack.c.l.b16 %v6009
    %v6733 = vunpack.c.h.b16 %v6009
    %v6734 = vunpack.c.l.b16 %v6010
    %v6735 = vunpack.c.h.b16 %v6010
    %v6736 = vunpack.c.l.b16 %v6011
    %v6737 = vunpack.c.h.b16 %v6011
    %v6738 = vunpack.c.l.b16 %v6012
    %v6739 = vunpack.c.h.b16 %v6012
    %v6740 = vunpack.c.l.b16 %v6013
    %v6741 = vunpack.c.h.b16 %v6013
    %v6742 = vunpack.c.l.b16 %v6014
    %v6743 = vunpack.c.h.b16 %v6014
    %v6744 = vunpack.c.l.b16 %v6015
    %v6745 = vunpack.c.h.b16 %v6015
    %v6746 = vunpack.c.l.b16 %v6016
    %v6747 = vunpack.c.h.b16 %v6016
    %v6748 = vunpack.c.l.b16 %v6017
    %v6749 = vunpack.c.h.b16 %v6017
    %v6750 = vunpack.c.l.b16 %v6018
    %v6751 = vunpack.c.h.b16 %v6018
    %v6752 = vunpack.c.l.b16 %v6019
    %v6753 = vunpack.c.h.b16 %v6019
    %v6754 = vunpack.c.l.b16 %v6020
    %v6755 = vunpack.c.h.b16 %v6020
    %v6756 = vunpack.c.l.b16 %v6021
    %v6757 = vunpack.c.h.b16 %v6021
    %v6758 = vunpack.c.l.b16 %v6022
    %v6759 = vunpack.c.h.b16 %v6022
    %v6760 = vunpack.c.l.b16 %v6023
    %v6761 = vunpack.c.h.b16 %v6023
    %v6762 = vunpack.c.l.b16 %v6024
    %v6763 = vunpack.c.h.b16 %v6024
    %v6764 = vunpack.c.l.b16 %v6025
    %v6765 = vunpack.c.h.b16 %v6025
    %v6766 = vunpack.c.l.b16 %v6026
    %v6767 = vunpack.c.h.b16 %v6026
    %v6768 = vunpack.c.l.b16 %v6027
    %v6769 = vunpack.c.h.b16 %v6027
    %v6770 = vunpack.c.l.b16 %v6028
    %v6771 = vunpack.c.h.b16 %v6028
    %v6772 = vunpack.c.l.b16 %v6029
    %v6773 = vunpack.c.h.b16 %v6029
    %v6774 = vunpack.c.l.b16 %v6030
    %v6775 = vunpack.c.h.b16 %v6030
    %v6776 = vunpack.c.l.b16 %v6031
    %v6777 = vunpack.c.h.b16 %v6031
    %v6778 = vunpack.c.l.b16 %v6032
    %v6779 = vunpack.c.h.b16 %v6032
    %v6780 = vunpack.c.l.b16 %v6033
    %v6781 = vunpack.c.h.b16 %v6033
    %v6782 = vunpack.c.l.b16 %v6034
    %v6783 = vunpack.c.h.b16 %v6034
    %v6784 = vunpack.c.l.b16 %v6035
    %v6785 = vunpack.c.h.b16 %v6035
    %v6786 = vunpack.c.l.b16 %v6036
    %v6787 = vunpack.c.h.b16 %v6036
    %v6788 = vunpack.c.l.b16 %v6037
    %v6789 = vunpack.c.h.b16 %v6037
    %v6790 = vunpack.c.l.b16 %v6038
    %v6791 = vunpack.c.h.b16 %v6038
    %v6792 = vunpack.c.l.b16 %v6039
    %v6793 = vunpack.c.h.b16 %v6039
    %v6794 = vunpack.c.l.b16 %v6040
    %v6795 = vunpack.c.h.b16 %v6040
    %v6796 = vunpack.c.l.b16 %v6041
    %v6797 = vunpack.c.h.b16 %v6041
    %v6798 = vunpack.c.l.b16 %v6042
    %v6799 = vunpack.c.h.b16 %v6042
    %v6800 = vunpack.c.l.b16 %v6043
    %v6801 = vunpack.c.h.b16 %v6043
    %v6802 = vunpack.c.l.b16 %v6044
    %v6803 = vunpack.c.h.b16 %v6044
    %v6804 = vunpack.c.l.b16 %v6045
    %v6805 = vunpack.c.h.b16 %v6045
    %v6806 = vunpack.c.l.b16 %v6046
    %v6807 = vunpack.c.h.b16 %v6046
    %v6808 = vunpack.c.l.b16 %v6047
    %v6809 = vunpack.c.h.b16 %v6047
    %v6810 = vunpack.c.l.b16 %v6048
    %v6811 = vunpack.c.h.b16 %v6048
    %v6812 = vunpack.c.l.b16 %v6049
    %v6813 = vunpack.c.h.b16 %v6049
    %v6814 = vunpack.c.l.b16 %v6050
    %v6815 = vunpack.c.h.b16 %v6050
    %v6816 = vunpack.c.l.b16 %v6051
    %v6817 = vunpack.c.h.b16 %v6051
    %v6818 = vunpack.c.l.b16 %v6052
    %v6819 = vunpack.c.h.b16 %v6052
    %v6820 = vunpack.c.l.b16 %v6053
    %v6821 = vunpack.c.h.b16 %v6053
    %v6822 = vunpack.c.l.b16 %v6054
    %v6823 = vunpack.c.h.b16 %v6054
    %v6824 = vunpack.c.l.b16 %v6055
    %v6825 = vunpack.c.h.b16 %v6055
    %v6826 = vunpack.c.l.b16 %v6056
    %v6827 = vunpack.c.h.b16 %v6056
    %v6828 = vunpack.c.l.b16 %v6057
    %v6829 = vunpack.c.h.b16 %v6057
    %v6830 = vunpack.c.l.b16 %v6058
    %v6831 = vunpack.c.h.b16 %v6058
    %v6832 = vunpack.c.l.b16 %v6059
    %v6833 = vunpack.c.h.b16 %v6059
    %v6834 = vunpack.c.l.b16 %v6060
    %v6835 = vunpack.c.h.b16 %v6060
    %v6836 = vunpack.c.l.b16 %v6061
    %v6837 = vunpack.c.h.b16 %v6061
    %v6838 = vunpack.c.l.b16 %v6062
    %v6839 = vunpack.c.h.b16 %v6062
    %v6840 = vunpack.c.l.b16 %v6063
    %v6841 = vunpack.c.h.b16 %v6063
    %v6842 = vunpack.c.l.b16 %v6064
    %v6843 = vunpack.c.h.b16 %v6064
    %v6844 = vunpack.c.l.b16 %v6065
    %v6845 = vunpack.c.h.b16 %v6065
    %v6846 = vunpack.c.l.b16 %v6066
    %v6847 = vunpack.c.h.b16 %v6066
    %v6848 = vunpack.c.l.b16 %v6067
    %v6849 = vunpack.c.h.b16 %v6067
    %v6850 = vunpack.c.l.b16 %v6068
    %v6851 = vunpack.c.h.b16 %v6068
    %v6852 = vunpack.c.l.b16 %v6069
    %v6853 = vunpack.c.h.b16 %v6069
    %v6854 = vunpack.c.l.b16 %v6070
    %v6855 = vunpack.c.h.b16 %v6070
    %v6856 = vunpack.c.l.b16 %v6071
    %v6857 = vunpack.c.h.b16 %v6071
    %v6858 = vunpack.c.l.b16 %v6072
    %v6859 = vunpack.c.h.b16 %v6072
    %v6860 = vunpack.c.l.b16 %v6073
    %v6861 = vunpack.c.h.b16 %v6073
    %v6862 = vunpack.c.l.b16 %v6074
    %v6863 = vunpack.c.h.b16 %v6074
    %v6864 = vunpack.c.l.b16 %v6075
    %v6865 = vunpack.c.h.b16 %v6075
    %v6866 = vpack.c.b16 %v6358, %v6354
    %v6867 = vpack.c.b16 %v6359, %v6355
    %v6868 = vpack.c.b16 %v6360, %v6356
    %v6869 = vpack.c.b16 %v6361, %v6357
    %v6870 = vpack.c.b16 %v6366, %v6362
    %v6871 = vpack.c.b16 %v6367, %v6363
    %v6872 = vpack.c.b16 %v6368, %v6364
    %v6873 = vpack.c.b16 %v6369, %v6365
    %v6874 = vpack.c.b16 %v6374, %v6370
    %v6875 = vpack.c.b16 %v6375, %v6371
    %v6876 = vpack.c.b16 %v6376, %v6372
    %v6877 = vpack.c.b16 %v6377, %v6373
    %v6878 = vpack.c.b16 %v6382, %v6378
    %v6879 = vpack.c.b16 %v6383, %v6379
    %v6880 = vpack.c.b16 %v6384, %v6380
    %v6881 = vpack.c.b16 %v6385, %v6381
    %v6882 = vpack.c.b16 %v6390, %v6386
    %v6883 = vpack.c.b16 %v6391, %v6387
    %v6884 = vpack.c.b16 %v6392, %v6388
    %v6885 = vpack.c.b16 %v6393, %v6389
    %v6886 = vpack.c.b16 %v6398, %v6394
    %v6887 = vpack.c.b16 %v6399, %v6395
    %v6888 = vpack.c.b16 %v6400, %v6396
    %v6889 = vpack.c.b16 %v6401, %v6397
    %v6890 = vpack.c.b16 %v6406, %v6402
    %v6891 = vpack.c.b16 %v6407, %v6403
    %v6892 = vpack.c.b16 %v6408, %v6404
    %v6893 = vpack.c.b16 %v6409, %v6405
    %v6894 = vpack.c.b16 %v6414, %v6410
    %v6895 = vpack.c.b16 %v6415, %v6411
    %v6896 = vpack.c.b16 %v6416, %v6412
    %v6897 = vpack.c.b16 %v6417, %v6413
    %v6898 = vpack.c.b16 %v6422, %v6418
    %v6899 = vpack.c.b16 %v6423, %v6419
    %v6900 = vpack.c.b16 %v6424, %v6420
    %v6901 = vpack.c.b16 %v6425, %v6421
    %v6902 = vpack.c.b16 %v6430, %v6426
    %v6903 = vpack.c.b16 %v6431, %v6427
    %v6904 = vpack.c.b16 %v6432, %v6428
    %v6905 = vpack.c.b16 %v6433, %v6429
    %v6906 = vpack.c.b16 %v6438, %v6434
    %v6907 = vpack.c.b16 %v6439, %v6435
    %v6908 = vpack.c.b16 %v6440, %v6436
    %v6909 = vpack.c.b16 %v6441, %v6437
    %v6910 = vpack.c.b16 %v6446, %v6442
    %v6911 = vpack.c.b16 %v6447, %v6443
    %v6912 = vpack.c.b16 %v6448, %v6444
    %v6913 = vpack.c.b16 %v6449, %v6445
    %v6914 = vpack.c.b16 %v6454, %v6450
    %v6915 = vpack.c.b16 %v6455, %v6451
    %v6916 = vpack.c.b16 %v6456, %v6452
    %v6917 = vpack.c.b16 %v6457, %v6453
    %v6918 = vpack.c.b16 %v6462, %v6458
    %v6919 = vpack.c.b16 %v6463, %v6459
    %v6920 = vpack.c.b16 %v6464, %v6460
    %v6921 = vpack.c.b16 %v6465, %v6461
    %v6922 = vpack.c.b16 %v6470, %v6466
    %v6923 = vpack.c.b16 %v6471, %v6467
    %v6924 = vpack.c.b16 %v6472, %v6468
    %v6925 = vpack.c.b16 %v6473, %v6469
    %v6926 = vpack.c.b16 %v6478, %v6474
    %v6927 = vpack.c.b16 %v6479, %v6475
    %v6928 = vpack.c.b16 %v6480, %v6476
    %v6929 = vpack.c.b16 %v6481, %v6477
    %v6930 = vpack.c.b16 %v6486, %v6482
    %v6931 = vpack.c.b16 %v6487, %v6483
    %v6932 = vpack.c.b16 %v6488, %v6484
    %v6933 = vpack.c.b16 %v6489, %v6485
    %v6934 = vpack.c.b16 %v6494, %v6490
    %v6935 = vpack.c.b16 %v6495, %v6491
    %v6936 = vpack.c.b16 %v6496, %v6492
    %v6937 = vpack.c.b16 %v6497, %v6493
    %v6938 = vpack.c.b16 %v6502, %v6498
    %v6939 = vpack.c.b16 %v6503, %v6499
    %v6940 = vpack.c.b16 %v6504, %v6500
    %v6941 = vpack.c.b16 %v6505, %v6501
    %v6942 = vpack.c.b16 %v6510, %v6506
    %v6943 = vpack.c.b16 %v6511, %v6507
    %v6944 = vpack.c.b16 %v6512, %v6508
    %v6945 = vpack.c.b16 %v6513, %v6509
    %v6946 = vpack.c.b16 %v6518, %v6514
    %v6947 = vpack.c.b16 %v6519, %v6515
    %v6948 = vpack.c.b16 %v6520, %v6516
    %v6949 = vpack.c.b16 %v6521, %v6517
    %v6950 = vpack.c.b16 %v6526, %v6522
    %v6951 = vpack.c.b16 %v6527, %v6523
    %v6952 = vpack.c.b16 %v6528, %v6524
    %v6953 = vpack.c.b16 %v6529, %v6525
    %v6954 = vpack.c.b16 %v6534, %v6530
    %v6955 = vpack.c.b16 %v6535, %v6531
    %v6956 = vpack.c.b16 %v6536, %v6532
    %v6957 = vpack.c.b16 %v6537, %v6533
    %v6958 = vpack.c.b16 %v6542, %v6538
    %v6959 = vpack.c.b16 %v6543, %v6539
    %v6960 = vpack.c.b16 %v6544, %v6540
    %v6961 = vpack.c.b16 %v6545, %v6541
    %v6962 = vpack.c.b16 %v6550, %v6546
    %v6963 = vpack.c.b16 %v6551, %v6547
    %v6964 = vpack.c.b16 %v6552, %v6548
    %v6965 = vpack.c.b16 %v6553, %v6549
    %v6966 = vpack.c.b16 %v6558, %v6554
    %v6967 = vpack.c.b16 %v6559, %v6555
    %v6968 = vpack.c.b16 %v6560, %v6556
    %v6969 = vpack.c.b16 %v6561, %v6557
    %v6970 = vpack.c.b16 %v6566, %v6562
    %v6971 = vpack.c.b16 %v6567, %v6563
    %v6972 = vpack.c.b16 %v6568, %v6564
    %v6973 = vpack.c.b16 %v6569, %v6565
    %v6974 = vpack.c.b16 %v6574, %v6570
    %v6975 = vpack.c.b16 %v6575, %v6571
    %v6976 = vpack.c.b16 %v6576, %v6572
    %v6977 = vpack.c.b16 %v6577, %v6573
    %v6978 = vpack.c.b16 %v6582, %v6578
    %v6979 = vpack.c.b16 %v6583, %v6579
    %v6980 = vpack.c.b16 %v6584, %v6580
    %v6981 = vpack.c.b16 %v6585, %v6581
    %v6982 = vpack.c.b16 %v6590, %v6586
    %v6983 = vpack.c.b16 %v6591, %v6587
    %v6984 = vpack.c.b16 %v6592, %v6588
    %v6985 = vpack.c.b16 %v6593, %v6589
    %v6986 = vpack.c.b16 %v6598, %v6594
    %v6987 = vpack.c.b16 %v6599, %v6595
    %v6988 = vpack.c.b16 %v6600, %v6596
    %v6989 = vpack.c.b16 %v6601, %v6597
    %v6990 = vpack.c.b16 %v6606, %v6602
    %v6991 = vpack.c.b16 %v6607, %v6603
    %v6992 = vpack.c.b16 %v6608, %v6604
    %v6993 = vpack.c.b16 %v6609, %v6605
    %v6994 = vpack.c.b16 %v6614, %v6610
    %v6995 = vpack.c.b16 %v6615, %v6611
    %v6996 = vpack.c.b16 %v6616, %v6612
    %v6997 = vpack.c.b16 %v6617, %v6613
    %v6998 = vpack.c.b16 %v6622, %v6618
    %v6999 = vpack.c.b16 %v6623, %v6619
    %v7000 = vpack.c.b16 %v6624, %v6620
    %v7001 = vpack.c.b16 %v6625, %v6621
    %v7002 = vpack.c.b16 %v6630, %v6626
    %v7003 = vpack.c.b16 %v6631, %v6627
    %v7004 = vpack.c.b16 %v6632, %v6628
    %v7005 = vpack.c.b16 %v6633, %v6629
    %v7006 = vpack.c.b16 %v6638, %v6634
    %v7007 = vpack.c.b16 %v6639, %v6635
    %v7008 = vpack.c.b16 %v6640, %v6636
    %v7009 = vpack.c.b16 %v6641, %v6637
    %v7010 = vpack.c.b16 %v6646, %v6642
    %v7011 = vpack.c.b16 %v6647, %v6643
    %v7012 = vpack.c.b16 %v6648, %v6644
    %v7013 = vpack.c.b16 %v6649, %v6645
    %v7014 = vpack.c.b16 %v6654, %v6650
    %v7015 = vpack.c.b16 %v6655, %v6651
    %v7016 = vpack.c.b16 %v6656, %v6652
    %v7017 = vpack.c.b16 %v6657, %v6653
    %v7018 = vpack.c.b16 %v6662, %v6658
    %v7019 = vpack.c.b16 %v6663, %v6659
    %v7020 = vpack.c.b16 %v6664, %v6660
    %v7021 = vpack.c.b16 %v6665, %v6661
    %v7022 = vpack.c.b16 %v6670, %v6666
    %v7023 = vpack.c.b16 %v6671, %v6667
    %v7024 = vpack.c.b16 %v6672, %v6668
    %v7025 = vpack.c.b16 %v6673, %v6669
    %v7026 = vpack.c.b16 %v6678, %v6674
    %v7027 = vpack.c.b16 %v6679, %v6675
    %v7028 = vpack.c.b16 %v6680, %v6676
    %v7029 = vpack.c.b16 %v6681, %v6677
    %v7030 = vpack.c.b16 %v6686, %v6682
    %v7031 = vpack.c.b16 %v6687, %v6683
    %v7032 = vpack.c.b16 %v6688, %v6684
    %v7033 = vpack.c.b16 %v6689, %v6685
    %v7034 = vpack.c.b16 %v6694, %v6690
    %v7035 = vpack.c.b16 %v6695, %v6691
    %v7036 = vpack.c.b16 %v6696, %v6692
    %v7037 = vpack.c.b16 %v6697, %v6693
    %v7038 = vpack.c.b16 %v6702, %v6698
    %v7039 = vpack.c.b16 %v6703, %v6699
    %v7040 = vpack.c.b16 %v6704, %v6700
    %v7041 = vpack.c.b16 %v6705, %v6701
    %v7042 = vpack.c.b16 %v6710, %v6706
    %v7043 = vpack.c.b16 %v6711, %v6707
    %v7044 = vpack.c.b16 %v6712, %v6708
    %v7045 = vpack.c.b16 %v6713, %v6709
    %v7046 = vpack.c.b16 %v6718, %v6714
    %v7047 = vpack.c.b16 %v6719, %v6715
    %v7048 = vpack.c.b16 %v6720, %v6716
    %v7049 = vpack.c.b16 %v6721, %v6717
    %v7050 = vpack.c.b16 %v6726, %v6722
    %v7051 = vpack.c.b16 %v6727, %v6723
    %v7052 = vpack.c.b16 %v6728, %v6724
    %v7053 = vpack.c.b16 %v6729, %v6725
    %v7054 = vpack.c.b16 %v6734, %v6730
    %v7055 = vpack.c.b16 %v6735, %v6731
    %v7056 = vpack.c.b16 %v6736, %v6732
    %v7057 = vpack.c.b16 %v6737, %v6733
    %v7058 = vpack.c.b16 %v6742, %v6738
    %v7059 = vpack.c.b16 %v6743, %v6739
    %v7060 = vpack.c.b16 %v6744, %v6740
    %v7061 = vpack.c.b16 %v6745, %v6741
    %v7062 = vpack.c.b16 %v6750, %v6746
    %v7063 = vpack.c.b16 %v6751, %v6747
    %v7064 = vpack.c.b16 %v6752, %v6748
    %v7065 = vpack.c.b16 %v6753, %v6749
    %v7066 = vpack.c.b16 %v6758, %v6754
    %v7067 = vpack.c.b16 %v6759, %v6755
    %v7068 = vpack.c.b16 %v6760, %v6756
    %v7069 = vpack.c.b16 %v6761, %v6757
    %v7070 = vpack.c.b16 %v6766, %v6762
    %v7071 = vpack.c.b16 %v6767, %v6763
    %v7072 = vpack.c.b16 %v6768, %v6764
    %v7073 = vpack.c.b16 %v6769, %v6765
    %v7074 = vpack.c.b16 %v6774, %v6770
    %v7075 = vpack.c.b16 %v6775, %v6771
    %v7076 = vpack.c.b16 %v6776, %v6772
    %v7077 = vpack.c.b16 %v6777, %v6773
    %v7078 = vpack.c.b16 %v6782, %v6778
    %v7079 = vpack.c.b16 %v6783, %v6779
    %v7080 = vpack.c.b16 %v6784, %v6780
    %v7081 = vpack.c.b16 %v6785, %v6781
    %v7082 = vpack.c.b16 %v6790, %v6786
    %v7083 = vpack.c.b16 %v6791, %v6787
    %v7084 = vpack.c.b16 %v6792, %v6788
    %v7085 = vpack.c.b16 %v6793, %v6789
    %v7086 = vpack.c.b16 %v6798, %v6794
    %v7087 = vpack.c.b16 %v6799, %v6795
    %v7088 = vpack.c.b16 %v6800, %v6796
    %v7089 = vpack.c.b16 %v6801, %v6797
    %v7090 = vpack.c.b16 %v6806, %v6802
    %v7091 = vpack.c.b16 %v6807, %v6803
    %v7092 = vpack.c.b16 %v6808, %v6804
    %v7093 = vpack.c.b16 %v6809, %v6805
    %v7094 = vpack.c.b16 %v6814, %v6810
    %v7095 = vpack.c.b16 %v6815, %v6811
    %v7096 = vpack.c.b16 %v6816, %v6812
    %v7097 = vpack.c.b16 %v6817, %v6813
    %v7098 = vpack.c.b16 %v6822, %v6818
    %v7099 = vpack.c.b16 %v6823, %v6819
    %v7100 = vpack.c.b16 %v6824, %v6820
    %v7101 = vpack.c.b16 %v6825, %v6821
    %v7102 = vpack.c.b16 %v6830, %v6826
    %v7103 = vpack.c.b16 %v6831, %v6827
    %v7104 = vpack.c.b16 %v6832, %v6828
    %v7105 = vpack.c.b16 %v6833, %v6829
    %v7106 = vpack.c.b16 %v6838, %v6834
    %v7107 = vpack.c.b16 %v6839, %v6835
    %v7108 = vpack.c.b16 %v6840, %v6836
    %v7109 = vpack.c.b16 %v6841, %v6837
    %v7110 = vpack.c.b16 %v6846, %v6842
    %v7111 = vpack.c.b16 %v6847, %v6843
    %v7112 = vpack.c.b16 %v6848, %v6844
    %v7113 = vpack.c.b16 %v6849, %v6845
    %v7114 = vpack.c.b16 %v6854, %v6850
    %v7115 = vpack.c.b16 %v6855, %v6851
    %v7116 = vpack.c.b16 %v6856, %v6852
    %v7117 = vpack.c.b16 %v6857, %v6853
    %v7118 = vpack.c.b16 %v6862, %v6858
    %v7119 = vpack.c.b16 %v6863, %v6859
    %v7120 = vpack.c.b16 %v6864, %v6860
    %v7121 = vpack.c.b16 %v6865, %v6861
    %7378 = vmatprep.subr.bf16.mxu0 %v6867
    %7379 = vmatpush1.bf16.msra.mxu0 %v6866
    %7380 = vmatprep.subr.bf16.mxu0 %v6871
    %7381 = vmatpush1.bf16.msra.mxu0 %v6870
    %7382 = vmatprep.subr.bf16.mxu0 %v6875
    %7383 = vmatpush1.bf16.msra.mxu0 %v6874
    %7384 = vmatprep.subr.bf16.mxu0 %v6879
    %7385 = vmatpush1.bf16.msra.mxu0 %v6878
    %7386 = vmatprep.subr.bf16.mxu0 %v6883
    %7387 = vmatpush1.bf16.msra.mxu0 %v6882
    %7388 = vmatprep.subr.bf16.mxu0 %v6887
    %7389 = vmatpush1.bf16.msra.mxu0 %v6886
    %7390 = vmatprep.subr.bf16.mxu0 %v6891
    %7391 = vmatpush1.bf16.msra.mxu0 %v6890
    %7392 = vmatprep.subr.bf16.mxu0 %v6895
    %7393 = vmatpush1.bf16.msra.mxu0 %v6894
    %7394 = vmatprep.subr.bf16.mxu0 %v6899
    %7395 = vmatpush1.bf16.msra.mxu0 %v6898
    %7396 = vmatprep.subr.bf16.mxu0 %v6903
    %7397 = vmatpush1.bf16.msra.mxu0 %v6902
    %7398 = vmatprep.subr.bf16.mxu0 %v6907
    %7399 = vmatpush1.bf16.msra.mxu0 %v6906
    %7400 = vmatprep.subr.bf16.mxu0 %v6911
    %7401 = vmatpush1.bf16.msra.mxu0 %v6910
    %7402 = vmatprep.subr.bf16.mxu0 %v6915
    %7403 = vmatpush1.bf16.msra.mxu0 %v6914
    %7404 = vmatprep.subr.bf16.mxu0 %v6919
    %7405 = vmatpush1.bf16.msra.mxu0 %v6918
    %7406 = vmatprep.subr.bf16.mxu0 %v6923
    %7407 = vmatpush1.bf16.msra.mxu0 %v6922
    %7408 = vmatprep.subr.bf16.mxu0 %v6927
    %7409 = vmatpush1.bf16.msra.mxu0 %v6926
    %7410 = vmatprep.mubr.bf16.mxu0 %v5813
    %7411 = vmatmul.mubr.bf16.gmra.mrb[0].mxu0 %v5812
    %v7412 = vpop.f32.mrb[0].mxu0
    %v7413 = vadd.f32 %v6081, %v7412
    %v7414 = vpop.f32.mrb[0].mxu0
    %v7415 = vadd.f32 %v6085, %v7414
    %v7416 = vpop.f32.mrb[0].mxu0
    %v7417 = vpop.f32.mrb[0].mxu0
    %7418 = vdwg.mxu0
    %7419 = vmatprep.subr.bf16.mxu0 %v6931
    %7420 = vmatpush1.bf16.msra.mxu0 %v6930
    %7421 = vmatprep.subr.bf16.mxu0 %v6935
    %7422 = vmatpush1.bf16.msra.mxu0 %v6934
    %7423 = vmatprep.subr.bf16.mxu0 %v6939
    %7424 = vmatpush1.bf16.msra.mxu0 %v6938
    %7425 = vmatprep.subr.bf16.mxu0 %v6943
    %7426 = vmatpush1.bf16.msra.mxu0 %v6942
    %7427 = vmatprep.subr.bf16.mxu0 %v6947
    %7428 = vmatpush1.bf16.msra.mxu0 %v6946
    %7429 = vmatprep.subr.bf16.mxu0 %v6951
    %7430 = vmatpush1.bf16.msra.mxu0 %v6950
    %7431 = vmatprep.subr.bf16.mxu0 %v6955
    %7432 = vmatpush1.bf16.msra.mxu0 %v6954
    %7433 = vmatprep.subr.bf16.mxu0 %v6959
    %7434 = vmatpush1.bf16.msra.mxu0 %v6958
    %7435 = vmatprep.subr.bf16.mxu0 %v6963
    %7436 = vmatpush1.bf16.msra.mxu0 %v6962
    %7437 = vmatprep.subr.bf16.mxu0 %v6967
    %7438 = vmatpush1.bf16.msra.mxu0 %v6966
    %7439 = vmatprep.subr.bf16.mxu0 %v6971
    %7440 = vmatpush1.bf16.msra.mxu0 %v6970
    %7441 = vmatprep.subr.bf16.mxu0 %v6975
    %7442 = vmatpush1.bf16.msra.mxu0 %v6974
    %7443 = vmatprep.subr.bf16.mxu0 %v6979
    %7444 = vmatpush1.bf16.msra.mxu0 %v6978
    %7445 = vmatprep.subr.bf16.mxu0 %v6983
    %7446 = vmatpush1.bf16.msra.mxu0 %v6982
    %7447 = vmatprep.subr.bf16.mxu0 %v6987
    %7448 = vmatpush1.bf16.msra.mxu0 %v6986
    %7449 = vmatprep.subr.bf16.mxu0 %v6991
    %7450 = vmatpush1.bf16.msra.mxu0 %v6990
    %7451 = vmatprep.mubr.bf16.mxu0 %v5815
    %7452 = vmatmul.mubr.bf16.gmra.mrb[0].mxu0 %v5814
    %v7453 = vpop.f32.mrb[0].mxu0
    %v7454 = vadd.f32 %v7413, %v7453
    %v7455 = vpop.f32.mrb[0].mxu0
    %v7456 = vadd.f32 %v7415, %v7455
    %v7457 = vpop.f32.mrb[0].mxu0
    %v7458 = vpop.f32.mrb[0].mxu0
    %7459 = vdwg.mxu0
    %7460 = vmatprep.subr.bf16.mxu0 %v6995
    %7461 = vmatpush1.bf16.msra.mxu0 %v6994
    %7462 = vmatprep.subr.bf16.mxu0 %v6999
    %7463 = vmatpush1.bf16.msra.mxu0 %v6998
    %7464 = vmatprep.subr.bf16.mxu0 %v7003
    %7465 = vmatpush1.bf16.msra.mxu0 %v7002
    %7466 = vmatprep.subr.bf16.mxu0 %v7007
    %7467 = vmatpush1.bf16.msra.mxu0 %v7006
    %7468 = vmatprep.subr.bf16.mxu0 %v7011
    %7469 = vmatpush1.bf16.msra.mxu0 %v7010
    %7470 = vmatprep.subr.bf16.mxu0 %v7015
    %7471 = vmatpush1.bf16.msra.mxu0 %v7014
    %7472 = vmatprep.subr.bf16.mxu0 %v7019
    %7473 = vmatpush1.bf16.msra.mxu0 %v7018
    %7474 = vmatprep.subr.bf16.mxu0 %v7023
    %7475 = vmatpush1.bf16.msra.mxu0 %v7022
    %7476 = vmatprep.subr.bf16.mxu0 %v7027
    %7477 = vmatpush1.bf16.msra.mxu0 %v7026
    %7478 = vmatprep.subr.bf16.mxu0 %v7031
    %7479 = vmatpush1.bf16.msra.mxu0 %v7030
    %7480 = vmatprep.subr.bf16.mxu0 %v7035
    %7481 = vmatpush1.bf16.msra.mxu0 %v7034
    %7482 = vmatprep.subr.bf16.mxu0 %v7039
    %7483 = vmatpush1.bf16.msra.mxu0 %v7038
    %7484 = vmatprep.subr.bf16.mxu0 %v7043
    %7485 = vmatpush1.bf16.msra.mxu0 %v7042
    %7486 = vmatprep.subr.bf16.mxu0 %v7047
    %7487 = vmatpush1.bf16.msra.mxu0 %v7046
    %7488 = vmatprep.subr.bf16.mxu0 %v7051
    %7489 = vmatpush1.bf16.msra.mxu0 %v7050
    %7490 = vmatprep.subr.bf16.mxu0 %v7055
    %7491 = vmatpush1.bf16.msra.mxu0 %v7054
    %7492 = vmatprep.mubr.bf16.mxu0 %v5817
    %7493 = vmatmul.mubr.bf16.gmra.mrb[0].mxu0 %v5816
    %v7494 = vpop.f32.mrb[0].mxu0
    %v7495 = vadd.f32 %v7454, %v7494
    %v7496 = vpop.f32.mrb[0].mxu0
    %v7497 = vadd.f32 %v7456, %v7496
    %v7498 = vpop.f32.mrb[0].mxu0
    %v7499 = vpop.f32.mrb[0].mxu0
    %7500 = vdwg.mxu0
    %7501 = vmatprep.subr.bf16.mxu0 %v7059
    %7502 = vmatpush1.bf16.msra.mxu0 %v7058
    %7503 = vmatprep.subr.bf16.mxu0 %v7063
    %7504 = vmatpush1.bf16.msra.mxu0 %v7062
    %7505 = vmatprep.subr.bf16.mxu0 %v7067
    %7506 = vmatpush1.bf16.msra.mxu0 %v7066
    %7507 = vmatprep.subr.bf16.mxu0 %v7071
    %7508 = vmatpush1.bf16.msra.mxu0 %v7070
    %7509 = vmatprep.subr.bf16.mxu0 %v7075
    %7510 = vmatpush1.bf16.msra.mxu0 %v7074
    %7511 = vmatprep.subr.bf16.mxu0 %v7079
    %7512 = vmatpush1.bf16.msra.mxu0 %v7078
    %7513 = vmatprep.subr.bf16.mxu0 %v7083
    %7514 = vmatpush1.bf16.msra.mxu0 %v7082
    %7515 = vmatprep.subr.bf16.mxu0 %v7087
    %7516 = vmatpush1.bf16.msra.mxu0 %v7086
    %7517 = vmatprep.subr.bf16.mxu0 %v7091
    %7518 = vmatpush1.bf16.msra.mxu0 %v7090
    %7519 = vmatprep.subr.bf16.mxu0 %v7095
    %7520 = vmatpush1.bf16.msra.mxu0 %v7094
    %7521 = vmatprep.subr.bf16.mxu0 %v7099
    %7522 = vmatpush1.bf16.msra.mxu0 %v7098
    %7523 = vmatprep.subr.bf16.mxu0 %v7103
    %7524 = vmatpush1.bf16.msra.mxu0 %v7102
    %7525 = vmatprep.subr.bf16.mxu0 %v7107
    %7526 = vmatpush1.bf16.msra.mxu0 %v7106
    %7527 = vmatprep.subr.bf16.mxu0 %v7111
    %7528 = vmatpush1.bf16.msra.mxu0 %v7110
    %7529 = vmatprep.subr.bf16.mxu0 %v7115
    %7530 = vmatpush1.bf16.msra.mxu0 %v7114
    %7531 = vmatprep.subr.bf16.mxu0 %v7119
    %7532 = vmatpush1.bf16.msra.mxu0 %v7118
    %7533 = vmatprep.mubr.bf16.mxu0 %v5819
    %7534 = vmatmul.mubr.bf16.gmra.mrb[0].mxu0 %v5818
    %v7535 = vpop.f32.mrb[0].mxu0
    %v7536 = vadd.f32 %v7495, %v7535
    %v7537 = vpop.f32.mrb[0].mxu0
    %v7538 = vadd.f32 %v7497, %v7537
    %v7539 = vpop.f32.mrb[0].mxu0
    %v7540 = vpop.f32.mrb[0].mxu0
    %7541 = vdwg.mxu0
    %7542 = vmatprep.subr.bf16.mxu0 %v6869
    %7543 = vmatpush1.bf16.msra.mxu0 %v6868
    %7544 = vmatprep.subr.bf16.mxu0 %v6873
    %7545 = vmatpush1.bf16.msra.mxu0 %v6872
    %7546 = vmatprep.subr.bf16.mxu0 %v6877
    %7547 = vmatpush1.bf16.msra.mxu0 %v6876
    %7548 = vmatprep.subr.bf16.mxu0 %v6881
    %7549 = vmatpush1.bf16.msra.mxu0 %v6880
    %7550 = vmatprep.subr.bf16.mxu0 %v6885
    %7551 = vmatpush1.bf16.msra.mxu0 %v6884
    %7552 = vmatprep.subr.bf16.mxu0 %v6889
    %7553 = vmatpush1.bf16.msra.mxu0 %v6888
    %7554 = vmatprep.subr.bf16.mxu0 %v6893
    %7555 = vmatpush1.bf16.msra.mxu0 %v6892
    %7556 = vmatprep.subr.bf16.mxu0 %v6897
    %7557 = vmatpush1.bf16.msra.mxu0 %v6896
    %7558 = vmatprep.subr.bf16.mxu0 %v6901
    %7559 = vmatpush1.bf16.msra.mxu0 %v6900
    %7560 = vmatprep.subr.bf16.mxu0 %v6905
    %7561 = vmatpush1.bf16.msra.mxu0 %v6904
    %7562 = vmatprep.subr.bf16.mxu0 %v6909
    %7563 = vmatpush1.bf16.msra.mxu0 %v6908
    %7564 = vmatprep.subr.bf16.mxu0 %v6913
    %7565 = vmatpush1.bf16.msra.mxu0 %v6912
    %7566 = vmatprep.subr.bf16.mxu0 %v6917
    %7567 = vmatpush1.bf16.msra.mxu0 %v6916
    %7568 = vmatprep.subr.bf16.mxu0 %v6921
    %7569 = vmatpush1.bf16.msra.mxu0 %v6920
    %7570 = vmatprep.subr.bf16.mxu0 %v6925
    %7571 = vmatpush1.bf16.msra.mxu0 %v6924
    %7572 = vmatprep.subr.bf16.mxu0 %v6929
    %7573 = vmatpush1.bf16.msra.mxu0 %v6928
    %7574 = vmatprep.mubr.bf16.mxu0 %v5813
    %7575 = vmatmul.mubr.bf16.gmra.mrb[0].mxu0 %v5812
    %v7576 = vpop.f32.mrb[0].mxu0
    %v7577 = vadd.f32 %v6089, %v7576
    %v7578 = vpop.f32.mrb[0].mxu0
    %v7579 = vadd.f32 %v6093, %v7578
    %v7580 = vpop.f32.mrb[0].mxu0
    %v7581 = vpop.f32.mrb[0].mxu0
    %7582 = vdwg.mxu0
    %7583 = vmatprep.subr.bf16.mxu0 %v6933
    %7584 = vmatpush1.bf16.msra.mxu0 %v6932
    %7585 = vmatprep.subr.bf16.mxu0 %v6937
    %7586 = vmatpush1.bf16.msra.mxu0 %v6936
    %7587 = vmatprep.subr.bf16.mxu0 %v6941
    %7588 = vmatpush1.bf16.msra.mxu0 %v6940
    %7589 = vmatprep.subr.bf16.mxu0 %v6945
    %7590 = vmatpush1.bf16.msra.mxu0 %v6944
    %7591 = vmatprep.subr.bf16.mxu0 %v6949
    %7592 = vmatpush1.bf16.msra.mxu0 %v6948
    %7593 = vmatprep.subr.bf16.mxu0 %v6953
    %7594 = vmatpush1.bf16.msra.mxu0 %v6952
    %7595 = vmatprep.subr.bf16.mxu0 %v6957
    %7596 = vmatpush1.bf16.msra.mxu0 %v6956
    %7597 = vmatprep.subr.bf16.mxu0 %v6961
    %7598 = vmatpush1.bf16.msra.mxu0 %v6960
    %7599 = vmatprep.subr.bf16.mxu0 %v6965
    %7600 = vmatpush1.bf16.msra.mxu0 %v6964
    %7601 = vmatprep.subr.bf16.mxu0 %v6969
    %7602 = vmatpush1.bf16.msra.mxu0 %v6968
    %7603 = vmatprep.subr.bf16.mxu0 %v6973
    %7604 = vmatpush1.bf16.msra.mxu0 %v6972
    %7605 = vmatprep.subr.bf16.mxu0 %v6977
    %7606 = vmatpush1.bf16.msra.mxu0 %v6976
    %7607 = vmatprep.subr.bf16.mxu0 %v6981
    %7608 = vmatpush1.bf16.msra.mxu0 %v6980
    %7609 = vmatprep.subr.bf16.mxu0 %v6985
    %7610 = vmatpush1.bf16.msra.mxu0 %v6984
    %7611 = vmatprep.subr.bf16.mxu0 %v6989
    %7612 = vmatpush1.bf16.msra.mxu0 %v6988
    %7613 = vmatprep.subr.bf16.mxu0 %v6993
    %7614 = vmatpush1.bf16.msra.mxu0 %v6992
    %7615 = vmatprep.mubr.bf16.mxu0 %v5815
    %7616 = vmatmul.mubr.bf16.gmra.mrb[0].mxu0 %v5814
    %v7617 = vpop.f32.mrb[0].mxu0
    %v7618 = vadd.f32 %v7577, %v7617
    %v7619 = vpop.f32.mrb[0].mxu0
    %v7620 = vadd.f32 %v7579, %v7619
    %v7621 = vpop.f32.mrb[0].mxu0
    %v7622 = vpop.f32.mrb[0].mxu0
    %7623 = vdwg.mxu0
    %7624 = vmatprep.subr.bf16.mxu0 %v6997
    %7625 = vmatpush1.bf16.msra.mxu0 %v6996
    %7626 = vmatprep.subr.bf16.mxu0 %v7001
    %7627 = vmatpush1.bf16.msra.mxu0 %v7000
    %7628 = vmatprep.subr.bf16.mxu0 %v7005
    %7629 = vmatpush1.bf16.msra.mxu0 %v7004
    %7630 = vmatprep.subr.bf16.mxu0 %v7009
    %7631 = vmatpush1.bf16.msra.mxu0 %v7008
    %7632 = vmatprep.subr.bf16.mxu0 %v7013
    %7633 = vmatpush1.bf16.msra.mxu0 %v7012
    %7634 = vmatprep.subr.bf16.mxu0 %v7017
    %7635 = vmatpush1.bf16.msra.mxu0 %v7016
    %7636 = vmatprep.subr.bf16.mxu0 %v7021
    %7637 = vmatpush1.bf16.msra.mxu0 %v7020
    %7638 = vmatprep.subr.bf16.mxu0 %v7025
    %7639 = vmatpush1.bf16.msra.mxu0 %v7024
    %7640 = vmatprep.subr.bf16.mxu0 %v7029
    %7641 = vmatpush1.bf16.msra.mxu0 %v7028
    %7642 = vmatprep.subr.bf16.mxu0 %v7033
    %7643 = vmatpush1.bf16.msra.mxu0 %v7032
    %7644 = vmatprep.subr.bf16.mxu0 %v7037
    %7645 = vmatpush1.bf16.msra.mxu0 %v7036
    %7646 = vmatprep.subr.bf16.mxu0 %v7041
    %7647 = vmatpush1.bf16.msra.mxu0 %v7040
    %7648 = vmatprep.subr.bf16.mxu0 %v7045
    %7649 = vmatpush1.bf16.msra.mxu0 %v7044
    %7650 = vmatprep.subr.bf16.mxu0 %v7049
    %7651 = vmatpush1.bf16.msra.mxu0 %v7048
    %7652 = vmatprep.subr.bf16.mxu0 %v7053
    %7653 = vmatpush1.bf16.msra.mxu0 %v7052
    %7654 = vmatprep.subr.bf16.mxu0 %v7057
    %7655 = vmatpush1.bf16.msra.mxu0 %v7056
    %7656 = vmatprep.mubr.bf16.mxu0 %v5817
    %7657 = vmatmul.mubr.bf16.gmra.mrb[0].mxu0 %v5816
    %v7658 = vpop.f32.mrb[0].mxu0
    %v7659 = vadd.f32 %v7618, %v7658
    %v7660 = vpop.f32.mrb[0].mxu0
    %v7661 = vadd.f32 %v7620, %v7660
    %v7662 = vpop.f32.mrb[0].mxu0
    %v7663 = vpop.f32.mrb[0].mxu0
    %7664 = vdwg.mxu0
    %7665 = vmatprep.subr.bf16.mxu0 %v7061
    %7666 = vmatpush1.bf16.msra.mxu0 %v7060
    %7667 = vmatprep.subr.bf16.mxu0 %v7065
    %7668 = vmatpush1.bf16.msra.mxu0 %v7064
    %7669 = vmatprep.subr.bf16.mxu0 %v7069
    %7670 = vmatpush1.bf16.msra.mxu0 %v7068
    %7671 = vmatprep.subr.bf16.mxu0 %v7073
    %7672 = vmatpush1.bf16.msra.mxu0 %v7072
    %7673 = vmatprep.subr.bf16.mxu0 %v7077
    %7674 = vmatpush1.bf16.msra.mxu0 %v7076
    %7675 = vmatprep.subr.bf16.mxu0 %v7081
    %7676 = vmatpush1.bf16.msra.mxu0 %v7080
    %7677 = vmatprep.subr.bf16.mxu0 %v7085
    %7678 = vmatpush1.bf16.msra.mxu0 %v7084
    %7679 = vmatprep.subr.bf16.mxu0 %v7089
    %7680 = vmatpush1.bf16.msra.mxu0 %v7088
    %7681 = vmatprep.subr.bf16.mxu0 %v7093
    %7682 = vmatpush1.bf16.msra.mxu0 %v7092
    %7683 = vmatprep.subr.bf16.mxu0 %v7097
    %7684 = vmatpush1.bf16.msra.mxu0 %v7096
    %7685 = vmatprep.subr.bf16.mxu0 %v7101
    %7686 = vmatpush1.bf16.msra.mxu0 %v7100
    %7687 = vmatprep.subr.bf16.mxu0 %v7105
    %7688 = vmatpush1.bf16.msra.mxu0 %v7104
    %7689 = vmatprep.subr.bf16.mxu0 %v7109
    %7690 = vmatpush1.bf16.msra.mxu0 %v7108
    %7691 = vmatprep.subr.bf16.mxu0 %v7113
    %7692 = vmatpush1.bf16.msra.mxu0 %v7112
    %7693 = vmatprep.subr.bf16.mxu0 %v7117
    %7694 = vmatpush1.bf16.msra.mxu0 %v7116
    %7695 = vmatprep.subr.bf16.mxu0 %v7121
    %7696 = vmatpush1.bf16.msra.mxu0 %v7120
    %7697 = vmatprep.mubr.bf16.mxu0 %v5819
    %7698 = vmatmul.mubr.bf16.gmra.mrb[0].mxu0 %v5818
    %v7699 = vpop.f32.mrb[0].mxu0
    %v7700 = vadd.f32 %v7659, %v7699
    %v7701 = vpop.f32.mrb[0].mxu0
    %v7702 = vadd.f32 %v7661, %v7701
    %v7703 = vpop.f32.mrb[0].mxu0
    %v7704 = vpop.f32.mrb[0].mxu0
    %7705 = vdwg.mxu0
    %v7706 = vmax.f32 %v7536, 0.0
    %v7707 = vmax.f32 %v7538, 0.0
    %v7708 = vmax.f32 %v7700, 0.0
    %v7709 = vmax.f32 %v7702, 0.0
    %v7710 = vpack.c.bf16 %v7706, %v7706
    %v7711 = vpack.c.bf16 %v7707, %v7707
    %v7712 = vpack.c.bf16 %v7708, %v7708
    %v7713 = vpack.c.bf16 %v7709, %v7709
    %v7714 = vld [vmem:[#allocation11] sm:$0xff]
    %v7715 = vld [vmem:[#allocation11 + $0x8] sm:$0xff]
    %v7716 = vld [vmem:[#allocation11 + $0x10] sm:$0xf]
    %v7717 = vld [vmem:[#allocation11 + $0x14] sm:$0xff]
    %v7718 = vld [vmem:[#allocation11 + $0x1c] sm:$0xff]
    %v7719 = vld [vmem:[#allocation11 + $0x24] sm:$0xf]
    %v7720 = vld [vmem:[#allocation11 + $0x28] sm:$0xff]
    %v7721 = vld [vmem:[#allocation11 + $0x30] sm:$0xff]
    %v7722 = vld [vmem:[#allocation11 + $0x38] sm:$0xf]
    %v7723 = vld [vmem:[#allocation11 + $0x3c] sm:$0xff]
    %v7724 = vld [vmem:[#allocation11 + $0x44] sm:$0xff]
    %v7725 = vld [vmem:[#allocation11 + $0x4c] sm:$0xf]
    %v7726 = vld [vmem:[#allocation11 + $0x50] sm:$0xff]
    %v7727 = vld [vmem:[#allocation11 + $0x58] sm:$0xff]
    %v7728 = vld [vmem:[#allocation11 + $0x60] sm:$0xf]
    %v7729 = vld [vmem:[#allocation11 + $0x64] sm:$0xff]
    %v7730 = vld [vmem:[#allocation11 + $0x6c] sm:$0xff]
    %v7731 = vld [vmem:[#allocation11 + $0x74] sm:$0xf]
    %v7732 = vld [vmem:[#allocation11 + $0x78] sm:$0xff]
    %v7733 = vld [vmem:[#allocation11 + $0x80] sm:$0xff]
    %v7734 = vld [vmem:[#allocation11 + $0x88] sm:$0xf]
    %v7735 = vld [vmem:[#allocation11 + $0x8c] sm:$0xff]
    %v7736 = vld [vmem:[#allocation11 + $0x94] sm:$0xff]
    %v7737 = vld [vmem:[#allocation11 + $0x9c] sm:$0xf]
    %v7738 = vld [vmem:[#allocation11 + $0xa0] sm:$0xff]
    %v7739 = vld [vmem:[#allocation11 + $0xa8] sm:$0xff]
    %v7740 = vld [vmem:[#allocation11 + $0xb0] sm:$0xf]
    %v7741 = vld [vmem:[#allocation11 + $0xb4] sm:$0xff]
    %v7742 = vld [vmem:[#allocation11 + $0xbc] sm:$0xff]
    %v7743 = vld [vmem:[#allocation11 + $0xc4] sm:$0xf]
    %v7744 = vld [vmem:[#allocation11 + $0xc8] sm:$0xff]
    %v7745 = vld [vmem:[#allocation11 + $0xd0] sm:$0xff]
    %v7746 = vld [vmem:[#allocation11 + $0xd8] sm:$0xf]
    %v7747 = vld [vmem:[#allocation11 + $0xdc] sm:$0xff]
    %v7748 = vld [vmem:[#allocation11 + $0xe4] sm:$0xff]
    %v7749 = vld [vmem:[#allocation11 + $0xec] sm:$0xf]
    %v7750 = vld [vmem:[#allocation11 + $0xf0] sm:$0xff]
    %v7751 = vld [vmem:[#allocation11 + $0xf8] sm:$0xff]
    %v7752 = vld [vmem:[#allocation11 + $0x100] sm:$0xf]
    %v7753 = vld [vmem:[#allocation11 + $0x104] sm:$0xff]
    %v7754 = vld [vmem:[#allocation11 + $0x10c] sm:$0xff]
    %v7755 = vld [vmem:[#allocation11 + $0x114] sm:$0xf]
    %v7756 = vld [vmem:[#allocation11 + $0x118] sm:$0xff]
    %v7757 = vld [vmem:[#allocation11 + $0x120] sm:$0xff]
    %v7758 = vld [vmem:[#allocation11 + $0x128] sm:$0xf]
    %v7759 = vld [vmem:[#allocation11 + $0x12c] sm:$0xff]
    %v7760 = vld [vmem:[#allocation11 + $0x134] sm:$0xff]
    %v7761 = vld [vmem:[#allocation11 + $0x13c] sm:$0xf]
    %v7762 = vld [vmem:[#allocation11 + $0x140] sm:$0xff]
    %v7763 = vld [vmem:[#allocation11 + $0x148] sm:$0xff]
    %v7764 = vld [vmem:[#allocation11 + $0x150] sm:$0xf]
    %v7765 = vld [vmem:[#allocation11 + $0x154] sm:$0xff]
    %v7766 = vld [vmem:[#allocation11 + $0x15c] sm:$0xff]
    %v7767 = vld [vmem:[#allocation11 + $0x164] sm:$0xf]
    %v7768 = vld [vmem:[#allocation11 + $0x168] sm:$0xff]
    %v7769 = vld [vmem:[#allocation11 + $0x170] sm:$0xff]
    %v7770 = vld [vmem:[#allocation11 + $0x178] sm:$0xf]
    %v7771 = vld [vmem:[#allocation11 + $0x17c] sm:$0xff]
    %v7772 = vld [vmem:[#allocation11 + $0x184] sm:$0xff]
    %v7773 = vld [vmem:[#allocation11 + $0x18c] sm:$0xf]
    %v7774 = vld [vmem:[#allocation11 + $0x190] sm:$0xff]
    %v7775 = vld [vmem:[#allocation11 + $0x198] sm:$0xff]
    %v7776 = vld [vmem:[#allocation11 + $0x1a0] sm:$0xf]
    %v7777 = vld [vmem:[#allocation11 + $0x1a4] sm:$0xff]
    %v7778 = vld [vmem:[#allocation11 + $0x1ac] sm:$0xff]
    %v7779 = vld [vmem:[#allocation11 + $0x1b4] sm:$0xf]
    %v7780 = vld [vmem:[#allocation11 + $0x1b8] sm:$0xff]
    %v7781 = vld [vmem:[#allocation11 + $0x1c0] sm:$0xff]
    %v7782 = vld [vmem:[#allocation11 + $0x1c8] sm:$0xf]
    %v7783 = vld [vmem:[#allocation11 + $0x1cc] sm:$0xff]
    %v7784 = vld [vmem:[#allocation11 + $0x1d4] sm:$0xff]
    %v7785 = vld [vmem:[#allocation11 + $0x1dc] sm:$0xf]
    %v7786 = vld [vmem:[#allocation11 + $0x1e0] sm:$0xff]
    %v7787 = vld [vmem:[#allocation11 + $0x1e8] sm:$0xff]
    %v7788 = vld [vmem:[#allocation11 + $0x1f0] sm:$0xf]
    %v7789 = vld [vmem:[#allocation11 + $0x1f4] sm:$0xff]
    %v7790 = vld [vmem:[#allocation11 + $0x1fc] sm:$0xff]
    %v7791 = vld [vmem:[#allocation11 + $0x204] sm:$0xf]
    %v7792 = vld [vmem:[#allocation11 + $0x208] sm:$0xff]
    %v7793 = vld [vmem:[#allocation11 + $0x210] sm:$0xff]
    %v7794 = vld [vmem:[#allocation11 + $0x218] sm:$0xf]
    %v7795 = vld [vmem:[#allocation11 + $0x21c] sm:$0xff]
    %v7796 = vld [vmem:[#allocation11 + $0x224] sm:$0xff]
    %v7797 = vld [vmem:[#allocation11 + $0x22c] sm:$0xf]
    %v7798 = vld [vmem:[#allocation11 + $0x230] sm:$0xff]
    %v7799 = vld [vmem:[#allocation11 + $0x238] sm:$0xff]
    %v7800 = vld [vmem:[#allocation11 + $0x240] sm:$0xf]
    %v7801 = vld [vmem:[#allocation11 + $0x244] sm:$0xff]
    %v7802 = vld [vmem:[#allocation11 + $0x24c] sm:$0xff]
    %v7803 = vld [vmem:[#allocation11 + $0x254] sm:$0xf]
    %v7804 = vld [vmem:[#allocation11 + $0x258] sm:$0xff]
    %v7805 = vld [vmem:[#allocation11 + $0x260] sm:$0xff]
    %v7806 = vld [vmem:[#allocation11 + $0x268] sm:$0xf]
    %v7807 = vld [vmem:[#allocation11 + $0x26c] sm:$0xff]
    %v7808 = vld [vmem:[#allocation11 + $0x274] sm:$0xff]
    %v7809 = vld [vmem:[#allocation11 + $0x27c] sm:$0xf]
    %v7810 = vld [vmem:[#allocation11 + $0x280] sm:$0xff]
    %v7811 = vld [vmem:[#allocation11 + $0x288] sm:$0xff]
    %v7812 = vld [vmem:[#allocation11 + $0x290] sm:$0xf]
    %v7813 = vld [vmem:[#allocation11 + $0x294] sm:$0xff]
    %v7814 = vld [vmem:[#allocation11 + $0x29c] sm:$0xff]
    %v7815 = vld [vmem:[#allocation11 + $0x2a4] sm:$0xf]
    %v7816 = vld [vmem:[#allocation11 + $0x2a8] sm:$0xff]
    %v7817 = vld [vmem:[#allocation11 + $0x2b0] sm:$0xff]
    %v7818 = vld [vmem:[#allocation11 + $0x2b8] sm:$0xf]
    %v7819 = vld [vmem:[#allocation11 + $0x2bc] sm:$0xff]
    %v7820 = vld [vmem:[#allocation11 + $0x2c4] sm:$0xff]
    %v7821 = vld [vmem:[#allocation11 + $0x2cc] sm:$0xf]
    %v7822 = vld [vmem:[#allocation11 + $0x2d0] sm:$0xff]
    %v7823 = vld [vmem:[#allocation11 + $0x2d8] sm:$0xff]
    %v7824 = vld [vmem:[#allocation11 + $0x2e0] sm:$0xf]
    %v7825 = vld [vmem:[#allocation11 + $0x2e4] sm:$0xff]
    %v7826 = vld [vmem:[#allocation11 + $0x2ec] sm:$0xff]
    %v7827 = vld [vmem:[#allocation11 + $0x2f4] sm:$0xf]
    %v7828 = vld [vmem:[#allocation11 + $0x2f8] sm:$0xff]
    %v7829 = vld [vmem:[#allocation11 + $0x300] sm:$0xff]
    %v7830 = vld [vmem:[#allocation11 + $0x308] sm:$0xf]
    %v7831 = vld [vmem:[#allocation11 + $0x30c] sm:$0xff]
    %v7832 = vld [vmem:[#allocation11 + $0x314] sm:$0xff]
    %v7833 = vld [vmem:[#allocation11 + $0x31c] sm:$0xf]
    %v7834 = vld [vmem:[#allocation11 + $0x320] sm:$0xff]
    %v7835 = vld [vmem:[#allocation11 + $0x328] sm:$0xff]
    %v7836 = vld [vmem:[#allocation11 + $0x330] sm:$0xf]
    %v7837 = vld [vmem:[#allocation11 + $0x334] sm:$0xff]
    %v7838 = vld [vmem:[#allocation11 + $0x33c] sm:$0xff]
    %v7839 = vld [vmem:[#allocation11 + $0x344] sm:$0xf]
    %v7840 = vld [vmem:[#allocation11 + $0x348] sm:$0xff]
    %v7841 = vld [vmem:[#allocation11 + $0x350] sm:$0xff]
    %v7842 = vld [vmem:[#allocation11 + $0x358] sm:$0xf]
    %v7843 = vld [vmem:[#allocation11 + $0x35c] sm:$0xff]
    %v7844 = vld [vmem:[#allocation11 + $0x364] sm:$0xff]
    %v7845 = vld [vmem:[#allocation11 + $0x36c] sm:$0xf]
    %v7846 = vld [vmem:[#allocation11 + $0x370] sm:$0xff]
    %v7847 = vld [vmem:[#allocation11 + $0x378] sm:$0xff]
    %v7848 = vld [vmem:[#allocation11 + $0x380] sm:$0xf]
    %v7849 = vld [vmem:[#allocation11 + $0x384] sm:$0xff]
    %v7850 = vld [vmem:[#allocation11 + $0x38c] sm:$0xff]
    %v7851 = vld [vmem:[#allocation11 + $0x394] sm:$0xf]
    %v7852 = vld [vmem:[#allocation11 + $0x398] sm:$0xff]
    %v7853 = vld [vmem:[#allocation11 + $0x3a0] sm:$0xff]
    %v7854 = vld [vmem:[#allocation11 + $0x3a8] sm:$0xf]
    %v7855 = vld [vmem:[#allocation11 + $0x3ac] sm:$0xff]
    %v7856 = vld [vmem:[#allocation11 + $0x3b4] sm:$0xff]
    %v7857 = vld [vmem:[#allocation11 + $0x3bc] sm:$0xf]
    %v7858 = vld [vmem:[#allocation11 + $0x3c0] sm:$0xff]
    %v7859 = vld [vmem:[#allocation11 + $0x3c8] sm:$0xff]
    %v7860 = vld [vmem:[#allocation11 + $0x3d0] sm:$0xf]
    %v7861 = vld [vmem:[#allocation11 + $0x3d4] sm:$0xff]
    %v7862 = vld [vmem:[#allocation11 + $0x3dc] sm:$0xff]
    %v7863 = vld [vmem:[#allocation11 + $0x3e4] sm:$0xf]
    %v7864 = vld [vmem:[#allocation11 + $0x3e8] sm:$0xff]
    %v7865 = vld [vmem:[#allocation11 + $0x3f0] sm:$0xff]
    %v7866 = vld [vmem:[#allocation11 + $0x3f8] sm:$0xf]
    %v7867 = vld [vmem:[#allocation11 + $0x3fc] sm:$0xff]
    %v7868 = vld [vmem:[#allocation11 + $0x404] sm:$0xff]
    %v7869 = vld [vmem:[#allocation11 + $0x40c] sm:$0xf]
    %v7870 = vld [vmem:[#allocation11 + $0x410] sm:$0xff]
    %v7871 = vld [vmem:[#allocation11 + $0x418] sm:$0xff]
    %v7872 = vld [vmem:[#allocation11 + $0x420] sm:$0xf]
    %v7873 = vld [vmem:[#allocation11 + $0x424] sm:$0xff]
    %v7874 = vld [vmem:[#allocation11 + $0x42c] sm:$0xff]
    %v7875 = vld [vmem:[#allocation11 + $0x434] sm:$0xf]
    %v7876 = vld [vmem:[#allocation11 + $0x438] sm:$0xff]
    %v7877 = vld [vmem:[#allocation11 + $0x440] sm:$0xff]
    %v7878 = vld [vmem:[#allocation11 + $0x448] sm:$0xf]
    %v7879 = vld [vmem:[#allocation11 + $0x44c] sm:$0xff]
    %v7880 = vld [vmem:[#allocation11 + $0x454] sm:$0xff]
    %v7881 = vld [vmem:[#allocation11 + $0x45c] sm:$0xf]
    %v7882 = vld [vmem:[#allocation11 + $0x460] sm:$0xff]
    %v7883 = vld [vmem:[#allocation11 + $0x468] sm:$0xff]
    %v7884 = vld [vmem:[#allocation11 + $0x470] sm:$0xf]
    %v7885 = vld [vmem:[#allocation11 + $0x474] sm:$0xff]
    %v7886 = vld [vmem:[#allocation11 + $0x47c] sm:$0xff]
    %v7887 = vld [vmem:[#allocation11 + $0x484] sm:$0xf]
    %v7888 = vld [vmem:[#allocation11 + $0x488] sm:$0xff]
    %v7889 = vld [vmem:[#allocation11 + $0x490] sm:$0xff]
    %v7890 = vld [vmem:[#allocation11 + $0x498] sm:$0xf]
    %v7891 = vld [vmem:[#allocation11 + $0x49c] sm:$0xff]
    %v7892 = vld [vmem:[#allocation11 + $0x4a4] sm:$0xff]
    %v7893 = vld [vmem:[#allocation11 + $0x4ac] sm:$0xf]
    %v7894 = vld [vmem:[#allocation11 + $0x4b0] sm:$0xff]
    %v7895 = vld [vmem:[#allocation11 + $0x4b8] sm:$0xff]
    %v7896 = vld [vmem:[#allocation11 + $0x4c0] sm:$0xf]
    %v7897 = vld [vmem:[#allocation11 + $0x4c4] sm:$0xff]
    %v7898 = vld [vmem:[#allocation11 + $0x4cc] sm:$0xff]
    %v7899 = vld [vmem:[#allocation11 + $0x4d4] sm:$0xf]
    %v7900 = vld [vmem:[#allocation11 + $0x4d8] sm:$0xff]
    %v7901 = vld [vmem:[#allocation11 + $0x4e0] sm:$0xff]
    %v7902 = vld [vmem:[#allocation11 + $0x4e8] sm:$0xf]
    %v7903 = vld [vmem:[#allocation11 + $0x4ec] sm:$0xff]
    %v7904 = vld [vmem:[#allocation11 + $0x4f4] sm:$0xff]
    %v7905 = vld [vmem:[#allocation11 + $0x4fc] sm:$0xf]
    %v7906 = vld [vmem:[#allocation13] sm:$0x1f]
    %v7908 = vlaneseq
    %v7909 = vshrl.u32 %v7908, 7
    %v7910 = vsub.s32 0, %v7909
    %v7911 = vrot.slane %v7906, %v7910
    %v7912 = vlaneseq
    %v7913 = vshrl.u32 %v7912, 7
    %v7914 = vsub.s32 1, %v7913
    %v7915 = vrot.slane %v7906, %v7914
    %v7916 = vlaneseq
    %v7917 = vshrl.u32 %v7916, 7
    %v7918 = vsub.s32 2, %v7917
    %v7919 = vrot.slane %v7906, %v7918
    %v7920 = vlaneseq
    %v7921 = vshrl.u32 %v7920, 7
    %v7922 = vsub.s32 3, %v7921
    %v7923 = vrot.slane %v7906, %v7922
    %v7924 = vlaneseq
    %v7925 = vshrl.u32 %v7924, 7
    %v7926 = vsub.s32 4, %v7925
    %v7927 = vrot.slane %v7906, %v7926
    %v8125 = vunpack.c.l.b16 %v7714
    %v8126 = vunpack.c.h.b16 %v7714
    %v8127 = vunpack.c.l.b16 %v7715
    %v8128 = vunpack.c.h.b16 %v7715
    %v8129 = vunpack.c.l.b16 %v7716
    %v8130 = vunpack.c.l.b16 %v7717
    %v8131 = vunpack.c.h.b16 %v7717
    %v8132 = vunpack.c.l.b16 %v7718
    %v8133 = vunpack.c.h.b16 %v7718
    %v8134 = vunpack.c.l.b16 %v7719
    %v8135 = vunpack.c.l.b16 %v7720
    %v8136 = vunpack.c.h.b16 %v7720
    %v8137 = vunpack.c.l.b16 %v7721
    %v8138 = vunpack.c.h.b16 %v7721
    %v8139 = vunpack.c.l.b16 %v7722
    %v8140 = vunpack.c.l.b16 %v7723
    %v8141 = vunpack.c.h.b16 %v7723
    %v8142 = vunpack.c.l.b16 %v7724
    %v8143 = vunpack.c.h.b16 %v7724
    %v8144 = vunpack.c.l.b16 %v7725
    %v8145 = vunpack.c.l.b16 %v7726
    %v8146 = vunpack.c.h.b16 %v7726
    %v8147 = vunpack.c.l.b16 %v7727
    %v8148 = vunpack.c.h.b16 %v7727
    %v8149 = vunpack.c.l.b16 %v7728
    %v8150 = vunpack.c.l.b16 %v7729
    %v8151 = vunpack.c.h.b16 %v7729
    %v8152 = vunpack.c.l.b16 %v7730
    %v8153 = vunpack.c.h.b16 %v7730
    %v8154 = vunpack.c.l.b16 %v7731
    %v8155 = vunpack.c.l.b16 %v7732
    %v8156 = vunpack.c.h.b16 %v7732
    %v8157 = vunpack.c.l.b16 %v7733
    %v8158 = vunpack.c.h.b16 %v7733
    %v8159 = vunpack.c.l.b16 %v7734
    %v8160 = vunpack.c.l.b16 %v7735
    %v8161 = vunpack.c.h.b16 %v7735
    %v8162 = vunpack.c.l.b16 %v7736
    %v8163 = vunpack.c.h.b16 %v7736
    %v8164 = vunpack.c.l.b16 %v7737
    %v8165 = vunpack.c.l.b16 %v7738
    %v8166 = vunpack.c.h.b16 %v7738
    %v8167 = vunpack.c.l.b16 %v7739
    %v8168 = vunpack.c.h.b16 %v7739
    %v8169 = vunpack.c.l.b16 %v7740
    %v8170 = vunpack.c.l.b16 %v7741
    %v8171 = vunpack.c.h.b16 %v7741
    %v8172 = vunpack.c.l.b16 %v7742
    %v8173 = vunpack.c.h.b16 %v7742
    %v8174 = vunpack.c.l.b16 %v7743
    %v8175 = vunpack.c.l.b16 %v7744
    %v8176 = vunpack.c.h.b16 %v7744
    %v8177 = vunpack.c.l.b16 %v7745
    %v8178 = vunpack.c.h.b16 %v7745
    %v8179 = vunpack.c.l.b16 %v7746
    %v8180 = vunpack.c.l.b16 %v7747
    %v8181 = vunpack.c.h.b16 %v7747
    %v8182 = vunpack.c.l.b16 %v7748
    %v8183 = vunpack.c.h.b16 %v7748
    %v8184 = vunpack.c.l.b16 %v7749
    %v8185 = vunpack.c.l.b16 %v7750
    %v8186 = vunpack.c.h.b16 %v7750
    %v8187 = vunpack.c.l.b16 %v7751
    %v8188 = vunpack.c.h.b16 %v7751
    %v8189 = vunpack.c.l.b16 %v7752
    %v8190 = vunpack.c.l.b16 %v7753
    %v8191 = vunpack.c.h.b16 %v7753
    %v8192 = vunpack.c.l.b16 %v7754
    %v8193 = vunpack.c.h.b16 %v7754
    %v8194 = vunpack.c.l.b16 %v7755
    %v8195 = vunpack.c.l.b16 %v7756
    %v8196 = vunpack.c.h.b16 %v7756
    %v8197 = vunpack.c.l.b16 %v7757
    %v8198 = vunpack.c.h.b16 %v7757
    %v8199 = vunpack.c.l.b16 %v7758
    %v8200 = vunpack.c.l.b16 %v7759
    %v8201 = vunpack.c.h.b16 %v7759
    %v8202 = vunpack.c.l.b16 %v7760
    %v8203 = vunpack.c.h.b16 %v7760
    %v8204 = vunpack.c.l.b16 %v7761
    %v8205 = vunpack.c.l.b16 %v7762
    %v8206 = vunpack.c.h.b16 %v7762
    %v8207 = vunpack.c.l.b16 %v7763
    %v8208 = vunpack.c.h.b16 %v7763
    %v8209 = vunpack.c.l.b16 %v7764
    %v8210 = vunpack.c.l.b16 %v7765
    %v8211 = vunpack.c.h.b16 %v7765
    %v8212 = vunpack.c.l.b16 %v7766
    %v8213 = vunpack.c.h.b16 %v7766
    %v8214 = vunpack.c.l.b16 %v7767
    %v8215 = vunpack.c.l.b16 %v7768
    %v8216 = vunpack.c.h.b16 %v7768
    %v8217 = vunpack.c.l.b16 %v7769
    %v8218 = vunpack.c.h.b16 %v7769
    %v8219 = vunpack.c.l.b16 %v7770
    %v8220 = vunpack.c.l.b16 %v7771
    %v8221 = vunpack.c.h.b16 %v7771
    %v8222 = vunpack.c.l.b16 %v7772
    %v8223 = vunpack.c.h.b16 %v7772
    %v8224 = vunpack.c.l.b16 %v7773
    %v8225 = vunpack.c.l.b16 %v7774
    %v8226 = vunpack.c.h.b16 %v7774
    %v8227 = vunpack.c.l.b16 %v7775
    %v8228 = vunpack.c.h.b16 %v7775
    %v8229 = vunpack.c.l.b16 %v7776
    %v8230 = vunpack.c.l.b16 %v7777
    %v8231 = vunpack.c.h.b16 %v7777
    %v8232 = vunpack.c.l.b16 %v7778
    %v8233 = vunpack.c.h.b16 %v7778
    %v8234 = vunpack.c.l.b16 %v7779
    %v8235 = vunpack.c.l.b16 %v7780
    %v8236 = vunpack.c.h.b16 %v7780
    %v8237 = vunpack.c.l.b16 %v7781
    %v8238 = vunpack.c.h.b16 %v7781
    %v8239 = vunpack.c.l.b16 %v7782
    %v8240 = vunpack.c.l.b16 %v7783
    %v8241 = vunpack.c.h.b16 %v7783
    %v8242 = vunpack.c.l.b16 %v7784
    %v8243 = vunpack.c.h.b16 %v7784
    %v8244 = vunpack.c.l.b16 %v7785
    %v8245 = vunpack.c.l.b16 %v7786
    %v8246 = vunpack.c.h.b16 %v7786
    %v8247 = vunpack.c.l.b16 %v7787
    %v8248 = vunpack.c.h.b16 %v7787
    %v8249 = vunpack.c.l.b16 %v7788
    %v8250 = vunpack.c.l.b16 %v7789
    %v8251 = vunpack.c.h.b16 %v7789
    %v8252 = vunpack.c.l.b16 %v7790
    %v8253 = vunpack.c.h.b16 %v7790
    %v8254 = vunpack.c.l.b16 %v7791
    %v8255 = vunpack.c.l.b16 %v7792
    %v8256 = vunpack.c.h.b16 %v7792
    %v8257 = vunpack.c.l.b16 %v7793
    %v8258 = vunpack.c.h.b16 %v7793
    %v8259 = vunpack.c.l.b16 %v7794
    %v8260 = vunpack.c.l.b16 %v7795
    %v8261 = vunpack.c.h.b16 %v7795
    %v8262 = vunpack.c.l.b16 %v7796
    %v8263 = vunpack.c.h.b16 %v7796
    %v8264 = vunpack.c.l.b16 %v7797
    %v8265 = vunpack.c.l.b16 %v7798
    %v8266 = vunpack.c.h.b16 %v7798
    %v8267 = vunpack.c.l.b16 %v7799
    %v8268 = vunpack.c.h.b16 %v7799
    %v8269 = vunpack.c.l.b16 %v7800
    %v8270 = vunpack.c.l.b16 %v7801
    %v8271 = vunpack.c.h.b16 %v7801
    %v8272 = vunpack.c.l.b16 %v7802
    %v8273 = vunpack.c.h.b16 %v7802
    %v8274 = vunpack.c.l.b16 %v7803
    %v8275 = vunpack.c.l.b16 %v7804
    %v8276 = vunpack.c.h.b16 %v7804
    %v8277 = vunpack.c.l.b16 %v7805
    %v8278 = vunpack.c.h.b16 %v7805
    %v8279 = vunpack.c.l.b16 %v7806
    %v8280 = vunpack.c.l.b16 %v7807
    %v8281 = vunpack.c.h.b16 %v7807
    %v8282 = vunpack.c.l.b16 %v7808
    %v8283 = vunpack.c.h.b16 %v7808
    %v8284 = vunpack.c.l.b16 %v7809
    %v8285 = vunpack.c.l.b16 %v7810
    %v8286 = vunpack.c.h.b16 %v7810
    %v8287 = vunpack.c.l.b16 %v7811
    %v8288 = vunpack.c.h.b16 %v7811
    %v8289 = vunpack.c.l.b16 %v7812
    %v8290 = vunpack.c.l.b16 %v7813
    %v8291 = vunpack.c.h.b16 %v7813
    %v8292 = vunpack.c.l.b16 %v7814
    %v8293 = vunpack.c.h.b16 %v7814
    %v8294 = vunpack.c.l.b16 %v7815
    %v8295 = vunpack.c.l.b16 %v7816
    %v8296 = vunpack.c.h.b16 %v7816
    %v8297 = vunpack.c.l.b16 %v7817
    %v8298 = vunpack.c.h.b16 %v7817
    %v8299 = vunpack.c.l.b16 %v7818
    %v8300 = vunpack.c.l.b16 %v7819
    %v8301 = vunpack.c.h.b16 %v7819
    %v8302 = vunpack.c.l.b16 %v7820
    %v8303 = vunpack.c.h.b16 %v7820
    %v8304 = vunpack.c.l.b16 %v7821
    %v8305 = vunpack.c.l.b16 %v7822
    %v8306 = vunpack.c.h.b16 %v7822
    %v8307 = vunpack.c.l.b16 %v7823
    %v8308 = vunpack.c.h.b16 %v7823
    %v8309 = vunpack.c.l.b16 %v7824
    %v8310 = vunpack.c.l.b16 %v7825
    %v8311 = vunpack.c.h.b16 %v7825
    %v8312 = vunpack.c.l.b16 %v7826
    %v8313 = vunpack.c.h.b16 %v7826
    %v8314 = vunpack.c.l.b16 %v7827
    %v8315 = vunpack.c.l.b16 %v7828
    %v8316 = vunpack.c.h.b16 %v7828
    %v8317 = vunpack.c.l.b16 %v7829
    %v8318 = vunpack.c.h.b16 %v7829
    %v8319 = vunpack.c.l.b16 %v7830
    %v8320 = vunpack.c.l.b16 %v7831
    %v8321 = vunpack.c.h.b16 %v7831
    %v8322 = vunpack.c.l.b16 %v7832
    %v8323 = vunpack.c.h.b16 %v7832
    %v8324 = vunpack.c.l.b16 %v7833
    %v8325 = vunpack.c.l.b16 %v7834
    %v8326 = vunpack.c.h.b16 %v7834
    %v8327 = vunpack.c.l.b16 %v7835
    %v8328 = vunpack.c.h.b16 %v7835
    %v8329 = vunpack.c.l.b16 %v7836
    %v8330 = vunpack.c.l.b16 %v7837
    %v8331 = vunpack.c.h.b16 %v7837
    %v8332 = vunpack.c.l.b16 %v7838
    %v8333 = vunpack.c.h.b16 %v7838
    %v8334 = vunpack.c.l.b16 %v7839
    %v8335 = vunpack.c.l.b16 %v7840
    %v8336 = vunpack.c.h.b16 %v7840
    %v8337 = vunpack.c.l.b16 %v7841
    %v8338 = vunpack.c.h.b16 %v7841
    %v8339 = vunpack.c.l.b16 %v7842
    %v8340 = vunpack.c.l.b16 %v7843
    %v8341 = vunpack.c.h.b16 %v7843
    %v8342 = vunpack.c.l.b16 %v7844
    %v8343 = vunpack.c.h.b16 %v7844
    %v8344 = vunpack.c.l.b16 %v7845
    %v8345 = vunpack.c.l.b16 %v7846
    %v8346 = vunpack.c.h.b16 %v7846
    %v8347 = vunpack.c.l.b16 %v7847
    %v8348 = vunpack.c.h.b16 %v7847
    %v8349 = vunpack.c.l.b16 %v7848
    %v8350 = vunpack.c.l.b16 %v7849
    %v8351 = vunpack.c.h.b16 %v7849
    %v8352 = vunpack.c.l.b16 %v7850
    %v8353 = vunpack.c.h.b16 %v7850
    %v8354 = vunpack.c.l.b16 %v7851
    %v8355 = vunpack.c.l.b16 %v7852
    %v8356 = vunpack.c.h.b16 %v7852
    %v8357 = vunpack.c.l.b16 %v7853
    %v8358 = vunpack.c.h.b16 %v7853
    %v8359 = vunpack.c.l.b16 %v7854
    %v8360 = vunpack.c.l.b16 %v7855
    %v8361 = vunpack.c.h.b16 %v7855
    %v8362 = vunpack.c.l.b16 %v7856
    %v8363 = vunpack.c.h.b16 %v7856
    %v8364 = vunpack.c.l.b16 %v7857
    %v8365 = vunpack.c.l.b16 %v7858
    %v8366 = vunpack.c.h.b16 %v7858
    %v8367 = vunpack.c.l.b16 %v7859
    %v8368 = vunpack.c.h.b16 %v7859
    %v8369 = vunpack.c.l.b16 %v7860
    %v8370 = vunpack.c.l.b16 %v7861
    %v8371 = vunpack.c.h.b16 %v7861
    %v8372 = vunpack.c.l.b16 %v7862
    %v8373 = vunpack.c.h.b16 %v7862
    %v8374 = vunpack.c.l.b16 %v7863
    %v8375 = vunpack.c.l.b16 %v7864
    %v8376 = vunpack.c.h.b16 %v7864
    %v8377 = vunpack.c.l.b16 %v7865
    %v8378 = vunpack.c.h.b16 %v7865
    %v8379 = vunpack.c.l.b16 %v7866
    %v8380 = vunpack.c.l.b16 %v7867
    %v8381 = vunpack.c.h.b16 %v7867
    %v8382 = vunpack.c.l.b16 %v7868
    %v8383 = vunpack.c.h.b16 %v7868
    %v8384 = vunpack.c.l.b16 %v7869
    %v8385 = vunpack.c.l.b16 %v7870
    %v8386 = vunpack.c.h.b16 %v7870
    %v8387 = vunpack.c.l.b16 %v7871
    %v8388 = vunpack.c.h.b16 %v7871
    %v8389 = vunpack.c.l.b16 %v7872
    %v8390 = vunpack.c.l.b16 %v7873
    %v8391 = vunpack.c.h.b16 %v7873
    %v8392 = vunpack.c.l.b16 %v7874
    %v8393 = vunpack.c.h.b16 %v7874
    %v8394 = vunpack.c.l.b16 %v7875
    %v8395 = vunpack.c.l.b16 %v7876
    %v8396 = vunpack.c.h.b16 %v7876
    %v8397 = vunpack.c.l.b16 %v7877
    %v8398 = vunpack.c.h.b16 %v7877
    %v8399 = vunpack.c.l.b16 %v7878
    %v8400 = vunpack.c.l.b16 %v7879
    %v8401 = vunpack.c.h.b16 %v7879
    %v8402 = vunpack.c.l.b16 %v7880
    %v8403 = vunpack.c.h.b16 %v7880
    %v8404 = vunpack.c.l.b16 %v7881
    %v8405 = vunpack.c.l.b16 %v7882
    %v8406 = vunpack.c.h.b16 %v7882
    %v8407 = vunpack.c.l.b16 %v7883
    %v8408 = vunpack.c.h.b16 %v7883
    %v8409 = vunpack.c.l.b16 %v7884
    %v8410 = vunpack.c.l.b16 %v7885
    %v8411 = vunpack.c.h.b16 %v7885
    %v8412 = vunpack.c.l.b16 %v7886
    %v8413 = vunpack.c.h.b16 %v7886
    %v8414 = vunpack.c.l.b16 %v7887
    %v8415 = vunpack.c.l.b16 %v7888
    %v8416 = vunpack.c.h.b16 %v7888
    %v8417 = vunpack.c.l.b16 %v7889
    %v8418 = vunpack.c.h.b16 %v7889
    %v8419 = vunpack.c.l.b16 %v7890
    %v8420 = vunpack.c.l.b16 %v7891
    %v8421 = vunpack.c.h.b16 %v7891
    %v8422 = vunpack.c.l.b16 %v7892
    %v8423 = vunpack.c.h.b16 %v7892
    %v8424 = vunpack.c.l.b16 %v7893
    %v8425 = vunpack.c.l.b16 %v7894
    %v8426 = vunpack.c.h.b16 %v7894
    %v8427 = vunpack.c.l.b16 %v7895
    %v8428 = vunpack.c.h.b16 %v7895
    %v8429 = vunpack.c.l.b16 %v7896
    %v8430 = vunpack.c.l.b16 %v7897
    %v8431 = vunpack.c.h.b16 %v7897
    %v8432 = vunpack.c.l.b16 %v7898
    %v8433 = vunpack.c.h.b16 %v7898
    %v8434 = vunpack.c.l.b16 %v7899
    %v8435 = vunpack.c.l.b16 %v7900
    %v8436 = vunpack.c.h.b16 %v7900
    %v8437 = vunpack.c.l.b16 %v7901
    %v8438 = vunpack.c.h.b16 %v7901
    %v8439 = vunpack.c.l.b16 %v7902
    %v8440 = vunpack.c.l.b16 %v7903
    %v8441 = vunpack.c.h.b16 %v7903
    %v8442 = vunpack.c.l.b16 %v7904
    %v8443 = vunpack.c.h.b16 %v7904
    %v8444 = vunpack.c.l.b16 %v7905
    %v8445 = vpack.c.b16 %v8130, %v8125
    %v8446 = vpack.c.b16 %v8131, %v8126
    %v8447 = vpack.c.b16 %v8132, %v8127
    %v8448 = vpack.c.b16 %v8133, %v8128
    %v8449 = vpack.c.b16 %v8134, %v8129
    %v8450 = vpack.c.b16 %v8140, %v8135
    %v8451 = vpack.c.b16 %v8141, %v8136
    %v8452 = vpack.c.b16 %v8142, %v8137
    %v8453 = vpack.c.b16 %v8143, %v8138
    %v8454 = vpack.c.b16 %v8144, %v8139
    %v8455 = vpack.c.b16 %v8150, %v8145
    %v8456 = vpack.c.b16 %v8151, %v8146
    %v8457 = vpack.c.b16 %v8152, %v8147
    %v8458 = vpack.c.b16 %v8153, %v8148
    %v8459 = vpack.c.b16 %v8154, %v8149
    %v8460 = vpack.c.b16 %v8160, %v8155
    %v8461 = vpack.c.b16 %v8161, %v8156
    %v8462 = vpack.c.b16 %v8162, %v8157
    %v8463 = vpack.c.b16 %v8163, %v8158
    %v8464 = vpack.c.b16 %v8164, %v8159
    %v8465 = vpack.c.b16 %v8170, %v8165
    %v8466 = vpack.c.b16 %v8171, %v8166
    %v8467 = vpack.c.b16 %v8172, %v8167
    %v8468 = vpack.c.b16 %v8173, %v8168
    %v8469 = vpack.c.b16 %v8174, %v8169
    %v8470 = vpack.c.b16 %v8180, %v8175
    %v8471 = vpack.c.b16 %v8181, %v8176
    %v8472 = vpack.c.b16 %v8182, %v8177
    %v8473 = vpack.c.b16 %v8183, %v8178
    %v8474 = vpack.c.b16 %v8184, %v8179
    %v8475 = vpack.c.b16 %v8190, %v8185
    %v8476 = vpack.c.b16 %v8191, %v8186
    %v8477 = vpack.c.b16 %v8192, %v8187
    %v8478 = vpack.c.b16 %v8193, %v8188
    %v8479 = vpack.c.b16 %v8194, %v8189
    %v8480 = vpack.c.b16 %v8200, %v8195
    %v8481 = vpack.c.b16 %v8201, %v8196
    %v8482 = vpack.c.b16 %v8202, %v8197
    %v8483 = vpack.c.b16 %v8203, %v8198
    %v8484 = vpack.c.b16 %v8204, %v8199
    %v8485 = vpack.c.b16 %v8210, %v8205
    %v8486 = vpack.c.b16 %v8211, %v8206
    %v8487 = vpack.c.b16 %v8212, %v8207
    %v8488 = vpack.c.b16 %v8213, %v8208
    %v8489 = vpack.c.b16 %v8214, %v8209
    %v8490 = vpack.c.b16 %v8220, %v8215
    %v8491 = vpack.c.b16 %v8221, %v8216
    %v8492 = vpack.c.b16 %v8222, %v8217
    %v8493 = vpack.c.b16 %v8223, %v8218
    %v8494 = vpack.c.b16 %v8224, %v8219
    %v8495 = vpack.c.b16 %v8230, %v8225
    %v8496 = vpack.c.b16 %v8231, %v8226
    %v8497 = vpack.c.b16 %v8232, %v8227
    %v8498 = vpack.c.b16 %v8233, %v8228
    %v8499 = vpack.c.b16 %v8234, %v8229
    %v8500 = vpack.c.b16 %v8240, %v8235
    %v8501 = vpack.c.b16 %v8241, %v8236
    %v8502 = vpack.c.b16 %v8242, %v8237
    %v8503 = vpack.c.b16 %v8243, %v8238
    %v8504 = vpack.c.b16 %v8244, %v8239
    %v8505 = vpack.c.b16 %v8250, %v8245
    %v8506 = vpack.c.b16 %v8251, %v8246
    %v8507 = vpack.c.b16 %v8252, %v8247
    %v8508 = vpack.c.b16 %v8253, %v8248
    %v8509 = vpack.c.b16 %v8254, %v8249
    %v8510 = vpack.c.b16 %v8260, %v8255
    %v8511 = vpack.c.b16 %v8261, %v8256
    %v8512 = vpack.c.b16 %v8262, %v8257
    %v8513 = vpack.c.b16 %v8263, %v8258
    %v8514 = vpack.c.b16 %v8264, %v8259
    %v8515 = vpack.c.b16 %v8270, %v8265
    %v8516 = vpack.c.b16 %v8271, %v8266
    %v8517 = vpack.c.b16 %v8272, %v8267
    %v8518 = vpack.c.b16 %v8273, %v8268
    %v8519 = vpack.c.b16 %v8274, %v8269
    %v8520 = vpack.c.b16 %v8280, %v8275
    %v8521 = vpack.c.b16 %v8281, %v8276
    %v8522 = vpack.c.b16 %v8282, %v8277
    %v8523 = vpack.c.b16 %v8283, %v8278
    %v8524 = vpack.c.b16 %v8284, %v8279
    %v8525 = vpack.c.b16 %v8290, %v8285
    %v8526 = vpack.c.b16 %v8291, %v8286
    %v8527 = vpack.c.b16 %v8292, %v8287
    %v8528 = vpack.c.b16 %v8293, %v8288
    %v8529 = vpack.c.b16 %v8294, %v8289
    %v8530 = vpack.c.b16 %v8300, %v8295
    %v8531 = vpack.c.b16 %v8301, %v8296
    %v8532 = vpack.c.b16 %v8302, %v8297
    %v8533 = vpack.c.b16 %v8303, %v8298
    %v8534 = vpack.c.b16 %v8304, %v8299
    %v8535 = vpack.c.b16 %v8310, %v8305
    %v8536 = vpack.c.b16 %v8311, %v8306
    %v8537 = vpack.c.b16 %v8312, %v8307
    %v8538 = vpack.c.b16 %v8313, %v8308
    %v8539 = vpack.c.b16 %v8314, %v8309
    %v8540 = vpack.c.b16 %v8320, %v8315
    %v8541 = vpack.c.b16 %v8321, %v8316
    %v8542 = vpack.c.b16 %v8322, %v8317
    %v8543 = vpack.c.b16 %v8323, %v8318
    %v8544 = vpack.c.b16 %v8324, %v8319
    %v8545 = vpack.c.b16 %v8330, %v8325
    %v8546 = vpack.c.b16 %v8331, %v8326
    %v8547 = vpack.c.b16 %v8332, %v8327
    %v8548 = vpack.c.b16 %v8333, %v8328
    %v8549 = vpack.c.b16 %v8334, %v8329
    %v8550 = vpack.c.b16 %v8340, %v8335
    %v8551 = vpack.c.b16 %v8341, %v8336
    %v8552 = vpack.c.b16 %v8342, %v8337
    %v8553 = vpack.c.b16 %v8343, %v8338
    %v8554 = vpack.c.b16 %v8344, %v8339
    %v8555 = vpack.c.b16 %v8350, %v8345
    %v8556 = vpack.c.b16 %v8351, %v8346
    %v8557 = vpack.c.b16 %v8352, %v8347
    %v8558 = vpack.c.b16 %v8353, %v8348
    %v8559 = vpack.c.b16 %v8354, %v8349
    %v8560 = vpack.c.b16 %v8360, %v8355
    %v8561 = vpack.c.b16 %v8361, %v8356
    %v8562 = vpack.c.b16 %v8362, %v8357
    %v8563 = vpack.c.b16 %v8363, %v8358
    %v8564 = vpack.c.b16 %v8364, %v8359
    %v8565 = vpack.c.b16 %v8370, %v8365
    %v8566 = vpack.c.b16 %v8371, %v8366
    %v8567 = vpack.c.b16 %v8372, %v8367
    %v8568 = vpack.c.b16 %v8373, %v8368
    %v8569 = vpack.c.b16 %v8374, %v8369
    %v8570 = vpack.c.b16 %v8380, %v8375
    %v8571 = vpack.c.b16 %v8381, %v8376
    %v8572 = vpack.c.b16 %v8382, %v8377
    %v8573 = vpack.c.b16 %v8383, %v8378
    %v8574 = vpack.c.b16 %v8384, %v8379
    %v8575 = vpack.c.b16 %v8390, %v8385
    %v8576 = vpack.c.b16 %v8391, %v8386
    %v8577 = vpack.c.b16 %v8392, %v8387
    %v8578 = vpack.c.b16 %v8393, %v8388
    %v8579 = vpack.c.b16 %v8394, %v8389
    %v8580 = vpack.c.b16 %v8400, %v8395
    %v8581 = vpack.c.b16 %v8401, %v8396
    %v8582 = vpack.c.b16 %v8402, %v8397
    %v8583 = vpack.c.b16 %v8403, %v8398
    %v8584 = vpack.c.b16 %v8404, %v8399
    %v8585 = vpack.c.b16 %v8410, %v8405
    %v8586 = vpack.c.b16 %v8411, %v8406
    %v8587 = vpack.c.b16 %v8412, %v8407
    %v8588 = vpack.c.b16 %v8413, %v8408
    %v8589 = vpack.c.b16 %v8414, %v8409
    %v8590 = vpack.c.b16 %v8420, %v8415
    %v8591 = vpack.c.b16 %v8421, %v8416
    %v8592 = vpack.c.b16 %v8422, %v8417
    %v8593 = vpack.c.b16 %v8423, %v8418
    %v8594 = vpack.c.b16 %v8424, %v8419
    %v8595 = vpack.c.b16 %v8430, %v8425
    %v8596 = vpack.c.b16 %v8431, %v8426
    %v8597 = vpack.c.b16 %v8432, %v8427
    %v8598 = vpack.c.b16 %v8433, %v8428
    %v8599 = vpack.c.b16 %v8434, %v8429
    %v8600 = vpack.c.b16 %v8440, %v8435
    %v8601 = vpack.c.b16 %v8441, %v8436
    %v8602 = vpack.c.b16 %v8442, %v8437
    %v8603 = vpack.c.b16 %v8443, %v8438
    %v8604 = vpack.c.b16 %v8444, %v8439
    %8765 = vmatprep.subr.bf16.mxu0 %v8446
    %8766 = vmatpush1.bf16.msra.mxu0 %v8445
    %8767 = vmatprep.subr.bf16.mxu0 %v8451
    %8768 = vmatpush1.bf16.msra.mxu0 %v8450
    %8769 = vmatprep.subr.bf16.mxu0 %v8456
    %8770 = vmatpush1.bf16.msra.mxu0 %v8455
    %8771 = vmatprep.subr.bf16.mxu0 %v8461
    %8772 = vmatpush1.bf16.msra.mxu0 %v8460
    %8773 = vmatprep.subr.bf16.mxu0 %v8466
    %8774 = vmatpush1.bf16.msra.mxu0 %v8465
    %8775 = vmatprep.subr.bf16.mxu0 %v8471
    %8776 = vmatpush1.bf16.msra.mxu0 %v8470
    %8777 = vmatprep.subr.bf16.mxu0 %v8476
    %8778 = vmatpush1.bf16.msra.mxu0 %v8475
    %8779 = vmatprep.subr.bf16.mxu0 %v8481
    %8780 = vmatpush1.bf16.msra.mxu0 %v8480
    %8781 = vmatprep.subr.bf16.mxu0 %v8486
    %8782 = vmatpush1.bf16.msra.mxu0 %v8485
    %8783 = vmatprep.subr.bf16.mxu0 %v8491
    %8784 = vmatpush1.bf16.msra.mxu0 %v8490
    %8785 = vmatprep.subr.bf16.mxu0 %v8496
    %8786 = vmatpush1.bf16.msra.mxu0 %v8495
    %8787 = vmatprep.subr.bf16.mxu0 %v8501
    %8788 = vmatpush1.bf16.msra.mxu0 %v8500
    %8789 = vmatprep.subr.bf16.mxu0 %v8506
    %8790 = vmatpush1.bf16.msra.mxu0 %v8505
    %8791 = vmatprep.subr.bf16.mxu0 %v8511
    %8792 = vmatpush1.bf16.msra.mxu0 %v8510
    %8793 = vmatprep.subr.bf16.mxu0 %v8516
    %8794 = vmatpush1.bf16.msra.mxu0 %v8515
    %8795 = vmatprep.subr.bf16.mxu0 %v8521
    %8796 = vmatpush1.bf16.msra.mxu0 %v8520
    %8797 = vmatprep.mubr.bf16.mxu0 %v7711
    %8798 = vmatmul.mubr.bf16.gmra.mrb[0].mxu0 %v7710
    %v8799 = vpop.f32.mrb[0].mxu0
    %v8800 = vadd.f32 %v7911, %v8799
    %v8801 = vpop.f32.mrb[0].mxu0
    %v8802 = vadd.f32 %v7915, %v8801
    %v8803 = vpop.f32.mrb[0].mxu0
    %v8804 = vpop.f32.mrb[0].mxu0
    %8805 = vdwg.mxu0
    %8806 = vmatprep.subr.bf16.mxu0 %v8526
    %8807 = vmatpush1.bf16.msra.mxu0 %v8525
    %8808 = vmatprep.subr.bf16.mxu0 %v8531
    %8809 = vmatpush1.bf16.msra.mxu0 %v8530
    %8810 = vmatprep.subr.bf16.mxu0 %v8536
    %8811 = vmatpush1.bf16.msra.mxu0 %v8535
    %8812 = vmatprep.subr.bf16.mxu0 %v8541
    %8813 = vmatpush1.bf16.msra.mxu0 %v8540
    %8814 = vmatprep.subr.bf16.mxu0 %v8546
    %8815 = vmatpush1.bf16.msra.mxu0 %v8545
    %8816 = vmatprep.subr.bf16.mxu0 %v8551
    %8817 = vmatpush1.bf16.msra.mxu0 %v8550
    %8818 = vmatprep.subr.bf16.mxu0 %v8556
    %8819 = vmatpush1.bf16.msra.mxu0 %v8555
    %8820 = vmatprep.subr.bf16.mxu0 %v8561
    %8821 = vmatpush1.bf16.msra.mxu0 %v8560
    %8822 = vmatprep.subr.bf16.mxu0 %v8566
    %8823 = vmatpush1.bf16.msra.mxu0 %v8565
    %8824 = vmatprep.subr.bf16.mxu0 %v8571
    %8825 = vmatpush1.bf16.msra.mxu0 %v8570
    %8826 = vmatprep.subr.bf16.mxu0 %v8576
    %8827 = vmatpush1.bf16.msra.mxu0 %v8575
    %8828 = vmatprep.subr.bf16.mxu0 %v8581
    %8829 = vmatpush1.bf16.msra.mxu0 %v8580
    %8830 = vmatprep.subr.bf16.mxu0 %v8586
    %8831 = vmatpush1.bf16.msra.mxu0 %v8585
    %8832 = vmatprep.subr.bf16.mxu0 %v8591
    %8833 = vmatpush1.bf16.msra.mxu0 %v8590
    %8834 = vmatprep.subr.bf16.mxu0 %v8596
    %8835 = vmatpush1.bf16.msra.mxu0 %v8595
    %8836 = vmatprep.subr.bf16.mxu0 %v8601
    %8837 = vmatpush1.bf16.msra.mxu0 %v8600
    %8838 = vmatprep.mubr.bf16.mxu0 %v7713
    %8839 = vmatmul.mubr.bf16.gmra.mrb[0].mxu0 %v7712
    %v8840 = vpop.f32.mrb[0].mxu0
    %v8841 = vadd.f32 %v8800, %v8840
    %v8842 = vpop.f32.mrb[0].mxu0
    %v8843 = vadd.f32 %v8802, %v8842
    %v8844 = vpop.f32.mrb[0].mxu0
    %v8845 = vpop.f32.mrb[0].mxu0
    %8846 = vdwg.mxu0
    %8847 = vmatprep.subr.bf16.mxu0 %v8448
    %8848 = vmatpush1.bf16.msra.mxu0 %v8447
    %8849 = vmatprep.subr.bf16.mxu0 %v8453
    %8850 = vmatpush1.bf16.msra.mxu0 %v8452
    %8851 = vmatprep.subr.bf16.mxu0 %v8458
    %8852 = vmatpush1.bf16.msra.mxu0 %v8457
    %8853 = vmatprep.subr.bf16.mxu0 %v8463
    %8854 = vmatpush1.bf16.msra.mxu0 %v8462
    %8855 = vmatprep.subr.bf16.mxu0 %v8468
    %8856 = vmatpush1.bf16.msra.mxu0 %v8467
    %8857 = vmatprep.subr.bf16.mxu0 %v8473
    %8858 = vmatpush1.bf16.msra.mxu0 %v8472
    %8859 = vmatprep.subr.bf16.mxu0 %v8478
    %8860 = vmatpush1.bf16.msra.mxu0 %v8477
    %8861 = vmatprep.subr.bf16.mxu0 %v8483
    %8862 = vmatpush1.bf16.msra.mxu0 %v8482
    %8863 = vmatprep.subr.bf16.mxu0 %v8488
    %8864 = vmatpush1.bf16.msra.mxu0 %v8487
    %8865 = vmatprep.subr.bf16.mxu0 %v8493
    %8866 = vmatpush1.bf16.msra.mxu0 %v8492
    %8867 = vmatprep.subr.bf16.mxu0 %v8498
    %8868 = vmatpush1.bf16.msra.mxu0 %v8497
    %8869 = vmatprep.subr.bf16.mxu0 %v8503
    %8870 = vmatpush1.bf16.msra.mxu0 %v8502
    %8871 = vmatprep.subr.bf16.mxu0 %v8508
    %8872 = vmatpush1.bf16.msra.mxu0 %v8507
    %8873 = vmatprep.subr.bf16.mxu0 %v8513
    %8874 = vmatpush1.bf16.msra.mxu0 %v8512
    %8875 = vmatprep.subr.bf16.mxu0 %v8518
    %8876 = vmatpush1.bf16.msra.mxu0 %v8517
    %8877 = vmatprep.subr.bf16.mxu0 %v8523
    %8878 = vmatpush1.bf16.msra.mxu0 %v8522
    %8879 = vmatprep.mubr.bf16.mxu0 %v7711
    %8880 = vmatmul.mubr.bf16.gmra.mrb[0].mxu0 %v7710
    %v8881 = vpop.f32.mrb[0].mxu0
    %v8882 = vadd.f32 %v7919, %v8881
    %v8883 = vpop.f32.mrb[0].mxu0
    %v8884 = vadd.f32 %v7923, %v8883
    %v8885 = vpop.f32.mrb[0].mxu0
    %v8886 = vpop.f32.mrb[0].mxu0
    %8887 = vdwg.mxu0
    %8888 = vmatprep.subr.bf16.mxu0 %v8528
    %8889 = vmatpush1.bf16.msra.mxu0 %v8527
    %8890 = vmatprep.subr.bf16.mxu0 %v8533
    %8891 = vmatpush1.bf16.msra.mxu0 %v8532
    %8892 = vmatprep.subr.bf16.mxu0 %v8538
    %8893 = vmatpush1.bf16.msra.mxu0 %v8537
    %8894 = vmatprep.subr.bf16.mxu0 %v8543
    %8895 = vmatpush1.bf16.msra.mxu0 %v8542
    %8896 = vmatprep.subr.bf16.mxu0 %v8548
    %8897 = vmatpush1.bf16.msra.mxu0 %v8547
    %8898 = vmatprep.subr.bf16.mxu0 %v8553
    %8899 = vmatpush1.bf16.msra.mxu0 %v8552
    %8900 = vmatprep.subr.bf16.mxu0 %v8558
    %8901 = vmatpush1.bf16.msra.mxu0 %v8557
    %8902 = vmatprep.subr.bf16.mxu0 %v8563
    %8903 = vmatpush1.bf16.msra.mxu0 %v8562
    %8904 = vmatprep.subr.bf16.mxu0 %v8568
    %8905 = vmatpush1.bf16.msra.mxu0 %v8567
    %8906 = vmatprep.subr.bf16.mxu0 %v8573
    %8907 = vmatpush1.bf16.msra.mxu0 %v8572
    %8908 = vmatprep.subr.bf16.mxu0 %v8578
    %8909 = vmatpush1.bf16.msra.mxu0 %v8577
    %8910 = vmatprep.subr.bf16.mxu0 %v8583
    %8911 = vmatpush1.bf16.msra.mxu0 %v8582
    %8912 = vmatprep.subr.bf16.mxu0 %v8588
    %8913 = vmatpush1.bf16.msra.mxu0 %v8587
    %8914 = vmatprep.subr.bf16.mxu0 %v8593
    %8915 = vmatpush1.bf16.msra.mxu0 %v8592
    %8916 = vmatprep.subr.bf16.mxu0 %v8598
    %8917 = vmatpush1.bf16.msra.mxu0 %v8597
    %8918 = vmatprep.subr.bf16.mxu0 %v8603
    %8919 = vmatpush1.bf16.msra.mxu0 %v8602
    %8920 = vmatprep.mubr.bf16.mxu0 %v7713
    %8921 = vmatmul.mubr.bf16.gmra.mrb[0].mxu0 %v7712
    %v8922 = vpop.f32.mrb[0].mxu0
    %v8923 = vadd.f32 %v8882, %v8922
    %v8924 = vpop.f32.mrb[0].mxu0
    %v8925 = vadd.f32 %v8884, %v8924
    %v8926 = vpop.f32.mrb[0].mxu0
    %v8927 = vpop.f32.mrb[0].mxu0
    %8928 = vdwg.mxu0
    %8929 = vmatprep.subr.bf16.mxu0 0
    %8930 = vmatpush1.bf16.msra.mxu0 %v8449
    %8931 = vmatprep.subr.bf16.mxu0 0
    %8932 = vmatpush1.bf16.msra.mxu0 %v8454
    %8933 = vmatprep.subr.bf16.mxu0 0
    %8934 = vmatpush1.bf16.msra.mxu0 %v8459
    %8935 = vmatprep.subr.bf16.mxu0 0
    %8936 = vmatpush1.bf16.msra.mxu0 %v8464
    %8937 = vmatprep.subr.bf16.mxu0 0
    %8938 = vmatpush1.bf16.msra.mxu0 %v8469
    %8939 = vmatprep.subr.bf16.mxu0 0
    %8940 = vmatpush1.bf16.msra.mxu0 %v8474
    %8941 = vmatprep.subr.bf16.mxu0 0
    %8942 = vmatpush1.bf16.msra.mxu0 %v8479
    %8943 = vmatprep.subr.bf16.mxu0 0
    %8944 = vmatpush1.bf16.msra.mxu0 %v8484
    %8945 = vmatprep.subr.bf16.mxu0 0
    %8946 = vmatpush1.bf16.msra.mxu0 %v8489
    %8947 = vmatprep.subr.bf16.mxu0 0
    %8948 = vmatpush1.bf16.msra.mxu0 %v8494
    %8949 = vmatprep.subr.bf16.mxu0 0
    %8950 = vmatpush1.bf16.msra.mxu0 %v8499
    %8951 = vmatprep.subr.bf16.mxu0 0
    %8952 = vmatpush1.bf16.msra.mxu0 %v8504
    %8953 = vmatprep.subr.bf16.mxu0 0
    %8954 = vmatpush1.bf16.msra.mxu0 %v8509
    %8955 = vmatprep.subr.bf16.mxu0 0
    %8956 = vmatpush1.bf16.msra.mxu0 %v8514
    %8957 = vmatprep.subr.bf16.mxu0 0
    %8958 = vmatpush1.bf16.msra.mxu0 %v8519
    %8959 = vmatprep.subr.bf16.mxu0 0
    %8960 = vmatpush1.bf16.msra.mxu0 %v8524
    %8961 = vmatprep.mubr.bf16.mxu0 %v7711
    %8962 = vmatmul.mubr.bf16.gmra.mrb[0].mxu0 %v7710
    %v8963 = vpop.f32.mrb[0].mxu0
    %v8964 = vadd.f32 %v7927, %v8963
    %v8965 = vpop.f32.mrb[0].mxu0
    %v8966 = vpop.f32.mrb[0].mxu0
    %v8967 = vpop.f32.mrb[0].mxu0
    %8968 = vdwg.mxu0
    %8969 = vmatprep.subr.bf16.mxu0 0
    %8970 = vmatpush1.bf16.msra.mxu0 %v8529
    %8971 = vmatprep.subr.bf16.mxu0 0
    %8972 = vmatpush1.bf16.msra.mxu0 %v8534
    %8973 = vmatprep.subr.bf16.mxu0 0
    %8974 = vmatpush1.bf16.msra.mxu0 %v8539
    %8975 = vmatprep.subr.bf16.mxu0 0
    %8976 = vmatpush1.bf16.msra.mxu0 %v8544
    %8977 = vmatprep.subr.bf16.mxu0 0
    %8978 = vmatpush1.bf16.msra.mxu0 %v8549
    %8979 = vmatprep.subr.bf16.mxu0 0
    %8980 = vmatpush1.bf16.msra.mxu0 %v8554
    %8981 = vmatprep.subr.bf16.mxu0 0
    %8982 = vmatpush1.bf16.msra.mxu0 %v8559
    %8983 = vmatprep.subr.bf16.mxu0 0
    %8984 = vmatpush1.bf16.msra.mxu0 %v8564
    %8985 = vmatprep.subr.bf16.mxu0 0
    %8986 = vmatpush1.bf16.msra.mxu0 %v8569
    %8987 = vmatprep.subr.bf16.mxu0 0
    %8988 = vmatpush1.bf16.msra.mxu0 %v8574
    %8989 = vmatprep.subr.bf16.mxu0 0
    %8990 = vmatpush1.bf16.msra.mxu0 %v8579
    %8991 = vmatprep.subr.bf16.mxu0 0
    %8992 = vmatpush1.bf16.msra.mxu0 %v8584
    %8993 = vmatprep.subr.bf16.mxu0 0
    %8994 = vmatpush1.bf16.msra.mxu0 %v8589
    %8995 = vmatprep.subr.bf16.mxu0 0
    %8996 = vmatpush1.bf16.msra.mxu0 %v8594
    %8997 = vmatprep.subr.bf16.mxu0 0
    %8998 = vmatpush1.bf16.msra.mxu0 %v8599
    %8999 = vmatprep.subr.bf16.mxu0 0
    %9000 = vmatpush1.bf16.msra.mxu0 %v8604
    %9001 = vmatprep.mubr.bf16.mxu0 %v7713
    %9002 = vmatmul.mubr.bf16.gmra.mrb[0].mxu0 %v7712
    %v9003 = vpop.f32.mrb[0].mxu0
    %v9004 = vadd.f32 %v8964, %v9003
    %v9005 = vpop.f32.mrb[0].mxu0
    %v9006 = vpop.f32.mrb[0].mxu0
    %v9007 = vpop.f32.mrb[0].mxu0
    %9008 = vdwg.mxu0
    %v9009 = vmax.f32 %v8841, 0.0
    %v9010 = vmax.f32 %v8843, 0.0
    %v9011 = vmax.f32 %v8923, 0.0
    %v9012 = vmax.f32 %v8925, 0.0
    %v9013 = vmax.f32 %v9004, 0.0
    %v9014 = vld [vmem:[#allocation14] sm:$0xff]
    %v9015 = vld [vmem:[#allocation14 + $0x8] sm:$0xff]
    %v9016 = vld [vmem:[#allocation14 + $0x10] sm:$0xff]
    %v9017 = vld [vmem:[#allocation14 + $0x18] sm:$0xff]
    %v9018 = vld [vmem:[#allocation14 + $0x20] sm:$0xff]
    %v9019 = vld [vmem:[#allocation14 + $0x28] sm:$0xff]
    %v9020 = vld [vmem:[#allocation14 + $0x30] sm:$0xff]
    %v9021 = vld [vmem:[#allocation14 + $0x38] sm:$0xff]
    %v9022 = vld [vmem:[#allocation14 + $0x40] sm:$0xff]
    %v9023 = vld [vmem:[#allocation14 + $0x48] sm:$0xff]
    %v9024 = vld [vmem:[#allocation14 + $0x50] sm:$0xff]
    %v9025 = vld [vmem:[#allocation14 + $0x58] sm:$0xff]
    %v9026 = vld [vmem:[#allocation14 + $0x60] sm:$0xff]
    %v9027 = vld [vmem:[#allocation14 + $0x68] sm:$0xff]
    %v9028 = vld [vmem:[#allocation14 + $0x70] sm:$0xff]
    %v9029 = vld [vmem:[#allocation14 + $0x78] sm:$0xff]
    %v9030 = vld [vmem:[#allocation14 + $0x80] sm:$0xff]
    %v9031 = vld [vmem:[#allocation14 + $0x88] sm:$0xff]
    %v9032 = vld [vmem:[#allocation14 + $0x90] sm:$0xff]
    %v9033 = vld [vmem:[#allocation14 + $0x98] sm:$0xff]
    %v9034 = vld [vmem:[#allocation14 + $0xa0] sm:$0xff]
    %v9035 = vld [vmem:[#allocation14 + $0xa8] sm:$0xff]
    %v9036 = vld [vmem:[#allocation14 + $0xb0] sm:$0xff]
    %v9037 = vld [vmem:[#allocation14 + $0xb8] sm:$0xff]
    %v9038 = vld [vmem:[#allocation14 + $0xc0] sm:$0xff]
    %v9039 = vld [vmem:[#allocation14 + $0xc8] sm:$0xff]
    %v9040 = vld [vmem:[#allocation14 + $0xd0] sm:$0xff]
    %v9041 = vld [vmem:[#allocation14 + $0xd8] sm:$0xff]
    %v9042 = vld [vmem:[#allocation14 + $0xe0] sm:$0xff]
    %v9043 = vld [vmem:[#allocation14 + $0xe8] sm:$0xff]
    %v9044 = vld [vmem:[#allocation14 + $0xf0] sm:$0xff]
    %v9045 = vld [vmem:[#allocation14 + $0xf8] sm:$0xff]
    %v9046 = vld [vmem:[#allocation14 + $0x100] sm:$0xff]
    %v9047 = vld [vmem:[#allocation14 + $0x108] sm:$0xff]
    %v9048 = vld [vmem:[#allocation14 + $0x110] sm:$0xff]
    %v9049 = vld [vmem:[#allocation14 + $0x118] sm:$0xff]
    %v9050 = vld [vmem:[#allocation14 + $0x120] sm:$0xff]
    %v9051 = vld [vmem:[#allocation14 + $0x128] sm:$0xff]
    %v9052 = vld [vmem:[#allocation14 + $0x130] sm:$0xff]
    %v9053 = vld [vmem:[#allocation14 + $0x138] sm:$0xff]
    %v9054 = vld [vmem:[#allocation14 + $0x140] sm:$0xff]
    %v9055 = vld [vmem:[#allocation14 + $0x148] sm:$0xff]
    %v9056 = vld [vmem:[#allocation14 + $0x150] sm:$0xff]
    %v9057 = vld [vmem:[#allocation14 + $0x158] sm:$0xff]
    %v9058 = vld [vmem:[#allocation14 + $0x160] sm:$0xff]
    %v9059 = vld [vmem:[#allocation14 + $0x168] sm:$0xff]
    %v9060 = vld [vmem:[#allocation14 + $0x170] sm:$0xff]
    %v9061 = vld [vmem:[#allocation14 + $0x178] sm:$0xff]
    %v9062 = vld [vmem:[#allocation14 + $0x180] sm:$0xff]
    %v9063 = vld [vmem:[#allocation14 + $0x188] sm:$0xff]
    %v9064 = vld [vmem:[#allocation14 + $0x190] sm:$0xff]
    %v9065 = vld [vmem:[#allocation14 + $0x198] sm:$0xff]
    %v9066 = vld [vmem:[#allocation14 + $0x1a0] sm:$0xff]
    %v9067 = vld [vmem:[#allocation14 + $0x1a8] sm:$0xff]
    %v9068 = vld [vmem:[#allocation14 + $0x1b0] sm:$0xff]
    %v9069 = vld [vmem:[#allocation14 + $0x1b8] sm:$0xff]
    %v9070 = vld [vmem:[#allocation14 + $0x1c0] sm:$0xff]
    %v9071 = vld [vmem:[#allocation14 + $0x1c8] sm:$0xff]
    %v9072 = vld [vmem:[#allocation14 + $0x1d0] sm:$0xff]
    %v9073 = vld [vmem:[#allocation14 + $0x1d8] sm:$0xff]
    %v9074 = vld [vmem:[#allocation14 + $0x1e0] sm:$0xff]
    %v9075 = vld [vmem:[#allocation14 + $0x1e8] sm:$0xff]
    %v9076 = vld [vmem:[#allocation14 + $0x1f0] sm:$0xff]
    %v9077 = vld [vmem:[#allocation14 + $0x1f8] sm:$0xff]
    %v9078 = vld [vmem:[#allocation14 + $0x200] sm:$0xff]
    %v9079 = vld [vmem:[#allocation14 + $0x208] sm:$0xff]
    %v9080 = vld [vmem:[#allocation14 + $0x210] sm:$0xff]
    %v9081 = vld [vmem:[#allocation14 + $0x218] sm:$0xff]
    %v9082 = vld [vmem:[#allocation14 + $0x220] sm:$0xff]
    %v9083 = vld [vmem:[#allocation14 + $0x228] sm:$0xff]
    %v9084 = vld [vmem:[#allocation14 + $0x230] sm:$0xff]
    %v9085 = vld [vmem:[#allocation14 + $0x238] sm:$0xff]
    %v9086 = vld [vmem:[#allocation14 + $0x240] sm:$0xff]
    %v9087 = vld [vmem:[#allocation14 + $0x248] sm:$0xff]
    %v9088 = vld [vmem:[#allocation14 + $0x250] sm:$0xff]
    %v9089 = vld [vmem:[#allocation14 + $0x258] sm:$0xff]
    %v9090 = vld [vmem:[#allocation14 + $0x260] sm:$0xff]
    %v9091 = vld [vmem:[#allocation14 + $0x268] sm:$0xff]
    %v9092 = vld [vmem:[#allocation14 + $0x270] sm:$0xff]
    %v9093 = vld [vmem:[#allocation14 + $0x278] sm:$0xff]
    %v9094 = vld [vmem:[#allocation16] sm:$0x1]
    %v9096 = vlaneseq
    %v9097 = vshrl.u32 %v9096, 7
    %v9098 = vsub.s32 0, %v9097
    %v9099 = vrot.slane %v9094, %v9098
    %9101 = vmatprep.subr.mxu0 0.0
    %9102 = vmatpush1.msra.mxu0 %v9014
    %9103 = vmatprep.subr.mxu0 0.0
    %9104 = vmatpush1.msra.mxu0 %v9015
    %9105 = vmatprep.subr.mxu0 0.0
    %9106 = vmatpush1.msra.mxu0 %v9016
    %9107 = vmatprep.subr.mxu0 0.0
    %9108 = vmatpush1.msra.mxu0 %v9017
    %9109 = vmatprep.subr.mxu0 0.0
    %9110 = vmatpush1.msra.mxu0 %v9018
    %9111 = vmatprep.subr.mxu0 0.0
    %9112 = vmatpush1.msra.mxu0 %v9019
    %9113 = vmatprep.subr.mxu0 0.0
    %9114 = vmatpush1.msra.mxu0 %v9020
    %9115 = vmatprep.subr.mxu0 0.0
    %9116 = vmatpush1.msra.mxu0 %v9021
    %9117 = vmatprep.subr.mxu0 0.0
    %9118 = vmatpush1.msra.mxu0 %v9022
    %9119 = vmatprep.subr.mxu0 0.0
    %9120 = vmatpush1.msra.mxu0 %v9023
    %9121 = vmatprep.subr.mxu0 0.0
    %9122 = vmatpush1.msra.mxu0 %v9024
    %9123 = vmatprep.subr.mxu0 0.0
    %9124 = vmatpush1.msra.mxu0 %v9025
    %9125 = vmatprep.subr.mxu0 0.0
    %9126 = vmatpush1.msra.mxu0 %v9026
    %9127 = vmatprep.subr.mxu0 0.0
    %9128 = vmatpush1.msra.mxu0 %v9027
    %9129 = vmatprep.subr.mxu0 0.0
    %9130 = vmatpush1.msra.mxu0 %v9028
    %9131 = vmatprep.subr.mxu0 0.0
    %9132 = vmatpush1.msra.mxu0 %v9029
    %9133 = vmatprep.subr.mxu0 0.0
    %9134 = vmatpush1.msra.mxu0 %v9030
    %9135 = vmatprep.subr.mxu0 0.0
    %9136 = vmatpush1.msra.mxu0 %v9031
    %9137 = vmatprep.subr.mxu0 0.0
    %9138 = vmatpush1.msra.mxu0 %v9032
    %9139 = vmatprep.subr.mxu0 0.0
    %9140 = vmatpush1.msra.mxu0 %v9033
    %9141 = vmatprep.subr.mxu0 0.0
    %9142 = vmatpush1.msra.mxu0 %v9034
    %9143 = vmatprep.subr.mxu0 0.0
    %9144 = vmatpush1.msra.mxu0 %v9035
    %9145 = vmatprep.subr.mxu0 0.0
    %9146 = vmatpush1.msra.mxu0 %v9036
    %9147 = vmatprep.subr.mxu0 0.0
    %9148 = vmatpush1.msra.mxu0 %v9037
    %9149 = vmatprep.subr.mxu0 0.0
    %9150 = vmatpush1.msra.mxu0 %v9038
    %9151 = vmatprep.subr.mxu0 0.0
    %9152 = vmatpush1.msra.mxu0 %v9039
    %9153 = vmatprep.subr.mxu0 0.0
    %9154 = vmatpush1.msra.mxu0 %v9040
    %9155 = vmatprep.subr.mxu0 0.0
    %9156 = vmatpush1.msra.mxu0 %v9041
    %9157 = vmatprep.subr.mxu0 0.0
    %9158 = vmatpush1.msra.mxu0 %v9042
    %9159 = vmatprep.subr.mxu0 0.0
    %9160 = vmatpush1.msra.mxu0 %v9043
    %9161 = vmatprep.subr.mxu0 0.0
    %9162 = vmatpush1.msra.mxu0 %v9044
    %9163 = vmatprep.subr.mxu0 0.0
    %9164 = vmatpush1.msra.mxu0 %v9045
    %9165 = vmatprep.mubr.f32.mxu0 %v9010
    %9166 = vmatmul.mubr.f32.gmra.mrb[0].mxu0 %v9009
    %v9167 = vpop.f32.mrb[0].mxu0
    %v9168 = vadd.f32 %v9099, %v9167
    %v9169 = vpop.f32.mrb[0].mxu0
    %9170 = vdwg.mxu0
    %9171 = vmatprep.subr.mxu0 0.0
    %9172 = vmatpush1.msra.mxu0 %v9046
    %9173 = vmatprep.subr.mxu0 0.0
    %9174 = vmatpush1.msra.mxu0 %v9047
    %9175 = vmatprep.subr.mxu0 0.0
    %9176 = vmatpush1.msra.mxu0 %v9048
    %9177 = vmatprep.subr.mxu0 0.0
    %9178 = vmatpush1.msra.mxu0 %v9049
    %9179 = vmatprep.subr.mxu0 0.0
    %9180 = vmatpush1.msra.mxu0 %v9050
    %9181 = vmatprep.subr.mxu0 0.0
    %9182 = vmatpush1.msra.mxu0 %v9051
    %9183 = vmatprep.subr.mxu0 0.0
    %9184 = vmatpush1.msra.mxu0 %v9052
    %9185 = vmatprep.subr.mxu0 0.0
    %9186 = vmatpush1.msra.mxu0 %v9053
    %9187 = vmatprep.subr.mxu0 0.0
    %9188 = vmatpush1.msra.mxu0 %v9054
    %9189 = vmatprep.subr.mxu0 0.0
    %9190 = vmatpush1.msra.mxu0 %v9055
    %9191 = vmatprep.subr.mxu0 0.0
    %9192 = vmatpush1.msra.mxu0 %v9056
    %9193 = vmatprep.subr.mxu0 0.0
    %9194 = vmatpush1.msra.mxu0 %v9057
    %9195 = vmatprep.subr.mxu0 0.0
    %9196 = vmatpush1.msra.mxu0 %v9058
    %9197 = vmatprep.subr.mxu0 0.0
    %9198 = vmatpush1.msra.mxu0 %v9059
    %9199 = vmatprep.subr.mxu0 0.0
    %9200 = vmatpush1.msra.mxu0 %v9060
    %9201 = vmatprep.subr.mxu0 0.0
    %9202 = vmatpush1.msra.mxu0 %v9061
    %9203 = vmatprep.subr.mxu0 0.0
    %9204 = vmatpush1.msra.mxu0 %v9062
    %9205 = vmatprep.subr.mxu0 0.0
    %9206 = vmatpush1.msra.mxu0 %v9063
    %9207 = vmatprep.subr.mxu0 0.0
    %9208 = vmatpush1.msra.mxu0 %v9064
    %9209 = vmatprep.subr.mxu0 0.0
    %9210 = vmatpush1.msra.mxu0 %v9065
    %9211 = vmatprep.subr.mxu0 0.0
    %9212 = vmatpush1.msra.mxu0 %v9066
    %9213 = vmatprep.subr.mxu0 0.0
    %9214 = vmatpush1.msra.mxu0 %v9067
    %9215 = vmatprep.subr.mxu0 0.0
    %9216 = vmatpush1.msra.mxu0 %v9068
    %9217 = vmatprep.subr.mxu0 0.0
    %9218 = vmatpush1.msra.mxu0 %v9069
    %9219 = vmatprep.subr.mxu0 0.0
    %9220 = vmatpush1.msra.mxu0 %v9070
    %9221 = vmatprep.subr.mxu0 0.0
    %9222 = vmatpush1.msra.mxu0 %v9071
    %9223 = vmatprep.subr.mxu0 0.0
    %9224 = vmatpush1.msra.mxu0 %v9072
    %9225 = vmatprep.subr.mxu0 0.0
    %9226 = vmatpush1.msra.mxu0 %v9073
    %9227 = vmatprep.subr.mxu0 0.0
    %9228 = vmatpush1.msra.mxu0 %v9074
    %9229 = vmatprep.subr.mxu0 0.0
    %9230 = vmatpush1.msra.mxu0 %v9075
    %9231 = vmatprep.subr.mxu0 0.0
    %9232 = vmatpush1.msra.mxu0 %v9076
    %9233 = vmatprep.subr.mxu0 0.0
    %9234 = vmatpush1.msra.mxu0 %v9077
    %9235 = vmatprep.mubr.f32.mxu0 %v9012
    %9236 = vmatmul.mubr.f32.gmra.mrb[0].mxu0 %v9011
    %v9237 = vpop.f32.mrb[0].mxu0
    %v9238 = vadd.f32 %v9168, %v9237
    %v9239 = vpop.f32.mrb[0].mxu0
    %9240 = vdwg.mxu0
    %9241 = vmatprep.subr.mxu0 0.0
    %9242 = vmatpush1.msra.mxu0 %v9078
    %9243 = vmatprep.subr.mxu0 0.0
    %9244 = vmatpush1.msra.mxu0 %v9079
    %9245 = vmatprep.subr.mxu0 0.0
    %9246 = vmatpush1.msra.mxu0 %v9080
    %9247 = vmatprep.subr.mxu0 0.0
    %9248 = vmatpush1.msra.mxu0 %v9081
    %9249 = vmatprep.subr.mxu0 0.0
    %9250 = vmatpush1.msra.mxu0 %v9082
    %9251 = vmatprep.subr.mxu0 0.0
    %9252 = vmatpush1.msra.mxu0 %v9083
    %9253 = vmatprep.subr.mxu0 0.0
    %9254 = vmatpush1.msra.mxu0 %v9084
    %9255 = vmatprep.subr.mxu0 0.0
    %9256 = vmatpush1.msra.mxu0 %v9085
    %9257 = vmatprep.subr.mxu0 0.0
    %9258 = vmatpush1.msra.mxu0 %v9086
    %9259 = vmatprep.subr.mxu0 0.0
    %9260 = vmatpush1.msra.mxu0 %v9087
    %9261 = vmatprep.subr.mxu0 0.0
    %9262 = vmatpush1.msra.mxu0 %v9088
    %9263 = vmatprep.subr.mxu0 0.0
    %9264 = vmatpush1.msra.mxu0 %v9089
    %9265 = vmatprep.subr.mxu0 0.0
    %9266 = vmatpush1.msra.mxu0 %v9090
    %9267 = vmatprep.subr.mxu0 0.0
    %9268 = vmatpush1.msra.mxu0 %v9091
    %9269 = vmatprep.subr.mxu0 0.0
    %9270 = vmatpush1.msra.mxu0 %v9092
    %9271 = vmatprep.subr.mxu0 0.0
    %9272 = vmatpush1.msra.mxu0 %v9093
    %9273 = vmatprep.subr.mxu0 0.0
    %9274 = vmatpush1.msra.mxu0 0.0
    %9275 = vmatprep.subr.mxu0 0.0
    %9276 = vmatpush1.msra.mxu0 0.0
    %9277 = vmatprep.subr.mxu0 0.0
    %9278 = vmatpush1.msra.mxu0 0.0
    %9279 = vmatprep.subr.mxu0 0.0
    %9280 = vmatpush1.msra.mxu0 0.0
    %9281 = vmatprep.subr.mxu0 0.0
    %9282 = vmatpush1.msra.mxu0 0.0
    %9283 = vmatprep.subr.mxu0 0.0
    %9284 = vmatpush1.msra.mxu0 0.0
    %9285 = vmatprep.subr.mxu0 0.0
    %9286 = vmatpush1.msra.mxu0 0.0
    %9287 = vmatprep.subr.mxu0 0.0
    %9288 = vmatpush1.msra.mxu0 0.0
    %9289 = vmatprep.subr.mxu0 0.0
    %9290 = vmatpush1.msra.mxu0 0.0
    %9291 = vmatprep.subr.mxu0 0.0
    %9292 = vmatpush1.msra.mxu0 0.0
    %9293 = vmatprep.subr.mxu0 0.0
    %9294 = vmatpush1.msra.mxu0 0.0
    %9295 = vmatprep.subr.mxu0 0.0
    %9296 = vmatpush1.msra.mxu0 0.0
    %9297 = vmatprep.subr.mxu0 0.0
    %9298 = vmatpush1.msra.mxu0 0.0
    %9299 = vmatprep.subr.mxu0 0.0
    %9300 = vmatpush1.msra.mxu0 0.0
    %9301 = vmatprep.subr.mxu0 0.0
    %9302 = vmatpush1.msra.mxu0 0.0
    %9303 = vmatprep.subr.mxu0 0.0
    %9304 = vmatpush1.msra.mxu0 0.0
    %9305 = vmatprep.mubr.f32.mxu0 0.0
    %9306 = vmatmul.mubr.f32.gmra.mrb[0].mxu0 %v9013
    %v9307 = vpop.f32.mrb[0].mxu0
    %v9308 = vadd.f32 %v9238, %v9307
    %v9309 = vpop.f32.mrb[0].mxu0
    %9310 = vdwg.mxu0
    %9311 = vst [vmem:[#allocation17] sm:$0xff] %v9308
    // Predicated region
    $region74: #{tpu_custom_call.1} parent=1 // pred_check
      _
    $region75: #{tpu_custom_call.1} parent=1 // pred_check_branch
      %9313 = sbr.rel (0) target = $region77
    $region76: #{tpu_custom_call.1} parent=1 // pred_region
      %s9315 = ssub.s32 128, 128
      %9316 = vsyncadd [#allocation4], %s9315
      %s9318 = sshll.u32 [#allocation17], 4
      %s9319 = int_to_ptr.vmem [resolvable:$true] %s9318
      %9321 = dma.vmem_to_hbm [thread:$0]  %s9319, 128, %s9, [#allocation4]
    $region77: #{tpu_custom_call.1} parent=1 // pred_fallthru
      _
    // Predicated region
    $region78: #{tpu_custom_call.1} parent=1 // pred_check
      _
    $region79: #{tpu_custom_call.1} parent=1 // pred_check_branch
      %9323 = sbr.rel (0) target = $region81
    $region80: #{tpu_custom_call.1} parent=1 // pred_region
      %9324 = dma.done [#allocation4], 128
    $region81: #{tpu_custom_call.1} parent=1 // pred_fallthru
      _
    %9325 = vsyncpa [#allocation3], 1
    %9326 = vsyncpa [#allocation6], 1
    %9327 = vsyncpa [#allocation9], 1
    %9328 = vsyncpa [#allocation12], 1
    %9329 = vsyncpa [#allocation15], 1
    %9330 = vsyncpa [#allocation4], 1

</llo_original>
